<compile_context>
chip_gen: v7x
topology: tpu7x:2x2x1
jax: 0.10.0
libtpu: 0.0.40
codegen_flags: <defaults>
</compile_context>

<pallas_src>
import jax
import jax.numpy as jnp
from jax.experimental import pallas as pl
from jax.experimental.pallas import tpu as pltpu

# Module-consistent config (matches the PyTorch defaults; lane-dense C).
N_EMB = 384
N_HEAD = 6
HEAD_SIZE = N_EMB // N_HEAD          # 64
BLOCK_SIZE = 64                      # causal-mask capacity; T <= BLOCK_SIZE
FFN_HIDDEN = 4 * N_EMB
LN_EPS = 1e-5


def _layernorm(h, g, b):
    mu = jnp.mean(h, axis=-1, keepdims=True)
    d = h - mu
    var = jnp.mean(d * d, axis=-1, keepdims=True)
    return d * jax.lax.rsqrt(var + LN_EPS) * g + b


def block_kernel(x_ref,
                 ln1g_ref, ln1b_ref,
                 wqkv_ref,                      # (C, 3C), scale folded into Q columns
                 wproj_ref, bproj_ref,          # (C, C), (1, C)
                 ln2g_ref, ln2b_ref,
                 w1_ref, b1_ref, w2_ref, b2_ref,
                 out_ref):
    Bt, T, C = x_ref.shape
    N = Bt * T
    D = C // N_HEAD

    # Flatten the batch tile into rows; C stays the (lane-dense) minor dim.
    x = x_ref[...].reshape(N, C)

    # ---- x = x + MultiHeadAttention(LayerNorm(x)) ----
    h = _layernorm(x, ln1g_ref[...], ln1b_ref[...])

    # Fused QKV projection: one (N, C) @ (C, 3C) matmul (lane-dense output).
    qkv = jnp.dot(h, wqkv_ref[...], preferred_element_type=jnp.float32)   # (N, 3C)

    # Single (T, T) causal mask, built once and shared by all heads / batches.
    row = jax.lax.broadcasted_iota(jnp.int32, (T, T), 0)
    col = jax.lax.broadcasted_iota(jnp.int32, (T, T), 1)
    causal = row >= col

    head_outs = []
    for hix in range(N_HEAD):
        # 64-wide lane slices of the fused QKV output, viewed per batch element.
        q = qkv[:, hix * D:(hix + 1) * D].reshape(Bt, T, D)          # pre-scaled
        k = qkv[:, C + hix * D:C + (hix + 1) * D].reshape(Bt, T, D)
        v = qkv[:, 2 * C + hix * D:2 * C + (hix + 1) * D].reshape(Bt, T, D)

        # Per-batch-element attention: (Bt, T, T) scores only (no cross-batch waste).
        s = jnp.einsum('btd,bsd->bts', q, k, preferred_element_type=jnp.float32)
        s = jnp.where(causal, s, -1e30)
        m = jnp.max(s, axis=-1, keepdims=True)
        e = jnp.exp(s - m)
        p = e * pl.reciprocal(jnp.sum(e, axis=-1, keepdims=True), approx=True)
        # TODO(synk): attention dropout skipped (inference / eval mode)

        o = jnp.einsum('bts,bsd->btd', p, v, preferred_element_type=jnp.float32)
        head_outs.append(o.reshape(N, D))

    # Concatenate head outputs once, then a single full-K output projection.
    o_cat = jnp.concatenate(head_outs, axis=-1)                           # (N, C)
    sa = jnp.dot(o_cat, wproj_ref[...],
                 preferred_element_type=jnp.float32) + bproj_ref[...]
    # TODO(synk): post-projection dropout skipped (inference / eval mode)
    x1 = x + sa

    # ---- x = x + FeedForward(LayerNorm(x)) ----
    h2 = _layernorm(x1, ln2g_ref[...], ln2b_ref[...])
    f = jnp.dot(h2, w1_ref[...], preferred_element_type=jnp.float32) + b1_ref[...]
    f = jnp.maximum(f, 0.0)
    y = jnp.dot(f, w2_ref[...], preferred_element_type=jnp.float32) + b2_ref[...]
    # TODO(synk): FFN dropout skipped (inference / eval mode)

    out_ref[...] = (x1 + y).reshape(Bt, T, C).astype(out_ref.dtype)


def _prep_kernel_params(params):
    """Host-side weight prep: fuse Q/K/V into one (C, 3C) matrix, fold the scale."""
    (ln1g, ln1b, wq, wk, wv, wproj, bproj, ln2g, ln2b, w1, b1, w2, b2) = params
    C = wq.shape[0]
    scale = C ** (-0.5)                      # embedding-dim scale, as in Head.forward
    wqkv = jnp.concatenate([wq * scale, wk, wv], axis=1)   # (C, 3C)
    return [ln1g, ln1b, wqkv, wproj, bproj, ln2g, ln2b, w1, b1, w2, b2]


def transformer_block(x, params, *, batch_tile=None):
    """x: (B, T, C) float32; params: list from init_params (module layout)."""
    B, T, C = x.shape
    if batch_tile is None:
        # >= 2 grid steps whenever possible (keeps both v7x TensorCores busy),
        # up to 16 batch elements per step to amortize per-step overhead.
        Bt = max(1, min(B // 2, 16))
    else:
        Bt = batch_tile
    while B % Bt:                 # ensure the batch tile divides B
        Bt -= 1

    kparams = _prep_kernel_params(params)

    def full_spec(shape):
        n = len(shape)
        return pl.BlockSpec(shape, lambda g, _n=n: (0,) * _n)

    in_specs = [pl.BlockSpec((Bt, T, C), lambda g: (g, 0, 0))]
    in_specs += [full_spec(p.shape) for p in kparams]

    return pl.pallas_call(
        block_kernel,
        out_shape=jax.ShapeDtypeStruct((B, T, C), x.dtype),
        grid=(B // Bt,),
        in_specs=in_specs,
        out_specs=pl.BlockSpec((Bt, T, C), lambda g: (g, 0, 0)),
        compiler_params=pltpu.CompilerParams(
            dimension_semantics=("parallel",),
            vmem_limit_bytes=48 << 20),
    )(x, *kparams)


def init_params(key, n_emb, n_head):
    ks = jax.random.split(key, 9)
    s = 0.02
    ln1g = jnp.ones((1, n_emb), jnp.float32)
    ln1b = jnp.zeros((1, n_emb), jnp.float32)
    wq = s * jax.random.normal(ks[0], (n_emb, n_emb), jnp.float32)
    wk = s * jax.random.normal(ks[1], (n_emb, n_emb), jnp.float32)
    wv = s * jax.random.normal(ks[2], (n_emb, n_emb), jnp.float32)
    wproj = s * jax.random.normal(ks[3], (n_emb, n_emb), jnp.float32)
    bproj = s * jax.random.normal(ks[4], (1, n_emb), jnp.float32)
    ln2g = jnp.ones((1, n_emb), jnp.float32)
    ln2b = jnp.zeros((1, n_emb), jnp.float32)
    w1 = s * jax.random.normal(ks[5], (n_emb, 4 * n_emb), jnp.float32)
    b1 = s * jax.random.normal(ks[6], (1, 4 * n_emb), jnp.float32)
    w2 = s * jax.random.normal(ks[7], (4 * n_emb, n_emb), jnp.float32)
    b2 = s * jax.random.normal(ks[8], (1, n_emb), jnp.float32)
    return [ln1g, ln1b, wq, wk, wv, wproj, bproj, ln2g, ln2b, w1, b1, w2, b2]


def reference_block(x, params):
    """Pure f32 JAX reference matching the PyTorch Block.forward semantics."""
    (ln1g, ln1b, wq, wk, wv, wproj, bproj,
     ln2g, ln2b, w1, b1, w2, b2) = params
    B, T, C = x.shape

    h = _layernorm(x, ln1g, ln1b)
    q, k, v = h @ wq, h @ wk, h @ wv
    scale = C ** (-0.5)
    mask = jnp.tril(jnp.ones((T, T), bool))
    outs = []
    for hix in range(N_HEAD):
        sl = slice(hix * HEAD_SIZE, (hix + 1) * HEAD_SIZE)
        wei = jnp.einsum('btd,bsd->bts', q[..., sl], k[..., sl]) * scale
        wei = jnp.where(mask, wei, -jnp.inf)
        wei = jax.nn.softmax(wei, axis=-1)
        outs.append(jnp.einsum('bts,bsd->btd', wei, v[..., sl]))
    sa = jnp.concatenate(outs, axis=-1) @ wproj + bproj
    x = x + sa

    h2 = _layernorm(x, ln2g, ln2b)
    f = jnp.maximum(h2 @ w1 + b1, 0.0) @ w2 + b2
    return x + f


if __name__ == "__main__":
    key = jax.random.PRNGKey(0)
    kx, kp = jax.random.split(key)

    B, T = 2, 16
    x = jax.random.normal(kx, (B, T, N_EMB), jnp.float32)
    params = init_params(kp, N_EMB, N_HEAD)

    out = transformer_block(x, params)
    out = jax.block_until_ready(out)

    ref = reference_block(x, params)
    assert out.shape == (B, T, N_EMB)
    # f32 kernel vs f32 reference (approx reciprocal / MXU default precision slack).
    assert jnp.allclose(out, ref, atol=3e-2, rtol=3e-2), (
        float(jnp.max(jnp.abs(out - ref))))

    print("KERNEL_OK")
</pallas_src>

<mosaic_0001>
module attributes {stable_mosaic.version = 11 : i64} {
  func.func @block_kernel(%arg0: i32, %arg1: memref<1x16x384xf32, #tpu.memory_space<vmem>>, %arg2: memref<1x384xf32, #tpu.memory_space<vmem>>, %arg3: memref<1x384xf32, #tpu.memory_space<vmem>>, %arg4: memref<384x1152xf32, #tpu.memory_space<vmem>>, %arg5: memref<384x384xf32, #tpu.memory_space<vmem>>, %arg6: memref<1x384xf32, #tpu.memory_space<vmem>>, %arg7: memref<1x384xf32, #tpu.memory_space<vmem>>, %arg8: memref<1x384xf32, #tpu.memory_space<vmem>>, %arg9: memref<384x1536xf32, #tpu.memory_space<vmem>>, %arg10: memref<1x1536xf32, #tpu.memory_space<vmem>>, %arg11: memref<1536x384xf32, #tpu.memory_space<vmem>>, %arg12: memref<1x384xf32, #tpu.memory_space<vmem>>, %arg13: memref<1x16x384xf32, #tpu.memory_space<vmem>>) attributes {dimension_semantics = [#tpu.dimension_semantics<parallel>], iteration_bounds = array<i64: 2>, scalar_prefetch = 0 : i64, scratch_operands = 0 : i64, tpu.core_type = #tpu.core_type<tc>, window_params = [{transform_indices = @transform_0, window_bounds = array<i64: 1, 16, 384>}, {pipeline_mode = #tpu.pipeline_mode<synchronous>, transform_indices = @transform_1, window_bounds = array<i64: 1, 384>}, {pipeline_mode = #tpu.pipeline_mode<synchronous>, transform_indices = @transform_2, window_bounds = array<i64: 1, 384>}, {pipeline_mode = #tpu.pipeline_mode<synchronous>, transform_indices = @transform_3, window_bounds = array<i64: 384, 1152>}, {pipeline_mode = #tpu.pipeline_mode<synchronous>, transform_indices = @transform_4, window_bounds = array<i64: 384, 384>}, {pipeline_mode = #tpu.pipeline_mode<synchronous>, transform_indices = @transform_5, window_bounds = array<i64: 1, 384>}, {pipeline_mode = #tpu.pipeline_mode<synchronous>, transform_indices = @transform_6, window_bounds = array<i64: 1, 384>}, {pipeline_mode = #tpu.pipeline_mode<synchronous>, transform_indices = @transform_7, window_bounds = array<i64: 1, 384>}, {pipeline_mode = #tpu.pipeline_mode<synchronous>, transform_indices = @transform_8, window_bounds = array<i64: 384, 1536>}, {pipeline_mode = #tpu.pipeline_mode<synchronous>, transform_indices = @transform_9, window_bounds = array<i64: 1, 1536>}, {pipeline_mode = #tpu.pipeline_mode<synchronous>, transform_indices = @transform_10, window_bounds = array<i64: 1536, 384>}, {pipeline_mode = #tpu.pipeline_mode<synchronous>, transform_indices = @transform_11, window_bounds = array<i64: 1, 384>}, {transform_indices = @transform_12, window_bounds = array<i64: 1, 16, 384>}]} {
    %c0 = arith.constant 0 : index
    %c0_0 = arith.constant 0 : index
    %c0_1 = arith.constant 0 : index
    %0 = vector.load %arg1[%c0, %c0_0, %c0_1] : memref<1x16x384xf32, #tpu.memory_space<vmem>>, vector<1x16x384xf32>
    %1 = vector.shape_cast %0 : vector<1x16x384xf32> to vector<16x384xf32>
    %c0_2 = arith.constant 0 : index
    %c0_3 = arith.constant 0 : index
    %2 = vector.load %arg2[%c0_2, %c0_3] : memref<1x384xf32, #tpu.memory_space<vmem>>, vector<1x384xf32>
    %c0_4 = arith.constant 0 : index
    %c0_5 = arith.constant 0 : index
    %3 = vector.load %arg3[%c0_4, %c0_5] : memref<1x384xf32, #tpu.memory_space<vmem>>, vector<1x384xf32>
    %cst = arith.constant dense<0.000000e+00> : vector<16xf32>
    %4 = vector.multi_reduction <add>, %1, %cst [1] : vector<16x384xf32> to vector<16xf32>
    %5 = vector.shape_cast %4 : vector<16xf32> to vector<16x1xf32>
    %cst_6 = arith.constant 3.840000e+02 : f32
    %6 = vector.broadcast %cst_6 : f32 to vector<16x1xf32>
    %7 = arith.divf %5, %6 : vector<16x1xf32>
    %8 = vector.broadcast %7 : vector<16x1xf32> to vector<16x384xf32>
    %9 = arith.subf %1, %8 : vector<16x384xf32>
    %10 = arith.mulf %9, %9 : vector<16x384xf32>
    %cst_7 = arith.constant dense<0.000000e+00> : vector<16xf32>
    %11 = vector.multi_reduction <add>, %10, %cst_7 [1] : vector<16x384xf32> to vector<16xf32>
    %12 = vector.shape_cast %11 : vector<16xf32> to vector<16x1xf32>
    %cst_8 = arith.constant 3.840000e+02 : f32
    %13 = vector.broadcast %cst_8 : f32 to vector<16x1xf32>
    %14 = arith.divf %12, %13 : vector<16x1xf32>
    %cst_9 = arith.constant 9.99999974E-6 : f32
    %15 = vector.broadcast %cst_9 : f32 to vector<16x1xf32>
    %16 = arith.addf %14, %15 : vector<16x1xf32>
    %17 = math.rsqrt %16 : vector<16x1xf32>
    %18 = vector.broadcast %17 : vector<16x1xf32> to vector<16x384xf32>
    %19 = arith.mulf %9, %18 : vector<16x384xf32>
    %20 = vector.broadcast %2 : vector<1x384xf32> to vector<16x384xf32>
    %21 = arith.mulf %19, %20 : vector<16x384xf32>
    %22 = vector.broadcast %3 : vector<1x384xf32> to vector<16x384xf32>
    %23 = arith.addf %21, %22 : vector<16x384xf32>
    %c0_10 = arith.constant 0 : index
    %c0_11 = arith.constant 0 : index
    %24 = vector.load %arg4[%c0_10, %c0_11] : memref<384x1152xf32, #tpu.memory_space<vmem>>, vector<384x1152xf32>
    %cst_12 = arith.constant dense<0.000000e+00> : vector<16x1152xf32>
    %25 = tpu.matmul %23, %24, %cst_12 {dimension_numbers = #tpu.dot_dimension_numbers<[1], [0], [0], [1], [0, 0, 1, 1], [], []>} : vector<16x384xf32>, vector<384x1152xf32>, vector<16x1152xf32> -> vector<16x1152xf32>
    %26 = tpu.iota {dimensions = array<i32: 0>} : vector<16x16xi32>
    %27 = tpu.iota {dimensions = array<i32: 1>} : vector<16x16xi32>
    %28 = arith.cmpi sge, %26, %27 : vector<16x16xi32>
    %29 = vector.extract_strided_slice %25 {offsets = [0, 0], sizes = [16, 64], strides = [1, 1]} : vector<16x1152xf32> to vector<16x64xf32>
    %30 = vector.shape_cast %29 : vector<16x64xf32> to vector<1x16x64xf32>
    %31 = vector.extract_strided_slice %25 {offsets = [0, 384], sizes = [16, 64], strides = [1, 1]} : vector<16x1152xf32> to vector<16x64xf32>
    %32 = vector.shape_cast %31 : vector<16x64xf32> to vector<1x16x64xf32>
    %33 = vector.extract_strided_slice %25 {offsets = [0, 768], sizes = [16, 64], strides = [1, 1]} : vector<16x1152xf32> to vector<16x64xf32>
    %34 = vector.shape_cast %33 : vector<16x64xf32> to vector<1x16x64xf32>
    "tpu.trace_start"() <{level = 10 : i32, message = "btd,bsd->bts"}> : () -> ()
    %cst_13 = arith.constant dense<0.000000e+00> : vector<1x16x16xf32>
    %35 = tpu.matmul %30, %32, %cst_13 {dimension_numbers = #tpu.dot_dimension_numbers<[2], [2], [1], [1], [0, 0, 0, 1, 1, 1], [0], [0]>} : vector<1x16x64xf32>, vector<1x16x64xf32>, vector<1x16x16xf32> -> vector<1x16x16xf32>
    %cst_14 = arith.constant -1.000000e+30 : f32
    "tpu.trace_stop"() : () -> ()
    %36 = vector.shape_cast %28 : vector<16x16xi1> to vector<1x16x16xi1>
    %37 = vector.broadcast %cst_14 : f32 to vector<1x16x16xf32>
    %38 = arith.select %36, %35, %37 : vector<1x16x16xi1>, vector<1x16x16xf32>
    %cst_15 = arith.constant dense<0xFF800000> : vector<1x16xf32>
    %39 = vector.multi_reduction <maximumf>, %38, %cst_15 [2] : vector<1x16x16xf32> to vector<1x16xf32>
    %40 = vector.shape_cast %39 : vector<1x16xf32> to vector<1x16x1xf32>
    %41 = vector.broadcast %40 : vector<1x16x1xf32> to vector<1x16x16xf32>
    %42 = arith.subf %38, %41 : vector<1x16x16xf32>
    %43 = math.exp %42 : vector<1x16x16xf32>
    %cst_16 = arith.constant dense<0.000000e+00> : vector<1x16xf32>
    %44 = vector.multi_reduction <add>, %43, %cst_16 [2] : vector<1x16x16xf32> to vector<1x16xf32>
    %45 = vector.shape_cast %44 : vector<1x16xf32> to vector<1x16x1xf32>
    %46 = tpu.reciprocal %45 {approx = true} : vector<1x16x1xf32> -> vector<1x16x1xf32>
    %47 = vector.broadcast %46 : vector<1x16x1xf32> to vector<1x16x16xf32>
    %48 = arith.mulf %43, %47 : vector<1x16x16xf32>
    "tpu.trace_start"() <{level = 10 : i32, message = "bts,bsd->btd"}> : () -> ()
    %cst_17 = arith.constant dense<0.000000e+00> : vector<1x16x64xf32>
    %49 = tpu.matmul %48, %34, %cst_17 {dimension_numbers = #tpu.dot_dimension_numbers<[2], [1], [1], [2], [0, 0, 0, 1, 1, 2], [0], [0]>} : vector<1x16x16xf32>, vector<1x16x64xf32>, vector<1x16x64xf32> -> vector<1x16x64xf32>
    "tpu.trace_stop"() : () -> ()
    %50 = vector.shape_cast %49 : vector<1x16x64xf32> to vector<16x64xf32>
    %51 = vector.extract_strided_slice %25 {offsets = [0, 64], sizes = [16, 64], strides = [1, 1]} : vector<16x1152xf32> to vector<16x64xf32>
    %52 = vector.shape_cast %51 : vector<16x64xf32> to vector<1x16x64xf32>
    %53 = vector.extract_strided_slice %25 {offsets = [0, 448], sizes = [16, 64], strides = [1, 1]} : vector<16x1152xf32> to vector<16x64xf32>
    %54 = vector.shape_cast %53 : vector<16x64xf32> to vector<1x16x64xf32>
    %55 = vector.extract_strided_slice %25 {offsets = [0, 832], sizes = [16, 64], strides = [1, 1]} : vector<16x1152xf32> to vector<16x64xf32>
    %56 = vector.shape_cast %55 : vector<16x64xf32> to vector<1x16x64xf32>
    "tpu.trace_start"() <{level = 10 : i32, message = "btd,bsd->bts"}> : () -> ()
    %cst_18 = arith.constant dense<0.000000e+00> : vector<1x16x16xf32>
    %57 = tpu.matmul %52, %54, %cst_18 {dimension_numbers = #tpu.dot_dimension_numbers<[2], [2], [1], [1], [0, 0, 0, 1, 1, 1], [0], [0]>} : vector<1x16x64xf32>, vector<1x16x64xf32>, vector<1x16x16xf32> -> vector<1x16x16xf32>
    %cst_19 = arith.constant -1.000000e+30 : f32
    "tpu.trace_stop"() : () -> ()
    %58 = vector.shape_cast %28 : vector<16x16xi1> to vector<1x16x16xi1>
    %59 = vector.broadcast %cst_19 : f32 to vector<1x16x16xf32>
    %60 = arith.select %58, %57, %59 : vector<1x16x16xi1>, vector<1x16x16xf32>
    %cst_20 = arith.constant dense<0xFF800000> : vector<1x16xf32>
    %61 = vector.multi_reduction <maximumf>, %60, %cst_20 [2] : vector<1x16x16xf32> to vector<1x16xf32>
    %62 = vector.shape_cast %61 : vector<1x16xf32> to vector<1x16x1xf32>
    %63 = vector.broadcast %62 : vector<1x16x1xf32> to vector<1x16x16xf32>
    %64 = arith.subf %60, %63 : vector<1x16x16xf32>
    %65 = math.exp %64 : vector<1x16x16xf32>
    %cst_21 = arith.constant dense<0.000000e+00> : vector<1x16xf32>
    %66 = vector.multi_reduction <add>, %65, %cst_21 [2] : vector<1x16x16xf32> to vector<1x16xf32>
    %67 = vector.shape_cast %66 : vector<1x16xf32> to vector<1x16x1xf32>
    %68 = tpu.reciprocal %67 {approx = true} : vector<1x16x1xf32> -> vector<1x16x1xf32>
    %69 = vector.broadcast %68 : vector<1x16x1xf32> to vector<1x16x16xf32>
    %70 = arith.mulf %65, %69 : vector<1x16x16xf32>
    "tpu.trace_start"() <{level = 10 : i32, message = "bts,bsd->btd"}> : () -> ()
    %cst_22 = arith.constant dense<0.000000e+00> : vector<1x16x64xf32>
    %71 = tpu.matmul %70, %56, %cst_22 {dimension_numbers = #tpu.dot_dimension_numbers<[2], [1], [1], [2], [0, 0, 0, 1, 1, 2], [0], [0]>} : vector<1x16x16xf32>, vector<1x16x64xf32>, vector<1x16x64xf32> -> vector<1x16x64xf32>
    "tpu.trace_stop"() : () -> ()
    %72 = vector.shape_cast %71 : vector<1x16x64xf32> to vector<16x64xf32>
    %73 = vector.extract_strided_slice %25 {offsets = [0, 128], sizes = [16, 64], strides = [1, 1]} : vector<16x1152xf32> to vector<16x64xf32>
    %74 = vector.shape_cast %73 : vector<16x64xf32> to vector<1x16x64xf32>
    %75 = vector.extract_strided_slice %25 {offsets = [0, 512], sizes = [16, 64], strides = [1, 1]} : vector<16x1152xf32> to vector<16x64xf32>
    %76 = vector.shape_cast %75 : vector<16x64xf32> to vector<1x16x64xf32>
    %77 = vector.extract_strided_slice %25 {offsets = [0, 896], sizes = [16, 64], strides = [1, 1]} : vector<16x1152xf32> to vector<16x64xf32>
    %78 = vector.shape_cast %77 : vector<16x64xf32> to vector<1x16x64xf32>
    "tpu.trace_start"() <{level = 10 : i32, message = "btd,bsd->bts"}> : () -> ()
    %cst_23 = arith.constant dense<0.000000e+00> : vector<1x16x16xf32>
    %79 = tpu.matmul %74, %76, %cst_23 {dimension_numbers = #tpu.dot_dimension_numbers<[2], [2], [1], [1], [0, 0, 0, 1, 1, 1], [0], [0]>} : vector<1x16x64xf32>, vector<1x16x64xf32>, vector<1x16x16xf32> -> vector<1x16x16xf32>
    %cst_24 = arith.constant -1.000000e+30 : f32
    "tpu.trace_stop"() : () -> ()
    %80 = vector.shape_cast %28 : vector<16x16xi1> to vector<1x16x16xi1>
    %81 = vector.broadcast %cst_24 : f32 to vector<1x16x16xf32>
    %82 = arith.select %80, %79, %81 : vector<1x16x16xi1>, vector<1x16x16xf32>
    %cst_25 = arith.constant dense<0xFF800000> : vector<1x16xf32>
    %83 = vector.multi_reduction <maximumf>, %82, %cst_25 [2] : vector<1x16x16xf32> to vector<1x16xf32>
    %84 = vector.shape_cast %83 : vector<1x16xf32> to vector<1x16x1xf32>
    %85 = vector.broadcast %84 : vector<1x16x1xf32> to vector<1x16x16xf32>
    %86 = arith.subf %82, %85 : vector<1x16x16xf32>
    %87 = math.exp %86 : vector<1x16x16xf32>
    %cst_26 = arith.constant dense<0.000000e+00> : vector<1x16xf32>
    %88 = vector.multi_reduction <add>, %87, %cst_26 [2] : vector<1x16x16xf32> to vector<1x16xf32>
    %89 = vector.shape_cast %88 : vector<1x16xf32> to vector<1x16x1xf32>
    %90 = tpu.reciprocal %89 {approx = true} : vector<1x16x1xf32> -> vector<1x16x1xf32>
    %91 = vector.broadcast %90 : vector<1x16x1xf32> to vector<1x16x16xf32>
    %92 = arith.mulf %87, %91 : vector<1x16x16xf32>
    "tpu.trace_start"() <{level = 10 : i32, message = "bts,bsd->btd"}> : () -> ()
    %cst_27 = arith.constant dense<0.000000e+00> : vector<1x16x64xf32>
    %93 = tpu.matmul %92, %78, %cst_27 {dimension_numbers = #tpu.dot_dimension_numbers<[2], [1], [1], [2], [0, 0, 0, 1, 1, 2], [0], [0]>} : vector<1x16x16xf32>, vector<1x16x64xf32>, vector<1x16x64xf32> -> vector<1x16x64xf32>
    "tpu.trace_stop"() : () -> ()
    %94 = vector.shape_cast %93 : vector<1x16x64xf32> to vector<16x64xf32>
    %95 = vector.extract_strided_slice %25 {offsets = [0, 192], sizes = [16, 64], strides = [1, 1]} : vector<16x1152xf32> to vector<16x64xf32>
    %96 = vector.shape_cast %95 : vector<16x64xf32> to vector<1x16x64xf32>
    %97 = vector.extract_strided_slice %25 {offsets = [0, 576], sizes = [16, 64], strides = [1, 1]} : vector<16x1152xf32> to vector<16x64xf32>
    %98 = vector.shape_cast %97 : vector<16x64xf32> to vector<1x16x64xf32>
    %99 = vector.extract_strided_slice %25 {offsets = [0, 960], sizes = [16, 64], strides = [1, 1]} : vector<16x1152xf32> to vector<16x64xf32>
    %100 = vector.shape_cast %99 : vector<16x64xf32> to vector<1x16x64xf32>
    "tpu.trace_start"() <{level = 10 : i32, message = "btd,bsd->bts"}> : () -> ()
    %cst_28 = arith.constant dense<0.000000e+00> : vector<1x16x16xf32>
    %101 = tpu.matmul %96, %98, %cst_28 {dimension_numbers = #tpu.dot_dimension_numbers<[2], [2], [1], [1], [0, 0, 0, 1, 1, 1], [0], [0]>} : vector<1x16x64xf32>, vector<1x16x64xf32>, vector<1x16x16xf32> -> vector<1x16x16xf32>
    %cst_29 = arith.constant -1.000000e+30 : f32
    "tpu.trace_stop"() : () -> ()
    %102 = vector.shape_cast %28 : vector<16x16xi1> to vector<1x16x16xi1>
    %103 = vector.broadcast %cst_29 : f32 to vector<1x16x16xf32>
    %104 = arith.select %102, %101, %103 : vector<1x16x16xi1>, vector<1x16x16xf32>
    %cst_30 = arith.constant dense<0xFF800000> : vector<1x16xf32>
    %105 = vector.multi_reduction <maximumf>, %104, %cst_30 [2] : vector<1x16x16xf32> to vector<1x16xf32>
    %106 = vector.shape_cast %105 : vector<1x16xf32> to vector<1x16x1xf32>
    %107 = vector.broadcast %106 : vector<1x16x1xf32> to vector<1x16x16xf32>
    %108 = arith.subf %104, %107 : vector<1x16x16xf32>
    %109 = math.exp %108 : vector<1x16x16xf32>
    %cst_31 = arith.constant dense<0.000000e+00> : vector<1x16xf32>
    %110 = vector.multi_reduction <add>, %109, %cst_31 [2] : vector<1x16x16xf32> to vector<1x16xf32>
    %111 = vector.shape_cast %110 : vector<1x16xf32> to vector<1x16x1xf32>
    %112 = tpu.reciprocal %111 {approx = true} : vector<1x16x1xf32> -> vector<1x16x1xf32>
    %113 = vector.broadcast %112 : vector<1x16x1xf32> to vector<1x16x16xf32>
    %114 = arith.mulf %109, %113 : vector<1x16x16xf32>
    "tpu.trace_start"() <{level = 10 : i32, message = "bts,bsd->btd"}> : () -> ()
    %cst_32 = arith.constant dense<0.000000e+00> : vector<1x16x64xf32>
    %115 = tpu.matmul %114, %100, %cst_32 {dimension_numbers = #tpu.dot_dimension_numbers<[2], [1], [1], [2], [0, 0, 0, 1, 1, 2], [0], [0]>} : vector<1x16x16xf32>, vector<1x16x64xf32>, vector<1x16x64xf32> -> vector<1x16x64xf32>
    "tpu.trace_stop"() : () -> ()
    %116 = vector.shape_cast %115 : vector<1x16x64xf32> to vector<16x64xf32>
    %117 = vector.extract_strided_slice %25 {offsets = [0, 256], sizes = [16, 64], strides = [1, 1]} : vector<16x1152xf32> to vector<16x64xf32>
    %118 = vector.shape_cast %117 : vector<16x64xf32> to vector<1x16x64xf32>
    %119 = vector.extract_strided_slice %25 {offsets = [0, 640], sizes = [16, 64], strides = [1, 1]} : vector<16x1152xf32> to vector<16x64xf32>
    %120 = vector.shape_cast %119 : vector<16x64xf32> to vector<1x16x64xf32>
    %121 = vector.extract_strided_slice %25 {offsets = [0, 1024], sizes = [16, 64], strides = [1, 1]} : vector<16x1152xf32> to vector<16x64xf32>
    %122 = vector.shape_cast %121 : vector<16x64xf32> to vector<1x16x64xf32>
    "tpu.trace_start"() <{level = 10 : i32, message = "btd,bsd->bts"}> : () -> ()
    %cst_33 = arith.constant dense<0.000000e+00> : vector<1x16x16xf32>
    %123 = tpu.matmul %118, %120, %cst_33 {dimension_numbers = #tpu.dot_dimension_numbers<[2], [2], [1], [1], [0, 0, 0, 1, 1, 1], [0], [0]>} : vector<1x16x64xf32>, vector<1x16x64xf32>, vector<1x16x16xf32> -> vector<1x16x16xf32>
    %cst_34 = arith.constant -1.000000e+30 : f32
    "tpu.trace_stop"() : () -> ()
    %124 = vector.shape_cast %28 : vector<16x16xi1> to vector<1x16x16xi1>
    %125 = vector.broadcast %cst_34 : f32 to vector<1x16x16xf32>
    %126 = arith.select %124, %123, %125 : vector<1x16x16xi1>, vector<1x16x16xf32>
    %cst_35 = arith.constant dense<0xFF800000> : vector<1x16xf32>
    %127 = vector.multi_reduction <maximumf>, %126, %cst_35 [2] : vector<1x16x16xf32> to vector<1x16xf32>
    %128 = vector.shape_cast %127 : vector<1x16xf32> to vector<1x16x1xf32>
    %129 = vector.broadcast %128 : vector<1x16x1xf32> to vector<1x16x16xf32>
    %130 = arith.subf %126, %129 : vector<1x16x16xf32>
    %131 = math.exp %130 : vector<1x16x16xf32>
    %cst_36 = arith.constant dense<0.000000e+00> : vector<1x16xf32>
    %132 = vector.multi_reduction <add>, %131, %cst_36 [2] : vector<1x16x16xf32> to vector<1x16xf32>
    %133 = vector.shape_cast %132 : vector<1x16xf32> to vector<1x16x1xf32>
    %134 = tpu.reciprocal %133 {approx = true} : vector<1x16x1xf32> -> vector<1x16x1xf32>
    %135 = vector.broadcast %134 : vector<1x16x1xf32> to vector<1x16x16xf32>
    %136 = arith.mulf %131, %135 : vector<1x16x16xf32>
    "tpu.trace_start"() <{level = 10 : i32, message = "bts,bsd->btd"}> : () -> ()
    %cst_37 = arith.constant dense<0.000000e+00> : vector<1x16x64xf32>
    %137 = tpu.matmul %136, %122, %cst_37 {dimension_numbers = #tpu.dot_dimension_numbers<[2], [1], [1], [2], [0, 0, 0, 1, 1, 2], [0], [0]>} : vector<1x16x16xf32>, vector<1x16x64xf32>, vector<1x16x64xf32> -> vector<1x16x64xf32>
    "tpu.trace_stop"() : () -> ()
    %138 = vector.shape_cast %137 : vector<1x16x64xf32> to vector<16x64xf32>
    %139 = vector.extract_strided_slice %25 {offsets = [0, 320], sizes = [16, 64], strides = [1, 1]} : vector<16x1152xf32> to vector<16x64xf32>
    %140 = vector.shape_cast %139 : vector<16x64xf32> to vector<1x16x64xf32>
    %141 = vector.extract_strided_slice %25 {offsets = [0, 704], sizes = [16, 64], strides = [1, 1]} : vector<16x1152xf32> to vector<16x64xf32>
    %142 = vector.shape_cast %141 : vector<16x64xf32> to vector<1x16x64xf32>
    %143 = vector.extract_strided_slice %25 {offsets = [0, 1088], sizes = [16, 64], strides = [1, 1]} : vector<16x1152xf32> to vector<16x64xf32>
    %144 = vector.shape_cast %143 : vector<16x64xf32> to vector<1x16x64xf32>
    "tpu.trace_start"() <{level = 10 : i32, message = "btd,bsd->bts"}> : () -> ()
    %cst_38 = arith.constant dense<0.000000e+00> : vector<1x16x16xf32>
    %145 = tpu.matmul %140, %142, %cst_38 {dimension_numbers = #tpu.dot_dimension_numbers<[2], [2], [1], [1], [0, 0, 0, 1, 1, 1], [0], [0]>} : vector<1x16x64xf32>, vector<1x16x64xf32>, vector<1x16x16xf32> -> vector<1x16x16xf32>
    %cst_39 = arith.constant -1.000000e+30 : f32
    "tpu.trace_stop"() : () -> ()
    %146 = vector.shape_cast %28 : vector<16x16xi1> to vector<1x16x16xi1>
    %147 = vector.broadcast %cst_39 : f32 to vector<1x16x16xf32>
    %148 = arith.select %146, %145, %147 : vector<1x16x16xi1>, vector<1x16x16xf32>
    %cst_40 = arith.constant dense<0xFF800000> : vector<1x16xf32>
    %149 = vector.multi_reduction <maximumf>, %148, %cst_40 [2] : vector<1x16x16xf32> to vector<1x16xf32>
    %150 = vector.shape_cast %149 : vector<1x16xf32> to vector<1x16x1xf32>
    %151 = vector.broadcast %150 : vector<1x16x1xf32> to vector<1x16x16xf32>
    %152 = arith.subf %148, %151 : vector<1x16x16xf32>
    %153 = math.exp %152 : vector<1x16x16xf32>
    %cst_41 = arith.constant dense<0.000000e+00> : vector<1x16xf32>
    %154 = vector.multi_reduction <add>, %153, %cst_41 [2] : vector<1x16x16xf32> to vector<1x16xf32>
    %155 = vector.shape_cast %154 : vector<1x16xf32> to vector<1x16x1xf32>
    %156 = tpu.reciprocal %155 {approx = true} : vector<1x16x1xf32> -> vector<1x16x1xf32>
    %157 = vector.broadcast %156 : vector<1x16x1xf32> to vector<1x16x16xf32>
    %158 = arith.mulf %153, %157 : vector<1x16x16xf32>
    "tpu.trace_start"() <{level = 10 : i32, message = "bts,bsd->btd"}> : () -> ()
    %cst_42 = arith.constant dense<0.000000e+00> : vector<1x16x64xf32>
    %159 = tpu.matmul %158, %144, %cst_42 {dimension_numbers = #tpu.dot_dimension_numbers<[2], [1], [1], [2], [0, 0, 0, 1, 1, 2], [0], [0]>} : vector<1x16x16xf32>, vector<1x16x64xf32>, vector<1x16x64xf32> -> vector<1x16x64xf32>
    "tpu.trace_stop"() : () -> ()
    %160 = vector.shape_cast %159 : vector<1x16x64xf32> to vector<16x64xf32>
    %161 = tpu.concatenate %50, %72, %94, %116, %138, %160 in 1 : vector<16x64xf32>, vector<16x64xf32>, vector<16x64xf32>, vector<16x64xf32>, vector<16x64xf32>, vector<16x64xf32> -> vector<16x384xf32>
    %c0_43 = arith.constant 0 : index
    %c0_44 = arith.constant 0 : index
    %162 = vector.load %arg5[%c0_43, %c0_44] : memref<384x384xf32, #tpu.memory_space<vmem>>, vector<384x384xf32>
    %cst_45 = arith.constant dense<0.000000e+00> : vector<16x384xf32>
    %163 = tpu.matmul %161, %162, %cst_45 {dimension_numbers = #tpu.dot_dimension_numbers<[1], [0], [0], [1], [0, 0, 1, 1], [], []>} : vector<16x384xf32>, vector<384x384xf32>, vector<16x384xf32> -> vector<16x384xf32>
    %c0_46 = arith.constant 0 : index
    %c0_47 = arith.constant 0 : index
    %164 = vector.load %arg6[%c0_46, %c0_47] : memref<1x384xf32, #tpu.memory_space<vmem>>, vector<1x384xf32>
    %165 = vector.broadcast %164 : vector<1x384xf32> to vector<16x384xf32>
    %166 = arith.addf %163, %165 : vector<16x384xf32>
    %167 = arith.addf %1, %166 : vector<16x384xf32>
    %c0_48 = arith.constant 0 : index
    %c0_49 = arith.constant 0 : index
    %168 = vector.load %arg7[%c0_48, %c0_49] : memref<1x384xf32, #tpu.memory_space<vmem>>, vector<1x384xf32>
    %c0_50 = arith.constant 0 : index
    %c0_51 = arith.constant 0 : index
    %169 = vector.load %arg8[%c0_50, %c0_51] : memref<1x384xf32, #tpu.memory_space<vmem>>, vector<1x384xf32>
    %cst_52 = arith.constant dense<0.000000e+00> : vector<16xf32>
    %170 = vector.multi_reduction <add>, %167, %cst_52 [1] : vector<16x384xf32> to vector<16xf32>
    %171 = vector.shape_cast %170 : vector<16xf32> to vector<16x1xf32>
    %cst_53 = arith.constant 3.840000e+02 : f32
    %172 = vector.broadcast %cst_53 : f32 to vector<16x1xf32>
    %173 = arith.divf %171, %172 : vector<16x1xf32>
    %174 = vector.broadcast %173 : vector<16x1xf32> to vector<16x384xf32>
    %175 = arith.subf %167, %174 : vector<16x384xf32>
    %176 = arith.mulf %175, %175 : vector<16x384xf32>
    %cst_54 = arith.constant dense<0.000000e+00> : vector<16xf32>
    %177 = vector.multi_reduction <add>, %176, %cst_54 [1] : vector<16x384xf32> to vector<16xf32>
    %178 = vector.shape_cast %177 : vector<16xf32> to vector<16x1xf32>
    %cst_55 = arith.constant 3.840000e+02 : f32
    %179 = vector.broadcast %cst_55 : f32 to vector<16x1xf32>
    %180 = arith.divf %178, %179 : vector<16x1xf32>
    %cst_56 = arith.constant 9.99999974E-6 : f32
    %181 = vector.broadcast %cst_56 : f32 to vector<16x1xf32>
    %182 = arith.addf %180, %181 : vector<16x1xf32>
    %183 = math.rsqrt %182 : vector<16x1xf32>
    %184 = vector.broadcast %183 : vector<16x1xf32> to vector<16x384xf32>
    %185 = arith.mulf %175, %184 : vector<16x384xf32>
    %186 = vector.broadcast %168 : vector<1x384xf32> to vector<16x384xf32>
    %187 = arith.mulf %185, %186 : vector<16x384xf32>
    %188 = vector.broadcast %169 : vector<1x384xf32> to vector<16x384xf32>
    %189 = arith.addf %187, %188 : vector<16x384xf32>
    %c0_57 = arith.constant 0 : index
    %c0_58 = arith.constant 0 : index
    %190 = vector.load %arg9[%c0_57, %c0_58] : memref<384x1536xf32, #tpu.memory_space<vmem>>, vector<384x1536xf32>
    %cst_59 = arith.constant dense<0.000000e+00> : vector<16x1536xf32>
    %191 = tpu.matmul %189, %190, %cst_59 {dimension_numbers = #tpu.dot_dimension_numbers<[1], [0], [0], [1], [0, 0, 1, 1], [], []>} : vector<16x384xf32>, vector<384x1536xf32>, vector<16x1536xf32> -> vector<16x1536xf32>
    %c0_60 = arith.constant 0 : index
    %c0_61 = arith.constant 0 : index
    %192 = vector.load %arg10[%c0_60, %c0_61] : memref<1x1536xf32, #tpu.memory_space<vmem>>, vector<1x1536xf32>
    %193 = vector.broadcast %192 : vector<1x1536xf32> to vector<16x1536xf32>
    %194 = arith.addf %191, %193 : vector<16x1536xf32>
    %cst_62 = arith.constant 0.000000e+00 : f32
    %195 = vector.broadcast %cst_62 : f32 to vector<16x1536xf32>
    %196 = arith.maximumf %194, %195 : vector<16x1536xf32>
    %c0_63 = arith.constant 0 : index
    %c0_64 = arith.constant 0 : index
    %197 = vector.load %arg11[%c0_63, %c0_64] : memref<1536x384xf32, #tpu.memory_space<vmem>>, vector<1536x384xf32>
    %cst_65 = arith.constant dense<0.000000e+00> : vector<16x384xf32>
    %198 = tpu.matmul %196, %197, %cst_65 {dimension_numbers = #tpu.dot_dimension_numbers<[1], [0], [0], [1], [0, 0, 1, 1], [], []>} : vector<16x1536xf32>, vector<1536x384xf32>, vector<16x384xf32> -> vector<16x384xf32>
    %c0_66 = arith.constant 0 : index
    %c0_67 = arith.constant 0 : index
    %199 = vector.load %arg12[%c0_66, %c0_67] : memref<1x384xf32, #tpu.memory_space<vmem>>, vector<1x384xf32>
    %200 = vector.broadcast %199 : vector<1x384xf32> to vector<16x384xf32>
    %201 = arith.addf %198, %200 : vector<16x384xf32>
    %202 = arith.addf %167, %201 : vector<16x384xf32>
    %203 = vector.shape_cast %202 : vector<16x384xf32> to vector<1x16x384xf32>
    %c0_68 = arith.constant 0 : index
    %c0_69 = arith.constant 0 : index
    %c0_70 = arith.constant 0 : index
    %204 = vector.load %arg13[%c0_68, %c0_69, %c0_70] : memref<1x16x384xf32, #tpu.memory_space<vmem>>, vector<1x16x384xf32>
    tpu.vector_store %arg13[%c0_68, %c0_69, %c0_70], %203 {strides = array<i32>} : memref<1x16x384xf32, #tpu.memory_space<vmem>>, vector<1x16x384xf32>,
    return
  }
  func.func @transform_0(%arg0: i32) -> (i32, i32, i32) {
    %c0_i32 = arith.constant 0 : i32
    %c0_i32_0 = arith.constant 0 : i32
    %c0_i32_1 = arith.constant 0 : i32
    return %arg0, %c0_i32, %c0_i32_0 : i32, i32, i32
  }
  func.func @transform_1(%arg0: i32) -> (i32, i32) {
    %c0_i32 = arith.constant 0 : i32
    %c0_i32_0 = arith.constant 0 : i32
    %c0_i32_1 = arith.constant 0 : i32
    return %c0_i32, %c0_i32_0 : i32, i32
  }
  func.func @transform_2(%arg0: i32) -> (i32, i32) {
    %c0_i32 = arith.constant 0 : i32
    %c0_i32_0 = arith.constant 0 : i32
    %c0_i32_1 = arith.constant 0 : i32
    return %c0_i32, %c0_i32_0 : i32, i32
  }
  func.func @transform_3(%arg0: i32) -> (i32, i32) {
    %c0_i32 = arith.constant 0 : i32
    %c0_i32_0 = arith.constant 0 : i32
    %c0_i32_1 = arith.constant 0 : i32
    return %c0_i32, %c0_i32_0 : i32, i32
  }
  func.func @transform_4(%arg0: i32) -> (i32, i32) {
    %c0_i32 = arith.constant 0 : i32
    %c0_i32_0 = arith.constant 0 : i32
    %c0_i32_1 = arith.constant 0 : i32
    return %c0_i32, %c0_i32_0 : i32, i32
  }
  func.func @transform_5(%arg0: i32) -> (i32, i32) {
    %c0_i32 = arith.constant 0 : i32
    %c0_i32_0 = arith.constant 0 : i32
    %c0_i32_1 = arith.constant 0 : i32
    return %c0_i32, %c0_i32_0 : i32, i32
  }
  func.func @transform_6(%arg0: i32) -> (i32, i32) {
    %c0_i32 = arith.constant 0 : i32
    %c0_i32_0 = arith.constant 0 : i32
    %c0_i32_1 = arith.constant 0 : i32
    return %c0_i32, %c0_i32_0 : i32, i32
  }
  func.func @transform_7(%arg0: i32) -> (i32, i32) {
    %c0_i32 = arith.constant 0 : i32
    %c0_i32_0 = arith.constant 0 : i32
    %c0_i32_1 = arith.constant 0 : i32
    return %c0_i32, %c0_i32_0 : i32, i32
  }
  func.func @transform_8(%arg0: i32) -> (i32, i32) {
    %c0_i32 = arith.constant 0 : i32
    %c0_i32_0 = arith.constant 0 : i32
    %c0_i32_1 = arith.constant 0 : i32
    return %c0_i32, %c0_i32_0 : i32, i32
  }
  func.func @transform_9(%arg0: i32) -> (i32, i32) {
    %c0_i32 = arith.constant 0 : i32
    %c0_i32_0 = arith.constant 0 : i32
    %c0_i32_1 = arith.constant 0 : i32
    return %c0_i32, %c0_i32_0 : i32, i32
  }
  func.func @transform_10(%arg0: i32) -> (i32, i32) {
    %c0_i32 = arith.constant 0 : i32
    %c0_i32_0 = arith.constant 0 : i32
    %c0_i32_1 = arith.constant 0 : i32
    return %c0_i32, %c0_i32_0 : i32, i32
  }
  func.func @transform_11(%arg0: i32) -> (i32, i32) {
    %c0_i32 = arith.constant 0 : i32
    %c0_i32_0 = arith.constant 0 : i32
    %c0_i32_1 = arith.constant 0 : i32
    return %c0_i32, %c0_i32_0 : i32, i32
  }
  func.func @transform_12(%arg0: i32) -> (i32, i32, i32) {
    %c0_i32 = arith.constant 0 : i32
    %c0_i32_0 = arith.constant 0 : i32
    %c0_i32_1 = arith.constant 0 : i32
    return %arg0, %c0_i32, %c0_i32_0 : i32, i32, i32
  }
}

</mosaic_0001>

<llo_original>
// kernel: tpu_custom_call.1
$region0: #{tpu_custom_call.1}
  #allocation0 [shape = 'u32[]', space=smem, size = 0x4, offset = 0x4, fixed_abs, tag = 'smem constant byte address 0x4 - core index']
  #allocation1 [shape = 'u32[144,128]{1,0:T(1,128)}', space=vmem, size = 0x12000, scoped, tag = 'internal scratch']
  %s0 = inlined_call_operand.hbm [shape: f32[2,16,384], index: 0, kind: input, shape index: {}]
  %s1 = inlined_call_operand.hbm [shape: f32[1,384], index: 1, kind: input, shape index: {}]
  %s2 = inlined_call_operand.hbm [shape: f32[1,384], index: 2, kind: input, shape index: {}]
  %s3 = inlined_call_operand.hbm [shape: f32[384,1152], index: 3, kind: input, shape index: {}]
  %s4 = inlined_call_operand.hbm [shape: f32[384,384], index: 4, kind: input, shape index: {}]
  %s5 = inlined_call_operand.hbm [shape: f32[1,384], index: 5, kind: input, shape index: {}]
  %s6 = inlined_call_operand.hbm [shape: f32[1,384], index: 6, kind: input, shape index: {}]
  %s7 = inlined_call_operand.hbm [shape: f32[1,384], index: 7, kind: input, shape index: {}]
  %s8 = inlined_call_operand.hbm [shape: f32[384,1536], index: 8, kind: input, shape index: {}]
  %s9 = inlined_call_operand.hbm [shape: f32[1,1536], index: 9, kind: input, shape index: {}]
  %s10 = inlined_call_operand.hbm [shape: f32[1536,384], index: 10, kind: input, shape index: {}]
  %s11 = inlined_call_operand.hbm [shape: f32[1,384], index: 11, kind: input, shape index: {}]
  %s12 = inlined_call_operand.hbm [shape: f32[2,16,384], index: 12, kind: output, shape index: {}]
  %s13 = sld [smem:[#allocation0]]
  $region129: #{tpu_custom_call.1} parent=0
    _
  %s15 = ssub.s32 1, %s13
  %s16 = scalar_select 0, %s15, %s13
  $region1: #{tpu_custom_call.1} parent=0
    #allocation2 [shape = 'u8[49152]{0}', space=vmem, size = 0xc000, scoped, tag = 'input window, operand 0']
    #allocation3 [shape = 's32[2]{0}', space=sflag, size = 0x8, scoped, tag = 'scoped memory for tpu_custom_call.1']
    #allocation4 [shape = 's32[2]{0}', space=sflag, size = 0x8, scoped, tag = 'scoped memory for tpu_custom_call.1']
    #allocation5 [shape = 'u8[1536]{0}', space=vmem, size = 0x800, scoped, tag = 'input window, operand 1, single buffered']
    #allocation6 [shape = 's32[1]{0}', space=sflag, size = 0x4, scoped, tag = 'scoped memory for tpu_custom_call.1']
    #allocation7 [shape = 'u8[1536]{0}', space=vmem, size = 0x800, scoped, tag = 'input window, operand 2, single buffered']
    #allocation8 [shape = 'u8[1769472]{0}', space=vmem, size = 0x1b0000, scoped, tag = 'input window, operand 3, single buffered']
    #allocation9 [shape = 's32[1]{0}', space=sflag, size = 0x4, scoped, tag = 'scoped memory for tpu_custom_call.1']
    #allocation10 [shape = 'u8[589824]{0}', space=vmem, size = 0x90000, scoped, tag = 'input window, operand 4, single buffered']
    #allocation11 [shape = 'u8[1536]{0}', space=vmem, size = 0x800, scoped, tag = 'input window, operand 5, single buffered']
    #allocation12 [shape = 's32[1]{0}', space=sflag, size = 0x4, scoped, tag = 'scoped memory for tpu_custom_call.1']
    #allocation13 [shape = 'u8[1536]{0}', space=vmem, size = 0x800, scoped, tag = 'input window, operand 6, single buffered']
    #allocation14 [shape = 'u8[1536]{0}', space=vmem, size = 0x800, scoped, tag = 'input window, operand 7, single buffered']
    #allocation15 [shape = 's32[1]{0}', space=sflag, size = 0x4, scoped, tag = 'scoped memory for tpu_custom_call.1']
    #allocation16 [shape = 'u8[2359296]{0}', space=vmem, size = 0x240000, scoped, tag = 'input window, operand 8, single buffered']
    #allocation17 [shape = 'u8[6144]{0}', space=vmem, size = 0x1800, scoped, tag = 'input window, operand 9, single buffered']
    #allocation18 [shape = 's32[1]{0}', space=sflag, size = 0x4, scoped, tag = 'scoped memory for tpu_custom_call.1']
    #allocation19 [shape = 'u8[2359296]{0}', space=vmem, size = 0x240000, scoped, tag = 'input window, operand 10, single buffered']
    #allocation20 [shape = 'u8[1536]{0}', space=vmem, size = 0x800, scoped, tag = 'input window, operand 11, single buffered']
    #allocation21 [shape = 's32[1]{0}', space=sflag, size = 0x4, scoped, tag = 'scoped memory for tpu_custom_call.1']
    #allocation22 [shape = 'u8[49152]{0}', space=vmem, size = 0xc000, scoped, tag = 'output window, operand 0']
    %17 = vsyncpa [#allocation3], 0
    %s18 = scalar_lea.sflag [#allocation3], 1
    %19 = vsyncpa %s18, 0
    %20 = vsyncpa [#allocation6], 0
    %21 = vsyncpa [#allocation9], 0
    %22 = vsyncpa [#allocation12], 0
    %23 = vsyncpa [#allocation15], 0
    %24 = vsyncpa [#allocation18], 0
    %25 = vsyncpa [#allocation21], 0
    %26 = vsyncpa [#allocation4], 0
    %s27 = scalar_lea.sflag [#allocation4], 1
    %28 = vsyncpa %s27, 0
    loop: start=0, step=1, limit=4
    $region2: #{tpu_custom_call.1} parent=1 // loop_pre_header
      _
    $region3: #{tpu_custom_call.1} parent=1 // loop_header
      %s30 = sphi 0, %s34
      %p31 = scmp.ge.s32.totalorder %s30, 4
      %s40 = sphi 0, %s42
      %s43 = sphi 0, %s40
      %s44 = sphi 0, %s43
      %s60 = sphi 0, %s44
      %s64 = sphi 0, %s64
      %s66 = sphi 0, %s64
      %s67 = sphi 0, %s66
      %s81 = sphi 0, %s67
      %s85 = sphi 0, %s85
      %s87 = sphi 0, %s85
      %s88 = sphi 0, %s87
      %s102 = sphi 0, %s88
      %s106 = sphi 0, %s106
      %s108 = sphi 0, %s106
      %s109 = sphi 0, %s108
      %s123 = sphi 0, %s109
      %s127 = sphi 0, %s127
      %s129 = sphi 0, %s127
      %s130 = sphi 0, %s129
      %s144 = sphi 0, %s130
      %s148 = sphi 0, %s148
      %s150 = sphi 0, %s148
      %s151 = sphi 0, %s150
      %s165 = sphi 0, %s151
      %s169 = sphi 0, %s169
      %s171 = sphi 0, %s169
      %s172 = sphi 0, %s171
      %s186 = sphi 0, %s172
      %s190 = sphi 0, %s190
      %s192 = sphi 0, %s190
      %s193 = sphi 0, %s192
      %s207 = sphi 0, %s193
      %s211 = sphi 0, %s211
      %s213 = sphi 0, %s211
      %s214 = sphi 0, %s213
      %s228 = sphi 0, %s214
      %s232 = sphi 0, %s232
      %s234 = sphi 0, %s232
      %s235 = sphi 0, %s234
      %s249 = sphi 0, %s235
      %s253 = sphi 0, %s253
      %s255 = sphi 0, %s253
      %s256 = sphi 0, %s255
      %s270 = sphi 0, %s256
      %s274 = sphi 0, %s274
      %s276 = sphi 0, %s274
      %s277 = sphi 0, %s276
      %s291 = sphi 0, %s277
      %s297 = sphi 0, %s299
      %s300 = sphi 0, %s297
      %s301 = sphi 0, %s300
      %s317 = sphi 0, %s301
    $region4: #{tpu_custom_call.1} parent=1 // loop_header_branch
      %33 = sbr.rel (%p31) target = $region8
    $region5: #{tpu_custom_call.1} parent=1 // loop_body
      %s35 = ssub.s32 %s30, 1
      %s36 = ssub.s32 %s30, 2
      %s37 = sadd.s32 %s30, 1
      %s38 = ssub.s32 %s30, %s37
      %p39 = scmp.eq.s32.totalorder %s38, 0
      %s41 = sadd.s32 %s40, 1
      %s42 = scalar_select %p39, %s40, %s41
      %p45 = pneg %p39
      %p46 = scmp.eq.s32.totalorder %s30, 1
      %p47 = por %p45, %p46
      %p48 = scmp.ne.s32.totalorder %s40, %s43
      %p49 = scmp.eq.s32.totalorder %s30, 0
      %p50 = por %p48, %p49
      %p51 = scmp.ne.s32.totalorder %s40, %s43
      %p52 = scmp.eq.s32.totalorder %s35, 1
      %p53 = por %p51, %p52
      %p54 = scmp.ne.s32.totalorder %s43, %s44
      %p55 = scmp.eq.s32.totalorder %s35, 0
      %p56 = por %p54, %p55
      %p57 = scmp.ne.s32.totalorder %s43, %s44
      %p58 = scmp.eq.s32.totalorder %s36, 1
      %p59 = por %p57, %p58
      %p61 = scmp.ne.s32.totalorder %s44, %s60
      %p62 = scmp.eq.s32.totalorder %s36, 0
      %p63 = por %p61, %p62
      %s65 = sadd.s32 %s64, 1
      %p68 = scmp.eq.s32.totalorder %s30, 1
      %p69 = scmp.ne.s32.totalorder %s64, %s66
      %p70 = scmp.eq.s32.totalorder %s30, 0
      %p71 = por %p69, %p70
      %p72 = scmp.ne.s32.totalorder %s64, %s66
      %p73 = scmp.eq.s32.totalorder %s35, 1
      %p74 = por %p72, %p73
      %p75 = scmp.ne.s32.totalorder %s66, %s67
      %p76 = scmp.eq.s32.totalorder %s35, 0
      %p77 = por %p75, %p76
      %p78 = scmp.ne.s32.totalorder %s66, %s67
      %p79 = scmp.eq.s32.totalorder %s36, 1
      %p80 = por %p78, %p79
      %p82 = scmp.ne.s32.totalorder %s67, %s81
      %p83 = scmp.eq.s32.totalorder %s36, 0
      %p84 = por %p82, %p83
      %s86 = sadd.s32 %s85, 1
      %p89 = scmp.eq.s32.totalorder %s30, 1
      %p90 = scmp.ne.s32.totalorder %s85, %s87
      %p91 = scmp.eq.s32.totalorder %s30, 0
      %p92 = por %p90, %p91
      %p93 = scmp.ne.s32.totalorder %s85, %s87
      %p94 = scmp.eq.s32.totalorder %s35, 1
      %p95 = por %p93, %p94
      %p96 = scmp.ne.s32.totalorder %s87, %s88
      %p97 = scmp.eq.s32.totalorder %s35, 0
      %p98 = por %p96, %p97
      %p99 = scmp.ne.s32.totalorder %s87, %s88
      %p100 = scmp.eq.s32.totalorder %s36, 1
      %p101 = por %p99, %p100
      %p103 = scmp.ne.s32.totalorder %s88, %s102
      %p104 = scmp.eq.s32.totalorder %s36, 0
      %p105 = por %p103, %p104
      %s107 = sadd.s32 %s106, 1
      %p110 = scmp.eq.s32.totalorder %s30, 1
      %p111 = scmp.ne.s32.totalorder %s106, %s108
      %p112 = scmp.eq.s32.totalorder %s30, 0
      %p113 = por %p111, %p112
      %p114 = scmp.ne.s32.totalorder %s106, %s108
      %p115 = scmp.eq.s32.totalorder %s35, 1
      %p116 = por %p114, %p115
      %p117 = scmp.ne.s32.totalorder %s108, %s109
      %p118 = scmp.eq.s32.totalorder %s35, 0
      %p119 = por %p117, %p118
      %p120 = scmp.ne.s32.totalorder %s108, %s109
      %p121 = scmp.eq.s32.totalorder %s36, 1
      %p122 = por %p120, %p121
      %p124 = scmp.ne.s32.totalorder %s109, %s123
      %p125 = scmp.eq.s32.totalorder %s36, 0
      %p126 = por %p124, %p125
      %s128 = sadd.s32 %s127, 1
      %p131 = scmp.eq.s32.totalorder %s30, 1
      %p132 = scmp.ne.s32.totalorder %s127, %s129
      %p133 = scmp.eq.s32.totalorder %s30, 0
      %p134 = por %p132, %p133
      %p135 = scmp.ne.s32.totalorder %s127, %s129
      %p136 = scmp.eq.s32.totalorder %s35, 1
      %p137 = por %p135, %p136
      %p138 = scmp.ne.s32.totalorder %s129, %s130
      %p139 = scmp.eq.s32.totalorder %s35, 0
      %p140 = por %p138, %p139
      %p141 = scmp.ne.s32.totalorder %s129, %s130
      %p142 = scmp.eq.s32.totalorder %s36, 1
      %p143 = por %p141, %p142
      %p145 = scmp.ne.s32.totalorder %s130, %s144
      %p146 = scmp.eq.s32.totalorder %s36, 0
      %p147 = por %p145, %p146
      %s149 = sadd.s32 %s148, 1
      %p152 = scmp.eq.s32.totalorder %s30, 1
      %p153 = scmp.ne.s32.totalorder %s148, %s150
      %p154 = scmp.eq.s32.totalorder %s30, 0
      %p155 = por %p153, %p154
      %p156 = scmp.ne.s32.totalorder %s148, %s150
      %p157 = scmp.eq.s32.totalorder %s35, 1
      %p158 = por %p156, %p157
      %p159 = scmp.ne.s32.totalorder %s150, %s151
      %p160 = scmp.eq.s32.totalorder %s35, 0
      %p161 = por %p159, %p160
      %p162 = scmp.ne.s32.totalorder %s150, %s151
      %p163 = scmp.eq.s32.totalorder %s36, 1
      %p164 = por %p162, %p163
      %p166 = scmp.ne.s32.totalorder %s151, %s165
      %p167 = scmp.eq.s32.totalorder %s36, 0
      %p168 = por %p166, %p167
      %s170 = sadd.s32 %s169, 1
      %p173 = scmp.eq.s32.totalorder %s30, 1
      %p174 = scmp.ne.s32.totalorder %s169, %s171
      %p175 = scmp.eq.s32.totalorder %s30, 0
      %p176 = por %p174, %p175
      %p177 = scmp.ne.s32.totalorder %s169, %s171
      %p178 = scmp.eq.s32.totalorder %s35, 1
      %p179 = por %p177, %p178
      %p180 = scmp.ne.s32.totalorder %s171, %s172
      %p181 = scmp.eq.s32.totalorder %s35, 0
      %p182 = por %p180, %p181
      %p183 = scmp.ne.s32.totalorder %s171, %s172
      %p184 = scmp.eq.s32.totalorder %s36, 1
      %p185 = por %p183, %p184
      %p187 = scmp.ne.s32.totalorder %s172, %s186
      %p188 = scmp.eq.s32.totalorder %s36, 0
      %p189 = por %p187, %p188
      %s191 = sadd.s32 %s190, 1
      %p194 = scmp.eq.s32.totalorder %s30, 1
      %p195 = scmp.ne.s32.totalorder %s190, %s192
      %p196 = scmp.eq.s32.totalorder %s30, 0
      %p197 = por %p195, %p196
      %p198 = scmp.ne.s32.totalorder %s190, %s192
      %p199 = scmp.eq.s32.totalorder %s35, 1
      %p200 = por %p198, %p199
      %p201 = scmp.ne.s32.totalorder %s192, %s193
      %p202 = scmp.eq.s32.totalorder %s35, 0
      %p203 = por %p201, %p202
      %p204 = scmp.ne.s32.totalorder %s192, %s193
      %p205 = scmp.eq.s32.totalorder %s36, 1
      %p206 = por %p204, %p205
      %p208 = scmp.ne.s32.totalorder %s193, %s207
      %p209 = scmp.eq.s32.totalorder %s36, 0
      %p210 = por %p208, %p209
      %s212 = sadd.s32 %s211, 1
      %p215 = scmp.eq.s32.totalorder %s30, 1
      %p216 = scmp.ne.s32.totalorder %s211, %s213
      %p217 = scmp.eq.s32.totalorder %s30, 0
      %p218 = por %p216, %p217
      %p219 = scmp.ne.s32.totalorder %s211, %s213
      %p220 = scmp.eq.s32.totalorder %s35, 1
      %p221 = por %p219, %p220
      %p222 = scmp.ne.s32.totalorder %s213, %s214
      %p223 = scmp.eq.s32.totalorder %s35, 0
      %p224 = por %p222, %p223
      %p225 = scmp.ne.s32.totalorder %s213, %s214
      %p226 = scmp.eq.s32.totalorder %s36, 1
      %p227 = por %p225, %p226
      %p229 = scmp.ne.s32.totalorder %s214, %s228
      %p230 = scmp.eq.s32.totalorder %s36, 0
      %p231 = por %p229, %p230
      %s233 = sadd.s32 %s232, 1
      %p236 = scmp.eq.s32.totalorder %s30, 1
      %p237 = scmp.ne.s32.totalorder %s232, %s234
      %p238 = scmp.eq.s32.totalorder %s30, 0
      %p239 = por %p237, %p238
      %p240 = scmp.ne.s32.totalorder %s232, %s234
      %p241 = scmp.eq.s32.totalorder %s35, 1
      %p242 = por %p240, %p241
      %p243 = scmp.ne.s32.totalorder %s234, %s235
      %p244 = scmp.eq.s32.totalorder %s35, 0
      %p245 = por %p243, %p244
      %p246 = scmp.ne.s32.totalorder %s234, %s235
      %p247 = scmp.eq.s32.totalorder %s36, 1
      %p248 = por %p246, %p247
      %p250 = scmp.ne.s32.totalorder %s235, %s249
      %p251 = scmp.eq.s32.totalorder %s36, 0
      %p252 = por %p250, %p251
      %s254 = sadd.s32 %s253, 1
      %p257 = scmp.eq.s32.totalorder %s30, 1
      %p258 = scmp.ne.s32.totalorder %s253, %s255
      %p259 = scmp.eq.s32.totalorder %s30, 0
      %p260 = por %p258, %p259
      %p261 = scmp.ne.s32.totalorder %s253, %s255
      %p262 = scmp.eq.s32.totalorder %s35, 1
      %p263 = por %p261, %p262
      %p264 = scmp.ne.s32.totalorder %s255, %s256
      %p265 = scmp.eq.s32.totalorder %s35, 0
      %p266 = por %p264, %p265
      %p267 = scmp.ne.s32.totalorder %s255, %s256
      %p268 = scmp.eq.s32.totalorder %s36, 1
      %p269 = por %p267, %p268
      %p271 = scmp.ne.s32.totalorder %s256, %s270
      %p272 = scmp.eq.s32.totalorder %s36, 0
      %p273 = por %p271, %p272
      %s275 = sadd.s32 %s274, 1
      %p278 = scmp.eq.s32.totalorder %s30, 1
      %p279 = scmp.ne.s32.totalorder %s274, %s276
      %p280 = scmp.eq.s32.totalorder %s30, 0
      %p281 = por %p279, %p280
      %p282 = scmp.ne.s32.totalorder %s274, %s276
      %p283 = scmp.eq.s32.totalorder %s35, 1
      %p284 = por %p282, %p283
      %p285 = scmp.ne.s32.totalorder %s276, %s277
      %p286 = scmp.eq.s32.totalorder %s35, 0
      %p287 = por %p285, %p286
      %p288 = scmp.ne.s32.totalorder %s276, %s277
      %p289 = scmp.eq.s32.totalorder %s36, 1
      %p290 = por %p288, %p289
      %p292 = scmp.ne.s32.totalorder %s277, %s291
      %p293 = scmp.eq.s32.totalorder %s36, 0
      %p294 = por %p292, %p293
      %s295 = ssub.s32 %s30, %s37
      %p296 = scmp.eq.s32.totalorder %s295, 0
      %s298 = sadd.s32 %s297, 1
      %s299 = scalar_select %p296, %s297, %s298
      %p302 = pneg %p296
      %p303 = scmp.eq.s32.totalorder %s30, 1
      %p304 = por %p302, %p303
      %p305 = scmp.ne.s32.totalorder %s297, %s300
      %p306 = scmp.eq.s32.totalorder %s30, 0
      %p307 = por %p305, %p306
      %p308 = scmp.ne.s32.totalorder %s297, %s300
      %p309 = scmp.eq.s32.totalorder %s35, 1
      %p310 = por %p308, %p309
      %p311 = scmp.ne.s32.totalorder %s300, %s301
      %p312 = scmp.eq.s32.totalorder %s35, 0
      %p313 = por %p311, %p312
      %p314 = scmp.ne.s32.totalorder %s300, %s301
      %p315 = scmp.eq.s32.totalorder %s36, 1
      %p316 = por %p314, %p315
      %p318 = scmp.ne.s32.totalorder %s301, %s317
      %p319 = scmp.eq.s32.totalorder %s36, 0
      %p320 = por %p318, %p319
      %p321 = scmp.le.s32.totalorder 1, %s30
      %p322 = scmp.lt.s32.totalorder %s30, 3
      %p323 = pnand %p321, %p322
      %p324 = pneg %p323
      // Predicated region
      $region9: #{tpu_custom_call.1} parent=5 // pred_check
        _
      $region10: #{tpu_custom_call.1} parent=5 // pred_check_branch
        %326 = sbr.rel (%p323) target = $region12
      $region11: #{tpu_custom_call.1} parent=5 // pred_region
        %s327 = ssub.s32 %s30, 1
        // Predicated region
        $region13: #{tpu_custom_call.1} parent=11 // pred_check
          %p328 = pneg %p77
        $region14: #{tpu_custom_call.1} parent=11 // pred_check_branch
          %330 = sbr.rel (%p328) target = $region16
        $region15: #{tpu_custom_call.1} parent=11 // pred_region
          %s332 = ssub.s32 48, 48
          %333 = vsyncadd [#allocation6], %s332
          %s335 = sshll.u32 [#allocation5], 4
          %s336 = int_to_ptr.vmem [resolvable:$true] %s335
          %338 = dma.hbm_to_vmem [thread:$0]  %s1, 48, %s336, [#allocation6]
        $region16: #{tpu_custom_call.1} parent=11 // pred_fallthru
          _
        // Predicated region
        $region17: #{tpu_custom_call.1} parent=11 // pred_check
          %p339 = pneg %p98
        $region18: #{tpu_custom_call.1} parent=11 // pred_check_branch
          %341 = sbr.rel (%p339) target = $region20
        $region19: #{tpu_custom_call.1} parent=11 // pred_region
          %s343 = ssub.s32 48, 48
          %344 = vsyncadd [#allocation6], %s343
          %s346 = sshll.u32 [#allocation7], 4
          %s347 = int_to_ptr.vmem [resolvable:$true] %s346
          %349 = dma.hbm_to_vmem [thread:$0]  %s2, 48, %s347, [#allocation6]
        $region20: #{tpu_custom_call.1} parent=11 // pred_fallthru
          _
        // Predicated region
        $region21: #{tpu_custom_call.1} parent=11 // pred_check
          %p350 = pneg %p119
        $region22: #{tpu_custom_call.1} parent=11 // pred_check_branch
          %352 = sbr.rel (%p350) target = $region24
        $region23: #{tpu_custom_call.1} parent=11 // pred_region
          %s354 = ssub.s32 55296, 55296
          %355 = vsyncadd [#allocation9], %s354
          %s356 = sshll.u32 [#allocation8], 4
          %s357 = int_to_ptr.vmem [resolvable:$true] %s356
          %362 = dma.hbm_to_vmem [thread:$0]  %s3, 55296, %s357, [#allocation9], 1152, 1152, 72
        $region24: #{tpu_custom_call.1} parent=11 // pred_fallthru
          _
        // Predicated region
        $region25: #{tpu_custom_call.1} parent=11 // pred_check
          %p363 = pneg %p140
        $region26: #{tpu_custom_call.1} parent=11 // pred_check_branch
          %365 = sbr.rel (%p363) target = $region28
        $region27: #{tpu_custom_call.1} parent=11 // pred_region
          %s367 = ssub.s32 18432, 18432
          %368 = vsyncadd [#allocation9], %s367
          %s369 = sshll.u32 [#allocation10], 4
          %s370 = int_to_ptr.vmem [resolvable:$true] %s369
          %375 = dma.hbm_to_vmem [thread:$0]  %s4, 18432, %s370, [#allocation9], 384, 384, 24
        $region28: #{tpu_custom_call.1} parent=11 // pred_fallthru
          _
        // Predicated region
        $region29: #{tpu_custom_call.1} parent=11 // pred_check
          %p376 = pneg %p161
        $region30: #{tpu_custom_call.1} parent=11 // pred_check_branch
          %378 = sbr.rel (%p376) target = $region32
        $region31: #{tpu_custom_call.1} parent=11 // pred_region
          %s380 = ssub.s32 48, 48
          %381 = vsyncadd [#allocation12], %s380
          %s383 = sshll.u32 [#allocation11], 4
          %s384 = int_to_ptr.vmem [resolvable:$true] %s383
          %386 = dma.hbm_to_vmem [thread:$0]  %s5, 48, %s384, [#allocation12]
        $region32: #{tpu_custom_call.1} parent=11 // pred_fallthru
          _
        // Predicated region
        $region33: #{tpu_custom_call.1} parent=11 // pred_check
          %p387 = pneg %p182
        $region34: #{tpu_custom_call.1} parent=11 // pred_check_branch
          %389 = sbr.rel (%p387) target = $region36
        $region35: #{tpu_custom_call.1} parent=11 // pred_region
          %s391 = ssub.s32 48, 48
          %392 = vsyncadd [#allocation12], %s391
          %s394 = sshll.u32 [#allocation13], 4
          %s395 = int_to_ptr.vmem [resolvable:$true] %s394
          %397 = dma.hbm_to_vmem [thread:$0]  %s6, 48, %s395, [#allocation12]
        $region36: #{tpu_custom_call.1} parent=11 // pred_fallthru
          _
        // Predicated region
        $region37: #{tpu_custom_call.1} parent=11 // pred_check
          %p398 = pneg %p203
        $region38: #{tpu_custom_call.1} parent=11 // pred_check_branch
          %400 = sbr.rel (%p398) target = $region40
        $region39: #{tpu_custom_call.1} parent=11 // pred_region
          %s402 = ssub.s32 48, 48
          %403 = vsyncadd [#allocation15], %s402
          %s405 = sshll.u32 [#allocation14], 4
          %s406 = int_to_ptr.vmem [resolvable:$true] %s405
          %408 = dma.hbm_to_vmem [thread:$0]  %s7, 48, %s406, [#allocation15]
        $region40: #{tpu_custom_call.1} parent=11 // pred_fallthru
          _
        // Predicated region
        $region41: #{tpu_custom_call.1} parent=11 // pred_check
          %p409 = pneg %p224
        $region42: #{tpu_custom_call.1} parent=11 // pred_check_branch
          %411 = sbr.rel (%p409) target = $region44
        $region43: #{tpu_custom_call.1} parent=11 // pred_region
          %s413 = ssub.s32 73728, 73728
          %414 = vsyncadd [#allocation15], %s413
          %s415 = sshll.u32 [#allocation16], 4
          %s416 = int_to_ptr.vmem [resolvable:$true] %s415
          %421 = dma.hbm_to_vmem [thread:$0]  %s8, 73728, %s416, [#allocation15], 1536, 1536, 96
        $region44: #{tpu_custom_call.1} parent=11 // pred_fallthru
          _
        // Predicated region
        $region45: #{tpu_custom_call.1} parent=11 // pred_check
          %p422 = pneg %p245
        $region46: #{tpu_custom_call.1} parent=11 // pred_check_branch
          %424 = sbr.rel (%p422) target = $region48
        $region47: #{tpu_custom_call.1} parent=11 // pred_region
          %s426 = ssub.s32 192, 192
          %427 = vsyncadd [#allocation18], %s426
          %s429 = sshll.u32 [#allocation17], 4
          %s430 = int_to_ptr.vmem [resolvable:$true] %s429
          %432 = dma.hbm_to_vmem [thread:$0]  %s9, 192, %s430, [#allocation18]
        $region48: #{tpu_custom_call.1} parent=11 // pred_fallthru
          _
        // Predicated region
        $region49: #{tpu_custom_call.1} parent=11 // pred_check
          %p433 = pneg %p266
        $region50: #{tpu_custom_call.1} parent=11 // pred_check_branch
          %435 = sbr.rel (%p433) target = $region52
        $region51: #{tpu_custom_call.1} parent=11 // pred_region
          %s437 = ssub.s32 73728, 73728
          %438 = vsyncadd [#allocation18], %s437
          %s439 = sshll.u32 [#allocation19], 4
          %s440 = int_to_ptr.vmem [resolvable:$true] %s439
          %445 = dma.hbm_to_vmem [thread:$0]  %s10, 73728, %s440, [#allocation18], 384, 384, 24
        $region52: #{tpu_custom_call.1} parent=11 // pred_fallthru
          _
        // Predicated region
        $region53: #{tpu_custom_call.1} parent=11 // pred_check
          %p446 = pneg %p287
        $region54: #{tpu_custom_call.1} parent=11 // pred_check_branch
          %448 = sbr.rel (%p446) target = $region56
        $region55: #{tpu_custom_call.1} parent=11 // pred_region
          %s450 = ssub.s32 48, 48
          %451 = vsyncadd [#allocation21], %s450
          %s453 = sshll.u32 [#allocation20], 4
          %s454 = int_to_ptr.vmem [resolvable:$true] %s453
          %456 = dma.hbm_to_vmem [thread:$0]  %s11, 48, %s454, [#allocation21]
        $region56: #{tpu_custom_call.1} parent=11 // pred_fallthru
          _
      $region12: #{tpu_custom_call.1} parent=5 // pred_fallthru
        _
      %p457 = scmp.lt.s32.totalorder %s30, 2
      // Predicated region
      $region57: #{tpu_custom_call.1} parent=5 // pred_check
        %p458 = pneg %p457
      $region58: #{tpu_custom_call.1} parent=5 // pred_check_branch
        %460 = sbr.rel (%p458) target = $region60
      $region59: #{tpu_custom_call.1} parent=5 // pred_region
        // Predicated region
        $region61: #{tpu_custom_call.1} parent=59 // pred_check
          %p461 = pneg %p50
        $region62: #{tpu_custom_call.1} parent=59 // pred_check_branch
          %463 = sbr.rel (%p461) target = $region64
        $region63: #{tpu_custom_call.1} parent=59 // pred_region
          %s464 = sand.u32 %s40, 1
          %s465 = scalar_lea.sflag [#allocation3], %s464
          %s466 = sand.u32 %s40, 1
          %s467 = smul.addr %s466, 48
          %s468 = scalar_lea.vmem [#allocation2], %s467
          %s470 = ssub.s32 768, 768
          %471 = vsyncadd %s465, %s470
          %s472 = smul.addr %s30, 6
          %s473 = smul.addr %s472, 128
          %s474 = scalar_lea.hbm %s0, %s473
          %s475 = sshll.u32 %s468, 4
          %s476 = int_to_ptr.vmem [resolvable:$true] %s475
          %481 = dma.hbm_to_vmem [thread:$0]  %s474, 768, %s476, %s465, 384, 384, 24
        $region64: #{tpu_custom_call.1} parent=59 // pred_fallthru
          _
      $region60: #{tpu_custom_call.1} parent=5 // pred_fallthru
        _
      %p482 = scmp.le.s32.totalorder 1, %s30
      %p483 = scmp.lt.s32.totalorder %s30, 3
      %p484 = pnand %p482, %p483
      %p485 = pneg %p484
      // Predicated region
      $region65: #{tpu_custom_call.1} parent=5 // pred_check
        _
      $region66: #{tpu_custom_call.1} parent=5 // pred_check_branch
        %487 = sbr.rel (%p484) target = $region68
      $region67: #{tpu_custom_call.1} parent=5 // pred_region
        %s488 = ssub.s32 %s30, 1
        %s489 = sand.u32 %s43, 1
        %s490 = scalar_lea.sflag [#allocation3], %s489
        %s491 = sand.u32 %s43, 1
        %s492 = smul.addr %s491, 48
        %s493 = scalar_lea.vmem [#allocation2], %s492
        // Predicated region
        $region69: #{tpu_custom_call.1} parent=67 // pred_check
          %p494 = pneg %p56
        $region70: #{tpu_custom_call.1} parent=67 // pred_check_branch
          %496 = sbr.rel (%p494) target = $region72
        $region71: #{tpu_custom_call.1} parent=67 // pred_region
          %497 = dma.done %s490, 768
        $region72: #{tpu_custom_call.1} parent=67 // pred_fallthru
          _
        // Predicated region
        $region73: #{tpu_custom_call.1} parent=67 // pred_check
          %p498 = pneg %p77
        $region74: #{tpu_custom_call.1} parent=67 // pred_check_branch
          %500 = sbr.rel (%p498) target = $region76
        $region75: #{tpu_custom_call.1} parent=67 // pred_region
          %501 = dma.done [#allocation6], 48
        $region76: #{tpu_custom_call.1} parent=67 // pred_fallthru
          _
        // Predicated region
        $region77: #{tpu_custom_call.1} parent=67 // pred_check
          %p502 = pneg %p98
        $region78: #{tpu_custom_call.1} parent=67 // pred_check_branch
          %504 = sbr.rel (%p502) target = $region80
        $region79: #{tpu_custom_call.1} parent=67 // pred_region
          %505 = dma.done [#allocation6], 48
        $region80: #{tpu_custom_call.1} parent=67 // pred_fallthru
          _
        // Predicated region
        $region81: #{tpu_custom_call.1} parent=67 // pred_check
          %p506 = pneg %p119
        $region82: #{tpu_custom_call.1} parent=67 // pred_check_branch
          %508 = sbr.rel (%p506) target = $region84
        $region83: #{tpu_custom_call.1} parent=67 // pred_region
          %509 = dma.done [#allocation9], 55296
        $region84: #{tpu_custom_call.1} parent=67 // pred_fallthru
          _
        // Predicated region
        $region85: #{tpu_custom_call.1} parent=67 // pred_check
          %p510 = pneg %p140
        $region86: #{tpu_custom_call.1} parent=67 // pred_check_branch
          %512 = sbr.rel (%p510) target = $region88
        $region87: #{tpu_custom_call.1} parent=67 // pred_region
          %513 = dma.done [#allocation9], 18432
        $region88: #{tpu_custom_call.1} parent=67 // pred_fallthru
          _
        // Predicated region
        $region89: #{tpu_custom_call.1} parent=67 // pred_check
          %p514 = pneg %p161
        $region90: #{tpu_custom_call.1} parent=67 // pred_check_branch
          %516 = sbr.rel (%p514) target = $region92
        $region91: #{tpu_custom_call.1} parent=67 // pred_region
          %517 = dma.done [#allocation12], 48
        $region92: #{tpu_custom_call.1} parent=67 // pred_fallthru
          _
        // Predicated region
        $region93: #{tpu_custom_call.1} parent=67 // pred_check
          %p518 = pneg %p182
        $region94: #{tpu_custom_call.1} parent=67 // pred_check_branch
          %520 = sbr.rel (%p518) target = $region96
        $region95: #{tpu_custom_call.1} parent=67 // pred_region
          %521 = dma.done [#allocation12], 48
        $region96: #{tpu_custom_call.1} parent=67 // pred_fallthru
          _
        // Predicated region
        $region97: #{tpu_custom_call.1} parent=67 // pred_check
          %p522 = pneg %p203
        $region98: #{tpu_custom_call.1} parent=67 // pred_check_branch
          %524 = sbr.rel (%p522) target = $region100
        $region99: #{tpu_custom_call.1} parent=67 // pred_region
          %525 = dma.done [#allocation15], 48
        $region100: #{tpu_custom_call.1} parent=67 // pred_fallthru
          _
        // Predicated region
        $region101: #{tpu_custom_call.1} parent=67 // pred_check
          %p526 = pneg %p224
        $region102: #{tpu_custom_call.1} parent=67 // pred_check_branch
          %528 = sbr.rel (%p526) target = $region104
        $region103: #{tpu_custom_call.1} parent=67 // pred_region
          %529 = dma.done [#allocation15], 73728
        $region104: #{tpu_custom_call.1} parent=67 // pred_fallthru
          _
        // Predicated region
        $region105: #{tpu_custom_call.1} parent=67 // pred_check
          %p530 = pneg %p245
        $region106: #{tpu_custom_call.1} parent=67 // pred_check_branch
          %532 = sbr.rel (%p530) target = $region108
        $region107: #{tpu_custom_call.1} parent=67 // pred_region
          %533 = dma.done [#allocation18], 192
        $region108: #{tpu_custom_call.1} parent=67 // pred_fallthru
          _
        // Predicated region
        $region109: #{tpu_custom_call.1} parent=67 // pred_check
          %p534 = pneg %p266
        $region110: #{tpu_custom_call.1} parent=67 // pred_check_branch
          %536 = sbr.rel (%p534) target = $region112
        $region111: #{tpu_custom_call.1} parent=67 // pred_region
          %537 = dma.done [#allocation18], 73728
        $region112: #{tpu_custom_call.1} parent=67 // pred_fallthru
          _
        // Predicated region
        $region113: #{tpu_custom_call.1} parent=67 // pred_check
          %p538 = pneg %p287
        $region114: #{tpu_custom_call.1} parent=67 // pred_check_branch
          %540 = sbr.rel (%p538) target = $region116
        $region115: #{tpu_custom_call.1} parent=67 // pred_region
          %541 = dma.done [#allocation21], 48
        $region116: #{tpu_custom_call.1} parent=67 // pred_fallthru
          _
        %s542 = sand.u32 %s43, 1
        %s543 = scalar_lea.sflag [#allocation3], %s542
        %s544 = sand.u32 %s43, 1
        %s545 = smul.addr %s544, 48
        %s546 = scalar_lea.vmem [#allocation2], %s545
        %p547 = pneg %p56
        %p548 = pneg %p53
        %p549 = pneg %p77
        %p550 = pneg %p74
        %p551 = pneg %p98
        %p552 = pneg %p95
        %p553 = pneg %p119
        %p554 = pneg %p116
        %p555 = pneg %p140
        %p556 = pneg %p137
        %p557 = pneg %p161
        %p558 = pneg %p158
        %p559 = pneg %p182
        %p560 = pneg %p179
        %p561 = pneg %p203
        %p562 = pneg %p200
        %p563 = pneg %p224
        %p564 = pneg %p221
        %p565 = pneg %p245
        %p566 = pneg %p242
        %p567 = pneg %p266
        %p568 = pneg %p263
        %p569 = pneg %p287
        %p570 = pneg %p284
        %p571 = pneg %p313
        %p572 = pneg %p310
        %s573 = sand.u32 %s300, 1
        %s574 = scalar_lea.sflag [#allocation4], %s573
        %s575 = sand.u32 %s300, 1
        %s576 = smul.addr %s575, 48
        %s577 = scalar_lea.vmem [#allocation22], %s576
        %v578 = vld [vmem:[%s493] sm:$0xff]
        %v579 = vld [vmem:[%s493 + $0x8] sm:$0xff]
        %v580 = vld [vmem:[%s493 + $0x10] sm:$0xff]
        %v581 = vld [vmem:[%s493 + $0x18] sm:$0xff]
        %v582 = vld [vmem:[%s493 + $0x20] sm:$0xff]
        %v583 = vld [vmem:[%s493 + $0x28] sm:$0xff]
        %v584 = vld [vmem:[#allocation5] sm:$0x7]
        %v585 = vld [vmem:[#allocation7] sm:$0x7]
        %v586 = vadd.f32 %v578, %v579
        %v587 = vadd.f32 %v586, %v580
        %588 = vadd.xlane.f32.xlu0 %v587
        %v589 = vpop.xlane.xlu0 %588
        %v590 = vadd.f32 %v581, %v582
        %v591 = vadd.f32 %v590, %v583
        %592 = vadd.xlane.f32.xlu0 %v591
        %v593 = vpop.xlane.xlu0 %592
        %v594 = vrcp.pop 384.0
        %v595 = vmul.f32 %v589, %v594
        %v596 = vmul.f32 %v593, %v594
        %v597 = vsub.f32 %v578, %v595
        %v598 = vsub.f32 %v579, %v595
        %v599 = vsub.f32 %v580, %v595
        %v600 = vsub.f32 %v581, %v596
        %v601 = vsub.f32 %v582, %v596
        %v602 = vsub.f32 %v583, %v596
        %v603 = vmul.f32 %v597, %v597
        %v604 = vmul.f32 %v598, %v598
        %v605 = vmul.f32 %v599, %v599
        %v606 = vmul.f32 %v600, %v600
        %v607 = vmul.f32 %v601, %v601
        %v608 = vmul.f32 %v602, %v602
        %v609 = vadd.f32 %v603, %v604
        %v610 = vadd.f32 %v609, %v605
        %611 = vadd.xlane.f32.xlu0 %v610
        %v612 = vpop.xlane.xlu0 %611
        %v613 = vadd.f32 %v606, %v607
        %v614 = vadd.f32 %v613, %v608
        %615 = vadd.xlane.f32.xlu0 %v614
        %v616 = vpop.xlane.xlu0 %615
        %v617 = vmul.f32 %v612, %v594
        %v618 = vmul.f32 %v616, %v594
        %v619 = vadd.f32 %v617, 1e-05
        %v620 = vadd.f32 %v618, 1e-05
        %v621 = vrsqrt.pop %v619
        %v622 = vrsqrt.pop %v620
        %v623 = vmul.f32 %v597, %v621
        %v624 = vmul.f32 %v598, %v621
        %v625 = vmul.f32 %v599, %v621
        %v626 = vmul.f32 %v600, %v622
        %v627 = vmul.f32 %v601, %v622
        %v628 = vmul.f32 %v602, %v622
        %v630 = vlaneseq
        %v631 = vshrl.u32 %v630, 7
        %v632 = vsub.s32 0, %v631
        %v633 = vrot.slane %v584, %v632
        %v634 = vlaneseq
        %v635 = vshrl.u32 %v634, 7
        %v636 = vsub.s32 1, %v635
        %v637 = vrot.slane %v584, %v636
        %v638 = vlaneseq
        %v639 = vshrl.u32 %v638, 7
        %v640 = vsub.s32 2, %v639
        %v641 = vrot.slane %v584, %v640
        %v645 = vmul.f32 %v623, %v633
        %v646 = vmul.f32 %v624, %v637
        %v647 = vmul.f32 %v625, %v641
        %v648 = vmul.f32 %v626, %v633
        %v649 = vmul.f32 %v627, %v637
        %v650 = vmul.f32 %v628, %v641
        %v652 = vlaneseq
        %v653 = vshrl.u32 %v652, 7
        %v654 = vsub.s32 0, %v653
        %v655 = vrot.slane %v585, %v654
        %v656 = vlaneseq
        %v657 = vshrl.u32 %v656, 7
        %v658 = vsub.s32 1, %v657
        %v659 = vrot.slane %v585, %v658
        %v660 = vlaneseq
        %v661 = vshrl.u32 %v660, 7
        %v662 = vsub.s32 2, %v661
        %v663 = vrot.slane %v585, %v662
        %v667 = vadd.f32 %v645, %v655
        %v668 = vadd.f32 %v646, %v659
        %v669 = vadd.f32 %v647, %v663
        %v670 = vadd.f32 %v648, %v655
        %v671 = vadd.f32 %v649, %v659
        %v672 = vadd.f32 %v650, %v663
        %v673 = vld [vmem:[#allocation8] sm:$0xff]
        %v674 = vld [vmem:[#allocation8 + $0x8] sm:$0xff]
        %v675 = vld [vmem:[#allocation8 + $0x10] sm:$0xff]
        %v676 = vld [vmem:[#allocation8 + $0x18] sm:$0xff]
        %v677 = vld [vmem:[#allocation8 + $0x20] sm:$0xff]
        %v678 = vld [vmem:[#allocation8 + $0x28] sm:$0xff]
        %v679 = vld [vmem:[#allocation8 + $0x30] sm:$0xff]
        %v680 = vld [vmem:[#allocation8 + $0x38] sm:$0xff]
        %v681 = vld [vmem:[#allocation8 + $0x40] sm:$0xff]
        %v682 = vld [vmem:[#allocation8 + $0x48] sm:$0xff]
        %v683 = vld [vmem:[#allocation8 + $0x50] sm:$0xff]
        %v684 = vld [vmem:[#allocation8 + $0x58] sm:$0xff]
        %v685 = vld [vmem:[#allocation8 + $0x60] sm:$0xff]
        %v686 = vld [vmem:[#allocation8 + $0x68] sm:$0xff]
        %v687 = vld [vmem:[#allocation8 + $0x70] sm:$0xff]
        %v688 = vld [vmem:[#allocation8 + $0x78] sm:$0xff]
        %v689 = vld [vmem:[#allocation8 + $0x80] sm:$0xff]
        %v690 = vld [vmem:[#allocation8 + $0x88] sm:$0xff]
        %v691 = vld [vmem:[#allocation8 + $0x90] sm:$0xff]
        %v692 = vld [vmem:[#allocation8 + $0x98] sm:$0xff]
        %v693 = vld [vmem:[#allocation8 + $0xa0] sm:$0xff]
        %v694 = vld [vmem:[#allocation8 + $0xa8] sm:$0xff]
        %v695 = vld [vmem:[#allocation8 + $0xb0] sm:$0xff]
        %v696 = vld [vmem:[#allocation8 + $0xb8] sm:$0xff]
        %v697 = vld [vmem:[#allocation8 + $0xc0] sm:$0xff]
        %v698 = vld [vmem:[#allocation8 + $0xc8] sm:$0xff]
        %v699 = vld [vmem:[#allocation8 + $0xd0] sm:$0xff]
        %v700 = vld [vmem:[#allocation8 + $0xd8] sm:$0xff]
        %v701 = vld [vmem:[#allocation8 + $0xe0] sm:$0xff]
        %v702 = vld [vmem:[#allocation8 + $0xe8] sm:$0xff]
        %v703 = vld [vmem:[#allocation8 + $0xf0] sm:$0xff]
        %v704 = vld [vmem:[#allocation8 + $0xf8] sm:$0xff]
        %v705 = vld [vmem:[#allocation8 + $0x100] sm:$0xff]
        %v706 = vld [vmem:[#allocation8 + $0x108] sm:$0xff]
        %v707 = vld [vmem:[#allocation8 + $0x110] sm:$0xff]
        %v708 = vld [vmem:[#allocation8 + $0x118] sm:$0xff]
        %v709 = vld [vmem:[#allocation8 + $0x120] sm:$0xff]
        %v710 = vld [vmem:[#allocation8 + $0x128] sm:$0xff]
        %v711 = vld [vmem:[#allocation8 + $0x130] sm:$0xff]
        %v712 = vld [vmem:[#allocation8 + $0x138] sm:$0xff]
        %v713 = vld [vmem:[#allocation8 + $0x140] sm:$0xff]
        %v714 = vld [vmem:[#allocation8 + $0x148] sm:$0xff]
        %v715 = vld [vmem:[#allocation8 + $0x150] sm:$0xff]
        %v716 = vld [vmem:[#allocation8 + $0x158] sm:$0xff]
        %v717 = vld [vmem:[#allocation8 + $0x160] sm:$0xff]
        %v718 = vld [vmem:[#allocation8 + $0x168] sm:$0xff]
        %v719 = vld [vmem:[#allocation8 + $0x170] sm:$0xff]
        %v720 = vld [vmem:[#allocation8 + $0x178] sm:$0xff]
        %v721 = vld [vmem:[#allocation8 + $0x180] sm:$0xff]
        %v722 = vld [vmem:[#allocation8 + $0x188] sm:$0xff]
        %v723 = vld [vmem:[#allocation8 + $0x190] sm:$0xff]
        %v724 = vld [vmem:[#allocation8 + $0x198] sm:$0xff]
        %v725 = vld [vmem:[#allocation8 + $0x1a0] sm:$0xff]
        %v726 = vld [vmem:[#allocation8 + $0x1a8] sm:$0xff]
        %v727 = vld [vmem:[#allocation8 + $0x1b0] sm:$0xff]
        %v728 = vld [vmem:[#allocation8 + $0x1b8] sm:$0xff]
        %v729 = vld [vmem:[#allocation8 + $0x1c0] sm:$0xff]
        %v730 = vld [vmem:[#allocation8 + $0x1c8] sm:$0xff]
        %v731 = vld [vmem:[#allocation8 + $0x1d0] sm:$0xff]
        %v732 = vld [vmem:[#allocation8 + $0x1d8] sm:$0xff]
        %v733 = vld [vmem:[#allocation8 + $0x1e0] sm:$0xff]
        %v734 = vld [vmem:[#allocation8 + $0x1e8] sm:$0xff]
        %v735 = vld [vmem:[#allocation8 + $0x1f0] sm:$0xff]
        %v736 = vld [vmem:[#allocation8 + $0x1f8] sm:$0xff]
        %v737 = vld [vmem:[#allocation8 + $0x200] sm:$0xff]
        %v738 = vld [vmem:[#allocation8 + $0x208] sm:$0xff]
        %v739 = vld [vmem:[#allocation8 + $0x210] sm:$0xff]
        %v740 = vld [vmem:[#allocation8 + $0x218] sm:$0xff]
        %v741 = vld [vmem:[#allocation8 + $0x220] sm:$0xff]
        %v742 = vld [vmem:[#allocation8 + $0x228] sm:$0xff]
        %v743 = vld [vmem:[#allocation8 + $0x230] sm:$0xff]
        %v744 = vld [vmem:[#allocation8 + $0x238] sm:$0xff]
        %v745 = vld [vmem:[#allocation8 + $0x240] sm:$0xff]
        %v746 = vld [vmem:[#allocation8 + $0x248] sm:$0xff]
        %v747 = vld [vmem:[#allocation8 + $0x250] sm:$0xff]
        %v748 = vld [vmem:[#allocation8 + $0x258] sm:$0xff]
        %v749 = vld [vmem:[#allocation8 + $0x260] sm:$0xff]
        %v750 = vld [vmem:[#allocation8 + $0x268] sm:$0xff]
        %v751 = vld [vmem:[#allocation8 + $0x270] sm:$0xff]
        %v752 = vld [vmem:[#allocation8 + $0x278] sm:$0xff]
        %v753 = vld [vmem:[#allocation8 + $0x280] sm:$0xff]
        %v754 = vld [vmem:[#allocation8 + $0x288] sm:$0xff]
        %v755 = vld [vmem:[#allocation8 + $0x290] sm:$0xff]
        %v756 = vld [vmem:[#allocation8 + $0x298] sm:$0xff]
        %v757 = vld [vmem:[#allocation8 + $0x2a0] sm:$0xff]
        %v758 = vld [vmem:[#allocation8 + $0x2a8] sm:$0xff]
        %v759 = vld [vmem:[#allocation8 + $0x2b0] sm:$0xff]
        %v760 = vld [vmem:[#allocation8 + $0x2b8] sm:$0xff]
        %v761 = vld [vmem:[#allocation8 + $0x2c0] sm:$0xff]
        %v762 = vld [vmem:[#allocation8 + $0x2c8] sm:$0xff]
        %v763 = vld [vmem:[#allocation8 + $0x2d0] sm:$0xff]
        %v764 = vld [vmem:[#allocation8 + $0x2d8] sm:$0xff]
        %v765 = vld [vmem:[#allocation8 + $0x2e0] sm:$0xff]
        %v766 = vld [vmem:[#allocation8 + $0x2e8] sm:$0xff]
        %v767 = vld [vmem:[#allocation8 + $0x2f0] sm:$0xff]
        %v768 = vld [vmem:[#allocation8 + $0x2f8] sm:$0xff]
        %v769 = vld [vmem:[#allocation8 + $0x300] sm:$0xff]
        %v770 = vld [vmem:[#allocation8 + $0x308] sm:$0xff]
        %v771 = vld [vmem:[#allocation8 + $0x310] sm:$0xff]
        %v772 = vld [vmem:[#allocation8 + $0x318] sm:$0xff]
        %v773 = vld [vmem:[#allocation8 + $0x320] sm:$0xff]
        %v774 = vld [vmem:[#allocation8 + $0x328] sm:$0xff]
        %v775 = vld [vmem:[#allocation8 + $0x330] sm:$0xff]
        %v776 = vld [vmem:[#allocation8 + $0x338] sm:$0xff]
        %v777 = vld [vmem:[#allocation8 + $0x340] sm:$0xff]
        %v778 = vld [vmem:[#allocation8 + $0x348] sm:$0xff]
        %v779 = vld [vmem:[#allocation8 + $0x350] sm:$0xff]
        %v780 = vld [vmem:[#allocation8 + $0x358] sm:$0xff]
        %v781 = vld [vmem:[#allocation8 + $0x360] sm:$0xff]
        %v782 = vld [vmem:[#allocation8 + $0x368] sm:$0xff]
        %v783 = vld [vmem:[#allocation8 + $0x370] sm:$0xff]
        %v784 = vld [vmem:[#allocation8 + $0x378] sm:$0xff]
        %v785 = vld [vmem:[#allocation8 + $0x380] sm:$0xff]
        %v786 = vld [vmem:[#allocation8 + $0x388] sm:$0xff]
        %v787 = vld [vmem:[#allocation8 + $0x390] sm:$0xff]
        %v788 = vld [vmem:[#allocation8 + $0x398] sm:$0xff]
        %v789 = vld [vmem:[#allocation8 + $0x3a0] sm:$0xff]
        %v790 = vld [vmem:[#allocation8 + $0x3a8] sm:$0xff]
        %v791 = vld [vmem:[#allocation8 + $0x3b0] sm:$0xff]
        %v792 = vld [vmem:[#allocation8 + $0x3b8] sm:$0xff]
        %v793 = vld [vmem:[#allocation8 + $0x3c0] sm:$0xff]
        %v794 = vld [vmem:[#allocation8 + $0x3c8] sm:$0xff]
        %v795 = vld [vmem:[#allocation8 + $0x3d0] sm:$0xff]
        %v796 = vld [vmem:[#allocation8 + $0x3d8] sm:$0xff]
        %v797 = vld [vmem:[#allocation8 + $0x3e0] sm:$0xff]
        %v798 = vld [vmem:[#allocation8 + $0x3e8] sm:$0xff]
        %v799 = vld [vmem:[#allocation8 + $0x3f0] sm:$0xff]
        %v800 = vld [vmem:[#allocation8 + $0x3f8] sm:$0xff]
        %v801 = vld [vmem:[#allocation8 + $0x400] sm:$0xff]
        %v802 = vld [vmem:[#allocation8 + $0x408] sm:$0xff]
        %v803 = vld [vmem:[#allocation8 + $0x410] sm:$0xff]
        %v804 = vld [vmem:[#allocation8 + $0x418] sm:$0xff]
        %v805 = vld [vmem:[#allocation8 + $0x420] sm:$0xff]
        %v806 = vld [vmem:[#allocation8 + $0x428] sm:$0xff]
        %v807 = vld [vmem:[#allocation8 + $0x430] sm:$0xff]
        %v808 = vld [vmem:[#allocation8 + $0x438] sm:$0xff]
        %v809 = vld [vmem:[#allocation8 + $0x440] sm:$0xff]
        %v810 = vld [vmem:[#allocation8 + $0x448] sm:$0xff]
        %v811 = vld [vmem:[#allocation8 + $0x450] sm:$0xff]
        %v812 = vld [vmem:[#allocation8 + $0x458] sm:$0xff]
        %v813 = vld [vmem:[#allocation8 + $0x460] sm:$0xff]
        %v814 = vld [vmem:[#allocation8 + $0x468] sm:$0xff]
        %v815 = vld [vmem:[#allocation8 + $0x470] sm:$0xff]
        %v816 = vld [vmem:[#allocation8 + $0x478] sm:$0xff]
        %v817 = vld [vmem:[#allocation8 + $0x480] sm:$0xff]
        %v818 = vld [vmem:[#allocation8 + $0x488] sm:$0xff]
        %v819 = vld [vmem:[#allocation8 + $0x490] sm:$0xff]
        %v820 = vld [vmem:[#allocation8 + $0x498] sm:$0xff]
        %v821 = vld [vmem:[#allocation8 + $0x4a0] sm:$0xff]
        %v822 = vld [vmem:[#allocation8 + $0x4a8] sm:$0xff]
        %v823 = vld [vmem:[#allocation8 + $0x4b0] sm:$0xff]
        %v824 = vld [vmem:[#allocation8 + $0x4b8] sm:$0xff]
        %v825 = vld [vmem:[#allocation8 + $0x4c0] sm:$0xff]
        %v826 = vld [vmem:[#allocation8 + $0x4c8] sm:$0xff]
        %v827 = vld [vmem:[#allocation8 + $0x4d0] sm:$0xff]
        %v828 = vld [vmem:[#allocation8 + $0x4d8] sm:$0xff]
        %v829 = vld [vmem:[#allocation8 + $0x4e0] sm:$0xff]
        %v830 = vld [vmem:[#allocation8 + $0x4e8] sm:$0xff]
        %v831 = vld [vmem:[#allocation8 + $0x4f0] sm:$0xff]
        %v832 = vld [vmem:[#allocation8 + $0x4f8] sm:$0xff]
        %v833 = vld [vmem:[#allocation8 + $0x500] sm:$0xff]
        %v834 = vld [vmem:[#allocation8 + $0x508] sm:$0xff]
        %v835 = vld [vmem:[#allocation8 + $0x510] sm:$0xff]
        %v836 = vld [vmem:[#allocation8 + $0x518] sm:$0xff]
        %v837 = vld [vmem:[#allocation8 + $0x520] sm:$0xff]
        %v838 = vld [vmem:[#allocation8 + $0x528] sm:$0xff]
        %v839 = vld [vmem:[#allocation8 + $0x530] sm:$0xff]
        %v840 = vld [vmem:[#allocation8 + $0x538] sm:$0xff]
        %v841 = vld [vmem:[#allocation8 + $0x540] sm:$0xff]
        %v842 = vld [vmem:[#allocation8 + $0x548] sm:$0xff]
        %v843 = vld [vmem:[#allocation8 + $0x550] sm:$0xff]
        %v844 = vld [vmem:[#allocation8 + $0x558] sm:$0xff]
        %v845 = vld [vmem:[#allocation8 + $0x560] sm:$0xff]
        %v846 = vld [vmem:[#allocation8 + $0x568] sm:$0xff]
        %v847 = vld [vmem:[#allocation8 + $0x570] sm:$0xff]
        %v848 = vld [vmem:[#allocation8 + $0x578] sm:$0xff]
        %v849 = vld [vmem:[#allocation8 + $0x580] sm:$0xff]
        %v850 = vld [vmem:[#allocation8 + $0x588] sm:$0xff]
        %v851 = vld [vmem:[#allocation8 + $0x590] sm:$0xff]
        %v852 = vld [vmem:[#allocation8 + $0x598] sm:$0xff]
        %v853 = vld [vmem:[#allocation8 + $0x5a0] sm:$0xff]
        %v854 = vld [vmem:[#allocation8 + $0x5a8] sm:$0xff]
        %v855 = vld [vmem:[#allocation8 + $0x5b0] sm:$0xff]
        %v856 = vld [vmem:[#allocation8 + $0x5b8] sm:$0xff]
        %v857 = vld [vmem:[#allocation8 + $0x5c0] sm:$0xff]
        %v858 = vld [vmem:[#allocation8 + $0x5c8] sm:$0xff]
        %v859 = vld [vmem:[#allocation8 + $0x5d0] sm:$0xff]
        %v860 = vld [vmem:[#allocation8 + $0x5d8] sm:$0xff]
        %v861 = vld [vmem:[#allocation8 + $0x5e0] sm:$0xff]
        %v862 = vld [vmem:[#allocation8 + $0x5e8] sm:$0xff]
        %v863 = vld [vmem:[#allocation8 + $0x5f0] sm:$0xff]
        %v864 = vld [vmem:[#allocation8 + $0x5f8] sm:$0xff]
        %v865 = vld [vmem:[#allocation8 + $0x600] sm:$0xff]
        %v866 = vld [vmem:[#allocation8 + $0x608] sm:$0xff]
        %v867 = vld [vmem:[#allocation8 + $0x610] sm:$0xff]
        %v868 = vld [vmem:[#allocation8 + $0x618] sm:$0xff]
        %v869 = vld [vmem:[#allocation8 + $0x620] sm:$0xff]
        %v870 = vld [vmem:[#allocation8 + $0x628] sm:$0xff]
        %v871 = vld [vmem:[#allocation8 + $0x630] sm:$0xff]
        %v872 = vld [vmem:[#allocation8 + $0x638] sm:$0xff]
        %v873 = vld [vmem:[#allocation8 + $0x640] sm:$0xff]
        %v874 = vld [vmem:[#allocation8 + $0x648] sm:$0xff]
        %v875 = vld [vmem:[#allocation8 + $0x650] sm:$0xff]
        %v876 = vld [vmem:[#allocation8 + $0x658] sm:$0xff]
        %v877 = vld [vmem:[#allocation8 + $0x660] sm:$0xff]
        %v878 = vld [vmem:[#allocation8 + $0x668] sm:$0xff]
        %v879 = vld [vmem:[#allocation8 + $0x670] sm:$0xff]
        %v880 = vld [vmem:[#allocation8 + $0x678] sm:$0xff]
        %v881 = vld [vmem:[#allocation8 + $0x680] sm:$0xff]
        %v882 = vld [vmem:[#allocation8 + $0x688] sm:$0xff]
        %v883 = vld [vmem:[#allocation8 + $0x690] sm:$0xff]
        %v884 = vld [vmem:[#allocation8 + $0x698] sm:$0xff]
        %v885 = vld [vmem:[#allocation8 + $0x6a0] sm:$0xff]
        %v886 = vld [vmem:[#allocation8 + $0x6a8] sm:$0xff]
        %v887 = vld [vmem:[#allocation8 + $0x6b0] sm:$0xff]
        %v888 = vld [vmem:[#allocation8 + $0x6b8] sm:$0xff]
        %v889 = vld [vmem:[#allocation8 + $0x6c0] sm:$0xff]
        %v890 = vld [vmem:[#allocation8 + $0x6c8] sm:$0xff]
        %v891 = vld [vmem:[#allocation8 + $0x6d0] sm:$0xff]
        %v892 = vld [vmem:[#allocation8 + $0x6d8] sm:$0xff]
        %v893 = vld [vmem:[#allocation8 + $0x6e0] sm:$0xff]
        %v894 = vld [vmem:[#allocation8 + $0x6e8] sm:$0xff]
        %v895 = vld [vmem:[#allocation8 + $0x6f0] sm:$0xff]
        %v896 = vld [vmem:[#allocation8 + $0x6f8] sm:$0xff]
        %v897 = vld [vmem:[#allocation8 + $0x700] sm:$0xff]
        %v898 = vld [vmem:[#allocation8 + $0x708] sm:$0xff]
        %v899 = vld [vmem:[#allocation8 + $0x710] sm:$0xff]
        %v900 = vld [vmem:[#allocation8 + $0x718] sm:$0xff]
        %v901 = vld [vmem:[#allocation8 + $0x720] sm:$0xff]
        %v902 = vld [vmem:[#allocation8 + $0x728] sm:$0xff]
        %v903 = vld [vmem:[#allocation8 + $0x730] sm:$0xff]
        %v904 = vld [vmem:[#allocation8 + $0x738] sm:$0xff]
        %v905 = vld [vmem:[#allocation8 + $0x740] sm:$0xff]
        %v906 = vld [vmem:[#allocation8 + $0x748] sm:$0xff]
        %v907 = vld [vmem:[#allocation8 + $0x750] sm:$0xff]
        %v908 = vld [vmem:[#allocation8 + $0x758] sm:$0xff]
        %v909 = vld [vmem:[#allocation8 + $0x760] sm:$0xff]
        %v910 = vld [vmem:[#allocation8 + $0x768] sm:$0xff]
        %v911 = vld [vmem:[#allocation8 + $0x770] sm:$0xff]
        %v912 = vld [vmem:[#allocation8 + $0x778] sm:$0xff]
        %v913 = vld [vmem:[#allocation8 + $0x780] sm:$0xff]
        %v914 = vld [vmem:[#allocation8 + $0x788] sm:$0xff]
        %v915 = vld [vmem:[#allocation8 + $0x790] sm:$0xff]
        %v916 = vld [vmem:[#allocation8 + $0x798] sm:$0xff]
        %v917 = vld [vmem:[#allocation8 + $0x7a0] sm:$0xff]
        %v918 = vld [vmem:[#allocation8 + $0x7a8] sm:$0xff]
        %v919 = vld [vmem:[#allocation8 + $0x7b0] sm:$0xff]
        %v920 = vld [vmem:[#allocation8 + $0x7b8] sm:$0xff]
        %v921 = vld [vmem:[#allocation8 + $0x7c0] sm:$0xff]
        %v922 = vld [vmem:[#allocation8 + $0x7c8] sm:$0xff]
        %v923 = vld [vmem:[#allocation8 + $0x7d0] sm:$0xff]
        %v924 = vld [vmem:[#allocation8 + $0x7d8] sm:$0xff]
        %v925 = vld [vmem:[#allocation8 + $0x7e0] sm:$0xff]
        %v926 = vld [vmem:[#allocation8 + $0x7e8] sm:$0xff]
        %v927 = vld [vmem:[#allocation8 + $0x7f0] sm:$0xff]
        %v928 = vld [vmem:[#allocation8 + $0x7f8] sm:$0xff]
        %v929 = vld [vmem:[#allocation8 + $0x800] sm:$0xff]
        %v930 = vld [vmem:[#allocation8 + $0x808] sm:$0xff]
        %v931 = vld [vmem:[#allocation8 + $0x810] sm:$0xff]
        %v932 = vld [vmem:[#allocation8 + $0x818] sm:$0xff]
        %v933 = vld [vmem:[#allocation8 + $0x820] sm:$0xff]
        %v934 = vld [vmem:[#allocation8 + $0x828] sm:$0xff]
        %v935 = vld [vmem:[#allocation8 + $0x830] sm:$0xff]
        %v936 = vld [vmem:[#allocation8 + $0x838] sm:$0xff]
        %v937 = vld [vmem:[#allocation8 + $0x840] sm:$0xff]
        %v938 = vld [vmem:[#allocation8 + $0x848] sm:$0xff]
        %v939 = vld [vmem:[#allocation8 + $0x850] sm:$0xff]
        %v940 = vld [vmem:[#allocation8 + $0x858] sm:$0xff]
        %v941 = vld [vmem:[#allocation8 + $0x860] sm:$0xff]
        %v942 = vld [vmem:[#allocation8 + $0x868] sm:$0xff]
        %v943 = vld [vmem:[#allocation8 + $0x870] sm:$0xff]
        %v944 = vld [vmem:[#allocation8 + $0x878] sm:$0xff]
        %v945 = vld [vmem:[#allocation8 + $0x880] sm:$0xff]
        %v946 = vld [vmem:[#allocation8 + $0x888] sm:$0xff]
        %v947 = vld [vmem:[#allocation8 + $0x890] sm:$0xff]
        %v948 = vld [vmem:[#allocation8 + $0x898] sm:$0xff]
        %v949 = vld [vmem:[#allocation8 + $0x8a0] sm:$0xff]
        %v950 = vld [vmem:[#allocation8 + $0x8a8] sm:$0xff]
        %v951 = vld [vmem:[#allocation8 + $0x8b0] sm:$0xff]
        %v952 = vld [vmem:[#allocation8 + $0x8b8] sm:$0xff]
        %v953 = vld [vmem:[#allocation8 + $0x8c0] sm:$0xff]
        %v954 = vld [vmem:[#allocation8 + $0x8c8] sm:$0xff]
        %v955 = vld [vmem:[#allocation8 + $0x8d0] sm:$0xff]
        %v956 = vld [vmem:[#allocation8 + $0x8d8] sm:$0xff]
        %v957 = vld [vmem:[#allocation8 + $0x8e0] sm:$0xff]
        %v958 = vld [vmem:[#allocation8 + $0x8e8] sm:$0xff]
        %v959 = vld [vmem:[#allocation8 + $0x8f0] sm:$0xff]
        %v960 = vld [vmem:[#allocation8 + $0x8f8] sm:$0xff]
        %v961 = vld [vmem:[#allocation8 + $0x900] sm:$0xff]
        %v962 = vld [vmem:[#allocation8 + $0x908] sm:$0xff]
        %v963 = vld [vmem:[#allocation8 + $0x910] sm:$0xff]
        %v964 = vld [vmem:[#allocation8 + $0x918] sm:$0xff]
        %v965 = vld [vmem:[#allocation8 + $0x920] sm:$0xff]
        %v966 = vld [vmem:[#allocation8 + $0x928] sm:$0xff]
        %v967 = vld [vmem:[#allocation8 + $0x930] sm:$0xff]
        %v968 = vld [vmem:[#allocation8 + $0x938] sm:$0xff]
        %v969 = vld [vmem:[#allocation8 + $0x940] sm:$0xff]
        %v970 = vld [vmem:[#allocation8 + $0x948] sm:$0xff]
        %v971 = vld [vmem:[#allocation8 + $0x950] sm:$0xff]
        %v972 = vld [vmem:[#allocation8 + $0x958] sm:$0xff]
        %v973 = vld [vmem:[#allocation8 + $0x960] sm:$0xff]
        %v974 = vld [vmem:[#allocation8 + $0x968] sm:$0xff]
        %v975 = vld [vmem:[#allocation8 + $0x970] sm:$0xff]
        %v976 = vld [vmem:[#allocation8 + $0x978] sm:$0xff]
        %v977 = vld [vmem:[#allocation8 + $0x980] sm:$0xff]
        %v978 = vld [vmem:[#allocation8 + $0x988] sm:$0xff]
        %v979 = vld [vmem:[#allocation8 + $0x990] sm:$0xff]
        %v980 = vld [vmem:[#allocation8 + $0x998] sm:$0xff]
        %v981 = vld [vmem:[#allocation8 + $0x9a0] sm:$0xff]
        %v982 = vld [vmem:[#allocation8 + $0x9a8] sm:$0xff]
        %v983 = vld [vmem:[#allocation8 + $0x9b0] sm:$0xff]
        %v984 = vld [vmem:[#allocation8 + $0x9b8] sm:$0xff]
        %v985 = vld [vmem:[#allocation8 + $0x9c0] sm:$0xff]
        %v986 = vld [vmem:[#allocation8 + $0x9c8] sm:$0xff]
        %v987 = vld [vmem:[#allocation8 + $0x9d0] sm:$0xff]
        %v988 = vld [vmem:[#allocation8 + $0x9d8] sm:$0xff]
        %v989 = vld [vmem:[#allocation8 + $0x9e0] sm:$0xff]
        %v990 = vld [vmem:[#allocation8 + $0x9e8] sm:$0xff]
        %v991 = vld [vmem:[#allocation8 + $0x9f0] sm:$0xff]
        %v992 = vld [vmem:[#allocation8 + $0x9f8] sm:$0xff]
        %v993 = vld [vmem:[#allocation8 + $0xa00] sm:$0xff]
        %v994 = vld [vmem:[#allocation8 + $0xa08] sm:$0xff]
        %v995 = vld [vmem:[#allocation8 + $0xa10] sm:$0xff]
        %v996 = vld [vmem:[#allocation8 + $0xa18] sm:$0xff]
        %v997 = vld [vmem:[#allocation8 + $0xa20] sm:$0xff]
        %v998 = vld [vmem:[#allocation8 + $0xa28] sm:$0xff]
        %v999 = vld [vmem:[#allocation8 + $0xa30] sm:$0xff]
        %v1000 = vld [vmem:[#allocation8 + $0xa38] sm:$0xff]
        %v1001 = vld [vmem:[#allocation8 + $0xa40] sm:$0xff]
        %v1002 = vld [vmem:[#allocation8 + $0xa48] sm:$0xff]
        %v1003 = vld [vmem:[#allocation8 + $0xa50] sm:$0xff]
        %v1004 = vld [vmem:[#allocation8 + $0xa58] sm:$0xff]
        %v1005 = vld [vmem:[#allocation8 + $0xa60] sm:$0xff]
        %v1006 = vld [vmem:[#allocation8 + $0xa68] sm:$0xff]
        %v1007 = vld [vmem:[#allocation8 + $0xa70] sm:$0xff]
        %v1008 = vld [vmem:[#allocation8 + $0xa78] sm:$0xff]
        %v1009 = vld [vmem:[#allocation8 + $0xa80] sm:$0xff]
        %v1010 = vld [vmem:[#allocation8 + $0xa88] sm:$0xff]
        %v1011 = vld [vmem:[#allocation8 + $0xa90] sm:$0xff]
        %v1012 = vld [vmem:[#allocation8 + $0xa98] sm:$0xff]
        %v1013 = vld [vmem:[#allocation8 + $0xaa0] sm:$0xff]
        %v1014 = vld [vmem:[#allocation8 + $0xaa8] sm:$0xff]
        %v1015 = vld [vmem:[#allocation8 + $0xab0] sm:$0xff]
        %v1016 = vld [vmem:[#allocation8 + $0xab8] sm:$0xff]
        %v1017 = vld [vmem:[#allocation8 + $0xac0] sm:$0xff]
        %v1018 = vld [vmem:[#allocation8 + $0xac8] sm:$0xff]
        %v1019 = vld [vmem:[#allocation8 + $0xad0] sm:$0xff]
        %v1020 = vld [vmem:[#allocation8 + $0xad8] sm:$0xff]
        %v1021 = vld [vmem:[#allocation8 + $0xae0] sm:$0xff]
        %v1022 = vld [vmem:[#allocation8 + $0xae8] sm:$0xff]
        %v1023 = vld [vmem:[#allocation8 + $0xaf0] sm:$0xff]
        %v1024 = vld [vmem:[#allocation8 + $0xaf8] sm:$0xff]
        %v1025 = vld [vmem:[#allocation8 + $0xb00] sm:$0xff]
        %v1026 = vld [vmem:[#allocation8 + $0xb08] sm:$0xff]
        %v1027 = vld [vmem:[#allocation8 + $0xb10] sm:$0xff]
        %v1028 = vld [vmem:[#allocation8 + $0xb18] sm:$0xff]
        %v1029 = vld [vmem:[#allocation8 + $0xb20] sm:$0xff]
        %v1030 = vld [vmem:[#allocation8 + $0xb28] sm:$0xff]
        %v1031 = vld [vmem:[#allocation8 + $0xb30] sm:$0xff]
        %v1032 = vld [vmem:[#allocation8 + $0xb38] sm:$0xff]
        %v1033 = vld [vmem:[#allocation8 + $0xb40] sm:$0xff]
        %v1034 = vld [vmem:[#allocation8 + $0xb48] sm:$0xff]
        %v1035 = vld [vmem:[#allocation8 + $0xb50] sm:$0xff]
        %v1036 = vld [vmem:[#allocation8 + $0xb58] sm:$0xff]
        %v1037 = vld [vmem:[#allocation8 + $0xb60] sm:$0xff]
        %v1038 = vld [vmem:[#allocation8 + $0xb68] sm:$0xff]
        %v1039 = vld [vmem:[#allocation8 + $0xb70] sm:$0xff]
        %v1040 = vld [vmem:[#allocation8 + $0xb78] sm:$0xff]
        %v1041 = vld [vmem:[#allocation8 + $0xb80] sm:$0xff]
        %v1042 = vld [vmem:[#allocation8 + $0xb88] sm:$0xff]
        %v1043 = vld [vmem:[#allocation8 + $0xb90] sm:$0xff]
        %v1044 = vld [vmem:[#allocation8 + $0xb98] sm:$0xff]
        %v1045 = vld [vmem:[#allocation8 + $0xba0] sm:$0xff]
        %v1046 = vld [vmem:[#allocation8 + $0xba8] sm:$0xff]
        %v1047 = vld [vmem:[#allocation8 + $0xbb0] sm:$0xff]
        %v1048 = vld [vmem:[#allocation8 + $0xbb8] sm:$0xff]
        %v1049 = vld [vmem:[#allocation8 + $0xbc0] sm:$0xff]
        %v1050 = vld [vmem:[#allocation8 + $0xbc8] sm:$0xff]
        %v1051 = vld [vmem:[#allocation8 + $0xbd0] sm:$0xff]
        %v1052 = vld [vmem:[#allocation8 + $0xbd8] sm:$0xff]
        %v1053 = vld [vmem:[#allocation8 + $0xbe0] sm:$0xff]
        %v1054 = vld [vmem:[#allocation8 + $0xbe8] sm:$0xff]
        %v1055 = vld [vmem:[#allocation8 + $0xbf0] sm:$0xff]
        %v1056 = vld [vmem:[#allocation8 + $0xbf8] sm:$0xff]
        %v1057 = vld [vmem:[#allocation8 + $0xc00] sm:$0xff]
        %v1058 = vld [vmem:[#allocation8 + $0xc08] sm:$0xff]
        %v1059 = vld [vmem:[#allocation8 + $0xc10] sm:$0xff]
        %v1060 = vld [vmem:[#allocation8 + $0xc18] sm:$0xff]
        %v1061 = vld [vmem:[#allocation8 + $0xc20] sm:$0xff]
        %v1062 = vld [vmem:[#allocation8 + $0xc28] sm:$0xff]
        %v1063 = vld [vmem:[#allocation8 + $0xc30] sm:$0xff]
        %v1064 = vld [vmem:[#allocation8 + $0xc38] sm:$0xff]
        %v1065 = vld [vmem:[#allocation8 + $0xc40] sm:$0xff]
        %v1066 = vld [vmem:[#allocation8 + $0xc48] sm:$0xff]
        %v1067 = vld [vmem:[#allocation8 + $0xc50] sm:$0xff]
        %v1068 = vld [vmem:[#allocation8 + $0xc58] sm:$0xff]
        %v1069 = vld [vmem:[#allocation8 + $0xc60] sm:$0xff]
        %v1070 = vld [vmem:[#allocation8 + $0xc68] sm:$0xff]
        %v1071 = vld [vmem:[#allocation8 + $0xc70] sm:$0xff]
        %v1072 = vld [vmem:[#allocation8 + $0xc78] sm:$0xff]
        %v1073 = vld [vmem:[#allocation8 + $0xc80] sm:$0xff]
        %v1074 = vld [vmem:[#allocation8 + $0xc88] sm:$0xff]
        %v1075 = vld [vmem:[#allocation8 + $0xc90] sm:$0xff]
        %v1076 = vld [vmem:[#allocation8 + $0xc98] sm:$0xff]
        %v1077 = vld [vmem:[#allocation8 + $0xca0] sm:$0xff]
        %v1078 = vld [vmem:[#allocation8 + $0xca8] sm:$0xff]
        %v1079 = vld [vmem:[#allocation8 + $0xcb0] sm:$0xff]
        %v1080 = vld [vmem:[#allocation8 + $0xcb8] sm:$0xff]
        %v1081 = vld [vmem:[#allocation8 + $0xcc0] sm:$0xff]
        %v1082 = vld [vmem:[#allocation8 + $0xcc8] sm:$0xff]
        %v1083 = vld [vmem:[#allocation8 + $0xcd0] sm:$0xff]
        %v1084 = vld [vmem:[#allocation8 + $0xcd8] sm:$0xff]
        %v1085 = vld [vmem:[#allocation8 + $0xce0] sm:$0xff]
        %v1086 = vld [vmem:[#allocation8 + $0xce8] sm:$0xff]
        %v1087 = vld [vmem:[#allocation8 + $0xcf0] sm:$0xff]
        %v1088 = vld [vmem:[#allocation8 + $0xcf8] sm:$0xff]
        %v1089 = vld [vmem:[#allocation8 + $0xd00] sm:$0xff]
        %v1090 = vld [vmem:[#allocation8 + $0xd08] sm:$0xff]
        %v1091 = vld [vmem:[#allocation8 + $0xd10] sm:$0xff]
        %v1092 = vld [vmem:[#allocation8 + $0xd18] sm:$0xff]
        %v1093 = vld [vmem:[#allocation8 + $0xd20] sm:$0xff]
        %v1094 = vld [vmem:[#allocation8 + $0xd28] sm:$0xff]
        %v1095 = vld [vmem:[#allocation8 + $0xd30] sm:$0xff]
        %v1096 = vld [vmem:[#allocation8 + $0xd38] sm:$0xff]
        %v1097 = vld [vmem:[#allocation8 + $0xd40] sm:$0xff]
        %v1098 = vld [vmem:[#allocation8 + $0xd48] sm:$0xff]
        %v1099 = vld [vmem:[#allocation8 + $0xd50] sm:$0xff]
        %v1100 = vld [vmem:[#allocation8 + $0xd58] sm:$0xff]
        %v1101 = vld [vmem:[#allocation8 + $0xd60] sm:$0xff]
        %v1102 = vld [vmem:[#allocation8 + $0xd68] sm:$0xff]
        %v1103 = vld [vmem:[#allocation8 + $0xd70] sm:$0xff]
        %v1104 = vld [vmem:[#allocation8 + $0xd78] sm:$0xff]
        %1105 = vmatprep.subr.mxu0 %v674
        %1106 = vmatpush1.msra.mxu0 %v673
        %1107 = vmatprep.subr.mxu0 %v683
        %1108 = vmatpush1.msra.mxu0 %v682
        %1109 = vmatprep.subr.mxu0 %v692
        %1110 = vmatpush1.msra.mxu0 %v691
        %1111 = vmatprep.subr.mxu0 %v701
        %1112 = vmatpush1.msra.mxu0 %v700
        %1113 = vmatprep.subr.mxu0 %v710
        %1114 = vmatpush1.msra.mxu0 %v709
        %1115 = vmatprep.subr.mxu0 %v719
        %1116 = vmatpush1.msra.mxu0 %v718
        %1117 = vmatprep.subr.mxu0 %v728
        %1118 = vmatpush1.msra.mxu0 %v727
        %1119 = vmatprep.subr.mxu0 %v737
        %1120 = vmatpush1.msra.mxu0 %v736
        %1121 = vmatprep.subr.mxu0 %v746
        %1122 = vmatpush1.msra.mxu0 %v745
        %1123 = vmatprep.subr.mxu0 %v755
        %1124 = vmatpush1.msra.mxu0 %v754
        %1125 = vmatprep.subr.mxu0 %v764
        %1126 = vmatpush1.msra.mxu0 %v763
        %1127 = vmatprep.subr.mxu0 %v773
        %1128 = vmatpush1.msra.mxu0 %v772
        %1129 = vmatprep.subr.mxu0 %v782
        %1130 = vmatpush1.msra.mxu0 %v781
        %1131 = vmatprep.subr.mxu0 %v791
        %1132 = vmatpush1.msra.mxu0 %v790
        %1133 = vmatprep.subr.mxu0 %v800
        %1134 = vmatpush1.msra.mxu0 %v799
        %1135 = vmatprep.subr.mxu0 %v809
        %1136 = vmatpush1.msra.mxu0 %v808
        %1137 = vmatprep.subr.mxu0 %v818
        %1138 = vmatpush1.msra.mxu0 %v817
        %1139 = vmatprep.subr.mxu0 %v827
        %1140 = vmatpush1.msra.mxu0 %v826
        %1141 = vmatprep.subr.mxu0 %v836
        %1142 = vmatpush1.msra.mxu0 %v835
        %1143 = vmatprep.subr.mxu0 %v845
        %1144 = vmatpush1.msra.mxu0 %v844
        %1145 = vmatprep.subr.mxu0 %v854
        %1146 = vmatpush1.msra.mxu0 %v853
        %1147 = vmatprep.subr.mxu0 %v863
        %1148 = vmatpush1.msra.mxu0 %v862
        %1149 = vmatprep.subr.mxu0 %v872
        %1150 = vmatpush1.msra.mxu0 %v871
        %1151 = vmatprep.subr.mxu0 %v881
        %1152 = vmatpush1.msra.mxu0 %v880
        %1153 = vmatprep.subr.mxu0 %v890
        %1154 = vmatpush1.msra.mxu0 %v889
        %1155 = vmatprep.subr.mxu0 %v899
        %1156 = vmatpush1.msra.mxu0 %v898
        %1157 = vmatprep.subr.mxu0 %v908
        %1158 = vmatpush1.msra.mxu0 %v907
        %1159 = vmatprep.subr.mxu0 %v917
        %1160 = vmatpush1.msra.mxu0 %v916
        %1161 = vmatprep.subr.mxu0 %v926
        %1162 = vmatpush1.msra.mxu0 %v925
        %1163 = vmatprep.subr.mxu0 %v935
        %1164 = vmatpush1.msra.mxu0 %v934
        %1165 = vmatprep.subr.mxu0 %v944
        %1166 = vmatpush1.msra.mxu0 %v943
        %1167 = vmatprep.subr.mxu0 %v953
        %1168 = vmatpush1.msra.mxu0 %v952
        %1169 = vmatprep.mubr.f32.mxu0 %v668
        %1170 = vmatmul.mubr.f32.gmra.mrb[0].mxu0 %v667
        %v1171 = vpop.f32.mrb[0].mxu0
        %v1172 = vadd.f32 0.0, %v1171
        %v1173 = vpop.f32.mrb[0].mxu0
        %v1174 = vadd.f32 0.0, %v1173
        %1175 = vmatprep.mubr.f32.mxu0 %v671
        %1176 = vmatmul.mubr.f32.gmra.mrb[0].mxu0 %v670
        %v1177 = vpop.f32.mrb[0].mxu0
        %v1178 = vadd.f32 0.0, %v1177
        %v1179 = vpop.f32.mrb[0].mxu0
        %v1180 = vadd.f32 0.0, %v1179
        %1181 = vdwg.mxu0
        %1182 = vmatprep.subr.mxu0 %v962
        %1183 = vmatpush1.msra.mxu0 %v961
        %1184 = vmatprep.subr.mxu0 %v971
        %1185 = vmatpush1.msra.mxu0 %v970
        %1186 = vmatprep.subr.mxu0 %v980
        %1187 = vmatpush1.msra.mxu0 %v979
        %1188 = vmatprep.subr.mxu0 %v989
        %1189 = vmatpush1.msra.mxu0 %v988
        %1190 = vmatprep.subr.mxu0 %v998
        %1191 = vmatpush1.msra.mxu0 %v997
        %1192 = vmatprep.subr.mxu0 %v1007
        %1193 = vmatpush1.msra.mxu0 %v1006
        %1194 = vmatprep.subr.mxu0 %v1016
        %1195 = vmatpush1.msra.mxu0 %v1015
        %1196 = vmatprep.subr.mxu0 %v1025
        %1197 = vmatpush1.msra.mxu0 %v1024
        %1198 = vmatprep.subr.mxu0 %v1034
        %1199 = vmatpush1.msra.mxu0 %v1033
        %1200 = vmatprep.subr.mxu0 %v1043
        %1201 = vmatpush1.msra.mxu0 %v1042
        %1202 = vmatprep.subr.mxu0 %v1052
        %1203 = vmatpush1.msra.mxu0 %v1051
        %1204 = vmatprep.subr.mxu0 %v1061
        %1205 = vmatpush1.msra.mxu0 %v1060
        %1206 = vmatprep.subr.mxu0 %v1070
        %1207 = vmatpush1.msra.mxu0 %v1069
        %1208 = vmatprep.subr.mxu0 %v1079
        %1209 = vmatpush1.msra.mxu0 %v1078
        %1210 = vmatprep.subr.mxu0 %v1088
        %1211 = vmatpush1.msra.mxu0 %v1087
        %1212 = vmatprep.subr.mxu0 %v1097
        %1213 = vmatpush1.msra.mxu0 %v1096
        %1214 = vmatprep.subr.mxu0 0.0
        %1215 = vmatpush1.msra.mxu0 0.0
        %1216 = vmatprep.subr.mxu0 0.0
        %1217 = vmatpush1.msra.mxu0 0.0
        %1218 = vmatprep.subr.mxu0 0.0
        %1219 = vmatpush1.msra.mxu0 0.0
        %1220 = vmatprep.subr.mxu0 0.0
        %1221 = vmatpush1.msra.mxu0 0.0
        %1222 = vmatprep.subr.mxu0 0.0
        %1223 = vmatpush1.msra.mxu0 0.0
        %1224 = vmatprep.subr.mxu0 0.0
        %1225 = vmatpush1.msra.mxu0 0.0
        %1226 = vmatprep.subr.mxu0 0.0
        %1227 = vmatpush1.msra.mxu0 0.0
        %1228 = vmatprep.subr.mxu0 0.0
        %1229 = vmatpush1.msra.mxu0 0.0
        %1230 = vmatprep.subr.mxu0 0.0
        %1231 = vmatpush1.msra.mxu0 0.0
        %1232 = vmatprep.subr.mxu0 0.0
        %1233 = vmatpush1.msra.mxu0 0.0
        %1234 = vmatprep.subr.mxu0 0.0
        %1235 = vmatpush1.msra.mxu0 0.0
        %1236 = vmatprep.subr.mxu0 0.0
        %1237 = vmatpush1.msra.mxu0 0.0
        %1238 = vmatprep.subr.mxu0 0.0
        %1239 = vmatpush1.msra.mxu0 0.0
        %1240 = vmatprep.subr.mxu0 0.0
        %1241 = vmatpush1.msra.mxu0 0.0
        %1242 = vmatprep.subr.mxu0 0.0
        %1243 = vmatpush1.msra.mxu0 0.0
        %1244 = vmatprep.subr.mxu0 0.0
        %1245 = vmatpush1.msra.mxu0 0.0
        %1246 = vmatprep.mubr.f32.mxu0 0.0
        %1247 = vmatmul.mubr.f32.gmra.mrb[0].mxu0 %v669
        %v1248 = vpop.f32.mrb[0].mxu0
        %v1249 = vadd.f32 %v1172, %v1248
        %v1250 = vpop.f32.mrb[0].mxu0
        %v1251 = vadd.f32 %v1174, %v1250
        %1252 = vmatprep.mubr.f32.mxu0 0.0
        %1253 = vmatmul.mubr.f32.gmra.mrb[0].mxu0 %v672
        %v1254 = vpop.f32.mrb[0].mxu0
        %v1255 = vadd.f32 %v1178, %v1254
        %v1256 = vpop.f32.mrb[0].mxu0
        %v1257 = vadd.f32 %v1180, %v1256
        %1258 = vdwg.mxu0
        %1259 = vmatprep.subr.mxu0 %v676
        %1260 = vmatpush1.msra.mxu0 %v675
        %1261 = vmatprep.subr.mxu0 %v685
        %1262 = vmatpush1.msra.mxu0 %v684
        %1263 = vmatprep.subr.mxu0 %v694
        %1264 = vmatpush1.msra.mxu0 %v693
        %1265 = vmatprep.subr.mxu0 %v703
        %1266 = vmatpush1.msra.mxu0 %v702
        %1267 = vmatprep.subr.mxu0 %v712
        %1268 = vmatpush1.msra.mxu0 %v711
        %1269 = vmatprep.subr.mxu0 %v721
        %1270 = vmatpush1.msra.mxu0 %v720
        %1271 = vmatprep.subr.mxu0 %v730
        %1272 = vmatpush1.msra.mxu0 %v729
        %1273 = vmatprep.subr.mxu0 %v739
        %1274 = vmatpush1.msra.mxu0 %v738
        %1275 = vmatprep.subr.mxu0 %v748
        %1276 = vmatpush1.msra.mxu0 %v747
        %1277 = vmatprep.subr.mxu0 %v757
        %1278 = vmatpush1.msra.mxu0 %v756
        %1279 = vmatprep.subr.mxu0 %v766
        %1280 = vmatpush1.msra.mxu0 %v765
        %1281 = vmatprep.subr.mxu0 %v775
        %1282 = vmatpush1.msra.mxu0 %v774
        %1283 = vmatprep.subr.mxu0 %v784
        %1284 = vmatpush1.msra.mxu0 %v783
        %1285 = vmatprep.subr.mxu0 %v793
        %1286 = vmatpush1.msra.mxu0 %v792
        %1287 = vmatprep.subr.mxu0 %v802
        %1288 = vmatpush1.msra.mxu0 %v801
        %1289 = vmatprep.subr.mxu0 %v811
        %1290 = vmatpush1.msra.mxu0 %v810
        %1291 = vmatprep.subr.mxu0 %v820
        %1292 = vmatpush1.msra.mxu0 %v819
        %1293 = vmatprep.subr.mxu0 %v829
        %1294 = vmatpush1.msra.mxu0 %v828
        %1295 = vmatprep.subr.mxu0 %v838
        %1296 = vmatpush1.msra.mxu0 %v837
        %1297 = vmatprep.subr.mxu0 %v847
        %1298 = vmatpush1.msra.mxu0 %v846
        %1299 = vmatprep.subr.mxu0 %v856
        %1300 = vmatpush1.msra.mxu0 %v855
        %1301 = vmatprep.subr.mxu0 %v865
        %1302 = vmatpush1.msra.mxu0 %v864
        %1303 = vmatprep.subr.mxu0 %v874
        %1304 = vmatpush1.msra.mxu0 %v873
        %1305 = vmatprep.subr.mxu0 %v883
        %1306 = vmatpush1.msra.mxu0 %v882
        %1307 = vmatprep.subr.mxu0 %v892
        %1308 = vmatpush1.msra.mxu0 %v891
        %1309 = vmatprep.subr.mxu0 %v901
        %1310 = vmatpush1.msra.mxu0 %v900
        %1311 = vmatprep.subr.mxu0 %v910
        %1312 = vmatpush1.msra.mxu0 %v909
        %1313 = vmatprep.subr.mxu0 %v919
        %1314 = vmatpush1.msra.mxu0 %v918
        %1315 = vmatprep.subr.mxu0 %v928
        %1316 = vmatpush1.msra.mxu0 %v927
        %1317 = vmatprep.subr.mxu0 %v937
        %1318 = vmatpush1.msra.mxu0 %v936
        %1319 = vmatprep.subr.mxu0 %v946
        %1320 = vmatpush1.msra.mxu0 %v945
        %1321 = vmatprep.subr.mxu0 %v955
        %1322 = vmatpush1.msra.mxu0 %v954
        %1323 = vmatprep.mubr.f32.mxu0 %v668
        %1324 = vmatmul.mubr.f32.gmra.mrb[0].mxu0 %v667
        %v1325 = vpop.f32.mrb[0].mxu0
        %v1326 = vadd.f32 0.0, %v1325
        %v1327 = vpop.f32.mrb[0].mxu0
        %v1328 = vadd.f32 0.0, %v1327
        %1329 = vmatprep.mubr.f32.mxu0 %v671
        %1330 = vmatmul.mubr.f32.gmra.mrb[0].mxu0 %v670
        %v1331 = vpop.f32.mrb[0].mxu0
        %v1332 = vadd.f32 0.0, %v1331
        %v1333 = vpop.f32.mrb[0].mxu0
        %v1334 = vadd.f32 0.0, %v1333
        %1335 = vdwg.mxu0
        %1336 = vmatprep.subr.mxu0 %v964
        %1337 = vmatpush1.msra.mxu0 %v963
        %1338 = vmatprep.subr.mxu0 %v973
        %1339 = vmatpush1.msra.mxu0 %v972
        %1340 = vmatprep.subr.mxu0 %v982
        %1341 = vmatpush1.msra.mxu0 %v981
        %1342 = vmatprep.subr.mxu0 %v991
        %1343 = vmatpush1.msra.mxu0 %v990
        %1344 = vmatprep.subr.mxu0 %v1000
        %1345 = vmatpush1.msra.mxu0 %v999
        %1346 = vmatprep.subr.mxu0 %v1009
        %1347 = vmatpush1.msra.mxu0 %v1008
        %1348 = vmatprep.subr.mxu0 %v1018
        %1349 = vmatpush1.msra.mxu0 %v1017
        %1350 = vmatprep.subr.mxu0 %v1027
        %1351 = vmatpush1.msra.mxu0 %v1026
        %1352 = vmatprep.subr.mxu0 %v1036
        %1353 = vmatpush1.msra.mxu0 %v1035
        %1354 = vmatprep.subr.mxu0 %v1045
        %1355 = vmatpush1.msra.mxu0 %v1044
        %1356 = vmatprep.subr.mxu0 %v1054
        %1357 = vmatpush1.msra.mxu0 %v1053
        %1358 = vmatprep.subr.mxu0 %v1063
        %1359 = vmatpush1.msra.mxu0 %v1062
        %1360 = vmatprep.subr.mxu0 %v1072
        %1361 = vmatpush1.msra.mxu0 %v1071
        %1362 = vmatprep.subr.mxu0 %v1081
        %1363 = vmatpush1.msra.mxu0 %v1080
        %1364 = vmatprep.subr.mxu0 %v1090
        %1365 = vmatpush1.msra.mxu0 %v1089
        %1366 = vmatprep.subr.mxu0 %v1099
        %1367 = vmatpush1.msra.mxu0 %v1098
        %1368 = vmatprep.subr.mxu0 0.0
        %1369 = vmatpush1.msra.mxu0 0.0
        %1370 = vmatprep.subr.mxu0 0.0
        %1371 = vmatpush1.msra.mxu0 0.0
        %1372 = vmatprep.subr.mxu0 0.0
        %1373 = vmatpush1.msra.mxu0 0.0
        %1374 = vmatprep.subr.mxu0 0.0
        %1375 = vmatpush1.msra.mxu0 0.0
        %1376 = vmatprep.subr.mxu0 0.0
        %1377 = vmatpush1.msra.mxu0 0.0
        %1378 = vmatprep.subr.mxu0 0.0
        %1379 = vmatpush1.msra.mxu0 0.0
        %1380 = vmatprep.subr.mxu0 0.0
        %1381 = vmatpush1.msra.mxu0 0.0
        %1382 = vmatprep.subr.mxu0 0.0
        %1383 = vmatpush1.msra.mxu0 0.0
        %1384 = vmatprep.subr.mxu0 0.0
        %1385 = vmatpush1.msra.mxu0 0.0
        %1386 = vmatprep.subr.mxu0 0.0
        %1387 = vmatpush1.msra.mxu0 0.0
        %1388 = vmatprep.subr.mxu0 0.0
        %1389 = vmatpush1.msra.mxu0 0.0
        %1390 = vmatprep.subr.mxu0 0.0
        %1391 = vmatpush1.msra.mxu0 0.0
        %1392 = vmatprep.subr.mxu0 0.0
        %1393 = vmatpush1.msra.mxu0 0.0
        %1394 = vmatprep.subr.mxu0 0.0
        %1395 = vmatpush1.msra.mxu0 0.0
        %1396 = vmatprep.subr.mxu0 0.0
        %1397 = vmatpush1.msra.mxu0 0.0
        %1398 = vmatprep.subr.mxu0 0.0
        %1399 = vmatpush1.msra.mxu0 0.0
        %1400 = vmatprep.mubr.f32.mxu0 0.0
        %1401 = vmatmul.mubr.f32.gmra.mrb[0].mxu0 %v669
        %v1402 = vpop.f32.mrb[0].mxu0
        %v1403 = vadd.f32 %v1326, %v1402
        %v1404 = vpop.f32.mrb[0].mxu0
        %v1405 = vadd.f32 %v1328, %v1404
        %1406 = vmatprep.mubr.f32.mxu0 0.0
        %1407 = vmatmul.mubr.f32.gmra.mrb[0].mxu0 %v672
        %v1408 = vpop.f32.mrb[0].mxu0
        %v1409 = vadd.f32 %v1332, %v1408
        %v1410 = vpop.f32.mrb[0].mxu0
        %v1411 = vadd.f32 %v1334, %v1410
        %1412 = vdwg.mxu0
        %1413 = vmatprep.subr.mxu0 %v678
        %1414 = vmatpush1.msra.mxu0 %v677
        %1415 = vmatprep.subr.mxu0 %v687
        %1416 = vmatpush1.msra.mxu0 %v686
        %1417 = vmatprep.subr.mxu0 %v696
        %1418 = vmatpush1.msra.mxu0 %v695
        %1419 = vmatprep.subr.mxu0 %v705
        %1420 = vmatpush1.msra.mxu0 %v704
        %1421 = vmatprep.subr.mxu0 %v714
        %1422 = vmatpush1.msra.mxu0 %v713
        %1423 = vmatprep.subr.mxu0 %v723
        %1424 = vmatpush1.msra.mxu0 %v722
        %1425 = vmatprep.subr.mxu0 %v732
        %1426 = vmatpush1.msra.mxu0 %v731
        %1427 = vmatprep.subr.mxu0 %v741
        %1428 = vmatpush1.msra.mxu0 %v740
        %1429 = vmatprep.subr.mxu0 %v750
        %1430 = vmatpush1.msra.mxu0 %v749
        %1431 = vmatprep.subr.mxu0 %v759
        %1432 = vmatpush1.msra.mxu0 %v758
        %1433 = vmatprep.subr.mxu0 %v768
        %1434 = vmatpush1.msra.mxu0 %v767
        %1435 = vmatprep.subr.mxu0 %v777
        %1436 = vmatpush1.msra.mxu0 %v776
        %1437 = vmatprep.subr.mxu0 %v786
        %1438 = vmatpush1.msra.mxu0 %v785
        %1439 = vmatprep.subr.mxu0 %v795
        %1440 = vmatpush1.msra.mxu0 %v794
        %1441 = vmatprep.subr.mxu0 %v804
        %1442 = vmatpush1.msra.mxu0 %v803
        %1443 = vmatprep.subr.mxu0 %v813
        %1444 = vmatpush1.msra.mxu0 %v812
        %1445 = vmatprep.subr.mxu0 %v822
        %1446 = vmatpush1.msra.mxu0 %v821
        %1447 = vmatprep.subr.mxu0 %v831
        %1448 = vmatpush1.msra.mxu0 %v830
        %1449 = vmatprep.subr.mxu0 %v840
        %1450 = vmatpush1.msra.mxu0 %v839
        %1451 = vmatprep.subr.mxu0 %v849
        %1452 = vmatpush1.msra.mxu0 %v848
        %1453 = vmatprep.subr.mxu0 %v858
        %1454 = vmatpush1.msra.mxu0 %v857
        %1455 = vmatprep.subr.mxu0 %v867
        %1456 = vmatpush1.msra.mxu0 %v866
        %1457 = vmatprep.subr.mxu0 %v876
        %1458 = vmatpush1.msra.mxu0 %v875
        %1459 = vmatprep.subr.mxu0 %v885
        %1460 = vmatpush1.msra.mxu0 %v884
        %1461 = vmatprep.subr.mxu0 %v894
        %1462 = vmatpush1.msra.mxu0 %v893
        %1463 = vmatprep.subr.mxu0 %v903
        %1464 = vmatpush1.msra.mxu0 %v902
        %1465 = vmatprep.subr.mxu0 %v912
        %1466 = vmatpush1.msra.mxu0 %v911
        %1467 = vmatprep.subr.mxu0 %v921
        %1468 = vmatpush1.msra.mxu0 %v920
        %1469 = vmatprep.subr.mxu0 %v930
        %1470 = vmatpush1.msra.mxu0 %v929
        %1471 = vmatprep.subr.mxu0 %v939
        %1472 = vmatpush1.msra.mxu0 %v938
        %1473 = vmatprep.subr.mxu0 %v948
        %1474 = vmatpush1.msra.mxu0 %v947
        %1475 = vmatprep.subr.mxu0 %v957
        %1476 = vmatpush1.msra.mxu0 %v956
        %1477 = vmatprep.mubr.f32.mxu0 %v668
        %1478 = vmatmul.mubr.f32.gmra.mrb[0].mxu0 %v667
        %v1479 = vpop.f32.mrb[0].mxu0
        %v1480 = vadd.f32 0.0, %v1479
        %v1481 = vpop.f32.mrb[0].mxu0
        %v1482 = vadd.f32 0.0, %v1481
        %1483 = vmatprep.mubr.f32.mxu0 %v671
        %1484 = vmatmul.mubr.f32.gmra.mrb[0].mxu0 %v670
        %v1485 = vpop.f32.mrb[0].mxu0
        %v1486 = vadd.f32 0.0, %v1485
        %v1487 = vpop.f32.mrb[0].mxu0
        %v1488 = vadd.f32 0.0, %v1487
        %1489 = vdwg.mxu0
        %1490 = vmatprep.subr.mxu0 %v966
        %1491 = vmatpush1.msra.mxu0 %v965
        %1492 = vmatprep.subr.mxu0 %v975
        %1493 = vmatpush1.msra.mxu0 %v974
        %1494 = vmatprep.subr.mxu0 %v984
        %1495 = vmatpush1.msra.mxu0 %v983
        %1496 = vmatprep.subr.mxu0 %v993
        %1497 = vmatpush1.msra.mxu0 %v992
        %1498 = vmatprep.subr.mxu0 %v1002
        %1499 = vmatpush1.msra.mxu0 %v1001
        %1500 = vmatprep.subr.mxu0 %v1011
        %1501 = vmatpush1.msra.mxu0 %v1010
        %1502 = vmatprep.subr.mxu0 %v1020
        %1503 = vmatpush1.msra.mxu0 %v1019
        %1504 = vmatprep.subr.mxu0 %v1029
        %1505 = vmatpush1.msra.mxu0 %v1028
        %1506 = vmatprep.subr.mxu0 %v1038
        %1507 = vmatpush1.msra.mxu0 %v1037
        %1508 = vmatprep.subr.mxu0 %v1047
        %1509 = vmatpush1.msra.mxu0 %v1046
        %1510 = vmatprep.subr.mxu0 %v1056
        %1511 = vmatpush1.msra.mxu0 %v1055
        %1512 = vmatprep.subr.mxu0 %v1065
        %1513 = vmatpush1.msra.mxu0 %v1064
        %1514 = vmatprep.subr.mxu0 %v1074
        %1515 = vmatpush1.msra.mxu0 %v1073
        %1516 = vmatprep.subr.mxu0 %v1083
        %1517 = vmatpush1.msra.mxu0 %v1082
        %1518 = vmatprep.subr.mxu0 %v1092
        %1519 = vmatpush1.msra.mxu0 %v1091
        %1520 = vmatprep.subr.mxu0 %v1101
        %1521 = vmatpush1.msra.mxu0 %v1100
        %1522 = vmatprep.subr.mxu0 0.0
        %1523 = vmatpush1.msra.mxu0 0.0
        %1524 = vmatprep.subr.mxu0 0.0
        %1525 = vmatpush1.msra.mxu0 0.0
        %1526 = vmatprep.subr.mxu0 0.0
        %1527 = vmatpush1.msra.mxu0 0.0
        %1528 = vmatprep.subr.mxu0 0.0
        %1529 = vmatpush1.msra.mxu0 0.0
        %1530 = vmatprep.subr.mxu0 0.0
        %1531 = vmatpush1.msra.mxu0 0.0
        %1532 = vmatprep.subr.mxu0 0.0
        %1533 = vmatpush1.msra.mxu0 0.0
        %1534 = vmatprep.subr.mxu0 0.0
        %1535 = vmatpush1.msra.mxu0 0.0
        %1536 = vmatprep.subr.mxu0 0.0
        %1537 = vmatpush1.msra.mxu0 0.0
        %1538 = vmatprep.subr.mxu0 0.0
        %1539 = vmatpush1.msra.mxu0 0.0
        %1540 = vmatprep.subr.mxu0 0.0
        %1541 = vmatpush1.msra.mxu0 0.0
        %1542 = vmatprep.subr.mxu0 0.0
        %1543 = vmatpush1.msra.mxu0 0.0
        %1544 = vmatprep.subr.mxu0 0.0
        %1545 = vmatpush1.msra.mxu0 0.0
        %1546 = vmatprep.subr.mxu0 0.0
        %1547 = vmatpush1.msra.mxu0 0.0
        %1548 = vmatprep.subr.mxu0 0.0
        %1549 = vmatpush1.msra.mxu0 0.0
        %1550 = vmatprep.subr.mxu0 0.0
        %1551 = vmatpush1.msra.mxu0 0.0
        %1552 = vmatprep.subr.mxu0 0.0
        %1553 = vmatpush1.msra.mxu0 0.0
        %1554 = vmatprep.mubr.f32.mxu0 0.0
        %1555 = vmatmul.mubr.f32.gmra.mrb[0].mxu0 %v669
        %v1556 = vpop.f32.mrb[0].mxu0
        %v1557 = vadd.f32 %v1480, %v1556
        %v1558 = vpop.f32.mrb[0].mxu0
        %v1559 = vadd.f32 %v1482, %v1558
        %1560 = vmatprep.mubr.f32.mxu0 0.0
        %1561 = vmatmul.mubr.f32.gmra.mrb[0].mxu0 %v672
        %v1562 = vpop.f32.mrb[0].mxu0
        %v1563 = vadd.f32 %v1486, %v1562
        %v1564 = vpop.f32.mrb[0].mxu0
        %v1565 = vadd.f32 %v1488, %v1564
        %1566 = vdwg.mxu0
        %1567 = vmatprep.subr.mxu0 %v680
        %1568 = vmatpush1.msra.mxu0 %v679
        %1569 = vmatprep.subr.mxu0 %v689
        %1570 = vmatpush1.msra.mxu0 %v688
        %1571 = vmatprep.subr.mxu0 %v698
        %1572 = vmatpush1.msra.mxu0 %v697
        %1573 = vmatprep.subr.mxu0 %v707
        %1574 = vmatpush1.msra.mxu0 %v706
        %1575 = vmatprep.subr.mxu0 %v716
        %1576 = vmatpush1.msra.mxu0 %v715
        %1577 = vmatprep.subr.mxu0 %v725
        %1578 = vmatpush1.msra.mxu0 %v724
        %1579 = vmatprep.subr.mxu0 %v734
        %1580 = vmatpush1.msra.mxu0 %v733
        %1581 = vmatprep.subr.mxu0 %v743
        %1582 = vmatpush1.msra.mxu0 %v742
        %1583 = vmatprep.subr.mxu0 %v752
        %1584 = vmatpush1.msra.mxu0 %v751
        %1585 = vmatprep.subr.mxu0 %v761
        %1586 = vmatpush1.msra.mxu0 %v760
        %1587 = vmatprep.subr.mxu0 %v770
        %1588 = vmatpush1.msra.mxu0 %v769
        %1589 = vmatprep.subr.mxu0 %v779
        %1590 = vmatpush1.msra.mxu0 %v778
        %1591 = vmatprep.subr.mxu0 %v788
        %1592 = vmatpush1.msra.mxu0 %v787
        %1593 = vmatprep.subr.mxu0 %v797
        %1594 = vmatpush1.msra.mxu0 %v796
        %1595 = vmatprep.subr.mxu0 %v806
        %1596 = vmatpush1.msra.mxu0 %v805
        %1597 = vmatprep.subr.mxu0 %v815
        %1598 = vmatpush1.msra.mxu0 %v814
        %1599 = vmatprep.subr.mxu0 %v824
        %1600 = vmatpush1.msra.mxu0 %v823
        %1601 = vmatprep.subr.mxu0 %v833
        %1602 = vmatpush1.msra.mxu0 %v832
        %1603 = vmatprep.subr.mxu0 %v842
        %1604 = vmatpush1.msra.mxu0 %v841
        %1605 = vmatprep.subr.mxu0 %v851
        %1606 = vmatpush1.msra.mxu0 %v850
        %1607 = vmatprep.subr.mxu0 %v860
        %1608 = vmatpush1.msra.mxu0 %v859
        %1609 = vmatprep.subr.mxu0 %v869
        %1610 = vmatpush1.msra.mxu0 %v868
        %1611 = vmatprep.subr.mxu0 %v878
        %1612 = vmatpush1.msra.mxu0 %v877
        %1613 = vmatprep.subr.mxu0 %v887
        %1614 = vmatpush1.msra.mxu0 %v886
        %1615 = vmatprep.subr.mxu0 %v896
        %1616 = vmatpush1.msra.mxu0 %v895
        %1617 = vmatprep.subr.mxu0 %v905
        %1618 = vmatpush1.msra.mxu0 %v904
        %1619 = vmatprep.subr.mxu0 %v914
        %1620 = vmatpush1.msra.mxu0 %v913
        %1621 = vmatprep.subr.mxu0 %v923
        %1622 = vmatpush1.msra.mxu0 %v922
        %1623 = vmatprep.subr.mxu0 %v932
        %1624 = vmatpush1.msra.mxu0 %v931
        %1625 = vmatprep.subr.mxu0 %v941
        %1626 = vmatpush1.msra.mxu0 %v940
        %1627 = vmatprep.subr.mxu0 %v950
        %1628 = vmatpush1.msra.mxu0 %v949
        %1629 = vmatprep.subr.mxu0 %v959
        %1630 = vmatpush1.msra.mxu0 %v958
        %1631 = vmatprep.mubr.f32.mxu0 %v668
        %1632 = vmatmul.mubr.f32.gmra.mrb[0].mxu0 %v667
        %v1633 = vpop.f32.mrb[0].mxu0
        %v1634 = vadd.f32 0.0, %v1633
        %v1635 = vpop.f32.mrb[0].mxu0
        %v1636 = vadd.f32 0.0, %v1635
        %1637 = vmatprep.mubr.f32.mxu0 %v671
        %1638 = vmatmul.mubr.f32.gmra.mrb[0].mxu0 %v670
        %v1639 = vpop.f32.mrb[0].mxu0
        %v1640 = vadd.f32 0.0, %v1639
        %v1641 = vpop.f32.mrb[0].mxu0
        %v1642 = vadd.f32 0.0, %v1641
        %1643 = vdwg.mxu0
        %1644 = vmatprep.subr.mxu0 %v968
        %1645 = vmatpush1.msra.mxu0 %v967
        %1646 = vmatprep.subr.mxu0 %v977
        %1647 = vmatpush1.msra.mxu0 %v976
        %1648 = vmatprep.subr.mxu0 %v986
        %1649 = vmatpush1.msra.mxu0 %v985
        %1650 = vmatprep.subr.mxu0 %v995
        %1651 = vmatpush1.msra.mxu0 %v994
        %1652 = vmatprep.subr.mxu0 %v1004
        %1653 = vmatpush1.msra.mxu0 %v1003
        %1654 = vmatprep.subr.mxu0 %v1013
        %1655 = vmatpush1.msra.mxu0 %v1012
        %1656 = vmatprep.subr.mxu0 %v1022
        %1657 = vmatpush1.msra.mxu0 %v1021
        %1658 = vmatprep.subr.mxu0 %v1031
        %1659 = vmatpush1.msra.mxu0 %v1030
        %1660 = vmatprep.subr.mxu0 %v1040
        %1661 = vmatpush1.msra.mxu0 %v1039
        %1662 = vmatprep.subr.mxu0 %v1049
        %1663 = vmatpush1.msra.mxu0 %v1048
        %1664 = vmatprep.subr.mxu0 %v1058
        %1665 = vmatpush1.msra.mxu0 %v1057
        %1666 = vmatprep.subr.mxu0 %v1067
        %1667 = vmatpush1.msra.mxu0 %v1066
        %1668 = vmatprep.subr.mxu0 %v1076
        %1669 = vmatpush1.msra.mxu0 %v1075
        %1670 = vmatprep.subr.mxu0 %v1085
        %1671 = vmatpush1.msra.mxu0 %v1084
        %1672 = vmatprep.subr.mxu0 %v1094
        %1673 = vmatpush1.msra.mxu0 %v1093
        %1674 = vmatprep.subr.mxu0 %v1103
        %1675 = vmatpush1.msra.mxu0 %v1102
        %1676 = vmatprep.subr.mxu0 0.0
        %1677 = vmatpush1.msra.mxu0 0.0
        %1678 = vmatprep.subr.mxu0 0.0
        %1679 = vmatpush1.msra.mxu0 0.0
        %1680 = vmatprep.subr.mxu0 0.0
        %1681 = vmatpush1.msra.mxu0 0.0
        %1682 = vmatprep.subr.mxu0 0.0
        %1683 = vmatpush1.msra.mxu0 0.0
        %1684 = vmatprep.subr.mxu0 0.0
        %1685 = vmatpush1.msra.mxu0 0.0
        %1686 = vmatprep.subr.mxu0 0.0
        %1687 = vmatpush1.msra.mxu0 0.0
        %1688 = vmatprep.subr.mxu0 0.0
        %1689 = vmatpush1.msra.mxu0 0.0
        %1690 = vmatprep.subr.mxu0 0.0
        %1691 = vmatpush1.msra.mxu0 0.0
        %1692 = vmatprep.subr.mxu0 0.0
        %1693 = vmatpush1.msra.mxu0 0.0
        %1694 = vmatprep.subr.mxu0 0.0
        %1695 = vmatpush1.msra.mxu0 0.0
        %1696 = vmatprep.subr.mxu0 0.0
        %1697 = vmatpush1.msra.mxu0 0.0
        %1698 = vmatprep.subr.mxu0 0.0
        %1699 = vmatpush1.msra.mxu0 0.0
        %1700 = vmatprep.subr.mxu0 0.0
        %1701 = vmatpush1.msra.mxu0 0.0
        %1702 = vmatprep.subr.mxu0 0.0
        %1703 = vmatpush1.msra.mxu0 0.0
        %1704 = vmatprep.subr.mxu0 0.0
        %1705 = vmatpush1.msra.mxu0 0.0
        %1706 = vmatprep.subr.mxu0 0.0
        %1707 = vmatpush1.msra.mxu0 0.0
        %1708 = vmatprep.mubr.f32.mxu0 0.0
        %1709 = vmatmul.mubr.f32.gmra.mrb[0].mxu0 %v669
        %v1710 = vpop.f32.mrb[0].mxu0
        %v1711 = vadd.f32 %v1634, %v1710
        %v1712 = vpop.f32.mrb[0].mxu0
        %v1713 = vadd.f32 %v1636, %v1712
        %1714 = vmatprep.mubr.f32.mxu0 0.0
        %1715 = vmatmul.mubr.f32.gmra.mrb[0].mxu0 %v672
        %v1716 = vpop.f32.mrb[0].mxu0
        %v1717 = vadd.f32 %v1640, %v1716
        %v1718 = vpop.f32.mrb[0].mxu0
        %v1719 = vadd.f32 %v1642, %v1718
        %1720 = vdwg.mxu0
        %1721 = vmatprep.subr.mxu0 0.0
        %1722 = vmatpush1.msra.mxu0 %v681
        %1723 = vmatprep.subr.mxu0 0.0
        %1724 = vmatpush1.msra.mxu0 %v690
        %1725 = vmatprep.subr.mxu0 0.0
        %1726 = vmatpush1.msra.mxu0 %v699
        %1727 = vmatprep.subr.mxu0 0.0
        %1728 = vmatpush1.msra.mxu0 %v708
        %1729 = vmatprep.subr.mxu0 0.0
        %1730 = vmatpush1.msra.mxu0 %v717
        %1731 = vmatprep.subr.mxu0 0.0
        %1732 = vmatpush1.msra.mxu0 %v726
        %1733 = vmatprep.subr.mxu0 0.0
        %1734 = vmatpush1.msra.mxu0 %v735
        %1735 = vmatprep.subr.mxu0 0.0
        %1736 = vmatpush1.msra.mxu0 %v744
        %1737 = vmatprep.subr.mxu0 0.0
        %1738 = vmatpush1.msra.mxu0 %v753
        %1739 = vmatprep.subr.mxu0 0.0
        %1740 = vmatpush1.msra.mxu0 %v762
        %1741 = vmatprep.subr.mxu0 0.0
        %1742 = vmatpush1.msra.mxu0 %v771
        %1743 = vmatprep.subr.mxu0 0.0
        %1744 = vmatpush1.msra.mxu0 %v780
        %1745 = vmatprep.subr.mxu0 0.0
        %1746 = vmatpush1.msra.mxu0 %v789
        %1747 = vmatprep.subr.mxu0 0.0
        %1748 = vmatpush1.msra.mxu0 %v798
        %1749 = vmatprep.subr.mxu0 0.0
        %1750 = vmatpush1.msra.mxu0 %v807
        %1751 = vmatprep.subr.mxu0 0.0
        %1752 = vmatpush1.msra.mxu0 %v816
        %1753 = vmatprep.subr.mxu0 0.0
        %1754 = vmatpush1.msra.mxu0 %v825
        %1755 = vmatprep.subr.mxu0 0.0
        %1756 = vmatpush1.msra.mxu0 %v834
        %1757 = vmatprep.subr.mxu0 0.0
        %1758 = vmatpush1.msra.mxu0 %v843
        %1759 = vmatprep.subr.mxu0 0.0
        %1760 = vmatpush1.msra.mxu0 %v852
        %1761 = vmatprep.subr.mxu0 0.0
        %1762 = vmatpush1.msra.mxu0 %v861
        %1763 = vmatprep.subr.mxu0 0.0
        %1764 = vmatpush1.msra.mxu0 %v870
        %1765 = vmatprep.subr.mxu0 0.0
        %1766 = vmatpush1.msra.mxu0 %v879
        %1767 = vmatprep.subr.mxu0 0.0
        %1768 = vmatpush1.msra.mxu0 %v888
        %1769 = vmatprep.subr.mxu0 0.0
        %1770 = vmatpush1.msra.mxu0 %v897
        %1771 = vmatprep.subr.mxu0 0.0
        %1772 = vmatpush1.msra.mxu0 %v906
        %1773 = vmatprep.subr.mxu0 0.0
        %1774 = vmatpush1.msra.mxu0 %v915
        %1775 = vmatprep.subr.mxu0 0.0
        %1776 = vmatpush1.msra.mxu0 %v924
        %1777 = vmatprep.subr.mxu0 0.0
        %1778 = vmatpush1.msra.mxu0 %v933
        %1779 = vmatprep.subr.mxu0 0.0
        %1780 = vmatpush1.msra.mxu0 %v942
        %1781 = vmatprep.subr.mxu0 0.0
        %1782 = vmatpush1.msra.mxu0 %v951
        %1783 = vmatprep.subr.mxu0 0.0
        %1784 = vmatpush1.msra.mxu0 %v960
        %1785 = vmatprep.mubr.f32.mxu0 %v668
        %1786 = vmatmul.mubr.f32.gmra.mrb[0].mxu0 %v667
        %v1787 = vpop.f32.mrb[0].mxu0
        %v1788 = vadd.f32 0.0, %v1787
        %v1789 = vpop.f32.mrb[0].mxu0
        %1790 = vmatprep.mubr.f32.mxu0 %v671
        %1791 = vmatmul.mubr.f32.gmra.mrb[0].mxu0 %v670
        %v1792 = vpop.f32.mrb[0].mxu0
        %v1793 = vadd.f32 0.0, %v1792
        %v1794 = vpop.f32.mrb[0].mxu0
        %1795 = vdwg.mxu0
        %1796 = vmatprep.subr.mxu0 0.0
        %1797 = vmatpush1.msra.mxu0 %v969
        %1798 = vmatprep.subr.mxu0 0.0
        %1799 = vmatpush1.msra.mxu0 %v978
        %1800 = vmatprep.subr.mxu0 0.0
        %1801 = vmatpush1.msra.mxu0 %v987
        %1802 = vmatprep.subr.mxu0 0.0
        %1803 = vmatpush1.msra.mxu0 %v996
        %1804 = vmatprep.subr.mxu0 0.0
        %1805 = vmatpush1.msra.mxu0 %v1005
        %1806 = vmatprep.subr.mxu0 0.0
        %1807 = vmatpush1.msra.mxu0 %v1014
        %1808 = vmatprep.subr.mxu0 0.0
        %1809 = vmatpush1.msra.mxu0 %v1023
        %1810 = vmatprep.subr.mxu0 0.0
        %1811 = vmatpush1.msra.mxu0 %v1032
        %1812 = vmatprep.subr.mxu0 0.0
        %1813 = vmatpush1.msra.mxu0 %v1041
        %1814 = vmatprep.subr.mxu0 0.0
        %1815 = vmatpush1.msra.mxu0 %v1050
        %1816 = vmatprep.subr.mxu0 0.0
        %1817 = vmatpush1.msra.mxu0 %v1059
        %1818 = vmatprep.subr.mxu0 0.0
        %1819 = vmatpush1.msra.mxu0 %v1068
        %1820 = vmatprep.subr.mxu0 0.0
        %1821 = vmatpush1.msra.mxu0 %v1077
        %1822 = vmatprep.subr.mxu0 0.0
        %1823 = vmatpush1.msra.mxu0 %v1086
        %1824 = vmatprep.subr.mxu0 0.0
        %1825 = vmatpush1.msra.mxu0 %v1095
        %1826 = vmatprep.subr.mxu0 0.0
        %1827 = vmatpush1.msra.mxu0 %v1104
        %1828 = vmatprep.subr.mxu0 0.0
        %1829 = vmatpush1.msra.mxu0 0.0
        %1830 = vmatprep.subr.mxu0 0.0
        %1831 = vmatpush1.msra.mxu0 0.0
        %1832 = vmatprep.subr.mxu0 0.0
        %1833 = vmatpush1.msra.mxu0 0.0
        %1834 = vmatprep.subr.mxu0 0.0
        %1835 = vmatpush1.msra.mxu0 0.0
        %1836 = vmatprep.subr.mxu0 0.0
        %1837 = vmatpush1.msra.mxu0 0.0
        %1838 = vmatprep.subr.mxu0 0.0
        %1839 = vmatpush1.msra.mxu0 0.0
        %1840 = vmatprep.subr.mxu0 0.0
        %1841 = vmatpush1.msra.mxu0 0.0
        %1842 = vmatprep.subr.mxu0 0.0
        %1843 = vmatpush1.msra.mxu0 0.0
        %1844 = vmatprep.subr.mxu0 0.0
        %1845 = vmatpush1.msra.mxu0 0.0
        %1846 = vmatprep.subr.mxu0 0.0
        %1847 = vmatpush1.msra.mxu0 0.0
        %1848 = vmatprep.subr.mxu0 0.0
        %1849 = vmatpush1.msra.mxu0 0.0
        %1850 = vmatprep.subr.mxu0 0.0
        %1851 = vmatpush1.msra.mxu0 0.0
        %1852 = vmatprep.subr.mxu0 0.0
        %1853 = vmatpush1.msra.mxu0 0.0
        %1854 = vmatprep.subr.mxu0 0.0
        %1855 = vmatpush1.msra.mxu0 0.0
        %1856 = vmatprep.subr.mxu0 0.0
        %1857 = vmatpush1.msra.mxu0 0.0
        %1858 = vmatprep.subr.mxu0 0.0
        %1859 = vmatpush1.msra.mxu0 0.0
        %1860 = vmatprep.mubr.f32.mxu0 0.0
        %1861 = vmatmul.mubr.f32.gmra.mrb[0].mxu0 %v669
        %v1862 = vpop.f32.mrb[0].mxu0
        %v1863 = vadd.f32 %v1788, %v1862
        %v1864 = vpop.f32.mrb[0].mxu0
        %1865 = vmatprep.mubr.f32.mxu0 0.0
        %1866 = vmatmul.mubr.f32.gmra.mrb[0].mxu0 %v672
        %v1867 = vpop.f32.mrb[0].mxu0
        %v1868 = vadd.f32 %v1793, %v1867
        %v1869 = vpop.f32.mrb[0].mxu0
        %1870 = vdwg.mxu0
        %v1871 = vlaneseq
        %v1872 = vshrl.u32 %v1871, 7
        %v1873 = vadd.s32 %v1872, 8
        %v1874 = vlaneseq
        %v1875 = vand.u32 %v1874, 127
        %vm1876 = vcmp.ge.s32.totalorder %v1872, %v1875
        %vm1877 = vcmp.ge.s32.totalorder %v1873, %v1875
        %vm1878 = vcmask 523264
        %v1880 = vsel %vm1878, %v1249, 0
        %v1883 = vsel %vm1878, %v1255, 0
        %v1886 = vsel %vm1878, %v1405, 0
        %v1889 = vsel %vm1878, %v1411, 0
        %1891 = vmatprep.subr.mxu0 0.0
        %1892 = vmatpush1.xpose.msra.mxu0 %v1886
        %1893 = vmatprep.subr.mxu0 0.0
        %1894 = vmatpush1.xpose.msra.mxu0 %v1889
        %1895 = vmatprep.subr.mxu0 0.0
        %1896 = vmatpush1.xpose.msra.mxu0 0.0
        %1897 = vmatprep.subr.mxu0 0.0
        %1898 = vmatpush1.xpose.msra.mxu0 0.0
        %1899 = vmatprep.subr.mxu0 0.0
        %1900 = vmatpush1.xpose.msra.mxu0 0.0
        %1901 = vmatprep.subr.mxu0 0.0
        %1902 = vmatpush1.xpose.msra.mxu0 0.0
        %1903 = vmatprep.subr.mxu0 0.0
        %1904 = vmatpush1.xpose.msra.mxu0 0.0
        %1905 = vmatprep.subr.mxu0 0.0
        %1906 = vmatpush1.xpose.msra.mxu0 0.0
        %1907 = vmatprep.subr.mxu0 0.0
        %1908 = vmatpush1.xpose.msra.mxu0 0.0
        %1909 = vmatprep.subr.mxu0 0.0
        %1910 = vmatpush1.xpose.msra.mxu0 0.0
        %1911 = vmatprep.subr.mxu0 0.0
        %1912 = vmatpush1.xpose.msra.mxu0 0.0
        %1913 = vmatprep.subr.mxu0 0.0
        %1914 = vmatpush1.xpose.msra.mxu0 0.0
        %1915 = vmatprep.subr.mxu0 0.0
        %1916 = vmatpush1.xpose.msra.mxu0 0.0
        %1917 = vmatprep.subr.mxu0 0.0
        %1918 = vmatpush1.xpose.msra.mxu0 0.0
        %1919 = vmatprep.subr.mxu0 0.0
        %1920 = vmatpush1.xpose.msra.mxu0 0.0
        %1921 = vmatprep.subr.mxu0 0.0
        %1922 = vmatpush1.xpose.msra.mxu0 0.0
        %1923 = vmatprep.subr.mxu0 0.0
        %1924 = vmatpush1.xpose.msra.mxu0 0.0
        %1925 = vmatprep.subr.mxu0 0.0
        %1926 = vmatpush1.xpose.msra.mxu0 0.0
        %1927 = vmatprep.subr.mxu0 0.0
        %1928 = vmatpush1.xpose.msra.mxu0 0.0
        %1929 = vmatprep.subr.mxu0 0.0
        %1930 = vmatpush1.xpose.msra.mxu0 0.0
        %1931 = vmatprep.subr.mxu0 0.0
        %1932 = vmatpush1.xpose.msra.mxu0 0.0
        %1933 = vmatprep.subr.mxu0 0.0
        %1934 = vmatpush1.xpose.msra.mxu0 0.0
        %1935 = vmatprep.subr.mxu0 0.0
        %1936 = vmatpush1.xpose.msra.mxu0 0.0
        %1937 = vmatprep.subr.mxu0 0.0
        %1938 = vmatpush1.xpose.msra.mxu0 0.0
        %1939 = vmatprep.subr.mxu0 0.0
        %1940 = vmatpush1.xpose.msra.mxu0 0.0
        %1941 = vmatprep.subr.mxu0 0.0
        %1942 = vmatpush1.xpose.msra.mxu0 0.0
        %1943 = vmatprep.subr.mxu0 0.0
        %1944 = vmatpush1.xpose.msra.mxu0 0.0
        %1945 = vmatprep.subr.mxu0 0.0
        %1946 = vmatpush1.xpose.msra.mxu0 0.0
        %1947 = vmatprep.subr.mxu0 0.0
        %1948 = vmatpush1.xpose.msra.mxu0 0.0
        %1949 = vmatprep.subr.mxu0 0.0
        %1950 = vmatpush1.xpose.msra.mxu0 0.0
        %1951 = vmatprep.subr.mxu0 0.0
        %1952 = vmatpush1.xpose.msra.mxu0 0.0
        %1953 = vmatprep.subr.mxu0 0.0
        %1954 = vmatpush1.xpose.msra.mxu0 0.0
        %1955 = vmatprep.mubr.f32.mxu0 0.0
        %1956 = vmatmul.mubr.f32.gmra.mrb[0].mxu0 %v1880
        %v1957 = vpop.f32.mrb[0].mxu0
        %v1958 = vadd.f32 0.0, %v1957
        %v1959 = vpop.f32.mrb[0].mxu0
        %1960 = vmatprep.mubr.f32.mxu0 0.0
        %1961 = vmatmul.mubr.f32.gmra.mrb[0].mxu0 %v1883
        %v1962 = vpop.f32.mrb[0].mxu0
        %v1963 = vadd.f32 0.0, %v1962
        %v1964 = vpop.f32.mrb[0].mxu0
        %1965 = vdwg.mxu0
        %v1966 = vsel %vm1876, %v1958, -1e+30
        %v1967 = vsel %vm1877, %v1963, -1e+30
        %vm1968 = vcmask 130048
        %v1969 = vsel %vm1968, %v1966, -inf
        %1970 = vmax.xlane.f32.xlu0 %v1969
        %v1971 = vpop.xlane.xlu0 %1970
        %v1972 = vsel %vm1968, %v1967, -inf
        %1973 = vmax.xlane.f32.xlu0 %v1972
        %v1974 = vpop.xlane.xlu0 %1973
        %v1975 = vsub.f32 %v1966, %v1971
        %v1976 = vsub.f32 %v1967, %v1974
        %v1977 = vmul.f32 %v1975, 1.442695
        %v1978 = vpow.pop %v1977
        %v1979 = vmul.f32 %v1976, 1.442695
        %v1980 = vpow.pop %v1979
        %v1981 = vsel %vm1968, %v1978, 0.0
        %1982 = vadd.xlane.f32.xlu0 %v1981
        %v1983 = vpop.xlane.xlu0 %1982
        %v1984 = vsel %vm1968, %v1980, 0.0
        %1985 = vadd.xlane.f32.xlu0 %v1984
        %v1986 = vpop.xlane.xlu0 %1985
        %v1987 = vrcp.pop %v1983
        %v1988 = vrcp.pop %v1986
        %v1989 = vmul.f32 %v1978, %v1987
        %v1990 = vmul.f32 %v1980, %v1988
        %v1992 = vsel %vm1968, %v1989, 0
        %v1995 = vsel %vm1968, %v1990, 0
        %1997 = vmatprep.subr.mxu0 0.0
        %1998 = vmatpush1.msra.mxu0 %v1711
        %1999 = vmatprep.subr.mxu0 0.0
        %2000 = vmatpush1.msra.mxu0 %v1717
        %2001 = vmatprep.subr.mxu0 0.0
        %2002 = vmatpush1.msra.mxu0 0.0
        %2003 = vmatprep.subr.mxu0 0.0
        %2004 = vmatpush1.msra.mxu0 0.0
        %2005 = vmatprep.subr.mxu0 0.0
        %2006 = vmatpush1.msra.mxu0 0.0
        %2007 = vmatprep.subr.mxu0 0.0
        %2008 = vmatpush1.msra.mxu0 0.0
        %2009 = vmatprep.subr.mxu0 0.0
        %2010 = vmatpush1.msra.mxu0 0.0
        %2011 = vmatprep.subr.mxu0 0.0
        %2012 = vmatpush1.msra.mxu0 0.0
        %2013 = vmatprep.subr.mxu0 0.0
        %2014 = vmatpush1.msra.mxu0 0.0
        %2015 = vmatprep.subr.mxu0 0.0
        %2016 = vmatpush1.msra.mxu0 0.0
        %2017 = vmatprep.subr.mxu0 0.0
        %2018 = vmatpush1.msra.mxu0 0.0
        %2019 = vmatprep.subr.mxu0 0.0
        %2020 = vmatpush1.msra.mxu0 0.0
        %2021 = vmatprep.subr.mxu0 0.0
        %2022 = vmatpush1.msra.mxu0 0.0
        %2023 = vmatprep.subr.mxu0 0.0
        %2024 = vmatpush1.msra.mxu0 0.0
        %2025 = vmatprep.subr.mxu0 0.0
        %2026 = vmatpush1.msra.mxu0 0.0
        %2027 = vmatprep.subr.mxu0 0.0
        %2028 = vmatpush1.msra.mxu0 0.0
        %2029 = vmatprep.subr.mxu0 0.0
        %2030 = vmatpush1.msra.mxu0 0.0
        %2031 = vmatprep.subr.mxu0 0.0
        %2032 = vmatpush1.msra.mxu0 0.0
        %2033 = vmatprep.subr.mxu0 0.0
        %2034 = vmatpush1.msra.mxu0 0.0
        %2035 = vmatprep.subr.mxu0 0.0
        %2036 = vmatpush1.msra.mxu0 0.0
        %2037 = vmatprep.subr.mxu0 0.0
        %2038 = vmatpush1.msra.mxu0 0.0
        %2039 = vmatprep.subr.mxu0 0.0
        %2040 = vmatpush1.msra.mxu0 0.0
        %2041 = vmatprep.subr.mxu0 0.0
        %2042 = vmatpush1.msra.mxu0 0.0
        %2043 = vmatprep.subr.mxu0 0.0
        %2044 = vmatpush1.msra.mxu0 0.0
        %2045 = vmatprep.subr.mxu0 0.0
        %2046 = vmatpush1.msra.mxu0 0.0
        %2047 = vmatprep.subr.mxu0 0.0
        %2048 = vmatpush1.msra.mxu0 0.0
        %2049 = vmatprep.subr.mxu0 0.0
        %2050 = vmatpush1.msra.mxu0 0.0
        %2051 = vmatprep.subr.mxu0 0.0
        %2052 = vmatpush1.msra.mxu0 0.0
        %2053 = vmatprep.subr.mxu0 0.0
        %2054 = vmatpush1.msra.mxu0 0.0
        %2055 = vmatprep.subr.mxu0 0.0
        %2056 = vmatpush1.msra.mxu0 0.0
        %2057 = vmatprep.subr.mxu0 0.0
        %2058 = vmatpush1.msra.mxu0 0.0
        %2059 = vmatprep.subr.mxu0 0.0
        %2060 = vmatpush1.msra.mxu0 0.0
        %2061 = vmatprep.mubr.f32.mxu0 0.0
        %2062 = vmatmul.mubr.f32.gmra.mrb[0].mxu0 %v1992
        %v2063 = vpop.f32.mrb[0].mxu0
        %v2064 = vadd.f32 0.0, %v2063
        %v2065 = vpop.f32.mrb[0].mxu0
        %2066 = vmatprep.mubr.f32.mxu0 0.0
        %2067 = vmatmul.mubr.f32.gmra.mrb[0].mxu0 %v1995
        %v2068 = vpop.f32.mrb[0].mxu0
        %v2069 = vadd.f32 0.0, %v2068
        %v2070 = vpop.f32.mrb[0].mxu0
        %2071 = vdwg.mxu0
        %2072 = vrot.lane.b32.xlu0 %v1249, 64
        %v2073 = vpop.permute.xlu0 %2072
        %2074 = vrot.lane.b32.xlu0 %v1255, 64
        %v2075 = vpop.permute.xlu0 %2074
        %2076 = vrot.lane.b32.xlu0 %v1405, 64
        %v2077 = vpop.permute.xlu0 %2076
        %2078 = vrot.lane.b32.xlu0 %v1411, 64
        %v2079 = vpop.permute.xlu0 %2078
        %v2080 = vsel %vm1878, %v2073, 0
        %v2082 = vsel %vm1878, %v2075, 0
        %v2084 = vsel %vm1878, %v2077, 0
        %v2086 = vsel %vm1878, %v2079, 0
        %2088 = vmatprep.subr.mxu0 0.0
        %2089 = vmatpush1.xpose.msra.mxu0 %v2084
        %2090 = vmatprep.subr.mxu0 0.0
        %2091 = vmatpush1.xpose.msra.mxu0 %v2086
        %2092 = vmatprep.subr.mxu0 0.0
        %2093 = vmatpush1.xpose.msra.mxu0 0.0
        %2094 = vmatprep.subr.mxu0 0.0
        %2095 = vmatpush1.xpose.msra.mxu0 0.0
        %2096 = vmatprep.subr.mxu0 0.0
        %2097 = vmatpush1.xpose.msra.mxu0 0.0
        %2098 = vmatprep.subr.mxu0 0.0
        %2099 = vmatpush1.xpose.msra.mxu0 0.0
        %2100 = vmatprep.subr.mxu0 0.0
        %2101 = vmatpush1.xpose.msra.mxu0 0.0
        %2102 = vmatprep.subr.mxu0 0.0
        %2103 = vmatpush1.xpose.msra.mxu0 0.0
        %2104 = vmatprep.subr.mxu0 0.0
        %2105 = vmatpush1.xpose.msra.mxu0 0.0
        %2106 = vmatprep.subr.mxu0 0.0
        %2107 = vmatpush1.xpose.msra.mxu0 0.0
        %2108 = vmatprep.subr.mxu0 0.0
        %2109 = vmatpush1.xpose.msra.mxu0 0.0
        %2110 = vmatprep.subr.mxu0 0.0
        %2111 = vmatpush1.xpose.msra.mxu0 0.0
        %2112 = vmatprep.subr.mxu0 0.0
        %2113 = vmatpush1.xpose.msra.mxu0 0.0
        %2114 = vmatprep.subr.mxu0 0.0
        %2115 = vmatpush1.xpose.msra.mxu0 0.0
        %2116 = vmatprep.subr.mxu0 0.0
        %2117 = vmatpush1.xpose.msra.mxu0 0.0
        %2118 = vmatprep.subr.mxu0 0.0
        %2119 = vmatpush1.xpose.msra.mxu0 0.0
        %2120 = vmatprep.subr.mxu0 0.0
        %2121 = vmatpush1.xpose.msra.mxu0 0.0
        %2122 = vmatprep.subr.mxu0 0.0
        %2123 = vmatpush1.xpose.msra.mxu0 0.0
        %2124 = vmatprep.subr.mxu0 0.0
        %2125 = vmatpush1.xpose.msra.mxu0 0.0
        %2126 = vmatprep.subr.mxu0 0.0
        %2127 = vmatpush1.xpose.msra.mxu0 0.0
        %2128 = vmatprep.subr.mxu0 0.0
        %2129 = vmatpush1.xpose.msra.mxu0 0.0
        %2130 = vmatprep.subr.mxu0 0.0
        %2131 = vmatpush1.xpose.msra.mxu0 0.0
        %2132 = vmatprep.subr.mxu0 0.0
        %2133 = vmatpush1.xpose.msra.mxu0 0.0
        %2134 = vmatprep.subr.mxu0 0.0
        %2135 = vmatpush1.xpose.msra.mxu0 0.0
        %2136 = vmatprep.subr.mxu0 0.0
        %2137 = vmatpush1.xpose.msra.mxu0 0.0
        %2138 = vmatprep.subr.mxu0 0.0
        %2139 = vmatpush1.xpose.msra.mxu0 0.0
        %2140 = vmatprep.subr.mxu0 0.0
        %2141 = vmatpush1.xpose.msra.mxu0 0.0
        %2142 = vmatprep.subr.mxu0 0.0
        %2143 = vmatpush1.xpose.msra.mxu0 0.0
        %2144 = vmatprep.subr.mxu0 0.0
        %2145 = vmatpush1.xpose.msra.mxu0 0.0
        %2146 = vmatprep.subr.mxu0 0.0
        %2147 = vmatpush1.xpose.msra.mxu0 0.0
        %2148 = vmatprep.subr.mxu0 0.0
        %2149 = vmatpush1.xpose.msra.mxu0 0.0
        %2150 = vmatprep.subr.mxu0 0.0
        %2151 = vmatpush1.xpose.msra.mxu0 0.0
        %2152 = vmatprep.mubr.f32.mxu0 0.0
        %2153 = vmatmul.mubr.f32.gmra.mrb[0].mxu0 %v2080
        %v2154 = vpop.f32.mrb[0].mxu0
        %v2155 = vadd.f32 0.0, %v2154
        %v2156 = vpop.f32.mrb[0].mxu0
        %2157 = vmatprep.mubr.f32.mxu0 0.0
        %2158 = vmatmul.mubr.f32.gmra.mrb[0].mxu0 %v2082
        %v2159 = vpop.f32.mrb[0].mxu0
        %v2160 = vadd.f32 0.0, %v2159
        %v2161 = vpop.f32.mrb[0].mxu0
        %2162 = vdwg.mxu0
        %v2163 = vsel %vm1876, %v2155, -1e+30
        %v2164 = vsel %vm1877, %v2160, -1e+30
        %v2165 = vsel %vm1968, %v2163, -inf
        %2166 = vmax.xlane.f32.xlu0 %v2165
        %v2167 = vpop.xlane.xlu0 %2166
        %v2168 = vsel %vm1968, %v2164, -inf
        %2169 = vmax.xlane.f32.xlu0 %v2168
        %v2170 = vpop.xlane.xlu0 %2169
        %v2171 = vsub.f32 %v2163, %v2167
        %v2172 = vsub.f32 %v2164, %v2170
        %v2173 = vmul.f32 %v2171, 1.442695
        %v2174 = vpow.pop %v2173
        %v2175 = vmul.f32 %v2172, 1.442695
        %v2176 = vpow.pop %v2175
        %v2177 = vsel %vm1968, %v2174, 0.0
        %2178 = vadd.xlane.f32.xlu0 %v2177
        %v2179 = vpop.xlane.xlu0 %2178
        %v2180 = vsel %vm1968, %v2176, 0.0
        %2181 = vadd.xlane.f32.xlu0 %v2180
        %v2182 = vpop.xlane.xlu0 %2181
        %v2183 = vrcp.pop %v2179
        %v2184 = vrcp.pop %v2182
        %v2185 = vmul.f32 %v2174, %v2183
        %v2186 = vmul.f32 %v2176, %v2184
        %2189 = vrot.lane.b32.xlu0 %v1711, 64
        %v2190 = vpop.permute.xlu0 %2189
        %2191 = vrot.lane.b32.xlu0 %v1717, 64
        %v2192 = vpop.permute.xlu0 %2191
        %v2196 = vsel %vm1968, %v2185, 0
        %v2199 = vsel %vm1968, %v2186, 0
        %2201 = vmatprep.subr.mxu0 0.0
        %2202 = vmatpush1.msra.mxu0 %v2190
        %2203 = vmatprep.subr.mxu0 0.0
        %2204 = vmatpush1.msra.mxu0 %v2192
        %2205 = vmatprep.subr.mxu0 0.0
        %2206 = vmatpush1.msra.mxu0 0.0
        %2207 = vmatprep.subr.mxu0 0.0
        %2208 = vmatpush1.msra.mxu0 0.0
        %2209 = vmatprep.subr.mxu0 0.0
        %2210 = vmatpush1.msra.mxu0 0.0
        %2211 = vmatprep.subr.mxu0 0.0
        %2212 = vmatpush1.msra.mxu0 0.0
        %2213 = vmatprep.subr.mxu0 0.0
        %2214 = vmatpush1.msra.mxu0 0.0
        %2215 = vmatprep.subr.mxu0 0.0
        %2216 = vmatpush1.msra.mxu0 0.0
        %2217 = vmatprep.subr.mxu0 0.0
        %2218 = vmatpush1.msra.mxu0 0.0
        %2219 = vmatprep.subr.mxu0 0.0
        %2220 = vmatpush1.msra.mxu0 0.0
        %2221 = vmatprep.subr.mxu0 0.0
        %2222 = vmatpush1.msra.mxu0 0.0
        %2223 = vmatprep.subr.mxu0 0.0
        %2224 = vmatpush1.msra.mxu0 0.0
        %2225 = vmatprep.subr.mxu0 0.0
        %2226 = vmatpush1.msra.mxu0 0.0
        %2227 = vmatprep.subr.mxu0 0.0
        %2228 = vmatpush1.msra.mxu0 0.0
        %2229 = vmatprep.subr.mxu0 0.0
        %2230 = vmatpush1.msra.mxu0 0.0
        %2231 = vmatprep.subr.mxu0 0.0
        %2232 = vmatpush1.msra.mxu0 0.0
        %2233 = vmatprep.subr.mxu0 0.0
        %2234 = vmatpush1.msra.mxu0 0.0
        %2235 = vmatprep.subr.mxu0 0.0
        %2236 = vmatpush1.msra.mxu0 0.0
        %2237 = vmatprep.subr.mxu0 0.0
        %2238 = vmatpush1.msra.mxu0 0.0
        %2239 = vmatprep.subr.mxu0 0.0
        %2240 = vmatpush1.msra.mxu0 0.0
        %2241 = vmatprep.subr.mxu0 0.0
        %2242 = vmatpush1.msra.mxu0 0.0
        %2243 = vmatprep.subr.mxu0 0.0
        %2244 = vmatpush1.msra.mxu0 0.0
        %2245 = vmatprep.subr.mxu0 0.0
        %2246 = vmatpush1.msra.mxu0 0.0
        %2247 = vmatprep.subr.mxu0 0.0
        %2248 = vmatpush1.msra.mxu0 0.0
        %2249 = vmatprep.subr.mxu0 0.0
        %2250 = vmatpush1.msra.mxu0 0.0
        %2251 = vmatprep.subr.mxu0 0.0
        %2252 = vmatpush1.msra.mxu0 0.0
        %2253 = vmatprep.subr.mxu0 0.0
        %2254 = vmatpush1.msra.mxu0 0.0
        %2255 = vmatprep.subr.mxu0 0.0
        %2256 = vmatpush1.msra.mxu0 0.0
        %2257 = vmatprep.subr.mxu0 0.0
        %2258 = vmatpush1.msra.mxu0 0.0
        %2259 = vmatprep.subr.mxu0 0.0
        %2260 = vmatpush1.msra.mxu0 0.0
        %2261 = vmatprep.subr.mxu0 0.0
        %2262 = vmatpush1.msra.mxu0 0.0
        %2263 = vmatprep.subr.mxu0 0.0
        %2264 = vmatpush1.msra.mxu0 0.0
        %2265 = vmatprep.mubr.f32.mxu0 0.0
        %2266 = vmatmul.mubr.f32.gmra.mrb[0].mxu0 %v2196
        %v2267 = vpop.f32.mrb[0].mxu0
        %v2268 = vadd.f32 0.0, %v2267
        %v2269 = vpop.f32.mrb[0].mxu0
        %2270 = vmatprep.mubr.f32.mxu0 0.0
        %2271 = vmatmul.mubr.f32.gmra.mrb[0].mxu0 %v2199
        %v2272 = vpop.f32.mrb[0].mxu0
        %v2273 = vadd.f32 0.0, %v2272
        %v2274 = vpop.f32.mrb[0].mxu0
        %2275 = vdwg.mxu0
        %v2277 = vsel %vm1878, %v1251, 0
        %v2280 = vsel %vm1878, %v1257, 0
        %v2283 = vsel %vm1878, %v1557, 0
        %v2286 = vsel %vm1878, %v1563, 0
        %2288 = vmatprep.subr.mxu0 0.0
        %2289 = vmatpush1.xpose.msra.mxu0 %v2283
        %2290 = vmatprep.subr.mxu0 0.0
        %2291 = vmatpush1.xpose.msra.mxu0 %v2286
        %2292 = vmatprep.subr.mxu0 0.0
        %2293 = vmatpush1.xpose.msra.mxu0 0.0
        %2294 = vmatprep.subr.mxu0 0.0
        %2295 = vmatpush1.xpose.msra.mxu0 0.0
        %2296 = vmatprep.subr.mxu0 0.0
        %2297 = vmatpush1.xpose.msra.mxu0 0.0
        %2298 = vmatprep.subr.mxu0 0.0
        %2299 = vmatpush1.xpose.msra.mxu0 0.0
        %2300 = vmatprep.subr.mxu0 0.0
        %2301 = vmatpush1.xpose.msra.mxu0 0.0
        %2302 = vmatprep.subr.mxu0 0.0
        %2303 = vmatpush1.xpose.msra.mxu0 0.0
        %2304 = vmatprep.subr.mxu0 0.0
        %2305 = vmatpush1.xpose.msra.mxu0 0.0
        %2306 = vmatprep.subr.mxu0 0.0
        %2307 = vmatpush1.xpose.msra.mxu0 0.0
        %2308 = vmatprep.subr.mxu0 0.0
        %2309 = vmatpush1.xpose.msra.mxu0 0.0
        %2310 = vmatprep.subr.mxu0 0.0
        %2311 = vmatpush1.xpose.msra.mxu0 0.0
        %2312 = vmatprep.subr.mxu0 0.0
        %2313 = vmatpush1.xpose.msra.mxu0 0.0
        %2314 = vmatprep.subr.mxu0 0.0
        %2315 = vmatpush1.xpose.msra.mxu0 0.0
        %2316 = vmatprep.subr.mxu0 0.0
        %2317 = vmatpush1.xpose.msra.mxu0 0.0
        %2318 = vmatprep.subr.mxu0 0.0
        %2319 = vmatpush1.xpose.msra.mxu0 0.0
        %2320 = vmatprep.subr.mxu0 0.0
        %2321 = vmatpush1.xpose.msra.mxu0 0.0
        %2322 = vmatprep.subr.mxu0 0.0
        %2323 = vmatpush1.xpose.msra.mxu0 0.0
        %2324 = vmatprep.subr.mxu0 0.0
        %2325 = vmatpush1.xpose.msra.mxu0 0.0
        %2326 = vmatprep.subr.mxu0 0.0
        %2327 = vmatpush1.xpose.msra.mxu0 0.0
        %2328 = vmatprep.subr.mxu0 0.0
        %2329 = vmatpush1.xpose.msra.mxu0 0.0
        %2330 = vmatprep.subr.mxu0 0.0
        %2331 = vmatpush1.xpose.msra.mxu0 0.0
        %2332 = vmatprep.subr.mxu0 0.0
        %2333 = vmatpush1.xpose.msra.mxu0 0.0
        %2334 = vmatprep.subr.mxu0 0.0
        %2335 = vmatpush1.xpose.msra.mxu0 0.0
        %2336 = vmatprep.subr.mxu0 0.0
        %2337 = vmatpush1.xpose.msra.mxu0 0.0
        %2338 = vmatprep.subr.mxu0 0.0
        %2339 = vmatpush1.xpose.msra.mxu0 0.0
        %2340 = vmatprep.subr.mxu0 0.0
        %2341 = vmatpush1.xpose.msra.mxu0 0.0
        %2342 = vmatprep.subr.mxu0 0.0
        %2343 = vmatpush1.xpose.msra.mxu0 0.0
        %2344 = vmatprep.subr.mxu0 0.0
        %2345 = vmatpush1.xpose.msra.mxu0 0.0
        %2346 = vmatprep.subr.mxu0 0.0
        %2347 = vmatpush1.xpose.msra.mxu0 0.0
        %2348 = vmatprep.subr.mxu0 0.0
        %2349 = vmatpush1.xpose.msra.mxu0 0.0
        %2350 = vmatprep.subr.mxu0 0.0
        %2351 = vmatpush1.xpose.msra.mxu0 0.0
        %2352 = vmatprep.mubr.f32.mxu0 0.0
        %2353 = vmatmul.mubr.f32.gmra.mrb[0].mxu0 %v2277
        %v2354 = vpop.f32.mrb[0].mxu0
        %v2355 = vadd.f32 0.0, %v2354
        %v2356 = vpop.f32.mrb[0].mxu0
        %2357 = vmatprep.mubr.f32.mxu0 0.0
        %2358 = vmatmul.mubr.f32.gmra.mrb[0].mxu0 %v2280
        %v2359 = vpop.f32.mrb[0].mxu0
        %v2360 = vadd.f32 0.0, %v2359
        %v2361 = vpop.f32.mrb[0].mxu0
        %2362 = vdwg.mxu0
        %v2363 = vsel %vm1876, %v2355, -1e+30
        %v2364 = vsel %vm1877, %v2360, -1e+30
        %v2365 = vsel %vm1968, %v2363, -inf
        %2366 = vmax.xlane.f32.xlu0 %v2365
        %v2367 = vpop.xlane.xlu0 %2366
        %v2368 = vsel %vm1968, %v2364, -inf
        %2369 = vmax.xlane.f32.xlu0 %v2368
        %v2370 = vpop.xlane.xlu0 %2369
        %v2371 = vsub.f32 %v2363, %v2367
        %v2372 = vsub.f32 %v2364, %v2370
        %v2373 = vmul.f32 %v2371, 1.442695
        %v2374 = vpow.pop %v2373
        %v2375 = vmul.f32 %v2372, 1.442695
        %v2376 = vpow.pop %v2375
        %v2377 = vsel %vm1968, %v2374, 0.0
        %2378 = vadd.xlane.f32.xlu0 %v2377
        %v2379 = vpop.xlane.xlu0 %2378
        %v2380 = vsel %vm1968, %v2376, 0.0
        %2381 = vadd.xlane.f32.xlu0 %v2380
        %v2382 = vpop.xlane.xlu0 %2381
        %v2383 = vrcp.pop %v2379
        %v2384 = vrcp.pop %v2382
        %v2385 = vmul.f32 %v2374, %v2383
        %v2386 = vmul.f32 %v2376, %v2384
        %v2388 = vsel %vm1968, %v2385, 0
        %v2391 = vsel %vm1968, %v2386, 0
        %2393 = vmatprep.subr.mxu0 0.0
        %2394 = vmatpush1.msra.mxu0 %v1713
        %2395 = vmatprep.subr.mxu0 0.0
        %2396 = vmatpush1.msra.mxu0 %v1719
        %2397 = vmatprep.subr.mxu0 0.0
        %2398 = vmatpush1.msra.mxu0 0.0
        %2399 = vmatprep.subr.mxu0 0.0
        %2400 = vmatpush1.msra.mxu0 0.0
        %2401 = vmatprep.subr.mxu0 0.0
        %2402 = vmatpush1.msra.mxu0 0.0
        %2403 = vmatprep.subr.mxu0 0.0
        %2404 = vmatpush1.msra.mxu0 0.0
        %2405 = vmatprep.subr.mxu0 0.0
        %2406 = vmatpush1.msra.mxu0 0.0
        %2407 = vmatprep.subr.mxu0 0.0
        %2408 = vmatpush1.msra.mxu0 0.0
        %2409 = vmatprep.subr.mxu0 0.0
        %2410 = vmatpush1.msra.mxu0 0.0
        %2411 = vmatprep.subr.mxu0 0.0
        %2412 = vmatpush1.msra.mxu0 0.0
        %2413 = vmatprep.subr.mxu0 0.0
        %2414 = vmatpush1.msra.mxu0 0.0
        %2415 = vmatprep.subr.mxu0 0.0
        %2416 = vmatpush1.msra.mxu0 0.0
        %2417 = vmatprep.subr.mxu0 0.0
        %2418 = vmatpush1.msra.mxu0 0.0
        %2419 = vmatprep.subr.mxu0 0.0
        %2420 = vmatpush1.msra.mxu0 0.0
        %2421 = vmatprep.subr.mxu0 0.0
        %2422 = vmatpush1.msra.mxu0 0.0
        %2423 = vmatprep.subr.mxu0 0.0
        %2424 = vmatpush1.msra.mxu0 0.0
        %2425 = vmatprep.subr.mxu0 0.0
        %2426 = vmatpush1.msra.mxu0 0.0
        %2427 = vmatprep.subr.mxu0 0.0
        %2428 = vmatpush1.msra.mxu0 0.0
        %2429 = vmatprep.subr.mxu0 0.0
        %2430 = vmatpush1.msra.mxu0 0.0
        %2431 = vmatprep.subr.mxu0 0.0
        %2432 = vmatpush1.msra.mxu0 0.0
        %2433 = vmatprep.subr.mxu0 0.0
        %2434 = vmatpush1.msra.mxu0 0.0
        %2435 = vmatprep.subr.mxu0 0.0
        %2436 = vmatpush1.msra.mxu0 0.0
        %2437 = vmatprep.subr.mxu0 0.0
        %2438 = vmatpush1.msra.mxu0 0.0
        %2439 = vmatprep.subr.mxu0 0.0
        %2440 = vmatpush1.msra.mxu0 0.0
        %2441 = vmatprep.subr.mxu0 0.0
        %2442 = vmatpush1.msra.mxu0 0.0
        %2443 = vmatprep.subr.mxu0 0.0
        %2444 = vmatpush1.msra.mxu0 0.0
        %2445 = vmatprep.subr.mxu0 0.0
        %2446 = vmatpush1.msra.mxu0 0.0
        %2447 = vmatprep.subr.mxu0 0.0
        %2448 = vmatpush1.msra.mxu0 0.0
        %2449 = vmatprep.subr.mxu0 0.0
        %2450 = vmatpush1.msra.mxu0 0.0
        %2451 = vmatprep.subr.mxu0 0.0
        %2452 = vmatpush1.msra.mxu0 0.0
        %2453 = vmatprep.subr.mxu0 0.0
        %2454 = vmatpush1.msra.mxu0 0.0
        %2455 = vmatprep.subr.mxu0 0.0
        %2456 = vmatpush1.msra.mxu0 0.0
        %2457 = vmatprep.mubr.f32.mxu0 0.0
        %2458 = vmatmul.mubr.f32.gmra.mrb[0].mxu0 %v2388
        %v2459 = vpop.f32.mrb[0].mxu0
        %v2460 = vadd.f32 0.0, %v2459
        %v2461 = vpop.f32.mrb[0].mxu0
        %2462 = vmatprep.mubr.f32.mxu0 0.0
        %2463 = vmatmul.mubr.f32.gmra.mrb[0].mxu0 %v2391
        %v2464 = vpop.f32.mrb[0].mxu0
        %v2465 = vadd.f32 0.0, %v2464
        %v2466 = vpop.f32.mrb[0].mxu0
        %2467 = vdwg.mxu0
        %2468 = vrot.lane.b32.xlu0 %v1251, 64
        %v2469 = vpop.permute.xlu0 %2468
        %2470 = vrot.lane.b32.xlu0 %v1257, 64
        %v2471 = vpop.permute.xlu0 %2470
        %2472 = vrot.lane.b32.xlu0 %v1557, 64
        %v2473 = vpop.permute.xlu0 %2472
        %2474 = vrot.lane.b32.xlu0 %v1563, 64
        %v2475 = vpop.permute.xlu0 %2474
        %v2476 = vsel %vm1878, %v2469, 0
        %v2478 = vsel %vm1878, %v2471, 0
        %v2480 = vsel %vm1878, %v2473, 0
        %v2482 = vsel %vm1878, %v2475, 0
        %2484 = vmatprep.subr.mxu0 0.0
        %2485 = vmatpush1.xpose.msra.mxu0 %v2480
        %2486 = vmatprep.subr.mxu0 0.0
        %2487 = vmatpush1.xpose.msra.mxu0 %v2482
        %2488 = vmatprep.subr.mxu0 0.0
        %2489 = vmatpush1.xpose.msra.mxu0 0.0
        %2490 = vmatprep.subr.mxu0 0.0
        %2491 = vmatpush1.xpose.msra.mxu0 0.0
        %2492 = vmatprep.subr.mxu0 0.0
        %2493 = vmatpush1.xpose.msra.mxu0 0.0
        %2494 = vmatprep.subr.mxu0 0.0
        %2495 = vmatpush1.xpose.msra.mxu0 0.0
        %2496 = vmatprep.subr.mxu0 0.0
        %2497 = vmatpush1.xpose.msra.mxu0 0.0
        %2498 = vmatprep.subr.mxu0 0.0
        %2499 = vmatpush1.xpose.msra.mxu0 0.0
        %2500 = vmatprep.subr.mxu0 0.0
        %2501 = vmatpush1.xpose.msra.mxu0 0.0
        %2502 = vmatprep.subr.mxu0 0.0
        %2503 = vmatpush1.xpose.msra.mxu0 0.0
        %2504 = vmatprep.subr.mxu0 0.0
        %2505 = vmatpush1.xpose.msra.mxu0 0.0
        %2506 = vmatprep.subr.mxu0 0.0
        %2507 = vmatpush1.xpose.msra.mxu0 0.0
        %2508 = vmatprep.subr.mxu0 0.0
        %2509 = vmatpush1.xpose.msra.mxu0 0.0
        %2510 = vmatprep.subr.mxu0 0.0
        %2511 = vmatpush1.xpose.msra.mxu0 0.0
        %2512 = vmatprep.subr.mxu0 0.0
        %2513 = vmatpush1.xpose.msra.mxu0 0.0
        %2514 = vmatprep.subr.mxu0 0.0
        %2515 = vmatpush1.xpose.msra.mxu0 0.0
        %2516 = vmatprep.subr.mxu0 0.0
        %2517 = vmatpush1.xpose.msra.mxu0 0.0
        %2518 = vmatprep.subr.mxu0 0.0
        %2519 = vmatpush1.xpose.msra.mxu0 0.0
        %2520 = vmatprep.subr.mxu0 0.0
        %2521 = vmatpush1.xpose.msra.mxu0 0.0
        %2522 = vmatprep.subr.mxu0 0.0
        %2523 = vmatpush1.xpose.msra.mxu0 0.0
        %2524 = vmatprep.subr.mxu0 0.0
        %2525 = vmatpush1.xpose.msra.mxu0 0.0
        %2526 = vmatprep.subr.mxu0 0.0
        %2527 = vmatpush1.xpose.msra.mxu0 0.0
        %2528 = vmatprep.subr.mxu0 0.0
        %2529 = vmatpush1.xpose.msra.mxu0 0.0
        %2530 = vmatprep.subr.mxu0 0.0
        %2531 = vmatpush1.xpose.msra.mxu0 0.0
        %2532 = vmatprep.subr.mxu0 0.0
        %2533 = vmatpush1.xpose.msra.mxu0 0.0
        %2534 = vmatprep.subr.mxu0 0.0
        %2535 = vmatpush1.xpose.msra.mxu0 0.0
        %2536 = vmatprep.subr.mxu0 0.0
        %2537 = vmatpush1.xpose.msra.mxu0 0.0
        %2538 = vmatprep.subr.mxu0 0.0
        %2539 = vmatpush1.xpose.msra.mxu0 0.0
        %2540 = vmatprep.subr.mxu0 0.0
        %2541 = vmatpush1.xpose.msra.mxu0 0.0
        %2542 = vmatprep.subr.mxu0 0.0
        %2543 = vmatpush1.xpose.msra.mxu0 0.0
        %2544 = vmatprep.subr.mxu0 0.0
        %2545 = vmatpush1.xpose.msra.mxu0 0.0
        %2546 = vmatprep.subr.mxu0 0.0
        %2547 = vmatpush1.xpose.msra.mxu0 0.0
        %2548 = vmatprep.mubr.f32.mxu0 0.0
        %2549 = vmatmul.mubr.f32.gmra.mrb[0].mxu0 %v2476
        %v2550 = vpop.f32.mrb[0].mxu0
        %v2551 = vadd.f32 0.0, %v2550
        %v2552 = vpop.f32.mrb[0].mxu0
        %2553 = vmatprep.mubr.f32.mxu0 0.0
        %2554 = vmatmul.mubr.f32.gmra.mrb[0].mxu0 %v2478
        %v2555 = vpop.f32.mrb[0].mxu0
        %v2556 = vadd.f32 0.0, %v2555
        %v2557 = vpop.f32.mrb[0].mxu0
        %2558 = vdwg.mxu0
        %v2559 = vsel %vm1876, %v2551, -1e+30
        %v2560 = vsel %vm1877, %v2556, -1e+30
        %v2561 = vsel %vm1968, %v2559, -inf
        %2562 = vmax.xlane.f32.xlu0 %v2561
        %v2563 = vpop.xlane.xlu0 %2562
        %v2564 = vsel %vm1968, %v2560, -inf
        %2565 = vmax.xlane.f32.xlu0 %v2564
        %v2566 = vpop.xlane.xlu0 %2565
        %v2567 = vsub.f32 %v2559, %v2563
        %v2568 = vsub.f32 %v2560, %v2566
        %v2569 = vmul.f32 %v2567, 1.442695
        %v2570 = vpow.pop %v2569
        %v2571 = vmul.f32 %v2568, 1.442695
        %v2572 = vpow.pop %v2571
        %v2573 = vsel %vm1968, %v2570, 0.0
        %2574 = vadd.xlane.f32.xlu0 %v2573
        %v2575 = vpop.xlane.xlu0 %2574
        %v2576 = vsel %vm1968, %v2572, 0.0
        %2577 = vadd.xlane.f32.xlu0 %v2576
        %v2578 = vpop.xlane.xlu0 %2577
        %v2579 = vrcp.pop %v2575
        %v2580 = vrcp.pop %v2578
        %v2581 = vmul.f32 %v2570, %v2579
        %v2582 = vmul.f32 %v2572, %v2580
        %2585 = vrot.lane.b32.xlu0 %v1713, 64
        %v2586 = vpop.permute.xlu0 %2585
        %2587 = vrot.lane.b32.xlu0 %v1719, 64
        %v2588 = vpop.permute.xlu0 %2587
        %v2592 = vsel %vm1968, %v2581, 0
        %v2595 = vsel %vm1968, %v2582, 0
        %2597 = vmatprep.subr.mxu0 0.0
        %2598 = vmatpush1.msra.mxu0 %v2586
        %2599 = vmatprep.subr.mxu0 0.0
        %2600 = vmatpush1.msra.mxu0 %v2588
        %2601 = vmatprep.subr.mxu0 0.0
        %2602 = vmatpush1.msra.mxu0 0.0
        %2603 = vmatprep.subr.mxu0 0.0
        %2604 = vmatpush1.msra.mxu0 0.0
        %2605 = vmatprep.subr.mxu0 0.0
        %2606 = vmatpush1.msra.mxu0 0.0
        %2607 = vmatprep.subr.mxu0 0.0
        %2608 = vmatpush1.msra.mxu0 0.0
        %2609 = vmatprep.subr.mxu0 0.0
        %2610 = vmatpush1.msra.mxu0 0.0
        %2611 = vmatprep.subr.mxu0 0.0
        %2612 = vmatpush1.msra.mxu0 0.0
        %2613 = vmatprep.subr.mxu0 0.0
        %2614 = vmatpush1.msra.mxu0 0.0
        %2615 = vmatprep.subr.mxu0 0.0
        %2616 = vmatpush1.msra.mxu0 0.0
        %2617 = vmatprep.subr.mxu0 0.0
        %2618 = vmatpush1.msra.mxu0 0.0
        %2619 = vmatprep.subr.mxu0 0.0
        %2620 = vmatpush1.msra.mxu0 0.0
        %2621 = vmatprep.subr.mxu0 0.0
        %2622 = vmatpush1.msra.mxu0 0.0
        %2623 = vmatprep.subr.mxu0 0.0
        %2624 = vmatpush1.msra.mxu0 0.0
        %2625 = vmatprep.subr.mxu0 0.0
        %2626 = vmatpush1.msra.mxu0 0.0
        %2627 = vmatprep.subr.mxu0 0.0
        %2628 = vmatpush1.msra.mxu0 0.0
        %2629 = vmatprep.subr.mxu0 0.0
        %2630 = vmatpush1.msra.mxu0 0.0
        %2631 = vmatprep.subr.mxu0 0.0
        %2632 = vmatpush1.msra.mxu0 0.0
        %2633 = vmatprep.subr.mxu0 0.0
        %2634 = vmatpush1.msra.mxu0 0.0
        %2635 = vmatprep.subr.mxu0 0.0
        %2636 = vmatpush1.msra.mxu0 0.0
        %2637 = vmatprep.subr.mxu0 0.0
        %2638 = vmatpush1.msra.mxu0 0.0
        %2639 = vmatprep.subr.mxu0 0.0
        %2640 = vmatpush1.msra.mxu0 0.0
        %2641 = vmatprep.subr.mxu0 0.0
        %2642 = vmatpush1.msra.mxu0 0.0
        %2643 = vmatprep.subr.mxu0 0.0
        %2644 = vmatpush1.msra.mxu0 0.0
        %2645 = vmatprep.subr.mxu0 0.0
        %2646 = vmatpush1.msra.mxu0 0.0
        %2647 = vmatprep.subr.mxu0 0.0
        %2648 = vmatpush1.msra.mxu0 0.0
        %2649 = vmatprep.subr.mxu0 0.0
        %2650 = vmatpush1.msra.mxu0 0.0
        %2651 = vmatprep.subr.mxu0 0.0
        %2652 = vmatpush1.msra.mxu0 0.0
        %2653 = vmatprep.subr.mxu0 0.0
        %2654 = vmatpush1.msra.mxu0 0.0
        %2655 = vmatprep.subr.mxu0 0.0
        %2656 = vmatpush1.msra.mxu0 0.0
        %2657 = vmatprep.subr.mxu0 0.0
        %2658 = vmatpush1.msra.mxu0 0.0
        %2659 = vmatprep.subr.mxu0 0.0
        %2660 = vmatpush1.msra.mxu0 0.0
        %2661 = vmatprep.mubr.f32.mxu0 0.0
        %2662 = vmatmul.mubr.f32.gmra.mrb[0].mxu0 %v2592
        %v2663 = vpop.f32.mrb[0].mxu0
        %v2664 = vadd.f32 0.0, %v2663
        %v2665 = vpop.f32.mrb[0].mxu0
        %2666 = vmatprep.mubr.f32.mxu0 0.0
        %2667 = vmatmul.mubr.f32.gmra.mrb[0].mxu0 %v2595
        %v2668 = vpop.f32.mrb[0].mxu0
        %v2669 = vadd.f32 0.0, %v2668
        %v2670 = vpop.f32.mrb[0].mxu0
        %2671 = vdwg.mxu0
        %v2673 = vsel %vm1878, %v1403, 0
        %v2676 = vsel %vm1878, %v1409, 0
        %v2679 = vsel %vm1878, %v1559, 0
        %v2682 = vsel %vm1878, %v1565, 0
        %2684 = vmatprep.subr.mxu0 0.0
        %2685 = vmatpush1.xpose.msra.mxu0 %v2679
        %2686 = vmatprep.subr.mxu0 0.0
        %2687 = vmatpush1.xpose.msra.mxu0 %v2682
        %2688 = vmatprep.subr.mxu0 0.0
        %2689 = vmatpush1.xpose.msra.mxu0 0.0
        %2690 = vmatprep.subr.mxu0 0.0
        %2691 = vmatpush1.xpose.msra.mxu0 0.0
        %2692 = vmatprep.subr.mxu0 0.0
        %2693 = vmatpush1.xpose.msra.mxu0 0.0
        %2694 = vmatprep.subr.mxu0 0.0
        %2695 = vmatpush1.xpose.msra.mxu0 0.0
        %2696 = vmatprep.subr.mxu0 0.0
        %2697 = vmatpush1.xpose.msra.mxu0 0.0
        %2698 = vmatprep.subr.mxu0 0.0
        %2699 = vmatpush1.xpose.msra.mxu0 0.0
        %2700 = vmatprep.subr.mxu0 0.0
        %2701 = vmatpush1.xpose.msra.mxu0 0.0
        %2702 = vmatprep.subr.mxu0 0.0
        %2703 = vmatpush1.xpose.msra.mxu0 0.0
        %2704 = vmatprep.subr.mxu0 0.0
        %2705 = vmatpush1.xpose.msra.mxu0 0.0
        %2706 = vmatprep.subr.mxu0 0.0
        %2707 = vmatpush1.xpose.msra.mxu0 0.0
        %2708 = vmatprep.subr.mxu0 0.0
        %2709 = vmatpush1.xpose.msra.mxu0 0.0
        %2710 = vmatprep.subr.mxu0 0.0
        %2711 = vmatpush1.xpose.msra.mxu0 0.0
        %2712 = vmatprep.subr.mxu0 0.0
        %2713 = vmatpush1.xpose.msra.mxu0 0.0
        %2714 = vmatprep.subr.mxu0 0.0
        %2715 = vmatpush1.xpose.msra.mxu0 0.0
        %2716 = vmatprep.subr.mxu0 0.0
        %2717 = vmatpush1.xpose.msra.mxu0 0.0
        %2718 = vmatprep.subr.mxu0 0.0
        %2719 = vmatpush1.xpose.msra.mxu0 0.0
        %2720 = vmatprep.subr.mxu0 0.0
        %2721 = vmatpush1.xpose.msra.mxu0 0.0
        %2722 = vmatprep.subr.mxu0 0.0
        %2723 = vmatpush1.xpose.msra.mxu0 0.0
        %2724 = vmatprep.subr.mxu0 0.0
        %2725 = vmatpush1.xpose.msra.mxu0 0.0
        %2726 = vmatprep.subr.mxu0 0.0
        %2727 = vmatpush1.xpose.msra.mxu0 0.0
        %2728 = vmatprep.subr.mxu0 0.0
        %2729 = vmatpush1.xpose.msra.mxu0 0.0
        %2730 = vmatprep.subr.mxu0 0.0
        %2731 = vmatpush1.xpose.msra.mxu0 0.0
        %2732 = vmatprep.subr.mxu0 0.0
        %2733 = vmatpush1.xpose.msra.mxu0 0.0
        %2734 = vmatprep.subr.mxu0 0.0
        %2735 = vmatpush1.xpose.msra.mxu0 0.0
        %2736 = vmatprep.subr.mxu0 0.0
        %2737 = vmatpush1.xpose.msra.mxu0 0.0
        %2738 = vmatprep.subr.mxu0 0.0
        %2739 = vmatpush1.xpose.msra.mxu0 0.0
        %2740 = vmatprep.subr.mxu0 0.0
        %2741 = vmatpush1.xpose.msra.mxu0 0.0
        %2742 = vmatprep.subr.mxu0 0.0
        %2743 = vmatpush1.xpose.msra.mxu0 0.0
        %2744 = vmatprep.subr.mxu0 0.0
        %2745 = vmatpush1.xpose.msra.mxu0 0.0
        %2746 = vmatprep.subr.mxu0 0.0
        %2747 = vmatpush1.xpose.msra.mxu0 0.0
        %2748 = vmatprep.mubr.f32.mxu0 0.0
        %2749 = vmatmul.mubr.f32.gmra.mrb[0].mxu0 %v2673
        %v2750 = vpop.f32.mrb[0].mxu0
        %v2751 = vadd.f32 0.0, %v2750
        %v2752 = vpop.f32.mrb[0].mxu0
        %2753 = vmatprep.mubr.f32.mxu0 0.0
        %2754 = vmatmul.mubr.f32.gmra.mrb[0].mxu0 %v2676
        %v2755 = vpop.f32.mrb[0].mxu0
        %v2756 = vadd.f32 0.0, %v2755
        %v2757 = vpop.f32.mrb[0].mxu0
        %2758 = vdwg.mxu0
        %v2759 = vsel %vm1876, %v2751, -1e+30
        %v2760 = vsel %vm1877, %v2756, -1e+30
        %v2761 = vsel %vm1968, %v2759, -inf
        %2762 = vmax.xlane.f32.xlu0 %v2761
        %v2763 = vpop.xlane.xlu0 %2762
        %v2764 = vsel %vm1968, %v2760, -inf
        %2765 = vmax.xlane.f32.xlu0 %v2764
        %v2766 = vpop.xlane.xlu0 %2765
        %v2767 = vsub.f32 %v2759, %v2763
        %v2768 = vsub.f32 %v2760, %v2766
        %v2769 = vmul.f32 %v2767, 1.442695
        %v2770 = vpow.pop %v2769
        %v2771 = vmul.f32 %v2768, 1.442695
        %v2772 = vpow.pop %v2771
        %v2773 = vsel %vm1968, %v2770, 0.0
        %2774 = vadd.xlane.f32.xlu0 %v2773
        %v2775 = vpop.xlane.xlu0 %2774
        %v2776 = vsel %vm1968, %v2772, 0.0
        %2777 = vadd.xlane.f32.xlu0 %v2776
        %v2778 = vpop.xlane.xlu0 %2777
        %v2779 = vrcp.pop %v2775
        %v2780 = vrcp.pop %v2778
        %v2781 = vmul.f32 %v2770, %v2779
        %v2782 = vmul.f32 %v2772, %v2780
        %v2784 = vsel %vm1968, %v2781, 0
        %v2787 = vsel %vm1968, %v2782, 0
        %2789 = vmatprep.subr.mxu0 0.0
        %2790 = vmatpush1.msra.mxu0 %v1863
        %2791 = vmatprep.subr.mxu0 0.0
        %2792 = vmatpush1.msra.mxu0 %v1868
        %2793 = vmatprep.subr.mxu0 0.0
        %2794 = vmatpush1.msra.mxu0 0.0
        %2795 = vmatprep.subr.mxu0 0.0
        %2796 = vmatpush1.msra.mxu0 0.0
        %2797 = vmatprep.subr.mxu0 0.0
        %2798 = vmatpush1.msra.mxu0 0.0
        %2799 = vmatprep.subr.mxu0 0.0
        %2800 = vmatpush1.msra.mxu0 0.0
        %2801 = vmatprep.subr.mxu0 0.0
        %2802 = vmatpush1.msra.mxu0 0.0
        %2803 = vmatprep.subr.mxu0 0.0
        %2804 = vmatpush1.msra.mxu0 0.0
        %2805 = vmatprep.subr.mxu0 0.0
        %2806 = vmatpush1.msra.mxu0 0.0
        %2807 = vmatprep.subr.mxu0 0.0
        %2808 = vmatpush1.msra.mxu0 0.0
        %2809 = vmatprep.subr.mxu0 0.0
        %2810 = vmatpush1.msra.mxu0 0.0
        %2811 = vmatprep.subr.mxu0 0.0
        %2812 = vmatpush1.msra.mxu0 0.0
        %2813 = vmatprep.subr.mxu0 0.0
        %2814 = vmatpush1.msra.mxu0 0.0
        %2815 = vmatprep.subr.mxu0 0.0
        %2816 = vmatpush1.msra.mxu0 0.0
        %2817 = vmatprep.subr.mxu0 0.0
        %2818 = vmatpush1.msra.mxu0 0.0
        %2819 = vmatprep.subr.mxu0 0.0
        %2820 = vmatpush1.msra.mxu0 0.0
        %2821 = vmatprep.subr.mxu0 0.0
        %2822 = vmatpush1.msra.mxu0 0.0
        %2823 = vmatprep.subr.mxu0 0.0
        %2824 = vmatpush1.msra.mxu0 0.0
        %2825 = vmatprep.subr.mxu0 0.0
        %2826 = vmatpush1.msra.mxu0 0.0
        %2827 = vmatprep.subr.mxu0 0.0
        %2828 = vmatpush1.msra.mxu0 0.0
        %2829 = vmatprep.subr.mxu0 0.0
        %2830 = vmatpush1.msra.mxu0 0.0
        %2831 = vmatprep.subr.mxu0 0.0
        %2832 = vmatpush1.msra.mxu0 0.0
        %2833 = vmatprep.subr.mxu0 0.0
        %2834 = vmatpush1.msra.mxu0 0.0
        %2835 = vmatprep.subr.mxu0 0.0
        %2836 = vmatpush1.msra.mxu0 0.0
        %2837 = vmatprep.subr.mxu0 0.0
        %2838 = vmatpush1.msra.mxu0 0.0
        %2839 = vmatprep.subr.mxu0 0.0
        %2840 = vmatpush1.msra.mxu0 0.0
        %2841 = vmatprep.subr.mxu0 0.0
        %2842 = vmatpush1.msra.mxu0 0.0
        %2843 = vmatprep.subr.mxu0 0.0
        %2844 = vmatpush1.msra.mxu0 0.0
        %2845 = vmatprep.subr.mxu0 0.0
        %2846 = vmatpush1.msra.mxu0 0.0
        %2847 = vmatprep.subr.mxu0 0.0
        %2848 = vmatpush1.msra.mxu0 0.0
        %2849 = vmatprep.subr.mxu0 0.0
        %2850 = vmatpush1.msra.mxu0 0.0
        %2851 = vmatprep.subr.mxu0 0.0
        %2852 = vmatpush1.msra.mxu0 0.0
        %2853 = vmatprep.mubr.f32.mxu0 0.0
        %2854 = vmatmul.mubr.f32.gmra.mrb[0].mxu0 %v2784
        %v2855 = vpop.f32.mrb[0].mxu0
        %v2856 = vadd.f32 0.0, %v2855
        %v2857 = vpop.f32.mrb[0].mxu0
        %2858 = vmatprep.mubr.f32.mxu0 0.0
        %2859 = vmatmul.mubr.f32.gmra.mrb[0].mxu0 %v2787
        %v2860 = vpop.f32.mrb[0].mxu0
        %v2861 = vadd.f32 0.0, %v2860
        %v2862 = vpop.f32.mrb[0].mxu0
        %2863 = vdwg.mxu0
        %2864 = vrot.lane.b32.xlu0 %v1403, 64
        %v2865 = vpop.permute.xlu0 %2864
        %2866 = vrot.lane.b32.xlu0 %v1409, 64
        %v2867 = vpop.permute.xlu0 %2866
        %2868 = vrot.lane.b32.xlu0 %v1559, 64
        %v2869 = vpop.permute.xlu0 %2868
        %2870 = vrot.lane.b32.xlu0 %v1565, 64
        %v2871 = vpop.permute.xlu0 %2870
        %v2872 = vsel %vm1878, %v2865, 0
        %v2874 = vsel %vm1878, %v2867, 0
        %v2876 = vsel %vm1878, %v2869, 0
        %v2878 = vsel %vm1878, %v2871, 0
        %2880 = vmatprep.subr.mxu0 0.0
        %2881 = vmatpush1.xpose.msra.mxu0 %v2876
        %2882 = vmatprep.subr.mxu0 0.0
        %2883 = vmatpush1.xpose.msra.mxu0 %v2878
        %2884 = vmatprep.subr.mxu0 0.0
        %2885 = vmatpush1.xpose.msra.mxu0 0.0
        %2886 = vmatprep.subr.mxu0 0.0
        %2887 = vmatpush1.xpose.msra.mxu0 0.0
        %2888 = vmatprep.subr.mxu0 0.0
        %2889 = vmatpush1.xpose.msra.mxu0 0.0
        %2890 = vmatprep.subr.mxu0 0.0
        %2891 = vmatpush1.xpose.msra.mxu0 0.0
        %2892 = vmatprep.subr.mxu0 0.0
        %2893 = vmatpush1.xpose.msra.mxu0 0.0
        %2894 = vmatprep.subr.mxu0 0.0
        %2895 = vmatpush1.xpose.msra.mxu0 0.0
        %2896 = vmatprep.subr.mxu0 0.0
        %2897 = vmatpush1.xpose.msra.mxu0 0.0
        %2898 = vmatprep.subr.mxu0 0.0
        %2899 = vmatpush1.xpose.msra.mxu0 0.0
        %2900 = vmatprep.subr.mxu0 0.0
        %2901 = vmatpush1.xpose.msra.mxu0 0.0
        %2902 = vmatprep.subr.mxu0 0.0
        %2903 = vmatpush1.xpose.msra.mxu0 0.0
        %2904 = vmatprep.subr.mxu0 0.0
        %2905 = vmatpush1.xpose.msra.mxu0 0.0
        %2906 = vmatprep.subr.mxu0 0.0
        %2907 = vmatpush1.xpose.msra.mxu0 0.0
        %2908 = vmatprep.subr.mxu0 0.0
        %2909 = vmatpush1.xpose.msra.mxu0 0.0
        %2910 = vmatprep.subr.mxu0 0.0
        %2911 = vmatpush1.xpose.msra.mxu0 0.0
        %2912 = vmatprep.subr.mxu0 0.0
        %2913 = vmatpush1.xpose.msra.mxu0 0.0
        %2914 = vmatprep.subr.mxu0 0.0
        %2915 = vmatpush1.xpose.msra.mxu0 0.0
        %2916 = vmatprep.subr.mxu0 0.0
        %2917 = vmatpush1.xpose.msra.mxu0 0.0
        %2918 = vmatprep.subr.mxu0 0.0
        %2919 = vmatpush1.xpose.msra.mxu0 0.0
        %2920 = vmatprep.subr.mxu0 0.0
        %2921 = vmatpush1.xpose.msra.mxu0 0.0
        %2922 = vmatprep.subr.mxu0 0.0
        %2923 = vmatpush1.xpose.msra.mxu0 0.0
        %2924 = vmatprep.subr.mxu0 0.0
        %2925 = vmatpush1.xpose.msra.mxu0 0.0
        %2926 = vmatprep.subr.mxu0 0.0
        %2927 = vmatpush1.xpose.msra.mxu0 0.0
        %2928 = vmatprep.subr.mxu0 0.0
        %2929 = vmatpush1.xpose.msra.mxu0 0.0
        %2930 = vmatprep.subr.mxu0 0.0
        %2931 = vmatpush1.xpose.msra.mxu0 0.0
        %2932 = vmatprep.subr.mxu0 0.0
        %2933 = vmatpush1.xpose.msra.mxu0 0.0
        %2934 = vmatprep.subr.mxu0 0.0
        %2935 = vmatpush1.xpose.msra.mxu0 0.0
        %2936 = vmatprep.subr.mxu0 0.0
        %2937 = vmatpush1.xpose.msra.mxu0 0.0
        %2938 = vmatprep.subr.mxu0 0.0
        %2939 = vmatpush1.xpose.msra.mxu0 0.0
        %2940 = vmatprep.subr.mxu0 0.0
        %2941 = vmatpush1.xpose.msra.mxu0 0.0
        %2942 = vmatprep.subr.mxu0 0.0
        %2943 = vmatpush1.xpose.msra.mxu0 0.0
        %2944 = vmatprep.mubr.f32.mxu0 0.0
        %2945 = vmatmul.mubr.f32.gmra.mrb[0].mxu0 %v2872
        %v2946 = vpop.f32.mrb[0].mxu0
        %v2947 = vadd.f32 0.0, %v2946
        %v2948 = vpop.f32.mrb[0].mxu0
        %2949 = vmatprep.mubr.f32.mxu0 0.0
        %2950 = vmatmul.mubr.f32.gmra.mrb[0].mxu0 %v2874
        %v2951 = vpop.f32.mrb[0].mxu0
        %v2952 = vadd.f32 0.0, %v2951
        %v2953 = vpop.f32.mrb[0].mxu0
        %2954 = vdwg.mxu0
        %v2955 = vsel %vm1876, %v2947, -1e+30
        %v2956 = vsel %vm1877, %v2952, -1e+30
        %v2957 = vsel %vm1968, %v2955, -inf
        %2958 = vmax.xlane.f32.xlu0 %v2957
        %v2959 = vpop.xlane.xlu0 %2958
        %v2960 = vsel %vm1968, %v2956, -inf
        %2961 = vmax.xlane.f32.xlu0 %v2960
        %v2962 = vpop.xlane.xlu0 %2961
        %v2963 = vsub.f32 %v2955, %v2959
        %v2964 = vsub.f32 %v2956, %v2962
        %v2965 = vmul.f32 %v2963, 1.442695
        %v2966 = vpow.pop %v2965
        %v2967 = vmul.f32 %v2964, 1.442695
        %v2968 = vpow.pop %v2967
        %v2969 = vsel %vm1968, %v2966, 0.0
        %2970 = vadd.xlane.f32.xlu0 %v2969
        %v2971 = vpop.xlane.xlu0 %2970
        %v2972 = vsel %vm1968, %v2968, 0.0
        %2973 = vadd.xlane.f32.xlu0 %v2972
        %v2974 = vpop.xlane.xlu0 %2973
        %v2975 = vrcp.pop %v2971
        %v2976 = vrcp.pop %v2974
        %v2977 = vmul.f32 %v2966, %v2975
        %v2978 = vmul.f32 %v2968, %v2976
        %2981 = vrot.lane.b32.xlu0 %v1863, 64
        %v2982 = vpop.permute.xlu0 %2981
        %2983 = vrot.lane.b32.xlu0 %v1868, 64
        %v2984 = vpop.permute.xlu0 %2983
        %v2988 = vsel %vm1968, %v2977, 0
        %v2991 = vsel %vm1968, %v2978, 0
        %2993 = vmatprep.subr.mxu0 0.0
        %2994 = vmatpush1.msra.mxu0 %v2982
        %2995 = vmatprep.subr.mxu0 0.0
        %2996 = vmatpush1.msra.mxu0 %v2984
        %2997 = vmatprep.subr.mxu0 0.0
        %2998 = vmatpush1.msra.mxu0 0.0
        %2999 = vmatprep.subr.mxu0 0.0
        %3000 = vmatpush1.msra.mxu0 0.0
        %3001 = vmatprep.subr.mxu0 0.0
        %3002 = vmatpush1.msra.mxu0 0.0
        %3003 = vmatprep.subr.mxu0 0.0
        %3004 = vmatpush1.msra.mxu0 0.0
        %3005 = vmatprep.subr.mxu0 0.0
        %3006 = vmatpush1.msra.mxu0 0.0
        %3007 = vmatprep.subr.mxu0 0.0
        %3008 = vmatpush1.msra.mxu0 0.0
        %3009 = vmatprep.subr.mxu0 0.0
        %3010 = vmatpush1.msra.mxu0 0.0
        %3011 = vmatprep.subr.mxu0 0.0
        %3012 = vmatpush1.msra.mxu0 0.0
        %3013 = vmatprep.subr.mxu0 0.0
        %3014 = vmatpush1.msra.mxu0 0.0
        %3015 = vmatprep.subr.mxu0 0.0
        %3016 = vmatpush1.msra.mxu0 0.0
        %3017 = vmatprep.subr.mxu0 0.0
        %3018 = vmatpush1.msra.mxu0 0.0
        %3019 = vmatprep.subr.mxu0 0.0
        %3020 = vmatpush1.msra.mxu0 0.0
        %3021 = vmatprep.subr.mxu0 0.0
        %3022 = vmatpush1.msra.mxu0 0.0
        %3023 = vmatprep.subr.mxu0 0.0
        %3024 = vmatpush1.msra.mxu0 0.0
        %3025 = vmatprep.subr.mxu0 0.0
        %3026 = vmatpush1.msra.mxu0 0.0
        %3027 = vmatprep.subr.mxu0 0.0
        %3028 = vmatpush1.msra.mxu0 0.0
        %3029 = vmatprep.subr.mxu0 0.0
        %3030 = vmatpush1.msra.mxu0 0.0
        %3031 = vmatprep.subr.mxu0 0.0
        %3032 = vmatpush1.msra.mxu0 0.0
        %3033 = vmatprep.subr.mxu0 0.0
        %3034 = vmatpush1.msra.mxu0 0.0
        %3035 = vmatprep.subr.mxu0 0.0
        %3036 = vmatpush1.msra.mxu0 0.0
        %3037 = vmatprep.subr.mxu0 0.0
        %3038 = vmatpush1.msra.mxu0 0.0
        %3039 = vmatprep.subr.mxu0 0.0
        %3040 = vmatpush1.msra.mxu0 0.0
        %3041 = vmatprep.subr.mxu0 0.0
        %3042 = vmatpush1.msra.mxu0 0.0
        %3043 = vmatprep.subr.mxu0 0.0
        %3044 = vmatpush1.msra.mxu0 0.0
        %3045 = vmatprep.subr.mxu0 0.0
        %3046 = vmatpush1.msra.mxu0 0.0
        %3047 = vmatprep.subr.mxu0 0.0
        %3048 = vmatpush1.msra.mxu0 0.0
        %3049 = vmatprep.subr.mxu0 0.0
        %3050 = vmatpush1.msra.mxu0 0.0
        %3051 = vmatprep.subr.mxu0 0.0
        %3052 = vmatpush1.msra.mxu0 0.0
        %3053 = vmatprep.subr.mxu0 0.0
        %3054 = vmatpush1.msra.mxu0 0.0
        %3055 = vmatprep.subr.mxu0 0.0
        %3056 = vmatpush1.msra.mxu0 0.0
        %3057 = vmatprep.mubr.f32.mxu0 0.0
        %3058 = vmatmul.mubr.f32.gmra.mrb[0].mxu0 %v2988
        %v3059 = vpop.f32.mrb[0].mxu0
        %v3060 = vadd.f32 0.0, %v3059
        %v3061 = vpop.f32.mrb[0].mxu0
        %3062 = vmatprep.mubr.f32.mxu0 0.0
        %3063 = vmatmul.mubr.f32.gmra.mrb[0].mxu0 %v2991
        %v3064 = vpop.f32.mrb[0].mxu0
        %v3065 = vadd.f32 0.0, %v3064
        %v3066 = vpop.f32.mrb[0].mxu0
        %3067 = vdwg.mxu0
        %3070 = vrot.lane.b32.xlu0 %v2268, 64
        %v3071 = vpop.permute.xlu0 %3070
        %3072 = vrot.lane.b32.xlu0 %v2273, 64
        %v3073 = vpop.permute.xlu0 %3072
        %3078 = vrot.lane.b32.xlu0 %v2664, 64
        %v3079 = vpop.permute.xlu0 %3078
        %3080 = vrot.lane.b32.xlu0 %v2669, 64
        %v3081 = vpop.permute.xlu0 %3080
        %3086 = vrot.lane.b32.xlu0 %v3060, 64
        %v3087 = vpop.permute.xlu0 %3086
        %3088 = vrot.lane.b32.xlu0 %v3065, 64
        %v3089 = vpop.permute.xlu0 %3088
        %v3092 = vsel %vm1878, %v2064, %v3071
        %v3093 = vsel %vm1878, %v2069, %v3073
        %v3094 = vsel %vm1878, %v2460, %v3079
        %v3095 = vsel %vm1878, %v2465, %v3081
        %v3096 = vsel %vm1878, %v2856, %v3087
        %v3097 = vsel %vm1878, %v2861, %v3089
        %v3098 = vld [vmem:[#allocation10] sm:$0xff]
        %v3099 = vld [vmem:[#allocation10 + $0x8] sm:$0xff]
        %v3100 = vld [vmem:[#allocation10 + $0x10] sm:$0xff]
        %v3101 = vld [vmem:[#allocation10 + $0x18] sm:$0xff]
        %v3102 = vld [vmem:[#allocation10 + $0x20] sm:$0xff]
        %v3103 = vld [vmem:[#allocation10 + $0x28] sm:$0xff]
        %v3104 = vld [vmem:[#allocation10 + $0x30] sm:$0xff]
        %v3105 = vld [vmem:[#allocation10 + $0x38] sm:$0xff]
        %v3106 = vld [vmem:[#allocation10 + $0x40] sm:$0xff]
        %v3107 = vld [vmem:[#allocation10 + $0x48] sm:$0xff]
        %v3108 = vld [vmem:[#allocation10 + $0x50] sm:$0xff]
        %v3109 = vld [vmem:[#allocation10 + $0x58] sm:$0xff]
        %v3110 = vld [vmem:[#allocation10 + $0x60] sm:$0xff]
        %v3111 = vld [vmem:[#allocation10 + $0x68] sm:$0xff]
        %v3112 = vld [vmem:[#allocation10 + $0x70] sm:$0xff]
        %v3113 = vld [vmem:[#allocation10 + $0x78] sm:$0xff]
        %v3114 = vld [vmem:[#allocation10 + $0x80] sm:$0xff]
        %v3115 = vld [vmem:[#allocation10 + $0x88] sm:$0xff]
        %v3116 = vld [vmem:[#allocation10 + $0x90] sm:$0xff]
        %v3117 = vld [vmem:[#allocation10 + $0x98] sm:$0xff]
        %v3118 = vld [vmem:[#allocation10 + $0xa0] sm:$0xff]
        %v3119 = vld [vmem:[#allocation10 + $0xa8] sm:$0xff]
        %v3120 = vld [vmem:[#allocation10 + $0xb0] sm:$0xff]
        %v3121 = vld [vmem:[#allocation10 + $0xb8] sm:$0xff]
        %v3122 = vld [vmem:[#allocation10 + $0xc0] sm:$0xff]
        %v3123 = vld [vmem:[#allocation10 + $0xc8] sm:$0xff]
        %v3124 = vld [vmem:[#allocation10 + $0xd0] sm:$0xff]
        %v3125 = vld [vmem:[#allocation10 + $0xd8] sm:$0xff]
        %v3126 = vld [vmem:[#allocation10 + $0xe0] sm:$0xff]
        %v3127 = vld [vmem:[#allocation10 + $0xe8] sm:$0xff]
        %v3128 = vld [vmem:[#allocation10 + $0xf0] sm:$0xff]
        %v3129 = vld [vmem:[#allocation10 + $0xf8] sm:$0xff]
        %v3130 = vld [vmem:[#allocation10 + $0x100] sm:$0xff]
        %v3131 = vld [vmem:[#allocation10 + $0x108] sm:$0xff]
        %v3132 = vld [vmem:[#allocation10 + $0x110] sm:$0xff]
        %v3133 = vld [vmem:[#allocation10 + $0x118] sm:$0xff]
        %v3134 = vld [vmem:[#allocation10 + $0x120] sm:$0xff]
        %v3135 = vld [vmem:[#allocation10 + $0x128] sm:$0xff]
        %v3136 = vld [vmem:[#allocation10 + $0x130] sm:$0xff]
        %v3137 = vld [vmem:[#allocation10 + $0x138] sm:$0xff]
        %v3138 = vld [vmem:[#allocation10 + $0x140] sm:$0xff]
        %v3139 = vld [vmem:[#allocation10 + $0x148] sm:$0xff]
        %v3140 = vld [vmem:[#allocation10 + $0x150] sm:$0xff]
        %v3141 = vld [vmem:[#allocation10 + $0x158] sm:$0xff]
        %v3142 = vld [vmem:[#allocation10 + $0x160] sm:$0xff]
        %v3143 = vld [vmem:[#allocation10 + $0x168] sm:$0xff]
        %v3144 = vld [vmem:[#allocation10 + $0x170] sm:$0xff]
        %v3145 = vld [vmem:[#allocation10 + $0x178] sm:$0xff]
        %v3146 = vld [vmem:[#allocation10 + $0x180] sm:$0xff]
        %v3147 = vld [vmem:[#allocation10 + $0x188] sm:$0xff]
        %v3148 = vld [vmem:[#allocation10 + $0x190] sm:$0xff]
        %v3149 = vld [vmem:[#allocation10 + $0x198] sm:$0xff]
        %v3150 = vld [vmem:[#allocation10 + $0x1a0] sm:$0xff]
        %v3151 = vld [vmem:[#allocation10 + $0x1a8] sm:$0xff]
        %v3152 = vld [vmem:[#allocation10 + $0x1b0] sm:$0xff]
        %v3153 = vld [vmem:[#allocation10 + $0x1b8] sm:$0xff]
        %v3154 = vld [vmem:[#allocation10 + $0x1c0] sm:$0xff]
        %v3155 = vld [vmem:[#allocation10 + $0x1c8] sm:$0xff]
        %v3156 = vld [vmem:[#allocation10 + $0x1d0] sm:$0xff]
        %v3157 = vld [vmem:[#allocation10 + $0x1d8] sm:$0xff]
        %v3158 = vld [vmem:[#allocation10 + $0x1e0] sm:$0xff]
        %v3159 = vld [vmem:[#allocation10 + $0x1e8] sm:$0xff]
        %v3160 = vld [vmem:[#allocation10 + $0x1f0] sm:$0xff]
        %v3161 = vld [vmem:[#allocation10 + $0x1f8] sm:$0xff]
        %v3162 = vld [vmem:[#allocation10 + $0x200] sm:$0xff]
        %v3163 = vld [vmem:[#allocation10 + $0x208] sm:$0xff]
        %v3164 = vld [vmem:[#allocation10 + $0x210] sm:$0xff]
        %v3165 = vld [vmem:[#allocation10 + $0x218] sm:$0xff]
        %v3166 = vld [vmem:[#allocation10 + $0x220] sm:$0xff]
        %v3167 = vld [vmem:[#allocation10 + $0x228] sm:$0xff]
        %v3168 = vld [vmem:[#allocation10 + $0x230] sm:$0xff]
        %v3169 = vld [vmem:[#allocation10 + $0x238] sm:$0xff]
        %v3170 = vld [vmem:[#allocation10 + $0x240] sm:$0xff]
        %v3171 = vld [vmem:[#allocation10 + $0x248] sm:$0xff]
        %v3172 = vld [vmem:[#allocation10 + $0x250] sm:$0xff]
        %v3173 = vld [vmem:[#allocation10 + $0x258] sm:$0xff]
        %v3174 = vld [vmem:[#allocation10 + $0x260] sm:$0xff]
        %v3175 = vld [vmem:[#allocation10 + $0x268] sm:$0xff]
        %v3176 = vld [vmem:[#allocation10 + $0x270] sm:$0xff]
        %v3177 = vld [vmem:[#allocation10 + $0x278] sm:$0xff]
        %v3178 = vld [vmem:[#allocation10 + $0x280] sm:$0xff]
        %v3179 = vld [vmem:[#allocation10 + $0x288] sm:$0xff]
        %v3180 = vld [vmem:[#allocation10 + $0x290] sm:$0xff]
        %v3181 = vld [vmem:[#allocation10 + $0x298] sm:$0xff]
        %v3182 = vld [vmem:[#allocation10 + $0x2a0] sm:$0xff]
        %v3183 = vld [vmem:[#allocation10 + $0x2a8] sm:$0xff]
        %v3184 = vld [vmem:[#allocation10 + $0x2b0] sm:$0xff]
        %v3185 = vld [vmem:[#allocation10 + $0x2b8] sm:$0xff]
        %v3186 = vld [vmem:[#allocation10 + $0x2c0] sm:$0xff]
        %v3187 = vld [vmem:[#allocation10 + $0x2c8] sm:$0xff]
        %v3188 = vld [vmem:[#allocation10 + $0x2d0] sm:$0xff]
        %v3189 = vld [vmem:[#allocation10 + $0x2d8] sm:$0xff]
        %v3190 = vld [vmem:[#allocation10 + $0x2e0] sm:$0xff]
        %v3191 = vld [vmem:[#allocation10 + $0x2e8] sm:$0xff]
        %v3192 = vld [vmem:[#allocation10 + $0x2f0] sm:$0xff]
        %v3193 = vld [vmem:[#allocation10 + $0x2f8] sm:$0xff]
        %v3194 = vld [vmem:[#allocation10 + $0x300] sm:$0xff]
        %v3195 = vld [vmem:[#allocation10 + $0x308] sm:$0xff]
        %v3196 = vld [vmem:[#allocation10 + $0x310] sm:$0xff]
        %v3197 = vld [vmem:[#allocation10 + $0x318] sm:$0xff]
        %v3198 = vld [vmem:[#allocation10 + $0x320] sm:$0xff]
        %v3199 = vld [vmem:[#allocation10 + $0x328] sm:$0xff]
        %v3200 = vld [vmem:[#allocation10 + $0x330] sm:$0xff]
        %v3201 = vld [vmem:[#allocation10 + $0x338] sm:$0xff]
        %v3202 = vld [vmem:[#allocation10 + $0x340] sm:$0xff]
        %v3203 = vld [vmem:[#allocation10 + $0x348] sm:$0xff]
        %v3204 = vld [vmem:[#allocation10 + $0x350] sm:$0xff]
        %v3205 = vld [vmem:[#allocation10 + $0x358] sm:$0xff]
        %v3206 = vld [vmem:[#allocation10 + $0x360] sm:$0xff]
        %v3207 = vld [vmem:[#allocation10 + $0x368] sm:$0xff]
        %v3208 = vld [vmem:[#allocation10 + $0x370] sm:$0xff]
        %v3209 = vld [vmem:[#allocation10 + $0x378] sm:$0xff]
        %v3210 = vld [vmem:[#allocation10 + $0x380] sm:$0xff]
        %v3211 = vld [vmem:[#allocation10 + $0x388] sm:$0xff]
        %v3212 = vld [vmem:[#allocation10 + $0x390] sm:$0xff]
        %v3213 = vld [vmem:[#allocation10 + $0x398] sm:$0xff]
        %v3214 = vld [vmem:[#allocation10 + $0x3a0] sm:$0xff]
        %v3215 = vld [vmem:[#allocation10 + $0x3a8] sm:$0xff]
        %v3216 = vld [vmem:[#allocation10 + $0x3b0] sm:$0xff]
        %v3217 = vld [vmem:[#allocation10 + $0x3b8] sm:$0xff]
        %v3218 = vld [vmem:[#allocation10 + $0x3c0] sm:$0xff]
        %v3219 = vld [vmem:[#allocation10 + $0x3c8] sm:$0xff]
        %v3220 = vld [vmem:[#allocation10 + $0x3d0] sm:$0xff]
        %v3221 = vld [vmem:[#allocation10 + $0x3d8] sm:$0xff]
        %v3222 = vld [vmem:[#allocation10 + $0x3e0] sm:$0xff]
        %v3223 = vld [vmem:[#allocation10 + $0x3e8] sm:$0xff]
        %v3224 = vld [vmem:[#allocation10 + $0x3f0] sm:$0xff]
        %v3225 = vld [vmem:[#allocation10 + $0x3f8] sm:$0xff]
        %v3226 = vld [vmem:[#allocation10 + $0x400] sm:$0xff]
        %v3227 = vld [vmem:[#allocation10 + $0x408] sm:$0xff]
        %v3228 = vld [vmem:[#allocation10 + $0x410] sm:$0xff]
        %v3229 = vld [vmem:[#allocation10 + $0x418] sm:$0xff]
        %v3230 = vld [vmem:[#allocation10 + $0x420] sm:$0xff]
        %v3231 = vld [vmem:[#allocation10 + $0x428] sm:$0xff]
        %v3232 = vld [vmem:[#allocation10 + $0x430] sm:$0xff]
        %v3233 = vld [vmem:[#allocation10 + $0x438] sm:$0xff]
        %v3234 = vld [vmem:[#allocation10 + $0x440] sm:$0xff]
        %v3235 = vld [vmem:[#allocation10 + $0x448] sm:$0xff]
        %v3236 = vld [vmem:[#allocation10 + $0x450] sm:$0xff]
        %v3237 = vld [vmem:[#allocation10 + $0x458] sm:$0xff]
        %v3238 = vld [vmem:[#allocation10 + $0x460] sm:$0xff]
        %v3239 = vld [vmem:[#allocation10 + $0x468] sm:$0xff]
        %v3240 = vld [vmem:[#allocation10 + $0x470] sm:$0xff]
        %v3241 = vld [vmem:[#allocation10 + $0x478] sm:$0xff]
        %v3242 = vld [vmem:[#allocation11] sm:$0x7]
        %v3244 = vlaneseq
        %v3245 = vshrl.u32 %v3244, 7
        %v3246 = vsub.s32 0, %v3245
        %v3247 = vrot.slane %v3242, %v3246
        %v3248 = vlaneseq
        %v3249 = vshrl.u32 %v3248, 7
        %v3250 = vsub.s32 1, %v3249
        %v3251 = vrot.slane %v3242, %v3250
        %v3252 = vlaneseq
        %v3253 = vshrl.u32 %v3252, 7
        %v3254 = vsub.s32 2, %v3253
        %v3255 = vrot.slane %v3242, %v3254
        %3259 = vmatprep.subr.mxu0 %v3099
        %3260 = vmatpush1.msra.mxu0 %v3098
        %3261 = vmatprep.subr.mxu0 %v3102
        %3262 = vmatpush1.msra.mxu0 %v3101
        %3263 = vmatprep.subr.mxu0 %v3105
        %3264 = vmatpush1.msra.mxu0 %v3104
        %3265 = vmatprep.subr.mxu0 %v3108
        %3266 = vmatpush1.msra.mxu0 %v3107
        %3267 = vmatprep.subr.mxu0 %v3111
        %3268 = vmatpush1.msra.mxu0 %v3110
        %3269 = vmatprep.subr.mxu0 %v3114
        %3270 = vmatpush1.msra.mxu0 %v3113
        %3271 = vmatprep.subr.mxu0 %v3117
        %3272 = vmatpush1.msra.mxu0 %v3116
        %3273 = vmatprep.subr.mxu0 %v3120
        %3274 = vmatpush1.msra.mxu0 %v3119
        %3275 = vmatprep.subr.mxu0 %v3123
        %3276 = vmatpush1.msra.mxu0 %v3122
        %3277 = vmatprep.subr.mxu0 %v3126
        %3278 = vmatpush1.msra.mxu0 %v3125
        %3279 = vmatprep.subr.mxu0 %v3129
        %3280 = vmatpush1.msra.mxu0 %v3128
        %3281 = vmatprep.subr.mxu0 %v3132
        %3282 = vmatpush1.msra.mxu0 %v3131
        %3283 = vmatprep.subr.mxu0 %v3135
        %3284 = vmatpush1.msra.mxu0 %v3134
        %3285 = vmatprep.subr.mxu0 %v3138
        %3286 = vmatpush1.msra.mxu0 %v3137
        %3287 = vmatprep.subr.mxu0 %v3141
        %3288 = vmatpush1.msra.mxu0 %v3140
        %3289 = vmatprep.subr.mxu0 %v3144
        %3290 = vmatpush1.msra.mxu0 %v3143
        %3291 = vmatprep.subr.mxu0 %v3147
        %3292 = vmatpush1.msra.mxu0 %v3146
        %3293 = vmatprep.subr.mxu0 %v3150
        %3294 = vmatpush1.msra.mxu0 %v3149
        %3295 = vmatprep.subr.mxu0 %v3153
        %3296 = vmatpush1.msra.mxu0 %v3152
        %3297 = vmatprep.subr.mxu0 %v3156
        %3298 = vmatpush1.msra.mxu0 %v3155
        %3299 = vmatprep.subr.mxu0 %v3159
        %3300 = vmatpush1.msra.mxu0 %v3158
        %3301 = vmatprep.subr.mxu0 %v3162
        %3302 = vmatpush1.msra.mxu0 %v3161
        %3303 = vmatprep.subr.mxu0 %v3165
        %3304 = vmatpush1.msra.mxu0 %v3164
        %3305 = vmatprep.subr.mxu0 %v3168
        %3306 = vmatpush1.msra.mxu0 %v3167
        %3307 = vmatprep.subr.mxu0 %v3171
        %3308 = vmatpush1.msra.mxu0 %v3170
        %3309 = vmatprep.subr.mxu0 %v3174
        %3310 = vmatpush1.msra.mxu0 %v3173
        %3311 = vmatprep.subr.mxu0 %v3177
        %3312 = vmatpush1.msra.mxu0 %v3176
        %3313 = vmatprep.subr.mxu0 %v3180
        %3314 = vmatpush1.msra.mxu0 %v3179
        %3315 = vmatprep.subr.mxu0 %v3183
        %3316 = vmatpush1.msra.mxu0 %v3182
        %3317 = vmatprep.subr.mxu0 %v3186
        %3318 = vmatpush1.msra.mxu0 %v3185
        %3319 = vmatprep.subr.mxu0 %v3189
        %3320 = vmatpush1.msra.mxu0 %v3188
        %3321 = vmatprep.subr.mxu0 %v3192
        %3322 = vmatpush1.msra.mxu0 %v3191
        %3323 = vmatprep.mubr.f32.mxu0 %v3094
        %3324 = vmatmul.mubr.f32.gmra.mrb[0].mxu0 %v3092
        %v3325 = vpop.f32.mrb[0].mxu0
        %v3326 = vadd.f32 %v3247, %v3325
        %v3327 = vpop.f32.mrb[0].mxu0
        %v3328 = vadd.f32 %v3251, %v3327
        %3329 = vmatprep.mubr.f32.mxu0 %v3095
        %3330 = vmatmul.mubr.f32.gmra.mrb[0].mxu0 %v3093
        %v3331 = vpop.f32.mrb[0].mxu0
        %v3332 = vadd.f32 %v3247, %v3331
        %v3333 = vpop.f32.mrb[0].mxu0
        %v3334 = vadd.f32 %v3251, %v3333
        %3335 = vdwg.mxu0
        %3336 = vmatprep.subr.mxu0 %v3195
        %3337 = vmatpush1.msra.mxu0 %v3194
        %3338 = vmatprep.subr.mxu0 %v3198
        %3339 = vmatpush1.msra.mxu0 %v3197
        %3340 = vmatprep.subr.mxu0 %v3201
        %3341 = vmatpush1.msra.mxu0 %v3200
        %3342 = vmatprep.subr.mxu0 %v3204
        %3343 = vmatpush1.msra.mxu0 %v3203
        %3344 = vmatprep.subr.mxu0 %v3207
        %3345 = vmatpush1.msra.mxu0 %v3206
        %3346 = vmatprep.subr.mxu0 %v3210
        %3347 = vmatpush1.msra.mxu0 %v3209
        %3348 = vmatprep.subr.mxu0 %v3213
        %3349 = vmatpush1.msra.mxu0 %v3212
        %3350 = vmatprep.subr.mxu0 %v3216
        %3351 = vmatpush1.msra.mxu0 %v3215
        %3352 = vmatprep.subr.mxu0 %v3219
        %3353 = vmatpush1.msra.mxu0 %v3218
        %3354 = vmatprep.subr.mxu0 %v3222
        %3355 = vmatpush1.msra.mxu0 %v3221
        %3356 = vmatprep.subr.mxu0 %v3225
        %3357 = vmatpush1.msra.mxu0 %v3224
        %3358 = vmatprep.subr.mxu0 %v3228
        %3359 = vmatpush1.msra.mxu0 %v3227
        %3360 = vmatprep.subr.mxu0 %v3231
        %3361 = vmatpush1.msra.mxu0 %v3230
        %3362 = vmatprep.subr.mxu0 %v3234
        %3363 = vmatpush1.msra.mxu0 %v3233
        %3364 = vmatprep.subr.mxu0 %v3237
        %3365 = vmatpush1.msra.mxu0 %v3236
        %3366 = vmatprep.subr.mxu0 %v3240
        %3367 = vmatpush1.msra.mxu0 %v3239
        %3368 = vmatprep.subr.mxu0 0.0
        %3369 = vmatpush1.msra.mxu0 0.0
        %3370 = vmatprep.subr.mxu0 0.0
        %3371 = vmatpush1.msra.mxu0 0.0
        %3372 = vmatprep.subr.mxu0 0.0
        %3373 = vmatpush1.msra.mxu0 0.0
        %3374 = vmatprep.subr.mxu0 0.0
        %3375 = vmatpush1.msra.mxu0 0.0
        %3376 = vmatprep.subr.mxu0 0.0
        %3377 = vmatpush1.msra.mxu0 0.0
        %3378 = vmatprep.subr.mxu0 0.0
        %3379 = vmatpush1.msra.mxu0 0.0
        %3380 = vmatprep.subr.mxu0 0.0
        %3381 = vmatpush1.msra.mxu0 0.0
        %3382 = vmatprep.subr.mxu0 0.0
        %3383 = vmatpush1.msra.mxu0 0.0
        %3384 = vmatprep.subr.mxu0 0.0
        %3385 = vmatpush1.msra.mxu0 0.0
        %3386 = vmatprep.subr.mxu0 0.0
        %3387 = vmatpush1.msra.mxu0 0.0
        %3388 = vmatprep.subr.mxu0 0.0
        %3389 = vmatpush1.msra.mxu0 0.0
        %3390 = vmatprep.subr.mxu0 0.0
        %3391 = vmatpush1.msra.mxu0 0.0
        %3392 = vmatprep.subr.mxu0 0.0
        %3393 = vmatpush1.msra.mxu0 0.0
        %3394 = vmatprep.subr.mxu0 0.0
        %3395 = vmatpush1.msra.mxu0 0.0
        %3396 = vmatprep.subr.mxu0 0.0
        %3397 = vmatpush1.msra.mxu0 0.0
        %3398 = vmatprep.subr.mxu0 0.0
        %3399 = vmatpush1.msra.mxu0 0.0
        %3400 = vmatprep.mubr.f32.mxu0 0.0
        %3401 = vmatmul.mubr.f32.gmra.mrb[0].mxu0 %v3096
        %v3402 = vpop.f32.mrb[0].mxu0
        %v3403 = vadd.f32 %v3326, %v3402
        %v3404 = vpop.f32.mrb[0].mxu0
        %v3405 = vadd.f32 %v3328, %v3404
        %3406 = vmatprep.mubr.f32.mxu0 0.0
        %3407 = vmatmul.mubr.f32.gmra.mrb[0].mxu0 %v3097
        %v3408 = vpop.f32.mrb[0].mxu0
        %v3409 = vadd.f32 %v3332, %v3408
        %v3410 = vpop.f32.mrb[0].mxu0
        %v3411 = vadd.f32 %v3334, %v3410
        %3412 = vdwg.mxu0
        %3413 = vmatprep.subr.mxu0 0.0
        %3414 = vmatpush1.msra.mxu0 %v3100
        %3415 = vmatprep.subr.mxu0 0.0
        %3416 = vmatpush1.msra.mxu0 %v3103
        %3417 = vmatprep.subr.mxu0 0.0
        %3418 = vmatpush1.msra.mxu0 %v3106
        %3419 = vmatprep.subr.mxu0 0.0
        %3420 = vmatpush1.msra.mxu0 %v3109
        %3421 = vmatprep.subr.mxu0 0.0
        %3422 = vmatpush1.msra.mxu0 %v3112
        %3423 = vmatprep.subr.mxu0 0.0
        %3424 = vmatpush1.msra.mxu0 %v3115
        %3425 = vmatprep.subr.mxu0 0.0
        %3426 = vmatpush1.msra.mxu0 %v3118
        %3427 = vmatprep.subr.mxu0 0.0
        %3428 = vmatpush1.msra.mxu0 %v3121
        %3429 = vmatprep.subr.mxu0 0.0
        %3430 = vmatpush1.msra.mxu0 %v3124
        %3431 = vmatprep.subr.mxu0 0.0
        %3432 = vmatpush1.msra.mxu0 %v3127
        %3433 = vmatprep.subr.mxu0 0.0
        %3434 = vmatpush1.msra.mxu0 %v3130
        %3435 = vmatprep.subr.mxu0 0.0
        %3436 = vmatpush1.msra.mxu0 %v3133
        %3437 = vmatprep.subr.mxu0 0.0
        %3438 = vmatpush1.msra.mxu0 %v3136
        %3439 = vmatprep.subr.mxu0 0.0
        %3440 = vmatpush1.msra.mxu0 %v3139
        %3441 = vmatprep.subr.mxu0 0.0
        %3442 = vmatpush1.msra.mxu0 %v3142
        %3443 = vmatprep.subr.mxu0 0.0
        %3444 = vmatpush1.msra.mxu0 %v3145
        %3445 = vmatprep.subr.mxu0 0.0
        %3446 = vmatpush1.msra.mxu0 %v3148
        %3447 = vmatprep.subr.mxu0 0.0
        %3448 = vmatpush1.msra.mxu0 %v3151
        %3449 = vmatprep.subr.mxu0 0.0
        %3450 = vmatpush1.msra.mxu0 %v3154
        %3451 = vmatprep.subr.mxu0 0.0
        %3452 = vmatpush1.msra.mxu0 %v3157
        %3453 = vmatprep.subr.mxu0 0.0
        %3454 = vmatpush1.msra.mxu0 %v3160
        %3455 = vmatprep.subr.mxu0 0.0
        %3456 = vmatpush1.msra.mxu0 %v3163
        %3457 = vmatprep.subr.mxu0 0.0
        %3458 = vmatpush1.msra.mxu0 %v3166
        %3459 = vmatprep.subr.mxu0 0.0
        %3460 = vmatpush1.msra.mxu0 %v3169
        %3461 = vmatprep.subr.mxu0 0.0
        %3462 = vmatpush1.msra.mxu0 %v3172
        %3463 = vmatprep.subr.mxu0 0.0
        %3464 = vmatpush1.msra.mxu0 %v3175
        %3465 = vmatprep.subr.mxu0 0.0
        %3466 = vmatpush1.msra.mxu0 %v3178
        %3467 = vmatprep.subr.mxu0 0.0
        %3468 = vmatpush1.msra.mxu0 %v3181
        %3469 = vmatprep.subr.mxu0 0.0
        %3470 = vmatpush1.msra.mxu0 %v3184
        %3471 = vmatprep.subr.mxu0 0.0
        %3472 = vmatpush1.msra.mxu0 %v3187
        %3473 = vmatprep.subr.mxu0 0.0
        %3474 = vmatpush1.msra.mxu0 %v3190
        %3475 = vmatprep.subr.mxu0 0.0
        %3476 = vmatpush1.msra.mxu0 %v3193
        %3477 = vmatprep.mubr.f32.mxu0 %v3094
        %3478 = vmatmul.mubr.f32.gmra.mrb[0].mxu0 %v3092
        %v3479 = vpop.f32.mrb[0].mxu0
        %v3480 = vadd.f32 %v3255, %v3479
        %v3481 = vpop.f32.mrb[0].mxu0
        %3482 = vmatprep.mubr.f32.mxu0 %v3095
        %3483 = vmatmul.mubr.f32.gmra.mrb[0].mxu0 %v3093
        %v3484 = vpop.f32.mrb[0].mxu0
        %v3485 = vadd.f32 %v3255, %v3484
        %v3486 = vpop.f32.mrb[0].mxu0
        %3487 = vdwg.mxu0
        %3488 = vmatprep.subr.mxu0 0.0
        %3489 = vmatpush1.msra.mxu0 %v3196
        %3490 = vmatprep.subr.mxu0 0.0
        %3491 = vmatpush1.msra.mxu0 %v3199
        %3492 = vmatprep.subr.mxu0 0.0
        %3493 = vmatpush1.msra.mxu0 %v3202
        %3494 = vmatprep.subr.mxu0 0.0
        %3495 = vmatpush1.msra.mxu0 %v3205
        %3496 = vmatprep.subr.mxu0 0.0
        %3497 = vmatpush1.msra.mxu0 %v3208
        %3498 = vmatprep.subr.mxu0 0.0
        %3499 = vmatpush1.msra.mxu0 %v3211
        %3500 = vmatprep.subr.mxu0 0.0
        %3501 = vmatpush1.msra.mxu0 %v3214
        %3502 = vmatprep.subr.mxu0 0.0
        %3503 = vmatpush1.msra.mxu0 %v3217
        %3504 = vmatprep.subr.mxu0 0.0
        %3505 = vmatpush1.msra.mxu0 %v3220
        %3506 = vmatprep.subr.mxu0 0.0
        %3507 = vmatpush1.msra.mxu0 %v3223
        %3508 = vmatprep.subr.mxu0 0.0
        %3509 = vmatpush1.msra.mxu0 %v3226
        %3510 = vmatprep.subr.mxu0 0.0
        %3511 = vmatpush1.msra.mxu0 %v3229
        %3512 = vmatprep.subr.mxu0 0.0
        %3513 = vmatpush1.msra.mxu0 %v3232
        %3514 = vmatprep.subr.mxu0 0.0
        %3515 = vmatpush1.msra.mxu0 %v3235
        %3516 = vmatprep.subr.mxu0 0.0
        %3517 = vmatpush1.msra.mxu0 %v3238
        %3518 = vmatprep.subr.mxu0 0.0
        %3519 = vmatpush1.msra.mxu0 %v3241
        %3520 = vmatprep.subr.mxu0 0.0
        %3521 = vmatpush1.msra.mxu0 0.0
        %3522 = vmatprep.subr.mxu0 0.0
        %3523 = vmatpush1.msra.mxu0 0.0
        %3524 = vmatprep.subr.mxu0 0.0
        %3525 = vmatpush1.msra.mxu0 0.0
        %3526 = vmatprep.subr.mxu0 0.0
        %3527 = vmatpush1.msra.mxu0 0.0
        %3528 = vmatprep.subr.mxu0 0.0
        %3529 = vmatpush1.msra.mxu0 0.0
        %3530 = vmatprep.subr.mxu0 0.0
        %3531 = vmatpush1.msra.mxu0 0.0
        %3532 = vmatprep.subr.mxu0 0.0
        %3533 = vmatpush1.msra.mxu0 0.0
        %3534 = vmatprep.subr.mxu0 0.0
        %3535 = vmatpush1.msra.mxu0 0.0
        %3536 = vmatprep.subr.mxu0 0.0
        %3537 = vmatpush1.msra.mxu0 0.0
        %3538 = vmatprep.subr.mxu0 0.0
        %3539 = vmatpush1.msra.mxu0 0.0
        %3540 = vmatprep.subr.mxu0 0.0
        %3541 = vmatpush1.msra.mxu0 0.0
        %3542 = vmatprep.subr.mxu0 0.0
        %3543 = vmatpush1.msra.mxu0 0.0
        %3544 = vmatprep.subr.mxu0 0.0
        %3545 = vmatpush1.msra.mxu0 0.0
        %3546 = vmatprep.subr.mxu0 0.0
        %3547 = vmatpush1.msra.mxu0 0.0
        %3548 = vmatprep.subr.mxu0 0.0
        %3549 = vmatpush1.msra.mxu0 0.0
        %3550 = vmatprep.subr.mxu0 0.0
        %3551 = vmatpush1.msra.mxu0 0.0
        %3552 = vmatprep.mubr.f32.mxu0 0.0
        %3553 = vmatmul.mubr.f32.gmra.mrb[0].mxu0 %v3096
        %v3554 = vpop.f32.mrb[0].mxu0
        %v3555 = vadd.f32 %v3480, %v3554
        %v3556 = vpop.f32.mrb[0].mxu0
        %3557 = vmatprep.mubr.f32.mxu0 0.0
        %3558 = vmatmul.mubr.f32.gmra.mrb[0].mxu0 %v3097
        %v3559 = vpop.f32.mrb[0].mxu0
        %v3560 = vadd.f32 %v3485, %v3559
        %v3561 = vpop.f32.mrb[0].mxu0
        %3562 = vdwg.mxu0
        %v3563 = vadd.f32 %v578, %v3403
        %v3564 = vadd.f32 %v579, %v3405
        %v3565 = vadd.f32 %v580, %v3555
        %v3566 = vadd.f32 %v581, %v3409
        %v3567 = vadd.f32 %v582, %v3411
        %v3568 = vadd.f32 %v583, %v3560
        %v3569 = vld [vmem:[#allocation13] sm:$0x7]
        %v3570 = vld [vmem:[#allocation14] sm:$0x7]
        %v3571 = vadd.f32 %v3563, %v3564
        %v3572 = vadd.f32 %v3571, %v3565
        %3573 = vadd.xlane.f32.xlu0 %v3572
        %v3574 = vpop.xlane.xlu0 %3573
        %v3575 = vadd.f32 %v3566, %v3567
        %v3576 = vadd.f32 %v3575, %v3568
        %3577 = vadd.xlane.f32.xlu0 %v3576
        %v3578 = vpop.xlane.xlu0 %3577
        %v3579 = vmul.f32 %v3574, %v594
        %v3580 = vmul.f32 %v3578, %v594
        %v3581 = vsub.f32 %v3563, %v3579
        %v3582 = vsub.f32 %v3564, %v3579
        %v3583 = vsub.f32 %v3565, %v3579
        %v3584 = vsub.f32 %v3566, %v3580
        %v3585 = vsub.f32 %v3567, %v3580
        %v3586 = vsub.f32 %v3568, %v3580
        %v3587 = vmul.f32 %v3581, %v3581
        %v3588 = vmul.f32 %v3582, %v3582
        %v3589 = vmul.f32 %v3583, %v3583
        %v3590 = vmul.f32 %v3584, %v3584
        %v3591 = vmul.f32 %v3585, %v3585
        %v3592 = vmul.f32 %v3586, %v3586
        %v3593 = vadd.f32 %v3587, %v3588
        %v3594 = vadd.f32 %v3593, %v3589
        %3595 = vadd.xlane.f32.xlu0 %v3594
        %v3596 = vpop.xlane.xlu0 %3595
        %v3597 = vadd.f32 %v3590, %v3591
        %v3598 = vadd.f32 %v3597, %v3592
        %3599 = vadd.xlane.f32.xlu0 %v3598
        %v3600 = vpop.xlane.xlu0 %3599
        %v3601 = vmul.f32 %v3596, %v594
        %v3602 = vmul.f32 %v3600, %v594
        %v3603 = vadd.f32 %v3601, 1e-05
        %v3604 = vadd.f32 %v3602, 1e-05
        %v3605 = vrsqrt.pop %v3603
        %v3606 = vrsqrt.pop %v3604
        %v3607 = vmul.f32 %v3581, %v3605
        %v3608 = vmul.f32 %v3582, %v3605
        %v3609 = vmul.f32 %v3583, %v3605
        %v3610 = vmul.f32 %v3584, %v3606
        %v3611 = vmul.f32 %v3585, %v3606
        %v3612 = vmul.f32 %v3586, %v3606
        %v3614 = vlaneseq
        %v3615 = vshrl.u32 %v3614, 7
        %v3616 = vsub.s32 0, %v3615
        %v3617 = vrot.slane %v3569, %v3616
        %v3618 = vlaneseq
        %v3619 = vshrl.u32 %v3618, 7
        %v3620 = vsub.s32 1, %v3619
        %v3621 = vrot.slane %v3569, %v3620
        %v3622 = vlaneseq
        %v3623 = vshrl.u32 %v3622, 7
        %v3624 = vsub.s32 2, %v3623
        %v3625 = vrot.slane %v3569, %v3624
        %v3629 = vmul.f32 %v3607, %v3617
        %v3630 = vmul.f32 %v3608, %v3621
        %v3631 = vmul.f32 %v3609, %v3625
        %v3632 = vmul.f32 %v3610, %v3617
        %v3633 = vmul.f32 %v3611, %v3621
        %v3634 = vmul.f32 %v3612, %v3625
        %v3636 = vlaneseq
        %v3637 = vshrl.u32 %v3636, 7
        %v3638 = vsub.s32 0, %v3637
        %v3639 = vrot.slane %v3570, %v3638
        %v3640 = vlaneseq
        %v3641 = vshrl.u32 %v3640, 7
        %v3642 = vsub.s32 1, %v3641
        %v3643 = vrot.slane %v3570, %v3642
        %v3644 = vlaneseq
        %v3645 = vshrl.u32 %v3644, 7
        %v3646 = vsub.s32 2, %v3645
        %v3647 = vrot.slane %v3570, %v3646
        %v3651 = vadd.f32 %v3629, %v3639
        %v3652 = vadd.f32 %v3630, %v3643
        %v3653 = vadd.f32 %v3631, %v3647
        %v3654 = vadd.f32 %v3632, %v3639
        %v3655 = vadd.f32 %v3633, %v3643
        %v3656 = vadd.f32 %v3634, %v3647
        %v3657 = vld [vmem:[#allocation16] sm:$0xff]
        %v3658 = vld [vmem:[#allocation16 + $0x8] sm:$0xff]
        %v3659 = vld [vmem:[#allocation16 + $0x10] sm:$0xff]
        %v3660 = vld [vmem:[#allocation16 + $0x18] sm:$0xff]
        %v3661 = vld [vmem:[#allocation16 + $0x20] sm:$0xff]
        %v3662 = vld [vmem:[#allocation16 + $0x28] sm:$0xff]
        %v3663 = vld [vmem:[#allocation16 + $0x30] sm:$0xff]
        %v3664 = vld [vmem:[#allocation16 + $0x38] sm:$0xff]
        %v3665 = vld [vmem:[#allocation16 + $0x40] sm:$0xff]
        %v3666 = vld [vmem:[#allocation16 + $0x48] sm:$0xff]
        %v3667 = vld [vmem:[#allocation16 + $0x50] sm:$0xff]
        %v3668 = vld [vmem:[#allocation16 + $0x58] sm:$0xff]
        %v3669 = vld [vmem:[#allocation16 + $0x60] sm:$0xff]
        %v3670 = vld [vmem:[#allocation16 + $0x68] sm:$0xff]
        %v3671 = vld [vmem:[#allocation16 + $0x70] sm:$0xff]
        %v3672 = vld [vmem:[#allocation16 + $0x78] sm:$0xff]
        %v3673 = vld [vmem:[#allocation16 + $0x80] sm:$0xff]
        %v3674 = vld [vmem:[#allocation16 + $0x88] sm:$0xff]
        %v3675 = vld [vmem:[#allocation16 + $0x90] sm:$0xff]
        %v3676 = vld [vmem:[#allocation16 + $0x98] sm:$0xff]
        %v3677 = vld [vmem:[#allocation16 + $0xa0] sm:$0xff]
        %v3678 = vld [vmem:[#allocation16 + $0xa8] sm:$0xff]
        %v3679 = vld [vmem:[#allocation16 + $0xb0] sm:$0xff]
        %v3680 = vld [vmem:[#allocation16 + $0xb8] sm:$0xff]
        %v3681 = vld [vmem:[#allocation16 + $0xc0] sm:$0xff]
        %v3682 = vld [vmem:[#allocation16 + $0xc8] sm:$0xff]
        %v3683 = vld [vmem:[#allocation16 + $0xd0] sm:$0xff]
        %v3684 = vld [vmem:[#allocation16 + $0xd8] sm:$0xff]
        %v3685 = vld [vmem:[#allocation16 + $0xe0] sm:$0xff]
        %v3686 = vld [vmem:[#allocation16 + $0xe8] sm:$0xff]
        %v3687 = vld [vmem:[#allocation16 + $0xf0] sm:$0xff]
        %v3688 = vld [vmem:[#allocation16 + $0xf8] sm:$0xff]
        %v3689 = vld [vmem:[#allocation16 + $0x100] sm:$0xff]
        %v3690 = vld [vmem:[#allocation16 + $0x108] sm:$0xff]
        %v3691 = vld [vmem:[#allocation16 + $0x110] sm:$0xff]
        %v3692 = vld [vmem:[#allocation16 + $0x118] sm:$0xff]
        %v3693 = vld [vmem:[#allocation16 + $0x120] sm:$0xff]
        %v3694 = vld [vmem:[#allocation16 + $0x128] sm:$0xff]
        %v3695 = vld [vmem:[#allocation16 + $0x130] sm:$0xff]
        %v3696 = vld [vmem:[#allocation16 + $0x138] sm:$0xff]
        %v3697 = vld [vmem:[#allocation16 + $0x140] sm:$0xff]
        %v3698 = vld [vmem:[#allocation16 + $0x148] sm:$0xff]
        %v3699 = vld [vmem:[#allocation16 + $0x150] sm:$0xff]
        %v3700 = vld [vmem:[#allocation16 + $0x158] sm:$0xff]
        %v3701 = vld [vmem:[#allocation16 + $0x160] sm:$0xff]
        %v3702 = vld [vmem:[#allocation16 + $0x168] sm:$0xff]
        %v3703 = vld [vmem:[#allocation16 + $0x170] sm:$0xff]
        %v3704 = vld [vmem:[#allocation16 + $0x178] sm:$0xff]
        %v3705 = vld [vmem:[#allocation16 + $0x180] sm:$0xff]
        %v3706 = vld [vmem:[#allocation16 + $0x188] sm:$0xff]
        %v3707 = vld [vmem:[#allocation16 + $0x190] sm:$0xff]
        %v3708 = vld [vmem:[#allocation16 + $0x198] sm:$0xff]
        %v3709 = vld [vmem:[#allocation16 + $0x1a0] sm:$0xff]
        %v3710 = vld [vmem:[#allocation16 + $0x1a8] sm:$0xff]
        %v3711 = vld [vmem:[#allocation16 + $0x1b0] sm:$0xff]
        %v3712 = vld [vmem:[#allocation16 + $0x1b8] sm:$0xff]
        %v3713 = vld [vmem:[#allocation16 + $0x1c0] sm:$0xff]
        %v3714 = vld [vmem:[#allocation16 + $0x1c8] sm:$0xff]
        %v3715 = vld [vmem:[#allocation16 + $0x1d0] sm:$0xff]
        %v3716 = vld [vmem:[#allocation16 + $0x1d8] sm:$0xff]
        %v3717 = vld [vmem:[#allocation16 + $0x1e0] sm:$0xff]
        %v3718 = vld [vmem:[#allocation16 + $0x1e8] sm:$0xff]
        %v3719 = vld [vmem:[#allocation16 + $0x1f0] sm:$0xff]
        %v3720 = vld [vmem:[#allocation16 + $0x1f8] sm:$0xff]
        %v3721 = vld [vmem:[#allocation16 + $0x200] sm:$0xff]
        %v3722 = vld [vmem:[#allocation16 + $0x208] sm:$0xff]
        %v3723 = vld [vmem:[#allocation16 + $0x210] sm:$0xff]
        %v3724 = vld [vmem:[#allocation16 + $0x218] sm:$0xff]
        %v3725 = vld [vmem:[#allocation16 + $0x220] sm:$0xff]
        %v3726 = vld [vmem:[#allocation16 + $0x228] sm:$0xff]
        %v3727 = vld [vmem:[#allocation16 + $0x230] sm:$0xff]
        %v3728 = vld [vmem:[#allocation16 + $0x238] sm:$0xff]
        %v3729 = vld [vmem:[#allocation16 + $0x240] sm:$0xff]
        %v3730 = vld [vmem:[#allocation16 + $0x248] sm:$0xff]
        %v3731 = vld [vmem:[#allocation16 + $0x250] sm:$0xff]
        %v3732 = vld [vmem:[#allocation16 + $0x258] sm:$0xff]
        %v3733 = vld [vmem:[#allocation16 + $0x260] sm:$0xff]
        %v3734 = vld [vmem:[#allocation16 + $0x268] sm:$0xff]
        %v3735 = vld [vmem:[#allocation16 + $0x270] sm:$0xff]
        %v3736 = vld [vmem:[#allocation16 + $0x278] sm:$0xff]
        %v3737 = vld [vmem:[#allocation16 + $0x280] sm:$0xff]
        %v3738 = vld [vmem:[#allocation16 + $0x288] sm:$0xff]
        %v3739 = vld [vmem:[#allocation16 + $0x290] sm:$0xff]
        %v3740 = vld [vmem:[#allocation16 + $0x298] sm:$0xff]
        %v3741 = vld [vmem:[#allocation16 + $0x2a0] sm:$0xff]
        %v3742 = vld [vmem:[#allocation16 + $0x2a8] sm:$0xff]
        %v3743 = vld [vmem:[#allocation16 + $0x2b0] sm:$0xff]
        %v3744 = vld [vmem:[#allocation16 + $0x2b8] sm:$0xff]
        %v3745 = vld [vmem:[#allocation16 + $0x2c0] sm:$0xff]
        %v3746 = vld [vmem:[#allocation16 + $0x2c8] sm:$0xff]
        %v3747 = vld [vmem:[#allocation16 + $0x2d0] sm:$0xff]
        %v3748 = vld [vmem:[#allocation16 + $0x2d8] sm:$0xff]
        %v3749 = vld [vmem:[#allocation16 + $0x2e0] sm:$0xff]
        %v3750 = vld [vmem:[#allocation16 + $0x2e8] sm:$0xff]
        %v3751 = vld [vmem:[#allocation16 + $0x2f0] sm:$0xff]
        %v3752 = vld [vmem:[#allocation16 + $0x2f8] sm:$0xff]
        %v3753 = vld [vmem:[#allocation16 + $0x300] sm:$0xff]
        %v3754 = vld [vmem:[#allocation16 + $0x308] sm:$0xff]
        %v3755 = vld [vmem:[#allocation16 + $0x310] sm:$0xff]
        %v3756 = vld [vmem:[#allocation16 + $0x318] sm:$0xff]
        %v3757 = vld [vmem:[#allocation16 + $0x320] sm:$0xff]
        %v3758 = vld [vmem:[#allocation16 + $0x328] sm:$0xff]
        %v3759 = vld [vmem:[#allocation16 + $0x330] sm:$0xff]
        %v3760 = vld [vmem:[#allocation16 + $0x338] sm:$0xff]
        %v3761 = vld [vmem:[#allocation16 + $0x340] sm:$0xff]
        %v3762 = vld [vmem:[#allocation16 + $0x348] sm:$0xff]
        %v3763 = vld [vmem:[#allocation16 + $0x350] sm:$0xff]
        %v3764 = vld [vmem:[#allocation16 + $0x358] sm:$0xff]
        %v3765 = vld [vmem:[#allocation16 + $0x360] sm:$0xff]
        %v3766 = vld [vmem:[#allocation16 + $0x368] sm:$0xff]
        %v3767 = vld [vmem:[#allocation16 + $0x370] sm:$0xff]
        %v3768 = vld [vmem:[#allocation16 + $0x378] sm:$0xff]
        %v3769 = vld [vmem:[#allocation16 + $0x380] sm:$0xff]
        %v3770 = vld [vmem:[#allocation16 + $0x388] sm:$0xff]
        %v3771 = vld [vmem:[#allocation16 + $0x390] sm:$0xff]
        %v3772 = vld [vmem:[#allocation16 + $0x398] sm:$0xff]
        %v3773 = vld [vmem:[#allocation16 + $0x3a0] sm:$0xff]
        %v3774 = vld [vmem:[#allocation16 + $0x3a8] sm:$0xff]
        %v3775 = vld [vmem:[#allocation16 + $0x3b0] sm:$0xff]
        %v3776 = vld [vmem:[#allocation16 + $0x3b8] sm:$0xff]
        %v3777 = vld [vmem:[#allocation16 + $0x3c0] sm:$0xff]
        %v3778 = vld [vmem:[#allocation16 + $0x3c8] sm:$0xff]
        %v3779 = vld [vmem:[#allocation16 + $0x3d0] sm:$0xff]
        %v3780 = vld [vmem:[#allocation16 + $0x3d8] sm:$0xff]
        %v3781 = vld [vmem:[#allocation16 + $0x3e0] sm:$0xff]
        %v3782 = vld [vmem:[#allocation16 + $0x3e8] sm:$0xff]
        %v3783 = vld [vmem:[#allocation16 + $0x3f0] sm:$0xff]
        %v3784 = vld [vmem:[#allocation16 + $0x3f8] sm:$0xff]
        %v3785 = vld [vmem:[#allocation16 + $0x400] sm:$0xff]
        %v3786 = vld [vmem:[#allocation16 + $0x408] sm:$0xff]
        %v3787 = vld [vmem:[#allocation16 + $0x410] sm:$0xff]
        %v3788 = vld [vmem:[#allocation16 + $0x418] sm:$0xff]
        %v3789 = vld [vmem:[#allocation16 + $0x420] sm:$0xff]
        %v3790 = vld [vmem:[#allocation16 + $0x428] sm:$0xff]
        %v3791 = vld [vmem:[#allocation16 + $0x430] sm:$0xff]
        %v3792 = vld [vmem:[#allocation16 + $0x438] sm:$0xff]
        %v3793 = vld [vmem:[#allocation16 + $0x440] sm:$0xff]
        %v3794 = vld [vmem:[#allocation16 + $0x448] sm:$0xff]
        %v3795 = vld [vmem:[#allocation16 + $0x450] sm:$0xff]
        %v3796 = vld [vmem:[#allocation16 + $0x458] sm:$0xff]
        %v3797 = vld [vmem:[#allocation16 + $0x460] sm:$0xff]
        %v3798 = vld [vmem:[#allocation16 + $0x468] sm:$0xff]
        %v3799 = vld [vmem:[#allocation16 + $0x470] sm:$0xff]
        %v3800 = vld [vmem:[#allocation16 + $0x478] sm:$0xff]
        %v3801 = vld [vmem:[#allocation16 + $0x480] sm:$0xff]
        %v3802 = vld [vmem:[#allocation16 + $0x488] sm:$0xff]
        %v3803 = vld [vmem:[#allocation16 + $0x490] sm:$0xff]
        %v3804 = vld [vmem:[#allocation16 + $0x498] sm:$0xff]
        %v3805 = vld [vmem:[#allocation16 + $0x4a0] sm:$0xff]
        %v3806 = vld [vmem:[#allocation16 + $0x4a8] sm:$0xff]
        %v3807 = vld [vmem:[#allocation16 + $0x4b0] sm:$0xff]
        %v3808 = vld [vmem:[#allocation16 + $0x4b8] sm:$0xff]
        %v3809 = vld [vmem:[#allocation16 + $0x4c0] sm:$0xff]
        %v3810 = vld [vmem:[#allocation16 + $0x4c8] sm:$0xff]
        %v3811 = vld [vmem:[#allocation16 + $0x4d0] sm:$0xff]
        %v3812 = vld [vmem:[#allocation16 + $0x4d8] sm:$0xff]
        %v3813 = vld [vmem:[#allocation16 + $0x4e0] sm:$0xff]
        %v3814 = vld [vmem:[#allocation16 + $0x4e8] sm:$0xff]
        %v3815 = vld [vmem:[#allocation16 + $0x4f0] sm:$0xff]
        %v3816 = vld [vmem:[#allocation16 + $0x4f8] sm:$0xff]
        %v3817 = vld [vmem:[#allocation16 + $0x500] sm:$0xff]
        %v3818 = vld [vmem:[#allocation16 + $0x508] sm:$0xff]
        %v3819 = vld [vmem:[#allocation16 + $0x510] sm:$0xff]
        %v3820 = vld [vmem:[#allocation16 + $0x518] sm:$0xff]
        %v3821 = vld [vmem:[#allocation16 + $0x520] sm:$0xff]
        %v3822 = vld [vmem:[#allocation16 + $0x528] sm:$0xff]
        %v3823 = vld [vmem:[#allocation16 + $0x530] sm:$0xff]
        %v3824 = vld [vmem:[#allocation16 + $0x538] sm:$0xff]
        %v3825 = vld [vmem:[#allocation16 + $0x540] sm:$0xff]
        %v3826 = vld [vmem:[#allocation16 + $0x548] sm:$0xff]
        %v3827 = vld [vmem:[#allocation16 + $0x550] sm:$0xff]
        %v3828 = vld [vmem:[#allocation16 + $0x558] sm:$0xff]
        %v3829 = vld [vmem:[#allocation16 + $0x560] sm:$0xff]
        %v3830 = vld [vmem:[#allocation16 + $0x568] sm:$0xff]
        %v3831 = vld [vmem:[#allocation16 + $0x570] sm:$0xff]
        %v3832 = vld [vmem:[#allocation16 + $0x578] sm:$0xff]
        %v3833 = vld [vmem:[#allocation16 + $0x580] sm:$0xff]
        %v3834 = vld [vmem:[#allocation16 + $0x588] sm:$0xff]
        %v3835 = vld [vmem:[#allocation16 + $0x590] sm:$0xff]
        %v3836 = vld [vmem:[#allocation16 + $0x598] sm:$0xff]
        %v3837 = vld [vmem:[#allocation16 + $0x5a0] sm:$0xff]
        %v3838 = vld [vmem:[#allocation16 + $0x5a8] sm:$0xff]
        %v3839 = vld [vmem:[#allocation16 + $0x5b0] sm:$0xff]
        %v3840 = vld [vmem:[#allocation16 + $0x5b8] sm:$0xff]
        %v3841 = vld [vmem:[#allocation16 + $0x5c0] sm:$0xff]
        %v3842 = vld [vmem:[#allocation16 + $0x5c8] sm:$0xff]
        %v3843 = vld [vmem:[#allocation16 + $0x5d0] sm:$0xff]
        %v3844 = vld [vmem:[#allocation16 + $0x5d8] sm:$0xff]
        %v3845 = vld [vmem:[#allocation16 + $0x5e0] sm:$0xff]
        %v3846 = vld [vmem:[#allocation16 + $0x5e8] sm:$0xff]
        %v3847 = vld [vmem:[#allocation16 + $0x5f0] sm:$0xff]
        %v3848 = vld [vmem:[#allocation16 + $0x5f8] sm:$0xff]
        %v3849 = vld [vmem:[#allocation16 + $0x600] sm:$0xff]
        %v3850 = vld [vmem:[#allocation16 + $0x608] sm:$0xff]
        %v3851 = vld [vmem:[#allocation16 + $0x610] sm:$0xff]
        %v3852 = vld [vmem:[#allocation16 + $0x618] sm:$0xff]
        %v3853 = vld [vmem:[#allocation16 + $0x620] sm:$0xff]
        %v3854 = vld [vmem:[#allocation16 + $0x628] sm:$0xff]
        %v3855 = vld [vmem:[#allocation16 + $0x630] sm:$0xff]
        %v3856 = vld [vmem:[#allocation16 + $0x638] sm:$0xff]
        %v3857 = vld [vmem:[#allocation16 + $0x640] sm:$0xff]
        %v3858 = vld [vmem:[#allocation16 + $0x648] sm:$0xff]
        %v3859 = vld [vmem:[#allocation16 + $0x650] sm:$0xff]
        %v3860 = vld [vmem:[#allocation16 + $0x658] sm:$0xff]
        %v3861 = vld [vmem:[#allocation16 + $0x660] sm:$0xff]
        %v3862 = vld [vmem:[#allocation16 + $0x668] sm:$0xff]
        %v3863 = vld [vmem:[#allocation16 + $0x670] sm:$0xff]
        %v3864 = vld [vmem:[#allocation16 + $0x678] sm:$0xff]
        %v3865 = vld [vmem:[#allocation16 + $0x680] sm:$0xff]
        %v3866 = vld [vmem:[#allocation16 + $0x688] sm:$0xff]
        %v3867 = vld [vmem:[#allocation16 + $0x690] sm:$0xff]
        %v3868 = vld [vmem:[#allocation16 + $0x698] sm:$0xff]
        %v3869 = vld [vmem:[#allocation16 + $0x6a0] sm:$0xff]
        %v3870 = vld [vmem:[#allocation16 + $0x6a8] sm:$0xff]
        %v3871 = vld [vmem:[#allocation16 + $0x6b0] sm:$0xff]
        %v3872 = vld [vmem:[#allocation16 + $0x6b8] sm:$0xff]
        %v3873 = vld [vmem:[#allocation16 + $0x6c0] sm:$0xff]
        %v3874 = vld [vmem:[#allocation16 + $0x6c8] sm:$0xff]
        %v3875 = vld [vmem:[#allocation16 + $0x6d0] sm:$0xff]
        %v3876 = vld [vmem:[#allocation16 + $0x6d8] sm:$0xff]
        %v3877 = vld [vmem:[#allocation16 + $0x6e0] sm:$0xff]
        %v3878 = vld [vmem:[#allocation16 + $0x6e8] sm:$0xff]
        %v3879 = vld [vmem:[#allocation16 + $0x6f0] sm:$0xff]
        %v3880 = vld [vmem:[#allocation16 + $0x6f8] sm:$0xff]
        %v3881 = vld [vmem:[#allocation16 + $0x700] sm:$0xff]
        %v3882 = vld [vmem:[#allocation16 + $0x708] sm:$0xff]
        %v3883 = vld [vmem:[#allocation16 + $0x710] sm:$0xff]
        %v3884 = vld [vmem:[#allocation16 + $0x718] sm:$0xff]
        %v3885 = vld [vmem:[#allocation16 + $0x720] sm:$0xff]
        %v3886 = vld [vmem:[#allocation16 + $0x728] sm:$0xff]
        %v3887 = vld [vmem:[#allocation16 + $0x730] sm:$0xff]
        %v3888 = vld [vmem:[#allocation16 + $0x738] sm:$0xff]
        %v3889 = vld [vmem:[#allocation16 + $0x740] sm:$0xff]
        %v3890 = vld [vmem:[#allocation16 + $0x748] sm:$0xff]
        %v3891 = vld [vmem:[#allocation16 + $0x750] sm:$0xff]
        %v3892 = vld [vmem:[#allocation16 + $0x758] sm:$0xff]
        %v3893 = vld [vmem:[#allocation16 + $0x760] sm:$0xff]
        %v3894 = vld [vmem:[#allocation16 + $0x768] sm:$0xff]
        %v3895 = vld [vmem:[#allocation16 + $0x770] sm:$0xff]
        %v3896 = vld [vmem:[#allocation16 + $0x778] sm:$0xff]
        %v3897 = vld [vmem:[#allocation16 + $0x780] sm:$0xff]
        %v3898 = vld [vmem:[#allocation16 + $0x788] sm:$0xff]
        %v3899 = vld [vmem:[#allocation16 + $0x790] sm:$0xff]
        %v3900 = vld [vmem:[#allocation16 + $0x798] sm:$0xff]
        %v3901 = vld [vmem:[#allocation16 + $0x7a0] sm:$0xff]
        %v3902 = vld [vmem:[#allocation16 + $0x7a8] sm:$0xff]
        %v3903 = vld [vmem:[#allocation16 + $0x7b0] sm:$0xff]
        %v3904 = vld [vmem:[#allocation16 + $0x7b8] sm:$0xff]
        %v3905 = vld [vmem:[#allocation16 + $0x7c0] sm:$0xff]
        %v3906 = vld [vmem:[#allocation16 + $0x7c8] sm:$0xff]
        %v3907 = vld [vmem:[#allocation16 + $0x7d0] sm:$0xff]
        %v3908 = vld [vmem:[#allocation16 + $0x7d8] sm:$0xff]
        %v3909 = vld [vmem:[#allocation16 + $0x7e0] sm:$0xff]
        %v3910 = vld [vmem:[#allocation16 + $0x7e8] sm:$0xff]
        %v3911 = vld [vmem:[#allocation16 + $0x7f0] sm:$0xff]
        %v3912 = vld [vmem:[#allocation16 + $0x7f8] sm:$0xff]
        %v3913 = vld [vmem:[#allocation16 + $0x800] sm:$0xff]
        %v3914 = vld [vmem:[#allocation16 + $0x808] sm:$0xff]
        %v3915 = vld [vmem:[#allocation16 + $0x810] sm:$0xff]
        %v3916 = vld [vmem:[#allocation16 + $0x818] sm:$0xff]
        %v3917 = vld [vmem:[#allocation16 + $0x820] sm:$0xff]
        %v3918 = vld [vmem:[#allocation16 + $0x828] sm:$0xff]
        %v3919 = vld [vmem:[#allocation16 + $0x830] sm:$0xff]
        %v3920 = vld [vmem:[#allocation16 + $0x838] sm:$0xff]
        %v3921 = vld [vmem:[#allocation16 + $0x840] sm:$0xff]
        %v3922 = vld [vmem:[#allocation16 + $0x848] sm:$0xff]
        %v3923 = vld [vmem:[#allocation16 + $0x850] sm:$0xff]
        %v3924 = vld [vmem:[#allocation16 + $0x858] sm:$0xff]
        %v3925 = vld [vmem:[#allocation16 + $0x860] sm:$0xff]
        %v3926 = vld [vmem:[#allocation16 + $0x868] sm:$0xff]
        %v3927 = vld [vmem:[#allocation16 + $0x870] sm:$0xff]
        %v3928 = vld [vmem:[#allocation16 + $0x878] sm:$0xff]
        %v3929 = vld [vmem:[#allocation16 + $0x880] sm:$0xff]
        %v3930 = vld [vmem:[#allocation16 + $0x888] sm:$0xff]
        %v3931 = vld [vmem:[#allocation16 + $0x890] sm:$0xff]
        %v3932 = vld [vmem:[#allocation16 + $0x898] sm:$0xff]
        %v3933 = vld [vmem:[#allocation16 + $0x8a0] sm:$0xff]
        %v3934 = vld [vmem:[#allocation16 + $0x8a8] sm:$0xff]
        %v3935 = vld [vmem:[#allocation16 + $0x8b0] sm:$0xff]
        %v3936 = vld [vmem:[#allocation16 + $0x8b8] sm:$0xff]
        %v3937 = vld [vmem:[#allocation16 + $0x8c0] sm:$0xff]
        %v3938 = vld [vmem:[#allocation16 + $0x8c8] sm:$0xff]
        %v3939 = vld [vmem:[#allocation16 + $0x8d0] sm:$0xff]
        %v3940 = vld [vmem:[#allocation16 + $0x8d8] sm:$0xff]
        %v3941 = vld [vmem:[#allocation16 + $0x8e0] sm:$0xff]
        %v3942 = vld [vmem:[#allocation16 + $0x8e8] sm:$0xff]
        %v3943 = vld [vmem:[#allocation16 + $0x8f0] sm:$0xff]
        %v3944 = vld [vmem:[#allocation16 + $0x8f8] sm:$0xff]
        %v3945 = vld [vmem:[#allocation16 + $0x900] sm:$0xff]
        %v3946 = vld [vmem:[#allocation16 + $0x908] sm:$0xff]
        %v3947 = vld [vmem:[#allocation16 + $0x910] sm:$0xff]
        %v3948 = vld [vmem:[#allocation16 + $0x918] sm:$0xff]
        %v3949 = vld [vmem:[#allocation16 + $0x920] sm:$0xff]
        %v3950 = vld [vmem:[#allocation16 + $0x928] sm:$0xff]
        %v3951 = vld [vmem:[#allocation16 + $0x930] sm:$0xff]
        %v3952 = vld [vmem:[#allocation16 + $0x938] sm:$0xff]
        %v3953 = vld [vmem:[#allocation16 + $0x940] sm:$0xff]
        %v3954 = vld [vmem:[#allocation16 + $0x948] sm:$0xff]
        %v3955 = vld [vmem:[#allocation16 + $0x950] sm:$0xff]
        %v3956 = vld [vmem:[#allocation16 + $0x958] sm:$0xff]
        %v3957 = vld [vmem:[#allocation16 + $0x960] sm:$0xff]
        %v3958 = vld [vmem:[#allocation16 + $0x968] sm:$0xff]
        %v3959 = vld [vmem:[#allocation16 + $0x970] sm:$0xff]
        %v3960 = vld [vmem:[#allocation16 + $0x978] sm:$0xff]
        %v3961 = vld [vmem:[#allocation16 + $0x980] sm:$0xff]
        %v3962 = vld [vmem:[#allocation16 + $0x988] sm:$0xff]
        %v3963 = vld [vmem:[#allocation16 + $0x990] sm:$0xff]
        %v3964 = vld [vmem:[#allocation16 + $0x998] sm:$0xff]
        %v3965 = vld [vmem:[#allocation16 + $0x9a0] sm:$0xff]
        %v3966 = vld [vmem:[#allocation16 + $0x9a8] sm:$0xff]
        %v3967 = vld [vmem:[#allocation16 + $0x9b0] sm:$0xff]
        %v3968 = vld [vmem:[#allocation16 + $0x9b8] sm:$0xff]
        %v3969 = vld [vmem:[#allocation16 + $0x9c0] sm:$0xff]
        %v3970 = vld [vmem:[#allocation16 + $0x9c8] sm:$0xff]
        %v3971 = vld [vmem:[#allocation16 + $0x9d0] sm:$0xff]
        %v3972 = vld [vmem:[#allocation16 + $0x9d8] sm:$0xff]
        %v3973 = vld [vmem:[#allocation16 + $0x9e0] sm:$0xff]
        %v3974 = vld [vmem:[#allocation16 + $0x9e8] sm:$0xff]
        %v3975 = vld [vmem:[#allocation16 + $0x9f0] sm:$0xff]
        %v3976 = vld [vmem:[#allocation16 + $0x9f8] sm:$0xff]
        %v3977 = vld [vmem:[#allocation16 + $0xa00] sm:$0xff]
        %v3978 = vld [vmem:[#allocation16 + $0xa08] sm:$0xff]
        %v3979 = vld [vmem:[#allocation16 + $0xa10] sm:$0xff]
        %v3980 = vld [vmem:[#allocation16 + $0xa18] sm:$0xff]
        %v3981 = vld [vmem:[#allocation16 + $0xa20] sm:$0xff]
        %v3982 = vld [vmem:[#allocation16 + $0xa28] sm:$0xff]
        %v3983 = vld [vmem:[#allocation16 + $0xa30] sm:$0xff]
        %v3984 = vld [vmem:[#allocation16 + $0xa38] sm:$0xff]
        %v3985 = vld [vmem:[#allocation16 + $0xa40] sm:$0xff]
        %v3986 = vld [vmem:[#allocation16 + $0xa48] sm:$0xff]
        %v3987 = vld [vmem:[#allocation16 + $0xa50] sm:$0xff]
        %v3988 = vld [vmem:[#allocation16 + $0xa58] sm:$0xff]
        %v3989 = vld [vmem:[#allocation16 + $0xa60] sm:$0xff]
        %v3990 = vld [vmem:[#allocation16 + $0xa68] sm:$0xff]
        %v3991 = vld [vmem:[#allocation16 + $0xa70] sm:$0xff]
        %v3992 = vld [vmem:[#allocation16 + $0xa78] sm:$0xff]
        %v3993 = vld [vmem:[#allocation16 + $0xa80] sm:$0xff]
        %v3994 = vld [vmem:[#allocation16 + $0xa88] sm:$0xff]
        %v3995 = vld [vmem:[#allocation16 + $0xa90] sm:$0xff]
        %v3996 = vld [vmem:[#allocation16 + $0xa98] sm:$0xff]
        %v3997 = vld [vmem:[#allocation16 + $0xaa0] sm:$0xff]
        %v3998 = vld [vmem:[#allocation16 + $0xaa8] sm:$0xff]
        %v3999 = vld [vmem:[#allocation16 + $0xab0] sm:$0xff]
        %v4000 = vld [vmem:[#allocation16 + $0xab8] sm:$0xff]
        %v4001 = vld [vmem:[#allocation16 + $0xac0] sm:$0xff]
        %v4002 = vld [vmem:[#allocation16 + $0xac8] sm:$0xff]
        %v4003 = vld [vmem:[#allocation16 + $0xad0] sm:$0xff]
        %v4004 = vld [vmem:[#allocation16 + $0xad8] sm:$0xff]
        %v4005 = vld [vmem:[#allocation16 + $0xae0] sm:$0xff]
        %v4006 = vld [vmem:[#allocation16 + $0xae8] sm:$0xff]
        %v4007 = vld [vmem:[#allocation16 + $0xaf0] sm:$0xff]
        %v4008 = vld [vmem:[#allocation16 + $0xaf8] sm:$0xff]
        %v4009 = vld [vmem:[#allocation16 + $0xb00] sm:$0xff]
        %v4010 = vld [vmem:[#allocation16 + $0xb08] sm:$0xff]
        %v4011 = vld [vmem:[#allocation16 + $0xb10] sm:$0xff]
        %v4012 = vld [vmem:[#allocation16 + $0xb18] sm:$0xff]
        %v4013 = vld [vmem:[#allocation16 + $0xb20] sm:$0xff]
        %v4014 = vld [vmem:[#allocation16 + $0xb28] sm:$0xff]
        %v4015 = vld [vmem:[#allocation16 + $0xb30] sm:$0xff]
        %v4016 = vld [vmem:[#allocation16 + $0xb38] sm:$0xff]
        %v4017 = vld [vmem:[#allocation16 + $0xb40] sm:$0xff]
        %v4018 = vld [vmem:[#allocation16 + $0xb48] sm:$0xff]
        %v4019 = vld [vmem:[#allocation16 + $0xb50] sm:$0xff]
        %v4020 = vld [vmem:[#allocation16 + $0xb58] sm:$0xff]
        %v4021 = vld [vmem:[#allocation16 + $0xb60] sm:$0xff]
        %v4022 = vld [vmem:[#allocation16 + $0xb68] sm:$0xff]
        %v4023 = vld [vmem:[#allocation16 + $0xb70] sm:$0xff]
        %v4024 = vld [vmem:[#allocation16 + $0xb78] sm:$0xff]
        %v4025 = vld [vmem:[#allocation16 + $0xb80] sm:$0xff]
        %v4026 = vld [vmem:[#allocation16 + $0xb88] sm:$0xff]
        %v4027 = vld [vmem:[#allocation16 + $0xb90] sm:$0xff]
        %v4028 = vld [vmem:[#allocation16 + $0xb98] sm:$0xff]
        %v4029 = vld [vmem:[#allocation16 + $0xba0] sm:$0xff]
        %v4030 = vld [vmem:[#allocation16 + $0xba8] sm:$0xff]
        %v4031 = vld [vmem:[#allocation16 + $0xbb0] sm:$0xff]
        %v4032 = vld [vmem:[#allocation16 + $0xbb8] sm:$0xff]
        %v4033 = vld [vmem:[#allocation16 + $0xbc0] sm:$0xff]
        %v4034 = vld [vmem:[#allocation16 + $0xbc8] sm:$0xff]
        %v4035 = vld [vmem:[#allocation16 + $0xbd0] sm:$0xff]
        %v4036 = vld [vmem:[#allocation16 + $0xbd8] sm:$0xff]
        %v4037 = vld [vmem:[#allocation16 + $0xbe0] sm:$0xff]
        %v4038 = vld [vmem:[#allocation16 + $0xbe8] sm:$0xff]
        %v4039 = vld [vmem:[#allocation16 + $0xbf0] sm:$0xff]
        %v4040 = vld [vmem:[#allocation16 + $0xbf8] sm:$0xff]
        %v4041 = vld [vmem:[#allocation16 + $0xc00] sm:$0xff]
        %v4042 = vld [vmem:[#allocation16 + $0xc08] sm:$0xff]
        %v4043 = vld [vmem:[#allocation16 + $0xc10] sm:$0xff]
        %v4044 = vld [vmem:[#allocation16 + $0xc18] sm:$0xff]
        %v4045 = vld [vmem:[#allocation16 + $0xc20] sm:$0xff]
        %v4046 = vld [vmem:[#allocation16 + $0xc28] sm:$0xff]
        %v4047 = vld [vmem:[#allocation16 + $0xc30] sm:$0xff]
        %v4048 = vld [vmem:[#allocation16 + $0xc38] sm:$0xff]
        %v4049 = vld [vmem:[#allocation16 + $0xc40] sm:$0xff]
        %v4050 = vld [vmem:[#allocation16 + $0xc48] sm:$0xff]
        %v4051 = vld [vmem:[#allocation16 + $0xc50] sm:$0xff]
        %v4052 = vld [vmem:[#allocation16 + $0xc58] sm:$0xff]
        %v4053 = vld [vmem:[#allocation16 + $0xc60] sm:$0xff]
        %v4054 = vld [vmem:[#allocation16 + $0xc68] sm:$0xff]
        %v4055 = vld [vmem:[#allocation16 + $0xc70] sm:$0xff]
        %v4056 = vld [vmem:[#allocation16 + $0xc78] sm:$0xff]
        %v4057 = vld [vmem:[#allocation16 + $0xc80] sm:$0xff]
        %v4058 = vld [vmem:[#allocation16 + $0xc88] sm:$0xff]
        %v4059 = vld [vmem:[#allocation16 + $0xc90] sm:$0xff]
        %v4060 = vld [vmem:[#allocation16 + $0xc98] sm:$0xff]
        %v4061 = vld [vmem:[#allocation16 + $0xca0] sm:$0xff]
        %v4062 = vld [vmem:[#allocation16 + $0xca8] sm:$0xff]
        %v4063 = vld [vmem:[#allocation16 + $0xcb0] sm:$0xff]
        %v4064 = vld [vmem:[#allocation16 + $0xcb8] sm:$0xff]
        %v4065 = vld [vmem:[#allocation16 + $0xcc0] sm:$0xff]
        %v4066 = vld [vmem:[#allocation16 + $0xcc8] sm:$0xff]
        %v4067 = vld [vmem:[#allocation16 + $0xcd0] sm:$0xff]
        %v4068 = vld [vmem:[#allocation16 + $0xcd8] sm:$0xff]
        %v4069 = vld [vmem:[#allocation16 + $0xce0] sm:$0xff]
        %v4070 = vld [vmem:[#allocation16 + $0xce8] sm:$0xff]
        %v4071 = vld [vmem:[#allocation16 + $0xcf0] sm:$0xff]
        %v4072 = vld [vmem:[#allocation16 + $0xcf8] sm:$0xff]
        %v4073 = vld [vmem:[#allocation16 + $0xd00] sm:$0xff]
        %v4074 = vld [vmem:[#allocation16 + $0xd08] sm:$0xff]
        %v4075 = vld [vmem:[#allocation16 + $0xd10] sm:$0xff]
        %v4076 = vld [vmem:[#allocation16 + $0xd18] sm:$0xff]
        %v4077 = vld [vmem:[#allocation16 + $0xd20] sm:$0xff]
        %v4078 = vld [vmem:[#allocation16 + $0xd28] sm:$0xff]
        %v4079 = vld [vmem:[#allocation16 + $0xd30] sm:$0xff]
        %v4080 = vld [vmem:[#allocation16 + $0xd38] sm:$0xff]
        %v4081 = vld [vmem:[#allocation16 + $0xd40] sm:$0xff]
        %v4082 = vld [vmem:[#allocation16 + $0xd48] sm:$0xff]
        %v4083 = vld [vmem:[#allocation16 + $0xd50] sm:$0xff]
        %v4084 = vld [vmem:[#allocation16 + $0xd58] sm:$0xff]
        %v4085 = vld [vmem:[#allocation16 + $0xd60] sm:$0xff]
        %v4086 = vld [vmem:[#allocation16 + $0xd68] sm:$0xff]
        %v4087 = vld [vmem:[#allocation16 + $0xd70] sm:$0xff]
        %v4088 = vld [vmem:[#allocation16 + $0xd78] sm:$0xff]
        %v4089 = vld [vmem:[#allocation16 + $0xd80] sm:$0xff]
        %v4090 = vld [vmem:[#allocation16 + $0xd88] sm:$0xff]
        %v4091 = vld [vmem:[#allocation16 + $0xd90] sm:$0xff]
        %v4092 = vld [vmem:[#allocation16 + $0xd98] sm:$0xff]
        %v4093 = vld [vmem:[#allocation16 + $0xda0] sm:$0xff]
        %v4094 = vld [vmem:[#allocation16 + $0xda8] sm:$0xff]
        %v4095 = vld [vmem:[#allocation16 + $0xdb0] sm:$0xff]
        %v4096 = vld [vmem:[#allocation16 + $0xdb8] sm:$0xff]
        %v4097 = vld [vmem:[#allocation16 + $0xdc0] sm:$0xff]
        %v4098 = vld [vmem:[#allocation16 + $0xdc8] sm:$0xff]
        %v4099 = vld [vmem:[#allocation16 + $0xdd0] sm:$0xff]
        %v4100 = vld [vmem:[#allocation16 + $0xdd8] sm:$0xff]
        %v4101 = vld [vmem:[#allocation16 + $0xde0] sm:$0xff]
        %v4102 = vld [vmem:[#allocation16 + $0xde8] sm:$0xff]
        %v4103 = vld [vmem:[#allocation16 + $0xdf0] sm:$0xff]
        %v4104 = vld [vmem:[#allocation16 + $0xdf8] sm:$0xff]
        %v4105 = vld [vmem:[#allocation16 + $0xe00] sm:$0xff]
        %v4106 = vld [vmem:[#allocation16 + $0xe08] sm:$0xff]
        %v4107 = vld [vmem:[#allocation16 + $0xe10] sm:$0xff]
        %v4108 = vld [vmem:[#allocation16 + $0xe18] sm:$0xff]
        %v4109 = vld [vmem:[#allocation16 + $0xe20] sm:$0xff]
        %v4110 = vld [vmem:[#allocation16 + $0xe28] sm:$0xff]
        %v4111 = vld [vmem:[#allocation16 + $0xe30] sm:$0xff]
        %v4112 = vld [vmem:[#allocation16 + $0xe38] sm:$0xff]
        %v4113 = vld [vmem:[#allocation16 + $0xe40] sm:$0xff]
        %v4114 = vld [vmem:[#allocation16 + $0xe48] sm:$0xff]
        %v4115 = vld [vmem:[#allocation16 + $0xe50] sm:$0xff]
        %v4116 = vld [vmem:[#allocation16 + $0xe58] sm:$0xff]
        %v4117 = vld [vmem:[#allocation16 + $0xe60] sm:$0xff]
        %v4118 = vld [vmem:[#allocation16 + $0xe68] sm:$0xff]
        %v4119 = vld [vmem:[#allocation16 + $0xe70] sm:$0xff]
        %v4120 = vld [vmem:[#allocation16 + $0xe78] sm:$0xff]
        %v4121 = vld [vmem:[#allocation16 + $0xe80] sm:$0xff]
        %v4122 = vld [vmem:[#allocation16 + $0xe88] sm:$0xff]
        %v4123 = vld [vmem:[#allocation16 + $0xe90] sm:$0xff]
        %v4124 = vld [vmem:[#allocation16 + $0xe98] sm:$0xff]
        %v4125 = vld [vmem:[#allocation16 + $0xea0] sm:$0xff]
        %v4126 = vld [vmem:[#allocation16 + $0xea8] sm:$0xff]
        %v4127 = vld [vmem:[#allocation16 + $0xeb0] sm:$0xff]
        %v4128 = vld [vmem:[#allocation16 + $0xeb8] sm:$0xff]
        %v4129 = vld [vmem:[#allocation16 + $0xec0] sm:$0xff]
        %v4130 = vld [vmem:[#allocation16 + $0xec8] sm:$0xff]
        %v4131 = vld [vmem:[#allocation16 + $0xed0] sm:$0xff]
        %v4132 = vld [vmem:[#allocation16 + $0xed8] sm:$0xff]
        %v4133 = vld [vmem:[#allocation16 + $0xee0] sm:$0xff]
        %v4134 = vld [vmem:[#allocation16 + $0xee8] sm:$0xff]
        %v4135 = vld [vmem:[#allocation16 + $0xef0] sm:$0xff]
        %v4136 = vld [vmem:[#allocation16 + $0xef8] sm:$0xff]
        %v4137 = vld [vmem:[#allocation16 + $0xf00] sm:$0xff]
        %v4138 = vld [vmem:[#allocation16 + $0xf08] sm:$0xff]
        %v4139 = vld [vmem:[#allocation16 + $0xf10] sm:$0xff]
        %v4140 = vld [vmem:[#allocation16 + $0xf18] sm:$0xff]
        %v4141 = vld [vmem:[#allocation16 + $0xf20] sm:$0xff]
        %v4142 = vld [vmem:[#allocation16 + $0xf28] sm:$0xff]
        %v4143 = vld [vmem:[#allocation16 + $0xf30] sm:$0xff]
        %v4144 = vld [vmem:[#allocation16 + $0xf38] sm:$0xff]
        %v4145 = vld [vmem:[#allocation16 + $0xf40] sm:$0xff]
        %v4146 = vld [vmem:[#allocation16 + $0xf48] sm:$0xff]
        %v4147 = vld [vmem:[#allocation16 + $0xf50] sm:$0xff]
        %v4148 = vld [vmem:[#allocation16 + $0xf58] sm:$0xff]
        %v4149 = vld [vmem:[#allocation16 + $0xf60] sm:$0xff]
        %v4150 = vld [vmem:[#allocation16 + $0xf68] sm:$0xff]
        %v4151 = vld [vmem:[#allocation16 + $0xf70] sm:$0xff]
        %v4152 = vld [vmem:[#allocation16 + $0xf78] sm:$0xff]
        %v4153 = vld [vmem:[#allocation16 + $0xf80] sm:$0xff]
        %v4154 = vld [vmem:[#allocation16 + $0xf88] sm:$0xff]
        %v4155 = vld [vmem:[#allocation16 + $0xf90] sm:$0xff]
        %v4156 = vld [vmem:[#allocation16 + $0xf98] sm:$0xff]
        %v4157 = vld [vmem:[#allocation16 + $0xfa0] sm:$0xff]
        %v4158 = vld [vmem:[#allocation16 + $0xfa8] sm:$0xff]
        %v4159 = vld [vmem:[#allocation16 + $0xfb0] sm:$0xff]
        %v4160 = vld [vmem:[#allocation16 + $0xfb8] sm:$0xff]
        %v4161 = vld [vmem:[#allocation16 + $0xfc0] sm:$0xff]
        %v4162 = vld [vmem:[#allocation16 + $0xfc8] sm:$0xff]
        %v4163 = vld [vmem:[#allocation16 + $0xfd0] sm:$0xff]
        %v4164 = vld [vmem:[#allocation16 + $0xfd8] sm:$0xff]
        %v4165 = vld [vmem:[#allocation16 + $0xfe0] sm:$0xff]
        %v4166 = vld [vmem:[#allocation16 + $0xfe8] sm:$0xff]
        %v4167 = vld [vmem:[#allocation16 + $0xff0] sm:$0xff]
        %v4168 = vld [vmem:[#allocation16 + $0xff8] sm:$0xff]
        %v4169 = vld [vmem:[#allocation16 + $0x1000] sm:$0xff]
        %v4170 = vld [vmem:[#allocation16 + $0x1008] sm:$0xff]
        %v4171 = vld [vmem:[#allocation16 + $0x1010] sm:$0xff]
        %v4172 = vld [vmem:[#allocation16 + $0x1018] sm:$0xff]
        %v4173 = vld [vmem:[#allocation16 + $0x1020] sm:$0xff]
        %v4174 = vld [vmem:[#allocation16 + $0x1028] sm:$0xff]
        %v4175 = vld [vmem:[#allocation16 + $0x1030] sm:$0xff]
        %v4176 = vld [vmem:[#allocation16 + $0x1038] sm:$0xff]
        %v4177 = vld [vmem:[#allocation16 + $0x1040] sm:$0xff]
        %v4178 = vld [vmem:[#allocation16 + $0x1048] sm:$0xff]
        %v4179 = vld [vmem:[#allocation16 + $0x1050] sm:$0xff]
        %v4180 = vld [vmem:[#allocation16 + $0x1058] sm:$0xff]
        %v4181 = vld [vmem:[#allocation16 + $0x1060] sm:$0xff]
        %v4182 = vld [vmem:[#allocation16 + $0x1068] sm:$0xff]
        %v4183 = vld [vmem:[#allocation16 + $0x1070] sm:$0xff]
        %v4184 = vld [vmem:[#allocation16 + $0x1078] sm:$0xff]
        %v4185 = vld [vmem:[#allocation16 + $0x1080] sm:$0xff]
        %v4186 = vld [vmem:[#allocation16 + $0x1088] sm:$0xff]
        %v4187 = vld [vmem:[#allocation16 + $0x1090] sm:$0xff]
        %v4188 = vld [vmem:[#allocation16 + $0x1098] sm:$0xff]
        %v4189 = vld [vmem:[#allocation16 + $0x10a0] sm:$0xff]
        %v4190 = vld [vmem:[#allocation16 + $0x10a8] sm:$0xff]
        %v4191 = vld [vmem:[#allocation16 + $0x10b0] sm:$0xff]
        %v4192 = vld [vmem:[#allocation16 + $0x10b8] sm:$0xff]
        %v4193 = vld [vmem:[#allocation16 + $0x10c0] sm:$0xff]
        %v4194 = vld [vmem:[#allocation16 + $0x10c8] sm:$0xff]
        %v4195 = vld [vmem:[#allocation16 + $0x10d0] sm:$0xff]
        %v4196 = vld [vmem:[#allocation16 + $0x10d8] sm:$0xff]
        %v4197 = vld [vmem:[#allocation16 + $0x10e0] sm:$0xff]
        %v4198 = vld [vmem:[#allocation16 + $0x10e8] sm:$0xff]
        %v4199 = vld [vmem:[#allocation16 + $0x10f0] sm:$0xff]
        %v4200 = vld [vmem:[#allocation16 + $0x10f8] sm:$0xff]
        %v4201 = vld [vmem:[#allocation16 + $0x1100] sm:$0xff]
        %v4202 = vld [vmem:[#allocation16 + $0x1108] sm:$0xff]
        %v4203 = vld [vmem:[#allocation16 + $0x1110] sm:$0xff]
        %v4204 = vld [vmem:[#allocation16 + $0x1118] sm:$0xff]
        %v4205 = vld [vmem:[#allocation16 + $0x1120] sm:$0xff]
        %v4206 = vld [vmem:[#allocation16 + $0x1128] sm:$0xff]
        %v4207 = vld [vmem:[#allocation16 + $0x1130] sm:$0xff]
        %v4208 = vld [vmem:[#allocation16 + $0x1138] sm:$0xff]
        %v4209 = vld [vmem:[#allocation16 + $0x1140] sm:$0xff]
        %v4210 = vld [vmem:[#allocation16 + $0x1148] sm:$0xff]
        %v4211 = vld [vmem:[#allocation16 + $0x1150] sm:$0xff]
        %v4212 = vld [vmem:[#allocation16 + $0x1158] sm:$0xff]
        %v4213 = vld [vmem:[#allocation16 + $0x1160] sm:$0xff]
        %v4214 = vld [vmem:[#allocation16 + $0x1168] sm:$0xff]
        %v4215 = vld [vmem:[#allocation16 + $0x1170] sm:$0xff]
        %v4216 = vld [vmem:[#allocation16 + $0x1178] sm:$0xff]
        %v4217 = vld [vmem:[#allocation16 + $0x1180] sm:$0xff]
        %v4218 = vld [vmem:[#allocation16 + $0x1188] sm:$0xff]
        %v4219 = vld [vmem:[#allocation16 + $0x1190] sm:$0xff]
        %v4220 = vld [vmem:[#allocation16 + $0x1198] sm:$0xff]
        %v4221 = vld [vmem:[#allocation16 + $0x11a0] sm:$0xff]
        %v4222 = vld [vmem:[#allocation16 + $0x11a8] sm:$0xff]
        %v4223 = vld [vmem:[#allocation16 + $0x11b0] sm:$0xff]
        %v4224 = vld [vmem:[#allocation16 + $0x11b8] sm:$0xff]
        %v4225 = vld [vmem:[#allocation16 + $0x11c0] sm:$0xff]
        %v4226 = vld [vmem:[#allocation16 + $0x11c8] sm:$0xff]
        %v4227 = vld [vmem:[#allocation16 + $0x11d0] sm:$0xff]
        %v4228 = vld [vmem:[#allocation16 + $0x11d8] sm:$0xff]
        %v4229 = vld [vmem:[#allocation16 + $0x11e0] sm:$0xff]
        %v4230 = vld [vmem:[#allocation16 + $0x11e8] sm:$0xff]
        %v4231 = vld [vmem:[#allocation16 + $0x11f0] sm:$0xff]
        %v4232 = vld [vmem:[#allocation16 + $0x11f8] sm:$0xff]
        %v4233 = vld [vmem:[#allocation17] sm:$0xff]
        %v4234 = vld [vmem:[#allocation17 + $0x8] sm:$0xf]
        %v4237 = vlaneseq
        %v4238 = vshrl.u32 %v4237, 7
        %v4239 = vsub.s32 0, %v4238
        %v4240 = vrot.slane %v4233, %v4239
        %v4241 = vlaneseq
        %v4242 = vshrl.u32 %v4241, 7
        %v4243 = vsub.s32 1, %v4242
        %v4244 = vrot.slane %v4233, %v4243
        %v4245 = vlaneseq
        %v4246 = vshrl.u32 %v4245, 7
        %v4247 = vsub.s32 2, %v4246
        %v4248 = vrot.slane %v4233, %v4247
        %v4249 = vlaneseq
        %v4250 = vshrl.u32 %v4249, 7
        %v4251 = vsub.s32 3, %v4250
        %v4252 = vrot.slane %v4233, %v4251
        %v4253 = vlaneseq
        %v4254 = vshrl.u32 %v4253, 7
        %v4255 = vsub.s32 4, %v4254
        %v4256 = vrot.slane %v4233, %v4255
        %v4257 = vlaneseq
        %v4258 = vshrl.u32 %v4257, 7
        %v4259 = vsub.s32 5, %v4258
        %v4260 = vrot.slane %v4233, %v4259
        %v4261 = vlaneseq
        %v4262 = vshrl.u32 %v4261, 7
        %v4263 = vsub.s32 6, %v4262
        %v4264 = vrot.slane %v4233, %v4263
        %v4265 = vlaneseq
        %v4266 = vshrl.u32 %v4265, 7
        %v4267 = vsub.s32 7, %v4266
        %v4268 = vrot.slane %v4233, %v4267
        %v4269 = vlaneseq
        %v4270 = vshrl.u32 %v4269, 7
        %v4271 = vsub.s32 0, %v4270
        %v4272 = vrot.slane %v4234, %v4271
        %v4273 = vlaneseq
        %v4274 = vshrl.u32 %v4273, 7
        %v4275 = vsub.s32 1, %v4274
        %v4276 = vrot.slane %v4234, %v4275
        %v4277 = vlaneseq
        %v4278 = vshrl.u32 %v4277, 7
        %v4279 = vsub.s32 2, %v4278
        %v4280 = vrot.slane %v4234, %v4279
        %v4281 = vlaneseq
        %v4282 = vshrl.u32 %v4281, 7
        %v4283 = vsub.s32 3, %v4282
        %v4284 = vrot.slane %v4234, %v4283
        %4297 = vmatprep.subr.mxu0 %v3658
        %4298 = vmatpush1.msra.mxu0 %v3657
        %4299 = vmatprep.subr.mxu0 %v3670
        %4300 = vmatpush1.msra.mxu0 %v3669
        %4301 = vmatprep.subr.mxu0 %v3682
        %4302 = vmatpush1.msra.mxu0 %v3681
        %4303 = vmatprep.subr.mxu0 %v3694
        %4304 = vmatpush1.msra.mxu0 %v3693
        %4305 = vmatprep.subr.mxu0 %v3706
        %4306 = vmatpush1.msra.mxu0 %v3705
        %4307 = vmatprep.subr.mxu0 %v3718
        %4308 = vmatpush1.msra.mxu0 %v3717
        %4309 = vmatprep.subr.mxu0 %v3730
        %4310 = vmatpush1.msra.mxu0 %v3729
        %4311 = vmatprep.subr.mxu0 %v3742
        %4312 = vmatpush1.msra.mxu0 %v3741
        %4313 = vmatprep.subr.mxu0 %v3754
        %4314 = vmatpush1.msra.mxu0 %v3753
        %4315 = vmatprep.subr.mxu0 %v3766
        %4316 = vmatpush1.msra.mxu0 %v3765
        %4317 = vmatprep.subr.mxu0 %v3778
        %4318 = vmatpush1.msra.mxu0 %v3777
        %4319 = vmatprep.subr.mxu0 %v3790
        %4320 = vmatpush1.msra.mxu0 %v3789
        %4321 = vmatprep.subr.mxu0 %v3802
        %4322 = vmatpush1.msra.mxu0 %v3801
        %4323 = vmatprep.subr.mxu0 %v3814
        %4324 = vmatpush1.msra.mxu0 %v3813
        %4325 = vmatprep.subr.mxu0 %v3826
        %4326 = vmatpush1.msra.mxu0 %v3825
        %4327 = vmatprep.subr.mxu0 %v3838
        %4328 = vmatpush1.msra.mxu0 %v3837
        %4329 = vmatprep.subr.mxu0 %v3850
        %4330 = vmatpush1.msra.mxu0 %v3849
        %4331 = vmatprep.subr.mxu0 %v3862
        %4332 = vmatpush1.msra.mxu0 %v3861
        %4333 = vmatprep.subr.mxu0 %v3874
        %4334 = vmatpush1.msra.mxu0 %v3873
        %4335 = vmatprep.subr.mxu0 %v3886
        %4336 = vmatpush1.msra.mxu0 %v3885
        %4337 = vmatprep.subr.mxu0 %v3898
        %4338 = vmatpush1.msra.mxu0 %v3897
        %4339 = vmatprep.subr.mxu0 %v3910
        %4340 = vmatpush1.msra.mxu0 %v3909
        %4341 = vmatprep.subr.mxu0 %v3922
        %4342 = vmatpush1.msra.mxu0 %v3921
        %4343 = vmatprep.subr.mxu0 %v3934
        %4344 = vmatpush1.msra.mxu0 %v3933
        %4345 = vmatprep.subr.mxu0 %v3946
        %4346 = vmatpush1.msra.mxu0 %v3945
        %4347 = vmatprep.subr.mxu0 %v3958
        %4348 = vmatpush1.msra.mxu0 %v3957
        %4349 = vmatprep.subr.mxu0 %v3970
        %4350 = vmatpush1.msra.mxu0 %v3969
        %4351 = vmatprep.subr.mxu0 %v3982
        %4352 = vmatpush1.msra.mxu0 %v3981
        %4353 = vmatprep.subr.mxu0 %v3994
        %4354 = vmatpush1.msra.mxu0 %v3993
        %4355 = vmatprep.subr.mxu0 %v4006
        %4356 = vmatpush1.msra.mxu0 %v4005
        %4357 = vmatprep.subr.mxu0 %v4018
        %4358 = vmatpush1.msra.mxu0 %v4017
        %4359 = vmatprep.subr.mxu0 %v4030
        %4360 = vmatpush1.msra.mxu0 %v4029
        %4361 = vmatprep.mubr.f32.mxu0 %v3652
        %4362 = vmatmul.mubr.f32.gmra.mrb[0].mxu0 %v3651
        %v4363 = vpop.f32.mrb[0].mxu0
        %v4364 = vadd.f32 %v4240, %v4363
        %v4365 = vpop.f32.mrb[0].mxu0
        %v4366 = vadd.f32 %v4244, %v4365
        %4367 = vmatprep.mubr.f32.mxu0 %v3655
        %4368 = vmatmul.mubr.f32.gmra.mrb[0].mxu0 %v3654
        %v4369 = vpop.f32.mrb[0].mxu0
        %v4370 = vadd.f32 %v4240, %v4369
        %v4371 = vpop.f32.mrb[0].mxu0
        %v4372 = vadd.f32 %v4244, %v4371
        %4373 = vdwg.mxu0
        %4374 = vmatprep.subr.mxu0 %v4042
        %4375 = vmatpush1.msra.mxu0 %v4041
        %4376 = vmatprep.subr.mxu0 %v4054
        %4377 = vmatpush1.msra.mxu0 %v4053
        %4378 = vmatprep.subr.mxu0 %v4066
        %4379 = vmatpush1.msra.mxu0 %v4065
        %4380 = vmatprep.subr.mxu0 %v4078
        %4381 = vmatpush1.msra.mxu0 %v4077
        %4382 = vmatprep.subr.mxu0 %v4090
        %4383 = vmatpush1.msra.mxu0 %v4089
        %4384 = vmatprep.subr.mxu0 %v4102
        %4385 = vmatpush1.msra.mxu0 %v4101
        %4386 = vmatprep.subr.mxu0 %v4114
        %4387 = vmatpush1.msra.mxu0 %v4113
        %4388 = vmatprep.subr.mxu0 %v4126
        %4389 = vmatpush1.msra.mxu0 %v4125
        %4390 = vmatprep.subr.mxu0 %v4138
        %4391 = vmatpush1.msra.mxu0 %v4137
        %4392 = vmatprep.subr.mxu0 %v4150
        %4393 = vmatpush1.msra.mxu0 %v4149
        %4394 = vmatprep.subr.mxu0 %v4162
        %4395 = vmatpush1.msra.mxu0 %v4161
        %4396 = vmatprep.subr.mxu0 %v4174
        %4397 = vmatpush1.msra.mxu0 %v4173
        %4398 = vmatprep.subr.mxu0 %v4186
        %4399 = vmatpush1.msra.mxu0 %v4185
        %4400 = vmatprep.subr.mxu0 %v4198
        %4401 = vmatpush1.msra.mxu0 %v4197
        %4402 = vmatprep.subr.mxu0 %v4210
        %4403 = vmatpush1.msra.mxu0 %v4209
        %4404 = vmatprep.subr.mxu0 %v4222
        %4405 = vmatpush1.msra.mxu0 %v4221
        %4406 = vmatprep.subr.mxu0 0.0
        %4407 = vmatpush1.msra.mxu0 0.0
        %4408 = vmatprep.subr.mxu0 0.0
        %4409 = vmatpush1.msra.mxu0 0.0
        %4410 = vmatprep.subr.mxu0 0.0
        %4411 = vmatpush1.msra.mxu0 0.0
        %4412 = vmatprep.subr.mxu0 0.0
        %4413 = vmatpush1.msra.mxu0 0.0
        %4414 = vmatprep.subr.mxu0 0.0
        %4415 = vmatpush1.msra.mxu0 0.0
        %4416 = vmatprep.subr.mxu0 0.0
        %4417 = vmatpush1.msra.mxu0 0.0
        %4418 = vmatprep.subr.mxu0 0.0
        %4419 = vmatpush1.msra.mxu0 0.0
        %4420 = vmatprep.subr.mxu0 0.0
        %4421 = vmatpush1.msra.mxu0 0.0
        %4422 = vmatprep.subr.mxu0 0.0
        %4423 = vmatpush1.msra.mxu0 0.0
        %4424 = vmatprep.subr.mxu0 0.0
        %4425 = vmatpush1.msra.mxu0 0.0
        %4426 = vmatprep.subr.mxu0 0.0
        %4427 = vmatpush1.msra.mxu0 0.0
        %4428 = vmatprep.subr.mxu0 0.0
        %4429 = vmatpush1.msra.mxu0 0.0
        %4430 = vmatprep.subr.mxu0 0.0
        %4431 = vmatpush1.msra.mxu0 0.0
        %4432 = vmatprep.subr.mxu0 0.0
        %4433 = vmatpush1.msra.mxu0 0.0
        %4434 = vmatprep.subr.mxu0 0.0
        %4435 = vmatpush1.msra.mxu0 0.0
        %4436 = vmatprep.subr.mxu0 0.0
        %4437 = vmatpush1.msra.mxu0 0.0
        %4438 = vmatprep.mubr.f32.mxu0 0.0
        %4439 = vmatmul.mubr.f32.gmra.mrb[0].mxu0 %v3653
        %v4440 = vpop.f32.mrb[0].mxu0
        %v4441 = vadd.f32 %v4364, %v4440
        %v4442 = vpop.f32.mrb[0].mxu0
        %v4443 = vadd.f32 %v4366, %v4442
        %4444 = vmatprep.mubr.f32.mxu0 0.0
        %4445 = vmatmul.mubr.f32.gmra.mrb[0].mxu0 %v3656
        %v4446 = vpop.f32.mrb[0].mxu0
        %v4447 = vadd.f32 %v4370, %v4446
        %v4448 = vpop.f32.mrb[0].mxu0
        %v4449 = vadd.f32 %v4372, %v4448
        %4450 = vdwg.mxu0
        %4451 = vmatprep.subr.mxu0 %v3660
        %4452 = vmatpush1.msra.mxu0 %v3659
        %4453 = vmatprep.subr.mxu0 %v3672
        %4454 = vmatpush1.msra.mxu0 %v3671
        %4455 = vmatprep.subr.mxu0 %v3684
        %4456 = vmatpush1.msra.mxu0 %v3683
        %4457 = vmatprep.subr.mxu0 %v3696
        %4458 = vmatpush1.msra.mxu0 %v3695
        %4459 = vmatprep.subr.mxu0 %v3708
        %4460 = vmatpush1.msra.mxu0 %v3707
        %4461 = vmatprep.subr.mxu0 %v3720
        %4462 = vmatpush1.msra.mxu0 %v3719
        %4463 = vmatprep.subr.mxu0 %v3732
        %4464 = vmatpush1.msra.mxu0 %v3731
        %4465 = vmatprep.subr.mxu0 %v3744
        %4466 = vmatpush1.msra.mxu0 %v3743
        %4467 = vmatprep.subr.mxu0 %v3756
        %4468 = vmatpush1.msra.mxu0 %v3755
        %4469 = vmatprep.subr.mxu0 %v3768
        %4470 = vmatpush1.msra.mxu0 %v3767
        %4471 = vmatprep.subr.mxu0 %v3780
        %4472 = vmatpush1.msra.mxu0 %v3779
        %4473 = vmatprep.subr.mxu0 %v3792
        %4474 = vmatpush1.msra.mxu0 %v3791
        %4475 = vmatprep.subr.mxu0 %v3804
        %4476 = vmatpush1.msra.mxu0 %v3803
        %4477 = vmatprep.subr.mxu0 %v3816
        %4478 = vmatpush1.msra.mxu0 %v3815
        %4479 = vmatprep.subr.mxu0 %v3828
        %4480 = vmatpush1.msra.mxu0 %v3827
        %4481 = vmatprep.subr.mxu0 %v3840
        %4482 = vmatpush1.msra.mxu0 %v3839
        %4483 = vmatprep.subr.mxu0 %v3852
        %4484 = vmatpush1.msra.mxu0 %v3851
        %4485 = vmatprep.subr.mxu0 %v3864
        %4486 = vmatpush1.msra.mxu0 %v3863
        %4487 = vmatprep.subr.mxu0 %v3876
        %4488 = vmatpush1.msra.mxu0 %v3875
        %4489 = vmatprep.subr.mxu0 %v3888
        %4490 = vmatpush1.msra.mxu0 %v3887
        %4491 = vmatprep.subr.mxu0 %v3900
        %4492 = vmatpush1.msra.mxu0 %v3899
        %4493 = vmatprep.subr.mxu0 %v3912
        %4494 = vmatpush1.msra.mxu0 %v3911
        %4495 = vmatprep.subr.mxu0 %v3924
        %4496 = vmatpush1.msra.mxu0 %v3923
        %4497 = vmatprep.subr.mxu0 %v3936
        %4498 = vmatpush1.msra.mxu0 %v3935
        %4499 = vmatprep.subr.mxu0 %v3948
        %4500 = vmatpush1.msra.mxu0 %v3947
        %4501 = vmatprep.subr.mxu0 %v3960
        %4502 = vmatpush1.msra.mxu0 %v3959
        %4503 = vmatprep.subr.mxu0 %v3972
        %4504 = vmatpush1.msra.mxu0 %v3971
        %4505 = vmatprep.subr.mxu0 %v3984
        %4506 = vmatpush1.msra.mxu0 %v3983
        %4507 = vmatprep.subr.mxu0 %v3996
        %4508 = vmatpush1.msra.mxu0 %v3995
        %4509 = vmatprep.subr.mxu0 %v4008
        %4510 = vmatpush1.msra.mxu0 %v4007
        %4511 = vmatprep.subr.mxu0 %v4020
        %4512 = vmatpush1.msra.mxu0 %v4019
        %4513 = vmatprep.subr.mxu0 %v4032
        %4514 = vmatpush1.msra.mxu0 %v4031
        %4515 = vmatprep.mubr.f32.mxu0 %v3652
        %4516 = vmatmul.mubr.f32.gmra.mrb[0].mxu0 %v3651
        %v4517 = vpop.f32.mrb[0].mxu0
        %v4518 = vadd.f32 %v4248, %v4517
        %v4519 = vpop.f32.mrb[0].mxu0
        %v4520 = vadd.f32 %v4252, %v4519
        %4521 = vmatprep.mubr.f32.mxu0 %v3655
        %4522 = vmatmul.mubr.f32.gmra.mrb[0].mxu0 %v3654
        %v4523 = vpop.f32.mrb[0].mxu0
        %v4524 = vadd.f32 %v4248, %v4523
        %v4525 = vpop.f32.mrb[0].mxu0
        %v4526 = vadd.f32 %v4252, %v4525
        %4527 = vdwg.mxu0
        %4528 = vmatprep.subr.mxu0 %v4044
        %4529 = vmatpush1.msra.mxu0 %v4043
        %4530 = vmatprep.subr.mxu0 %v4056
        %4531 = vmatpush1.msra.mxu0 %v4055
        %4532 = vmatprep.subr.mxu0 %v4068
        %4533 = vmatpush1.msra.mxu0 %v4067
        %4534 = vmatprep.subr.mxu0 %v4080
        %4535 = vmatpush1.msra.mxu0 %v4079
        %4536 = vmatprep.subr.mxu0 %v4092
        %4537 = vmatpush1.msra.mxu0 %v4091
        %4538 = vmatprep.subr.mxu0 %v4104
        %4539 = vmatpush1.msra.mxu0 %v4103
        %4540 = vmatprep.subr.mxu0 %v4116
        %4541 = vmatpush1.msra.mxu0 %v4115
        %4542 = vmatprep.subr.mxu0 %v4128
        %4543 = vmatpush1.msra.mxu0 %v4127
        %4544 = vmatprep.subr.mxu0 %v4140
        %4545 = vmatpush1.msra.mxu0 %v4139
        %4546 = vmatprep.subr.mxu0 %v4152
        %4547 = vmatpush1.msra.mxu0 %v4151
        %4548 = vmatprep.subr.mxu0 %v4164
        %4549 = vmatpush1.msra.mxu0 %v4163
        %4550 = vmatprep.subr.mxu0 %v4176
        %4551 = vmatpush1.msra.mxu0 %v4175
        %4552 = vmatprep.subr.mxu0 %v4188
        %4553 = vmatpush1.msra.mxu0 %v4187
        %4554 = vmatprep.subr.mxu0 %v4200
        %4555 = vmatpush1.msra.mxu0 %v4199
        %4556 = vmatprep.subr.mxu0 %v4212
        %4557 = vmatpush1.msra.mxu0 %v4211
        %4558 = vmatprep.subr.mxu0 %v4224
        %4559 = vmatpush1.msra.mxu0 %v4223
        %4560 = vmatprep.subr.mxu0 0.0
        %4561 = vmatpush1.msra.mxu0 0.0
        %4562 = vmatprep.subr.mxu0 0.0
        %4563 = vmatpush1.msra.mxu0 0.0
        %4564 = vmatprep.subr.mxu0 0.0
        %4565 = vmatpush1.msra.mxu0 0.0
        %4566 = vmatprep.subr.mxu0 0.0
        %4567 = vmatpush1.msra.mxu0 0.0
        %4568 = vmatprep.subr.mxu0 0.0
        %4569 = vmatpush1.msra.mxu0 0.0
        %4570 = vmatprep.subr.mxu0 0.0
        %4571 = vmatpush1.msra.mxu0 0.0
        %4572 = vmatprep.subr.mxu0 0.0
        %4573 = vmatpush1.msra.mxu0 0.0
        %4574 = vmatprep.subr.mxu0 0.0
        %4575 = vmatpush1.msra.mxu0 0.0
        %4576 = vmatprep.subr.mxu0 0.0
        %4577 = vmatpush1.msra.mxu0 0.0
        %4578 = vmatprep.subr.mxu0 0.0
        %4579 = vmatpush1.msra.mxu0 0.0
        %4580 = vmatprep.subr.mxu0 0.0
        %4581 = vmatpush1.msra.mxu0 0.0
        %4582 = vmatprep.subr.mxu0 0.0
        %4583 = vmatpush1.msra.mxu0 0.0
        %4584 = vmatprep.subr.mxu0 0.0
        %4585 = vmatpush1.msra.mxu0 0.0
        %4586 = vmatprep.subr.mxu0 0.0
        %4587 = vmatpush1.msra.mxu0 0.0
        %4588 = vmatprep.subr.mxu0 0.0
        %4589 = vmatpush1.msra.mxu0 0.0
        %4590 = vmatprep.subr.mxu0 0.0
        %4591 = vmatpush1.msra.mxu0 0.0
        %4592 = vmatprep.mubr.f32.mxu0 0.0
        %4593 = vmatmul.mubr.f32.gmra.mrb[0].mxu0 %v3653
        %v4594 = vpop.f32.mrb[0].mxu0
        %v4595 = vadd.f32 %v4518, %v4594
        %v4596 = vpop.f32.mrb[0].mxu0
        %v4597 = vadd.f32 %v4520, %v4596
        %4598 = vmatprep.mubr.f32.mxu0 0.0
        %4599 = vmatmul.mubr.f32.gmra.mrb[0].mxu0 %v3656
        %v4600 = vpop.f32.mrb[0].mxu0
        %v4601 = vadd.f32 %v4524, %v4600
        %v4602 = vpop.f32.mrb[0].mxu0
        %v4603 = vadd.f32 %v4526, %v4602
        %4604 = vdwg.mxu0
        %4605 = vmatprep.subr.mxu0 %v3662
        %4606 = vmatpush1.msra.mxu0 %v3661
        %4607 = vmatprep.subr.mxu0 %v3674
        %4608 = vmatpush1.msra.mxu0 %v3673
        %4609 = vmatprep.subr.mxu0 %v3686
        %4610 = vmatpush1.msra.mxu0 %v3685
        %4611 = vmatprep.subr.mxu0 %v3698
        %4612 = vmatpush1.msra.mxu0 %v3697
        %4613 = vmatprep.subr.mxu0 %v3710
        %4614 = vmatpush1.msra.mxu0 %v3709
        %4615 = vmatprep.subr.mxu0 %v3722
        %4616 = vmatpush1.msra.mxu0 %v3721
        %4617 = vmatprep.subr.mxu0 %v3734
        %4618 = vmatpush1.msra.mxu0 %v3733
        %4619 = vmatprep.subr.mxu0 %v3746
        %4620 = vmatpush1.msra.mxu0 %v3745
        %4621 = vmatprep.subr.mxu0 %v3758
        %4622 = vmatpush1.msra.mxu0 %v3757
        %4623 = vmatprep.subr.mxu0 %v3770
        %4624 = vmatpush1.msra.mxu0 %v3769
        %4625 = vmatprep.subr.mxu0 %v3782
        %4626 = vmatpush1.msra.mxu0 %v3781
        %4627 = vmatprep.subr.mxu0 %v3794
        %4628 = vmatpush1.msra.mxu0 %v3793
        %4629 = vmatprep.subr.mxu0 %v3806
        %4630 = vmatpush1.msra.mxu0 %v3805
        %4631 = vmatprep.subr.mxu0 %v3818
        %4632 = vmatpush1.msra.mxu0 %v3817
        %4633 = vmatprep.subr.mxu0 %v3830
        %4634 = vmatpush1.msra.mxu0 %v3829
        %4635 = vmatprep.subr.mxu0 %v3842
        %4636 = vmatpush1.msra.mxu0 %v3841
        %4637 = vmatprep.subr.mxu0 %v3854
        %4638 = vmatpush1.msra.mxu0 %v3853
        %4639 = vmatprep.subr.mxu0 %v3866
        %4640 = vmatpush1.msra.mxu0 %v3865
        %4641 = vmatprep.subr.mxu0 %v3878
        %4642 = vmatpush1.msra.mxu0 %v3877
        %4643 = vmatprep.subr.mxu0 %v3890
        %4644 = vmatpush1.msra.mxu0 %v3889
        %4645 = vmatprep.subr.mxu0 %v3902
        %4646 = vmatpush1.msra.mxu0 %v3901
        %4647 = vmatprep.subr.mxu0 %v3914
        %4648 = vmatpush1.msra.mxu0 %v3913
        %4649 = vmatprep.subr.mxu0 %v3926
        %4650 = vmatpush1.msra.mxu0 %v3925
        %4651 = vmatprep.subr.mxu0 %v3938
        %4652 = vmatpush1.msra.mxu0 %v3937
        %4653 = vmatprep.subr.mxu0 %v3950
        %4654 = vmatpush1.msra.mxu0 %v3949
        %4655 = vmatprep.subr.mxu0 %v3962
        %4656 = vmatpush1.msra.mxu0 %v3961
        %4657 = vmatprep.subr.mxu0 %v3974
        %4658 = vmatpush1.msra.mxu0 %v3973
        %4659 = vmatprep.subr.mxu0 %v3986
        %4660 = vmatpush1.msra.mxu0 %v3985
        %4661 = vmatprep.subr.mxu0 %v3998
        %4662 = vmatpush1.msra.mxu0 %v3997
        %4663 = vmatprep.subr.mxu0 %v4010
        %4664 = vmatpush1.msra.mxu0 %v4009
        %4665 = vmatprep.subr.mxu0 %v4022
        %4666 = vmatpush1.msra.mxu0 %v4021
        %4667 = vmatprep.subr.mxu0 %v4034
        %4668 = vmatpush1.msra.mxu0 %v4033
        %4669 = vmatprep.mubr.f32.mxu0 %v3652
        %4670 = vmatmul.mubr.f32.gmra.mrb[0].mxu0 %v3651
        %v4671 = vpop.f32.mrb[0].mxu0
        %v4672 = vadd.f32 %v4256, %v4671
        %v4673 = vpop.f32.mrb[0].mxu0
        %v4674 = vadd.f32 %v4260, %v4673
        %4675 = vmatprep.mubr.f32.mxu0 %v3655
        %4676 = vmatmul.mubr.f32.gmra.mrb[0].mxu0 %v3654
        %v4677 = vpop.f32.mrb[0].mxu0
        %v4678 = vadd.f32 %v4256, %v4677
        %v4679 = vpop.f32.mrb[0].mxu0
        %v4680 = vadd.f32 %v4260, %v4679
        %4681 = vdwg.mxu0
        %4682 = vmatprep.subr.mxu0 %v4046
        %4683 = vmatpush1.msra.mxu0 %v4045
        %4684 = vmatprep.subr.mxu0 %v4058
        %4685 = vmatpush1.msra.mxu0 %v4057
        %4686 = vmatprep.subr.mxu0 %v4070
        %4687 = vmatpush1.msra.mxu0 %v4069
        %4688 = vmatprep.subr.mxu0 %v4082
        %4689 = vmatpush1.msra.mxu0 %v4081
        %4690 = vmatprep.subr.mxu0 %v4094
        %4691 = vmatpush1.msra.mxu0 %v4093
        %4692 = vmatprep.subr.mxu0 %v4106
        %4693 = vmatpush1.msra.mxu0 %v4105
        %4694 = vmatprep.subr.mxu0 %v4118
        %4695 = vmatpush1.msra.mxu0 %v4117
        %4696 = vmatprep.subr.mxu0 %v4130
        %4697 = vmatpush1.msra.mxu0 %v4129
        %4698 = vmatprep.subr.mxu0 %v4142
        %4699 = vmatpush1.msra.mxu0 %v4141
        %4700 = vmatprep.subr.mxu0 %v4154
        %4701 = vmatpush1.msra.mxu0 %v4153
        %4702 = vmatprep.subr.mxu0 %v4166
        %4703 = vmatpush1.msra.mxu0 %v4165
        %4704 = vmatprep.subr.mxu0 %v4178
        %4705 = vmatpush1.msra.mxu0 %v4177
        %4706 = vmatprep.subr.mxu0 %v4190
        %4707 = vmatpush1.msra.mxu0 %v4189
        %4708 = vmatprep.subr.mxu0 %v4202
        %4709 = vmatpush1.msra.mxu0 %v4201
        %4710 = vmatprep.subr.mxu0 %v4214
        %4711 = vmatpush1.msra.mxu0 %v4213
        %4712 = vmatprep.subr.mxu0 %v4226
        %4713 = vmatpush1.msra.mxu0 %v4225
        %4714 = vmatprep.subr.mxu0 0.0
        %4715 = vmatpush1.msra.mxu0 0.0
        %4716 = vmatprep.subr.mxu0 0.0
        %4717 = vmatpush1.msra.mxu0 0.0
        %4718 = vmatprep.subr.mxu0 0.0
        %4719 = vmatpush1.msra.mxu0 0.0
        %4720 = vmatprep.subr.mxu0 0.0
        %4721 = vmatpush1.msra.mxu0 0.0
        %4722 = vmatprep.subr.mxu0 0.0
        %4723 = vmatpush1.msra.mxu0 0.0
        %4724 = vmatprep.subr.mxu0 0.0
        %4725 = vmatpush1.msra.mxu0 0.0
        %4726 = vmatprep.subr.mxu0 0.0
        %4727 = vmatpush1.msra.mxu0 0.0
        %4728 = vmatprep.subr.mxu0 0.0
        %4729 = vmatpush1.msra.mxu0 0.0
        %4730 = vmatprep.subr.mxu0 0.0
        %4731 = vmatpush1.msra.mxu0 0.0
        %4732 = vmatprep.subr.mxu0 0.0
        %4733 = vmatpush1.msra.mxu0 0.0
        %4734 = vmatprep.subr.mxu0 0.0
        %4735 = vmatpush1.msra.mxu0 0.0
        %4736 = vmatprep.subr.mxu0 0.0
        %4737 = vmatpush1.msra.mxu0 0.0
        %4738 = vmatprep.subr.mxu0 0.0
        %4739 = vmatpush1.msra.mxu0 0.0
        %4740 = vmatprep.subr.mxu0 0.0
        %4741 = vmatpush1.msra.mxu0 0.0
        %4742 = vmatprep.subr.mxu0 0.0
        %4743 = vmatpush1.msra.mxu0 0.0
        %4744 = vmatprep.subr.mxu0 0.0
        %4745 = vmatpush1.msra.mxu0 0.0
        %4746 = vmatprep.mubr.f32.mxu0 0.0
        %4747 = vmatmul.mubr.f32.gmra.mrb[0].mxu0 %v3653
        %v4748 = vpop.f32.mrb[0].mxu0
        %v4749 = vadd.f32 %v4672, %v4748
        %v4750 = vpop.f32.mrb[0].mxu0
        %v4751 = vadd.f32 %v4674, %v4750
        %4752 = vmatprep.mubr.f32.mxu0 0.0
        %4753 = vmatmul.mubr.f32.gmra.mrb[0].mxu0 %v3656
        %v4754 = vpop.f32.mrb[0].mxu0
        %v4755 = vadd.f32 %v4678, %v4754
        %v4756 = vpop.f32.mrb[0].mxu0
        %v4757 = vadd.f32 %v4680, %v4756
        %4758 = vdwg.mxu0
        %4759 = vmatprep.subr.mxu0 %v3664
        %4760 = vmatpush1.msra.mxu0 %v3663
        %4761 = vmatprep.subr.mxu0 %v3676
        %4762 = vmatpush1.msra.mxu0 %v3675
        %4763 = vmatprep.subr.mxu0 %v3688
        %4764 = vmatpush1.msra.mxu0 %v3687
        %4765 = vmatprep.subr.mxu0 %v3700
        %4766 = vmatpush1.msra.mxu0 %v3699
        %4767 = vmatprep.subr.mxu0 %v3712
        %4768 = vmatpush1.msra.mxu0 %v3711
        %4769 = vmatprep.subr.mxu0 %v3724
        %4770 = vmatpush1.msra.mxu0 %v3723
        %4771 = vmatprep.subr.mxu0 %v3736
        %4772 = vmatpush1.msra.mxu0 %v3735
        %4773 = vmatprep.subr.mxu0 %v3748
        %4774 = vmatpush1.msra.mxu0 %v3747
        %4775 = vmatprep.subr.mxu0 %v3760
        %4776 = vmatpush1.msra.mxu0 %v3759
        %4777 = vmatprep.subr.mxu0 %v3772
        %4778 = vmatpush1.msra.mxu0 %v3771
        %4779 = vmatprep.subr.mxu0 %v3784
        %4780 = vmatpush1.msra.mxu0 %v3783
        %4781 = vmatprep.subr.mxu0 %v3796
        %4782 = vmatpush1.msra.mxu0 %v3795
        %4783 = vmatprep.subr.mxu0 %v3808
        %4784 = vmatpush1.msra.mxu0 %v3807
        %4785 = vmatprep.subr.mxu0 %v3820
        %4786 = vmatpush1.msra.mxu0 %v3819
        %4787 = vmatprep.subr.mxu0 %v3832
        %4788 = vmatpush1.msra.mxu0 %v3831
        %4789 = vmatprep.subr.mxu0 %v3844
        %4790 = vmatpush1.msra.mxu0 %v3843
        %4791 = vmatprep.subr.mxu0 %v3856
        %4792 = vmatpush1.msra.mxu0 %v3855
        %4793 = vmatprep.subr.mxu0 %v3868
        %4794 = vmatpush1.msra.mxu0 %v3867
        %4795 = vmatprep.subr.mxu0 %v3880
        %4796 = vmatpush1.msra.mxu0 %v3879
        %4797 = vmatprep.subr.mxu0 %v3892
        %4798 = vmatpush1.msra.mxu0 %v3891
        %4799 = vmatprep.subr.mxu0 %v3904
        %4800 = vmatpush1.msra.mxu0 %v3903
        %4801 = vmatprep.subr.mxu0 %v3916
        %4802 = vmatpush1.msra.mxu0 %v3915
        %4803 = vmatprep.subr.mxu0 %v3928
        %4804 = vmatpush1.msra.mxu0 %v3927
        %4805 = vmatprep.subr.mxu0 %v3940
        %4806 = vmatpush1.msra.mxu0 %v3939
        %4807 = vmatprep.subr.mxu0 %v3952
        %4808 = vmatpush1.msra.mxu0 %v3951
        %4809 = vmatprep.subr.mxu0 %v3964
        %4810 = vmatpush1.msra.mxu0 %v3963
        %4811 = vmatprep.subr.mxu0 %v3976
        %4812 = vmatpush1.msra.mxu0 %v3975
        %4813 = vmatprep.subr.mxu0 %v3988
        %4814 = vmatpush1.msra.mxu0 %v3987
        %4815 = vmatprep.subr.mxu0 %v4000
        %4816 = vmatpush1.msra.mxu0 %v3999
        %4817 = vmatprep.subr.mxu0 %v4012
        %4818 = vmatpush1.msra.mxu0 %v4011
        %4819 = vmatprep.subr.mxu0 %v4024
        %4820 = vmatpush1.msra.mxu0 %v4023
        %4821 = vmatprep.subr.mxu0 %v4036
        %4822 = vmatpush1.msra.mxu0 %v4035
        %4823 = vmatprep.mubr.f32.mxu0 %v3652
        %4824 = vmatmul.mubr.f32.gmra.mrb[0].mxu0 %v3651
        %v4825 = vpop.f32.mrb[0].mxu0
        %v4826 = vadd.f32 %v4264, %v4825
        %v4827 = vpop.f32.mrb[0].mxu0
        %v4828 = vadd.f32 %v4268, %v4827
        %4829 = vmatprep.mubr.f32.mxu0 %v3655
        %4830 = vmatmul.mubr.f32.gmra.mrb[0].mxu0 %v3654
        %v4831 = vpop.f32.mrb[0].mxu0
        %v4832 = vadd.f32 %v4264, %v4831
        %v4833 = vpop.f32.mrb[0].mxu0
        %v4834 = vadd.f32 %v4268, %v4833
        %4835 = vdwg.mxu0
        %4836 = vmatprep.subr.mxu0 %v4048
        %4837 = vmatpush1.msra.mxu0 %v4047
        %4838 = vmatprep.subr.mxu0 %v4060
        %4839 = vmatpush1.msra.mxu0 %v4059
        %4840 = vmatprep.subr.mxu0 %v4072
        %4841 = vmatpush1.msra.mxu0 %v4071
        %4842 = vmatprep.subr.mxu0 %v4084
        %4843 = vmatpush1.msra.mxu0 %v4083
        %4844 = vmatprep.subr.mxu0 %v4096
        %4845 = vmatpush1.msra.mxu0 %v4095
        %4846 = vmatprep.subr.mxu0 %v4108
        %4847 = vmatpush1.msra.mxu0 %v4107
        %4848 = vmatprep.subr.mxu0 %v4120
        %4849 = vmatpush1.msra.mxu0 %v4119
        %4850 = vmatprep.subr.mxu0 %v4132
        %4851 = vmatpush1.msra.mxu0 %v4131
        %4852 = vmatprep.subr.mxu0 %v4144
        %4853 = vmatpush1.msra.mxu0 %v4143
        %4854 = vmatprep.subr.mxu0 %v4156
        %4855 = vmatpush1.msra.mxu0 %v4155
        %4856 = vmatprep.subr.mxu0 %v4168
        %4857 = vmatpush1.msra.mxu0 %v4167
        %4858 = vmatprep.subr.mxu0 %v4180
        %4859 = vmatpush1.msra.mxu0 %v4179
        %4860 = vmatprep.subr.mxu0 %v4192
        %4861 = vmatpush1.msra.mxu0 %v4191
        %4862 = vmatprep.subr.mxu0 %v4204
        %4863 = vmatpush1.msra.mxu0 %v4203
        %4864 = vmatprep.subr.mxu0 %v4216
        %4865 = vmatpush1.msra.mxu0 %v4215
        %4866 = vmatprep.subr.mxu0 %v4228
        %4867 = vmatpush1.msra.mxu0 %v4227
        %4868 = vmatprep.subr.mxu0 0.0
        %4869 = vmatpush1.msra.mxu0 0.0
        %4870 = vmatprep.subr.mxu0 0.0
        %4871 = vmatpush1.msra.mxu0 0.0
        %4872 = vmatprep.subr.mxu0 0.0
        %4873 = vmatpush1.msra.mxu0 0.0
        %4874 = vmatprep.subr.mxu0 0.0
        %4875 = vmatpush1.msra.mxu0 0.0
        %4876 = vmatprep.subr.mxu0 0.0
        %4877 = vmatpush1.msra.mxu0 0.0
        %4878 = vmatprep.subr.mxu0 0.0
        %4879 = vmatpush1.msra.mxu0 0.0
        %4880 = vmatprep.subr.mxu0 0.0
        %4881 = vmatpush1.msra.mxu0 0.0
        %4882 = vmatprep.subr.mxu0 0.0
        %4883 = vmatpush1.msra.mxu0 0.0
        %4884 = vmatprep.subr.mxu0 0.0
        %4885 = vmatpush1.msra.mxu0 0.0
        %4886 = vmatprep.subr.mxu0 0.0
        %4887 = vmatpush1.msra.mxu0 0.0
        %4888 = vmatprep.subr.mxu0 0.0
        %4889 = vmatpush1.msra.mxu0 0.0
        %4890 = vmatprep.subr.mxu0 0.0
        %4891 = vmatpush1.msra.mxu0 0.0
        %4892 = vmatprep.subr.mxu0 0.0
        %4893 = vmatpush1.msra.mxu0 0.0
        %4894 = vmatprep.subr.mxu0 0.0
        %4895 = vmatpush1.msra.mxu0 0.0
        %4896 = vmatprep.subr.mxu0 0.0
        %4897 = vmatpush1.msra.mxu0 0.0
        %4898 = vmatprep.subr.mxu0 0.0
        %4899 = vmatpush1.msra.mxu0 0.0
        %4900 = vmatprep.mubr.f32.mxu0 0.0
        %4901 = vmatmul.mubr.f32.gmra.mrb[0].mxu0 %v3653
        %v4902 = vpop.f32.mrb[0].mxu0
        %v4903 = vadd.f32 %v4826, %v4902
        %v4904 = vpop.f32.mrb[0].mxu0
        %v4905 = vadd.f32 %v4828, %v4904
        %4906 = vmatprep.mubr.f32.mxu0 0.0
        %4907 = vmatmul.mubr.f32.gmra.mrb[0].mxu0 %v3656
        %v4908 = vpop.f32.mrb[0].mxu0
        %v4909 = vadd.f32 %v4832, %v4908
        %v4910 = vpop.f32.mrb[0].mxu0
        %v4911 = vadd.f32 %v4834, %v4910
        %4912 = vdwg.mxu0
        %4913 = vmatprep.subr.mxu0 %v3666
        %4914 = vmatpush1.msra.mxu0 %v3665
        %4915 = vmatprep.subr.mxu0 %v3678
        %4916 = vmatpush1.msra.mxu0 %v3677
        %4917 = vmatprep.subr.mxu0 %v3690
        %4918 = vmatpush1.msra.mxu0 %v3689
        %4919 = vmatprep.subr.mxu0 %v3702
        %4920 = vmatpush1.msra.mxu0 %v3701
        %4921 = vmatprep.subr.mxu0 %v3714
        %4922 = vmatpush1.msra.mxu0 %v3713
        %4923 = vmatprep.subr.mxu0 %v3726
        %4924 = vmatpush1.msra.mxu0 %v3725
        %4925 = vmatprep.subr.mxu0 %v3738
        %4926 = vmatpush1.msra.mxu0 %v3737
        %4927 = vmatprep.subr.mxu0 %v3750
        %4928 = vmatpush1.msra.mxu0 %v3749
        %4929 = vmatprep.subr.mxu0 %v3762
        %4930 = vmatpush1.msra.mxu0 %v3761
        %4931 = vmatprep.subr.mxu0 %v3774
        %4932 = vmatpush1.msra.mxu0 %v3773
        %4933 = vmatprep.subr.mxu0 %v3786
        %4934 = vmatpush1.msra.mxu0 %v3785
        %4935 = vmatprep.subr.mxu0 %v3798
        %4936 = vmatpush1.msra.mxu0 %v3797
        %4937 = vmatprep.subr.mxu0 %v3810
        %4938 = vmatpush1.msra.mxu0 %v3809
        %4939 = vmatprep.subr.mxu0 %v3822
        %4940 = vmatpush1.msra.mxu0 %v3821
        %4941 = vmatprep.subr.mxu0 %v3834
        %4942 = vmatpush1.msra.mxu0 %v3833
        %4943 = vmatprep.subr.mxu0 %v3846
        %4944 = vmatpush1.msra.mxu0 %v3845
        %4945 = vmatprep.subr.mxu0 %v3858
        %4946 = vmatpush1.msra.mxu0 %v3857
        %4947 = vmatprep.subr.mxu0 %v3870
        %4948 = vmatpush1.msra.mxu0 %v3869
        %4949 = vmatprep.subr.mxu0 %v3882
        %4950 = vmatpush1.msra.mxu0 %v3881
        %4951 = vmatprep.subr.mxu0 %v3894
        %4952 = vmatpush1.msra.mxu0 %v3893
        %4953 = vmatprep.subr.mxu0 %v3906
        %4954 = vmatpush1.msra.mxu0 %v3905
        %4955 = vmatprep.subr.mxu0 %v3918
        %4956 = vmatpush1.msra.mxu0 %v3917
        %4957 = vmatprep.subr.mxu0 %v3930
        %4958 = vmatpush1.msra.mxu0 %v3929
        %4959 = vmatprep.subr.mxu0 %v3942
        %4960 = vmatpush1.msra.mxu0 %v3941
        %4961 = vmatprep.subr.mxu0 %v3954
        %4962 = vmatpush1.msra.mxu0 %v3953
        %4963 = vmatprep.subr.mxu0 %v3966
        %4964 = vmatpush1.msra.mxu0 %v3965
        %4965 = vmatprep.subr.mxu0 %v3978
        %4966 = vmatpush1.msra.mxu0 %v3977
        %4967 = vmatprep.subr.mxu0 %v3990
        %4968 = vmatpush1.msra.mxu0 %v3989
        %4969 = vmatprep.subr.mxu0 %v4002
        %4970 = vmatpush1.msra.mxu0 %v4001
        %4971 = vmatprep.subr.mxu0 %v4014
        %4972 = vmatpush1.msra.mxu0 %v4013
        %4973 = vmatprep.subr.mxu0 %v4026
        %4974 = vmatpush1.msra.mxu0 %v4025
        %4975 = vmatprep.subr.mxu0 %v4038
        %4976 = vmatpush1.msra.mxu0 %v4037
        %4977 = vmatprep.mubr.f32.mxu0 %v3652
        %4978 = vmatmul.mubr.f32.gmra.mrb[0].mxu0 %v3651
        %v4979 = vpop.f32.mrb[0].mxu0
        %v4980 = vadd.f32 %v4272, %v4979
        %v4981 = vpop.f32.mrb[0].mxu0
        %v4982 = vadd.f32 %v4276, %v4981
        %4983 = vmatprep.mubr.f32.mxu0 %v3655
        %4984 = vmatmul.mubr.f32.gmra.mrb[0].mxu0 %v3654
        %v4985 = vpop.f32.mrb[0].mxu0
        %v4986 = vadd.f32 %v4272, %v4985
        %v4987 = vpop.f32.mrb[0].mxu0
        %v4988 = vadd.f32 %v4276, %v4987
        %4989 = vdwg.mxu0
        %4990 = vmatprep.subr.mxu0 %v4050
        %4991 = vmatpush1.msra.mxu0 %v4049
        %4992 = vmatprep.subr.mxu0 %v4062
        %4993 = vmatpush1.msra.mxu0 %v4061
        %4994 = vmatprep.subr.mxu0 %v4074
        %4995 = vmatpush1.msra.mxu0 %v4073
        %4996 = vmatprep.subr.mxu0 %v4086
        %4997 = vmatpush1.msra.mxu0 %v4085
        %4998 = vmatprep.subr.mxu0 %v4098
        %4999 = vmatpush1.msra.mxu0 %v4097
        %5000 = vmatprep.subr.mxu0 %v4110
        %5001 = vmatpush1.msra.mxu0 %v4109
        %5002 = vmatprep.subr.mxu0 %v4122
        %5003 = vmatpush1.msra.mxu0 %v4121
        %5004 = vmatprep.subr.mxu0 %v4134
        %5005 = vmatpush1.msra.mxu0 %v4133
        %5006 = vmatprep.subr.mxu0 %v4146
        %5007 = vmatpush1.msra.mxu0 %v4145
        %5008 = vmatprep.subr.mxu0 %v4158
        %5009 = vmatpush1.msra.mxu0 %v4157
        %5010 = vmatprep.subr.mxu0 %v4170
        %5011 = vmatpush1.msra.mxu0 %v4169
        %5012 = vmatprep.subr.mxu0 %v4182
        %5013 = vmatpush1.msra.mxu0 %v4181
        %5014 = vmatprep.subr.mxu0 %v4194
        %5015 = vmatpush1.msra.mxu0 %v4193
        %5016 = vmatprep.subr.mxu0 %v4206
        %5017 = vmatpush1.msra.mxu0 %v4205
        %5018 = vmatprep.subr.mxu0 %v4218
        %5019 = vmatpush1.msra.mxu0 %v4217
        %5020 = vmatprep.subr.mxu0 %v4230
        %5021 = vmatpush1.msra.mxu0 %v4229
        %5022 = vmatprep.subr.mxu0 0.0
        %5023 = vmatpush1.msra.mxu0 0.0
        %5024 = vmatprep.subr.mxu0 0.0
        %5025 = vmatpush1.msra.mxu0 0.0
        %5026 = vmatprep.subr.mxu0 0.0
        %5027 = vmatpush1.msra.mxu0 0.0
        %5028 = vmatprep.subr.mxu0 0.0
        %5029 = vmatpush1.msra.mxu0 0.0
        %5030 = vmatprep.subr.mxu0 0.0
        %5031 = vmatpush1.msra.mxu0 0.0
        %5032 = vmatprep.subr.mxu0 0.0
        %5033 = vmatpush1.msra.mxu0 0.0
        %5034 = vmatprep.subr.mxu0 0.0
        %5035 = vmatpush1.msra.mxu0 0.0
        %5036 = vmatprep.subr.mxu0 0.0
        %5037 = vmatpush1.msra.mxu0 0.0
        %5038 = vmatprep.subr.mxu0 0.0
        %5039 = vmatpush1.msra.mxu0 0.0
        %5040 = vmatprep.subr.mxu0 0.0
        %5041 = vmatpush1.msra.mxu0 0.0
        %5042 = vmatprep.subr.mxu0 0.0
        %5043 = vmatpush1.msra.mxu0 0.0
        %5044 = vmatprep.subr.mxu0 0.0
        %5045 = vmatpush1.msra.mxu0 0.0
        %5046 = vmatprep.subr.mxu0 0.0
        %5047 = vmatpush1.msra.mxu0 0.0
        %5048 = vmatprep.subr.mxu0 0.0
        %5049 = vmatpush1.msra.mxu0 0.0
        %5050 = vmatprep.subr.mxu0 0.0
        %5051 = vmatpush1.msra.mxu0 0.0
        %5052 = vmatprep.subr.mxu0 0.0
        %5053 = vmatpush1.msra.mxu0 0.0
        %5054 = vmatprep.mubr.f32.mxu0 0.0
        %5055 = vmatmul.mubr.f32.gmra.mrb[0].mxu0 %v3653
        %v5056 = vpop.f32.mrb[0].mxu0
        %v5057 = vadd.f32 %v4980, %v5056
        %v5058 = vpop.f32.mrb[0].mxu0
        %v5059 = vadd.f32 %v4982, %v5058
        %5060 = vmatprep.mubr.f32.mxu0 0.0
        %5061 = vmatmul.mubr.f32.gmra.mrb[0].mxu0 %v3656
        %v5062 = vpop.f32.mrb[0].mxu0
        %v5063 = vadd.f32 %v4986, %v5062
        %v5064 = vpop.f32.mrb[0].mxu0
        %v5065 = vadd.f32 %v4988, %v5064
        %5066 = vdwg.mxu0
        %5067 = vmatprep.subr.mxu0 %v3668
        %5068 = vmatpush1.msra.mxu0 %v3667
        %5069 = vmatprep.subr.mxu0 %v3680
        %5070 = vmatpush1.msra.mxu0 %v3679
        %5071 = vmatprep.subr.mxu0 %v3692
        %5072 = vmatpush1.msra.mxu0 %v3691
        %5073 = vmatprep.subr.mxu0 %v3704
        %5074 = vmatpush1.msra.mxu0 %v3703
        %5075 = vmatprep.subr.mxu0 %v3716
        %5076 = vmatpush1.msra.mxu0 %v3715
        %5077 = vmatprep.subr.mxu0 %v3728
        %5078 = vmatpush1.msra.mxu0 %v3727
        %5079 = vmatprep.subr.mxu0 %v3740
        %5080 = vmatpush1.msra.mxu0 %v3739
        %5081 = vmatprep.subr.mxu0 %v3752
        %5082 = vmatpush1.msra.mxu0 %v3751
        %5083 = vmatprep.subr.mxu0 %v3764
        %5084 = vmatpush1.msra.mxu0 %v3763
        %5085 = vmatprep.subr.mxu0 %v3776
        %5086 = vmatpush1.msra.mxu0 %v3775
        %5087 = vmatprep.subr.mxu0 %v3788
        %5088 = vmatpush1.msra.mxu0 %v3787
        %5089 = vmatprep.subr.mxu0 %v3800
        %5090 = vmatpush1.msra.mxu0 %v3799
        %5091 = vmatprep.subr.mxu0 %v3812
        %5092 = vmatpush1.msra.mxu0 %v3811
        %5093 = vmatprep.subr.mxu0 %v3824
        %5094 = vmatpush1.msra.mxu0 %v3823
        %5095 = vmatprep.subr.mxu0 %v3836
        %5096 = vmatpush1.msra.mxu0 %v3835
        %5097 = vmatprep.subr.mxu0 %v3848
        %5098 = vmatpush1.msra.mxu0 %v3847
        %5099 = vmatprep.subr.mxu0 %v3860
        %5100 = vmatpush1.msra.mxu0 %v3859
        %5101 = vmatprep.subr.mxu0 %v3872
        %5102 = vmatpush1.msra.mxu0 %v3871
        %5103 = vmatprep.subr.mxu0 %v3884
        %5104 = vmatpush1.msra.mxu0 %v3883
        %5105 = vmatprep.subr.mxu0 %v3896
        %5106 = vmatpush1.msra.mxu0 %v3895
        %5107 = vmatprep.subr.mxu0 %v3908
        %5108 = vmatpush1.msra.mxu0 %v3907
        %5109 = vmatprep.subr.mxu0 %v3920
        %5110 = vmatpush1.msra.mxu0 %v3919
        %5111 = vmatprep.subr.mxu0 %v3932
        %5112 = vmatpush1.msra.mxu0 %v3931
        %5113 = vmatprep.subr.mxu0 %v3944
        %5114 = vmatpush1.msra.mxu0 %v3943
        %5115 = vmatprep.subr.mxu0 %v3956
        %5116 = vmatpush1.msra.mxu0 %v3955
        %5117 = vmatprep.subr.mxu0 %v3968
        %5118 = vmatpush1.msra.mxu0 %v3967
        %5119 = vmatprep.subr.mxu0 %v3980
        %5120 = vmatpush1.msra.mxu0 %v3979
        %5121 = vmatprep.subr.mxu0 %v3992
        %5122 = vmatpush1.msra.mxu0 %v3991
        %5123 = vmatprep.subr.mxu0 %v4004
        %5124 = vmatpush1.msra.mxu0 %v4003
        %5125 = vmatprep.subr.mxu0 %v4016
        %5126 = vmatpush1.msra.mxu0 %v4015
        %5127 = vmatprep.subr.mxu0 %v4028
        %5128 = vmatpush1.msra.mxu0 %v4027
        %5129 = vmatprep.subr.mxu0 %v4040
        %5130 = vmatpush1.msra.mxu0 %v4039
        %5131 = vmatprep.mubr.f32.mxu0 %v3652
        %5132 = vmatmul.mubr.f32.gmra.mrb[0].mxu0 %v3651
        %v5133 = vpop.f32.mrb[0].mxu0
        %v5134 = vadd.f32 %v4280, %v5133
        %v5135 = vpop.f32.mrb[0].mxu0
        %v5136 = vadd.f32 %v4284, %v5135
        %5137 = vmatprep.mubr.f32.mxu0 %v3655
        %5138 = vmatmul.mubr.f32.gmra.mrb[0].mxu0 %v3654
        %v5139 = vpop.f32.mrb[0].mxu0
        %v5140 = vadd.f32 %v4280, %v5139
        %v5141 = vpop.f32.mrb[0].mxu0
        %v5142 = vadd.f32 %v4284, %v5141
        %5143 = vdwg.mxu0
        %5144 = vmatprep.subr.mxu0 %v4052
        %5145 = vmatpush1.msra.mxu0 %v4051
        %5146 = vmatprep.subr.mxu0 %v4064
        %5147 = vmatpush1.msra.mxu0 %v4063
        %5148 = vmatprep.subr.mxu0 %v4076
        %5149 = vmatpush1.msra.mxu0 %v4075
        %5150 = vmatprep.subr.mxu0 %v4088
        %5151 = vmatpush1.msra.mxu0 %v4087
        %5152 = vmatprep.subr.mxu0 %v4100
        %5153 = vmatpush1.msra.mxu0 %v4099
        %5154 = vmatprep.subr.mxu0 %v4112
        %5155 = vmatpush1.msra.mxu0 %v4111
        %5156 = vmatprep.subr.mxu0 %v4124
        %5157 = vmatpush1.msra.mxu0 %v4123
        %5158 = vmatprep.subr.mxu0 %v4136
        %5159 = vmatpush1.msra.mxu0 %v4135
        %5160 = vmatprep.subr.mxu0 %v4148
        %5161 = vmatpush1.msra.mxu0 %v4147
        %5162 = vmatprep.subr.mxu0 %v4160
        %5163 = vmatpush1.msra.mxu0 %v4159
        %5164 = vmatprep.subr.mxu0 %v4172
        %5165 = vmatpush1.msra.mxu0 %v4171
        %5166 = vmatprep.subr.mxu0 %v4184
        %5167 = vmatpush1.msra.mxu0 %v4183
        %5168 = vmatprep.subr.mxu0 %v4196
        %5169 = vmatpush1.msra.mxu0 %v4195
        %5170 = vmatprep.subr.mxu0 %v4208
        %5171 = vmatpush1.msra.mxu0 %v4207
        %5172 = vmatprep.subr.mxu0 %v4220
        %5173 = vmatpush1.msra.mxu0 %v4219
        %5174 = vmatprep.subr.mxu0 %v4232
        %5175 = vmatpush1.msra.mxu0 %v4231
        %5176 = vmatprep.subr.mxu0 0.0
        %5177 = vmatpush1.msra.mxu0 0.0
        %5178 = vmatprep.subr.mxu0 0.0
        %5179 = vmatpush1.msra.mxu0 0.0
        %5180 = vmatprep.subr.mxu0 0.0
        %5181 = vmatpush1.msra.mxu0 0.0
        %5182 = vmatprep.subr.mxu0 0.0
        %5183 = vmatpush1.msra.mxu0 0.0
        %5184 = vmatprep.subr.mxu0 0.0
        %5185 = vmatpush1.msra.mxu0 0.0
        %5186 = vmatprep.subr.mxu0 0.0
        %5187 = vmatpush1.msra.mxu0 0.0
        %5188 = vmatprep.subr.mxu0 0.0
        %5189 = vmatpush1.msra.mxu0 0.0
        %5190 = vmatprep.subr.mxu0 0.0
        %5191 = vmatpush1.msra.mxu0 0.0
        %5192 = vmatprep.subr.mxu0 0.0
        %5193 = vmatpush1.msra.mxu0 0.0
        %5194 = vmatprep.subr.mxu0 0.0
        %5195 = vmatpush1.msra.mxu0 0.0
        %5196 = vmatprep.subr.mxu0 0.0
        %5197 = vmatpush1.msra.mxu0 0.0
        %5198 = vmatprep.subr.mxu0 0.0
        %5199 = vmatpush1.msra.mxu0 0.0
        %5200 = vmatprep.subr.mxu0 0.0
        %5201 = vmatpush1.msra.mxu0 0.0
        %5202 = vmatprep.subr.mxu0 0.0
        %5203 = vmatpush1.msra.mxu0 0.0
        %5204 = vmatprep.subr.mxu0 0.0
        %5205 = vmatpush1.msra.mxu0 0.0
        %5206 = vmatprep.subr.mxu0 0.0
        %5207 = vmatpush1.msra.mxu0 0.0
        %5208 = vmatprep.mubr.f32.mxu0 0.0
        %5209 = vmatmul.mubr.f32.gmra.mrb[0].mxu0 %v3653
        %v5210 = vpop.f32.mrb[0].mxu0
        %v5211 = vadd.f32 %v5134, %v5210
        %v5212 = vpop.f32.mrb[0].mxu0
        %v5213 = vadd.f32 %v5136, %v5212
        %5214 = vmatprep.mubr.f32.mxu0 0.0
        %5215 = vmatmul.mubr.f32.gmra.mrb[0].mxu0 %v3656
        %v5216 = vpop.f32.mrb[0].mxu0
        %v5217 = vadd.f32 %v5140, %v5216
        %v5218 = vpop.f32.mrb[0].mxu0
        %v5219 = vadd.f32 %v5142, %v5218
        %5220 = vdwg.mxu0
        %v5221 = vmax.f32 %v4441, 0.0
        %v5222 = vmax.f32 %v4443, 0.0
        %v5223 = vmax.f32 %v4595, 0.0
        %v5224 = vmax.f32 %v4597, 0.0
        %v5225 = vmax.f32 %v4749, 0.0
        %v5226 = vmax.f32 %v4751, 0.0
        %v5227 = vmax.f32 %v4903, 0.0
        %v5228 = vmax.f32 %v4905, 0.0
        %v5229 = vmax.f32 %v5057, 0.0
        %v5230 = vmax.f32 %v5059, 0.0
        %v5231 = vmax.f32 %v5211, 0.0
        %v5232 = vmax.f32 %v5213, 0.0
        %v5233 = vmax.f32 %v4447, 0.0
        %v5234 = vmax.f32 %v4449, 0.0
        %v5235 = vmax.f32 %v4601, 0.0
        %v5236 = vmax.f32 %v4603, 0.0
        %v5237 = vmax.f32 %v4755, 0.0
        %v5238 = vmax.f32 %v4757, 0.0
        %v5239 = vmax.f32 %v4909, 0.0
        %v5240 = vmax.f32 %v4911, 0.0
        %v5241 = vmax.f32 %v5063, 0.0
        %v5242 = vmax.f32 %v5065, 0.0
        %v5243 = vmax.f32 %v5217, 0.0
        %v5244 = vmax.f32 %v5219, 0.0
        %v5245 = vld [vmem:[#allocation19] sm:$0xff]
        %v5246 = vld [vmem:[#allocation19 + $0x8] sm:$0xff]
        %v5247 = vld [vmem:[#allocation19 + $0x10] sm:$0xff]
        %v5248 = vld [vmem:[#allocation19 + $0x18] sm:$0xff]
        %v5249 = vld [vmem:[#allocation19 + $0x20] sm:$0xff]
        %v5250 = vld [vmem:[#allocation19 + $0x28] sm:$0xff]
        %v5251 = vld [vmem:[#allocation19 + $0x30] sm:$0xff]
        %v5252 = vld [vmem:[#allocation19 + $0x38] sm:$0xff]
        %v5253 = vld [vmem:[#allocation19 + $0x40] sm:$0xff]
        %v5254 = vld [vmem:[#allocation19 + $0x48] sm:$0xff]
        %v5255 = vld [vmem:[#allocation19 + $0x50] sm:$0xff]
        %v5256 = vld [vmem:[#allocation19 + $0x58] sm:$0xff]
        %v5257 = vld [vmem:[#allocation19 + $0x60] sm:$0xff]
        %v5258 = vld [vmem:[#allocation19 + $0x68] sm:$0xff]
        %v5259 = vld [vmem:[#allocation19 + $0x70] sm:$0xff]
        %v5260 = vld [vmem:[#allocation19 + $0x78] sm:$0xff]
        %v5261 = vld [vmem:[#allocation19 + $0x80] sm:$0xff]
        %v5262 = vld [vmem:[#allocation19 + $0x88] sm:$0xff]
        %v5263 = vld [vmem:[#allocation19 + $0x90] sm:$0xff]
        %v5264 = vld [vmem:[#allocation19 + $0x98] sm:$0xff]
        %v5265 = vld [vmem:[#allocation19 + $0xa0] sm:$0xff]
        %v5266 = vld [vmem:[#allocation19 + $0xa8] sm:$0xff]
        %v5267 = vld [vmem:[#allocation19 + $0xb0] sm:$0xff]
        %v5268 = vld [vmem:[#allocation19 + $0xb8] sm:$0xff]
        %v5269 = vld [vmem:[#allocation19 + $0xc0] sm:$0xff]
        %v5270 = vld [vmem:[#allocation19 + $0xc8] sm:$0xff]
        %v5271 = vld [vmem:[#allocation19 + $0xd0] sm:$0xff]
        %v5272 = vld [vmem:[#allocation19 + $0xd8] sm:$0xff]
        %v5273 = vld [vmem:[#allocation19 + $0xe0] sm:$0xff]
        %v5274 = vld [vmem:[#allocation19 + $0xe8] sm:$0xff]
        %v5275 = vld [vmem:[#allocation19 + $0xf0] sm:$0xff]
        %v5276 = vld [vmem:[#allocation19 + $0xf8] sm:$0xff]
        %v5277 = vld [vmem:[#allocation19 + $0x100] sm:$0xff]
        %v5278 = vld [vmem:[#allocation19 + $0x108] sm:$0xff]
        %v5279 = vld [vmem:[#allocation19 + $0x110] sm:$0xff]
        %v5280 = vld [vmem:[#allocation19 + $0x118] sm:$0xff]
        %v5281 = vld [vmem:[#allocation19 + $0x120] sm:$0xff]
        %v5282 = vld [vmem:[#allocation19 + $0x128] sm:$0xff]
        %v5283 = vld [vmem:[#allocation19 + $0x130] sm:$0xff]
        %v5284 = vld [vmem:[#allocation19 + $0x138] sm:$0xff]
        %v5285 = vld [vmem:[#allocation19 + $0x140] sm:$0xff]
        %v5286 = vld [vmem:[#allocation19 + $0x148] sm:$0xff]
        %v5287 = vld [vmem:[#allocation19 + $0x150] sm:$0xff]
        %v5288 = vld [vmem:[#allocation19 + $0x158] sm:$0xff]
        %v5289 = vld [vmem:[#allocation19 + $0x160] sm:$0xff]
        %v5290 = vld [vmem:[#allocation19 + $0x168] sm:$0xff]
        %v5291 = vld [vmem:[#allocation19 + $0x170] sm:$0xff]
        %v5292 = vld [vmem:[#allocation19 + $0x178] sm:$0xff]
        %v5293 = vld [vmem:[#allocation19 + $0x180] sm:$0xff]
        %v5294 = vld [vmem:[#allocation19 + $0x188] sm:$0xff]
        %v5295 = vld [vmem:[#allocation19 + $0x190] sm:$0xff]
        %v5296 = vld [vmem:[#allocation19 + $0x198] sm:$0xff]
        %v5297 = vld [vmem:[#allocation19 + $0x1a0] sm:$0xff]
        %v5298 = vld [vmem:[#allocation19 + $0x1a8] sm:$0xff]
        %v5299 = vld [vmem:[#allocation19 + $0x1b0] sm:$0xff]
        %v5300 = vld [vmem:[#allocation19 + $0x1b8] sm:$0xff]
        %v5301 = vld [vmem:[#allocation19 + $0x1c0] sm:$0xff]
        %v5302 = vld [vmem:[#allocation19 + $0x1c8] sm:$0xff]
        %v5303 = vld [vmem:[#allocation19 + $0x1d0] sm:$0xff]
        %v5304 = vld [vmem:[#allocation19 + $0x1d8] sm:$0xff]
        %v5305 = vld [vmem:[#allocation19 + $0x1e0] sm:$0xff]
        %v5306 = vld [vmem:[#allocation19 + $0x1e8] sm:$0xff]
        %v5307 = vld [vmem:[#allocation19 + $0x1f0] sm:$0xff]
        %v5308 = vld [vmem:[#allocation19 + $0x1f8] sm:$0xff]
        %v5309 = vld [vmem:[#allocation19 + $0x200] sm:$0xff]
        %v5310 = vld [vmem:[#allocation19 + $0x208] sm:$0xff]
        %v5311 = vld [vmem:[#allocation19 + $0x210] sm:$0xff]
        %v5312 = vld [vmem:[#allocation19 + $0x218] sm:$0xff]
        %v5313 = vld [vmem:[#allocation19 + $0x220] sm:$0xff]
        %v5314 = vld [vmem:[#allocation19 + $0x228] sm:$0xff]
        %v5315 = vld [vmem:[#allocation19 + $0x230] sm:$0xff]
        %v5316 = vld [vmem:[#allocation19 + $0x238] sm:$0xff]
        %v5317 = vld [vmem:[#allocation19 + $0x240] sm:$0xff]
        %v5318 = vld [vmem:[#allocation19 + $0x248] sm:$0xff]
        %v5319 = vld [vmem:[#allocation19 + $0x250] sm:$0xff]
        %v5320 = vld [vmem:[#allocation19 + $0x258] sm:$0xff]
        %v5321 = vld [vmem:[#allocation19 + $0x260] sm:$0xff]
        %v5322 = vld [vmem:[#allocation19 + $0x268] sm:$0xff]
        %v5323 = vld [vmem:[#allocation19 + $0x270] sm:$0xff]
        %v5324 = vld [vmem:[#allocation19 + $0x278] sm:$0xff]
        %v5325 = vld [vmem:[#allocation19 + $0x280] sm:$0xff]
        %v5326 = vld [vmem:[#allocation19 + $0x288] sm:$0xff]
        %v5327 = vld [vmem:[#allocation19 + $0x290] sm:$0xff]
        %v5328 = vld [vmem:[#allocation19 + $0x298] sm:$0xff]
        %v5329 = vld [vmem:[#allocation19 + $0x2a0] sm:$0xff]
        %v5330 = vld [vmem:[#allocation19 + $0x2a8] sm:$0xff]
        %v5331 = vld [vmem:[#allocation19 + $0x2b0] sm:$0xff]
        %v5332 = vld [vmem:[#allocation19 + $0x2b8] sm:$0xff]
        %v5333 = vld [vmem:[#allocation19 + $0x2c0] sm:$0xff]
        %v5334 = vld [vmem:[#allocation19 + $0x2c8] sm:$0xff]
        %v5335 = vld [vmem:[#allocation19 + $0x2d0] sm:$0xff]
        %v5336 = vld [vmem:[#allocation19 + $0x2d8] sm:$0xff]
        %v5337 = vld [vmem:[#allocation19 + $0x2e0] sm:$0xff]
        %v5338 = vld [vmem:[#allocation19 + $0x2e8] sm:$0xff]
        %v5339 = vld [vmem:[#allocation19 + $0x2f0] sm:$0xff]
        %v5340 = vld [vmem:[#allocation19 + $0x2f8] sm:$0xff]
        %v5341 = vld [vmem:[#allocation19 + $0x300] sm:$0xff]
        %v5342 = vld [vmem:[#allocation19 + $0x308] sm:$0xff]
        %v5343 = vld [vmem:[#allocation19 + $0x310] sm:$0xff]
        %v5344 = vld [vmem:[#allocation19 + $0x318] sm:$0xff]
        %v5345 = vld [vmem:[#allocation19 + $0x320] sm:$0xff]
        %v5346 = vld [vmem:[#allocation19 + $0x328] sm:$0xff]
        %v5347 = vld [vmem:[#allocation19 + $0x330] sm:$0xff]
        %v5348 = vld [vmem:[#allocation19 + $0x338] sm:$0xff]
        %v5349 = vld [vmem:[#allocation19 + $0x340] sm:$0xff]
        %v5350 = vld [vmem:[#allocation19 + $0x348] sm:$0xff]
        %v5351 = vld [vmem:[#allocation19 + $0x350] sm:$0xff]
        %v5352 = vld [vmem:[#allocation19 + $0x358] sm:$0xff]
        %v5353 = vld [vmem:[#allocation19 + $0x360] sm:$0xff]
        %v5354 = vld [vmem:[#allocation19 + $0x368] sm:$0xff]
        %v5355 = vld [vmem:[#allocation19 + $0x370] sm:$0xff]
        %v5356 = vld [vmem:[#allocation19 + $0x378] sm:$0xff]
        %v5357 = vld [vmem:[#allocation19 + $0x380] sm:$0xff]
        %v5358 = vld [vmem:[#allocation19 + $0x388] sm:$0xff]
        %v5359 = vld [vmem:[#allocation19 + $0x390] sm:$0xff]
        %v5360 = vld [vmem:[#allocation19 + $0x398] sm:$0xff]
        %v5361 = vld [vmem:[#allocation19 + $0x3a0] sm:$0xff]
        %v5362 = vld [vmem:[#allocation19 + $0x3a8] sm:$0xff]
        %v5363 = vld [vmem:[#allocation19 + $0x3b0] sm:$0xff]
        %v5364 = vld [vmem:[#allocation19 + $0x3b8] sm:$0xff]
        %v5365 = vld [vmem:[#allocation19 + $0x3c0] sm:$0xff]
        %v5366 = vld [vmem:[#allocation19 + $0x3c8] sm:$0xff]
        %v5367 = vld [vmem:[#allocation19 + $0x3d0] sm:$0xff]
        %v5368 = vld [vmem:[#allocation19 + $0x3d8] sm:$0xff]
        %v5369 = vld [vmem:[#allocation19 + $0x3e0] sm:$0xff]
        %v5370 = vld [vmem:[#allocation19 + $0x3e8] sm:$0xff]
        %v5371 = vld [vmem:[#allocation19 + $0x3f0] sm:$0xff]
        %v5372 = vld [vmem:[#allocation19 + $0x3f8] sm:$0xff]
        %v5373 = vld [vmem:[#allocation19 + $0x400] sm:$0xff]
        %v5374 = vld [vmem:[#allocation19 + $0x408] sm:$0xff]
        %v5375 = vld [vmem:[#allocation19 + $0x410] sm:$0xff]
        %v5376 = vld [vmem:[#allocation19 + $0x418] sm:$0xff]
        %v5377 = vld [vmem:[#allocation19 + $0x420] sm:$0xff]
        %v5378 = vld [vmem:[#allocation19 + $0x428] sm:$0xff]
        %v5379 = vld [vmem:[#allocation19 + $0x430] sm:$0xff]
        %v5380 = vld [vmem:[#allocation19 + $0x438] sm:$0xff]
        %v5381 = vld [vmem:[#allocation19 + $0x440] sm:$0xff]
        %v5382 = vld [vmem:[#allocation19 + $0x448] sm:$0xff]
        %v5383 = vld [vmem:[#allocation19 + $0x450] sm:$0xff]
        %v5384 = vld [vmem:[#allocation19 + $0x458] sm:$0xff]
        %v5385 = vld [vmem:[#allocation19 + $0x460] sm:$0xff]
        %v5386 = vld [vmem:[#allocation19 + $0x468] sm:$0xff]
        %v5387 = vld [vmem:[#allocation19 + $0x470] sm:$0xff]
        %v5388 = vld [vmem:[#allocation19 + $0x478] sm:$0xff]
        %v5389 = vld [vmem:[#allocation19 + $0x480] sm:$0xff]
        %v5390 = vld [vmem:[#allocation19 + $0x488] sm:$0xff]
        %v5391 = vld [vmem:[#allocation19 + $0x490] sm:$0xff]
        %v5392 = vld [vmem:[#allocation19 + $0x498] sm:$0xff]
        %v5393 = vld [vmem:[#allocation19 + $0x4a0] sm:$0xff]
        %v5394 = vld [vmem:[#allocation19 + $0x4a8] sm:$0xff]
        %v5395 = vld [vmem:[#allocation19 + $0x4b0] sm:$0xff]
        %v5396 = vld [vmem:[#allocation19 + $0x4b8] sm:$0xff]
        %v5397 = vld [vmem:[#allocation19 + $0x4c0] sm:$0xff]
        %v5398 = vld [vmem:[#allocation19 + $0x4c8] sm:$0xff]
        %v5399 = vld [vmem:[#allocation19 + $0x4d0] sm:$0xff]
        %v5400 = vld [vmem:[#allocation19 + $0x4d8] sm:$0xff]
        %v5401 = vld [vmem:[#allocation19 + $0x4e0] sm:$0xff]
        %v5402 = vld [vmem:[#allocation19 + $0x4e8] sm:$0xff]
        %v5403 = vld [vmem:[#allocation19 + $0x4f0] sm:$0xff]
        %v5404 = vld [vmem:[#allocation19 + $0x4f8] sm:$0xff]
        %v5405 = vld [vmem:[#allocation19 + $0x500] sm:$0xff]
        %v5406 = vld [vmem:[#allocation19 + $0x508] sm:$0xff]
        %v5407 = vld [vmem:[#allocation19 + $0x510] sm:$0xff]
        %v5408 = vld [vmem:[#allocation19 + $0x518] sm:$0xff]
        %v5409 = vld [vmem:[#allocation19 + $0x520] sm:$0xff]
        %v5410 = vld [vmem:[#allocation19 + $0x528] sm:$0xff]
        %v5411 = vld [vmem:[#allocation19 + $0x530] sm:$0xff]
        %v5412 = vld [vmem:[#allocation19 + $0x538] sm:$0xff]
        %v5413 = vld [vmem:[#allocation19 + $0x540] sm:$0xff]
        %v5414 = vld [vmem:[#allocation19 + $0x548] sm:$0xff]
        %v5415 = vld [vmem:[#allocation19 + $0x550] sm:$0xff]
        %v5416 = vld [vmem:[#allocation19 + $0x558] sm:$0xff]
        %v5417 = vld [vmem:[#allocation19 + $0x560] sm:$0xff]
        %v5418 = vld [vmem:[#allocation19 + $0x568] sm:$0xff]
        %v5419 = vld [vmem:[#allocation19 + $0x570] sm:$0xff]
        %v5420 = vld [vmem:[#allocation19 + $0x578] sm:$0xff]
        %v5421 = vld [vmem:[#allocation19 + $0x580] sm:$0xff]
        %v5422 = vld [vmem:[#allocation19 + $0x588] sm:$0xff]
        %v5423 = vld [vmem:[#allocation19 + $0x590] sm:$0xff]
        %v5424 = vld [vmem:[#allocation19 + $0x598] sm:$0xff]
        %v5425 = vld [vmem:[#allocation19 + $0x5a0] sm:$0xff]
        %v5426 = vld [vmem:[#allocation19 + $0x5a8] sm:$0xff]
        %v5427 = vld [vmem:[#allocation19 + $0x5b0] sm:$0xff]
        %v5428 = vld [vmem:[#allocation19 + $0x5b8] sm:$0xff]
        %v5429 = vld [vmem:[#allocation19 + $0x5c0] sm:$0xff]
        %v5430 = vld [vmem:[#allocation19 + $0x5c8] sm:$0xff]
        %v5431 = vld [vmem:[#allocation19 + $0x5d0] sm:$0xff]
        %v5432 = vld [vmem:[#allocation19 + $0x5d8] sm:$0xff]
        %v5433 = vld [vmem:[#allocation19 + $0x5e0] sm:$0xff]
        %v5434 = vld [vmem:[#allocation19 + $0x5e8] sm:$0xff]
        %v5435 = vld [vmem:[#allocation19 + $0x5f0] sm:$0xff]
        %v5436 = vld [vmem:[#allocation19 + $0x5f8] sm:$0xff]
        %v5437 = vld [vmem:[#allocation19 + $0x600] sm:$0xff]
        %v5438 = vld [vmem:[#allocation19 + $0x608] sm:$0xff]
        %v5439 = vld [vmem:[#allocation19 + $0x610] sm:$0xff]
        %v5440 = vld [vmem:[#allocation19 + $0x618] sm:$0xff]
        %v5441 = vld [vmem:[#allocation19 + $0x620] sm:$0xff]
        %v5442 = vld [vmem:[#allocation19 + $0x628] sm:$0xff]
        %v5443 = vld [vmem:[#allocation19 + $0x630] sm:$0xff]
        %v5444 = vld [vmem:[#allocation19 + $0x638] sm:$0xff]
        %v5445 = vld [vmem:[#allocation19 + $0x640] sm:$0xff]
        %v5446 = vld [vmem:[#allocation19 + $0x648] sm:$0xff]
        %v5447 = vld [vmem:[#allocation19 + $0x650] sm:$0xff]
        %v5448 = vld [vmem:[#allocation19 + $0x658] sm:$0xff]
        %v5449 = vld [vmem:[#allocation19 + $0x660] sm:$0xff]
        %v5450 = vld [vmem:[#allocation19 + $0x668] sm:$0xff]
        %v5451 = vld [vmem:[#allocation19 + $0x670] sm:$0xff]
        %v5452 = vld [vmem:[#allocation19 + $0x678] sm:$0xff]
        %v5453 = vld [vmem:[#allocation19 + $0x680] sm:$0xff]
        %v5454 = vld [vmem:[#allocation19 + $0x688] sm:$0xff]
        %v5455 = vld [vmem:[#allocation19 + $0x690] sm:$0xff]
        %v5456 = vld [vmem:[#allocation19 + $0x698] sm:$0xff]
        %v5457 = vld [vmem:[#allocation19 + $0x6a0] sm:$0xff]
        %v5458 = vld [vmem:[#allocation19 + $0x6a8] sm:$0xff]
        %v5459 = vld [vmem:[#allocation19 + $0x6b0] sm:$0xff]
        %v5460 = vld [vmem:[#allocation19 + $0x6b8] sm:$0xff]
        %v5461 = vld [vmem:[#allocation19 + $0x6c0] sm:$0xff]
        %v5462 = vld [vmem:[#allocation19 + $0x6c8] sm:$0xff]
        %v5463 = vld [vmem:[#allocation19 + $0x6d0] sm:$0xff]
        %v5464 = vld [vmem:[#allocation19 + $0x6d8] sm:$0xff]
        %v5465 = vld [vmem:[#allocation19 + $0x6e0] sm:$0xff]
        %v5466 = vld [vmem:[#allocation19 + $0x6e8] sm:$0xff]
        %v5467 = vld [vmem:[#allocation19 + $0x6f0] sm:$0xff]
        %v5468 = vld [vmem:[#allocation19 + $0x6f8] sm:$0xff]
        %v5469 = vld [vmem:[#allocation19 + $0x700] sm:$0xff]
        %v5470 = vld [vmem:[#allocation19 + $0x708] sm:$0xff]
        %v5471 = vld [vmem:[#allocation19 + $0x710] sm:$0xff]
        %v5472 = vld [vmem:[#allocation19 + $0x718] sm:$0xff]
        %v5473 = vld [vmem:[#allocation19 + $0x720] sm:$0xff]
        %v5474 = vld [vmem:[#allocation19 + $0x728] sm:$0xff]
        %v5475 = vld [vmem:[#allocation19 + $0x730] sm:$0xff]
        %v5476 = vld [vmem:[#allocation19 + $0x738] sm:$0xff]
        %v5477 = vld [vmem:[#allocation19 + $0x740] sm:$0xff]
        %v5478 = vld [vmem:[#allocation19 + $0x748] sm:$0xff]
        %v5479 = vld [vmem:[#allocation19 + $0x750] sm:$0xff]
        %v5480 = vld [vmem:[#allocation19 + $0x758] sm:$0xff]
        %v5481 = vld [vmem:[#allocation19 + $0x760] sm:$0xff]
        %v5482 = vld [vmem:[#allocation19 + $0x768] sm:$0xff]
        %v5483 = vld [vmem:[#allocation19 + $0x770] sm:$0xff]
        %v5484 = vld [vmem:[#allocation19 + $0x778] sm:$0xff]
        %v5485 = vld [vmem:[#allocation19 + $0x780] sm:$0xff]
        %v5486 = vld [vmem:[#allocation19 + $0x788] sm:$0xff]
        %v5487 = vld [vmem:[#allocation19 + $0x790] sm:$0xff]
        %v5488 = vld [vmem:[#allocation19 + $0x798] sm:$0xff]
        %v5489 = vld [vmem:[#allocation19 + $0x7a0] sm:$0xff]
        %v5490 = vld [vmem:[#allocation19 + $0x7a8] sm:$0xff]
        %v5491 = vld [vmem:[#allocation19 + $0x7b0] sm:$0xff]
        %v5492 = vld [vmem:[#allocation19 + $0x7b8] sm:$0xff]
        %v5493 = vld [vmem:[#allocation19 + $0x7c0] sm:$0xff]
        %v5494 = vld [vmem:[#allocation19 + $0x7c8] sm:$0xff]
        %v5495 = vld [vmem:[#allocation19 + $0x7d0] sm:$0xff]
        %v5496 = vld [vmem:[#allocation19 + $0x7d8] sm:$0xff]
        %v5497 = vld [vmem:[#allocation19 + $0x7e0] sm:$0xff]
        %v5498 = vld [vmem:[#allocation19 + $0x7e8] sm:$0xff]
        %v5499 = vld [vmem:[#allocation19 + $0x7f0] sm:$0xff]
        %v5500 = vld [vmem:[#allocation19 + $0x7f8] sm:$0xff]
        %v5501 = vld [vmem:[#allocation19 + $0x800] sm:$0xff]
        %v5502 = vld [vmem:[#allocation19 + $0x808] sm:$0xff]
        %v5503 = vld [vmem:[#allocation19 + $0x810] sm:$0xff]
        %v5504 = vld [vmem:[#allocation19 + $0x818] sm:$0xff]
        %v5505 = vld [vmem:[#allocation19 + $0x820] sm:$0xff]
        %v5506 = vld [vmem:[#allocation19 + $0x828] sm:$0xff]
        %v5507 = vld [vmem:[#allocation19 + $0x830] sm:$0xff]
        %v5508 = vld [vmem:[#allocation19 + $0x838] sm:$0xff]
        %v5509 = vld [vmem:[#allocation19 + $0x840] sm:$0xff]
        %v5510 = vld [vmem:[#allocation19 + $0x848] sm:$0xff]
        %v5511 = vld [vmem:[#allocation19 + $0x850] sm:$0xff]
        %v5512 = vld [vmem:[#allocation19 + $0x858] sm:$0xff]
        %v5513 = vld [vmem:[#allocation19 + $0x860] sm:$0xff]
        %v5514 = vld [vmem:[#allocation19 + $0x868] sm:$0xff]
        %v5515 = vld [vmem:[#allocation19 + $0x870] sm:$0xff]
        %v5516 = vld [vmem:[#allocation19 + $0x878] sm:$0xff]
        %v5517 = vld [vmem:[#allocation19 + $0x880] sm:$0xff]
        %v5518 = vld [vmem:[#allocation19 + $0x888] sm:$0xff]
        %v5519 = vld [vmem:[#allocation19 + $0x890] sm:$0xff]
        %v5520 = vld [vmem:[#allocation19 + $0x898] sm:$0xff]
        %v5521 = vld [vmem:[#allocation19 + $0x8a0] sm:$0xff]
        %v5522 = vld [vmem:[#allocation19 + $0x8a8] sm:$0xff]
        %v5523 = vld [vmem:[#allocation19 + $0x8b0] sm:$0xff]
        %v5524 = vld [vmem:[#allocation19 + $0x8b8] sm:$0xff]
        %v5525 = vld [vmem:[#allocation19 + $0x8c0] sm:$0xff]
        %v5526 = vld [vmem:[#allocation19 + $0x8c8] sm:$0xff]
        %v5527 = vld [vmem:[#allocation19 + $0x8d0] sm:$0xff]
        %v5528 = vld [vmem:[#allocation19 + $0x8d8] sm:$0xff]
        %v5529 = vld [vmem:[#allocation19 + $0x8e0] sm:$0xff]
        %v5530 = vld [vmem:[#allocation19 + $0x8e8] sm:$0xff]
        %v5531 = vld [vmem:[#allocation19 + $0x8f0] sm:$0xff]
        %v5532 = vld [vmem:[#allocation19 + $0x8f8] sm:$0xff]
        %v5533 = vld [vmem:[#allocation19 + $0x900] sm:$0xff]
        %v5534 = vld [vmem:[#allocation19 + $0x908] sm:$0xff]
        %v5535 = vld [vmem:[#allocation19 + $0x910] sm:$0xff]
        %v5536 = vld [vmem:[#allocation19 + $0x918] sm:$0xff]
        %v5537 = vld [vmem:[#allocation19 + $0x920] sm:$0xff]
        %v5538 = vld [vmem:[#allocation19 + $0x928] sm:$0xff]
        %v5539 = vld [vmem:[#allocation19 + $0x930] sm:$0xff]
        %v5540 = vld [vmem:[#allocation19 + $0x938] sm:$0xff]
        %v5541 = vld [vmem:[#allocation19 + $0x940] sm:$0xff]
        %v5542 = vld [vmem:[#allocation19 + $0x948] sm:$0xff]
        %v5543 = vld [vmem:[#allocation19 + $0x950] sm:$0xff]
        %v5544 = vld [vmem:[#allocation19 + $0x958] sm:$0xff]
        %v5545 = vld [vmem:[#allocation19 + $0x960] sm:$0xff]
        %v5546 = vld [vmem:[#allocation19 + $0x968] sm:$0xff]
        %v5547 = vld [vmem:[#allocation19 + $0x970] sm:$0xff]
        %v5548 = vld [vmem:[#allocation19 + $0x978] sm:$0xff]
        %v5549 = vld [vmem:[#allocation19 + $0x980] sm:$0xff]
        %v5550 = vld [vmem:[#allocation19 + $0x988] sm:$0xff]
        %v5551 = vld [vmem:[#allocation19 + $0x990] sm:$0xff]
        %v5552 = vld [vmem:[#allocation19 + $0x998] sm:$0xff]
        %v5553 = vld [vmem:[#allocation19 + $0x9a0] sm:$0xff]
        %v5554 = vld [vmem:[#allocation19 + $0x9a8] sm:$0xff]
        %v5555 = vld [vmem:[#allocation19 + $0x9b0] sm:$0xff]
        %v5556 = vld [vmem:[#allocation19 + $0x9b8] sm:$0xff]
        %v5557 = vld [vmem:[#allocation19 + $0x9c0] sm:$0xff]
        %v5558 = vld [vmem:[#allocation19 + $0x9c8] sm:$0xff]
        %v5559 = vld [vmem:[#allocation19 + $0x9d0] sm:$0xff]
        %v5560 = vld [vmem:[#allocation19 + $0x9d8] sm:$0xff]
        %v5561 = vld [vmem:[#allocation19 + $0x9e0] sm:$0xff]
        %v5562 = vld [vmem:[#allocation19 + $0x9e8] sm:$0xff]
        %v5563 = vld [vmem:[#allocation19 + $0x9f0] sm:$0xff]
        %v5564 = vld [vmem:[#allocation19 + $0x9f8] sm:$0xff]
        %v5565 = vld [vmem:[#allocation19 + $0xa00] sm:$0xff]
        %v5566 = vld [vmem:[#allocation19 + $0xa08] sm:$0xff]
        %v5567 = vld [vmem:[#allocation19 + $0xa10] sm:$0xff]
        %v5568 = vld [vmem:[#allocation19 + $0xa18] sm:$0xff]
        %v5569 = vld [vmem:[#allocation19 + $0xa20] sm:$0xff]
        %v5570 = vld [vmem:[#allocation19 + $0xa28] sm:$0xff]
        %v5571 = vld [vmem:[#allocation19 + $0xa30] sm:$0xff]
        %v5572 = vld [vmem:[#allocation19 + $0xa38] sm:$0xff]
        %v5573 = vld [vmem:[#allocation19 + $0xa40] sm:$0xff]
        %v5574 = vld [vmem:[#allocation19 + $0xa48] sm:$0xff]
        %v5575 = vld [vmem:[#allocation19 + $0xa50] sm:$0xff]
        %v5576 = vld [vmem:[#allocation19 + $0xa58] sm:$0xff]
        %v5577 = vld [vmem:[#allocation19 + $0xa60] sm:$0xff]
        %v5578 = vld [vmem:[#allocation19 + $0xa68] sm:$0xff]
        %v5579 = vld [vmem:[#allocation19 + $0xa70] sm:$0xff]
        %v5580 = vld [vmem:[#allocation19 + $0xa78] sm:$0xff]
        %v5581 = vld [vmem:[#allocation19 + $0xa80] sm:$0xff]
        %v5582 = vld [vmem:[#allocation19 + $0xa88] sm:$0xff]
        %v5583 = vld [vmem:[#allocation19 + $0xa90] sm:$0xff]
        %v5584 = vld [vmem:[#allocation19 + $0xa98] sm:$0xff]
        %v5585 = vld [vmem:[#allocation19 + $0xaa0] sm:$0xff]
        %v5586 = vld [vmem:[#allocation19 + $0xaa8] sm:$0xff]
        %v5587 = vld [vmem:[#allocation19 + $0xab0] sm:$0xff]
        %v5588 = vld [vmem:[#allocation19 + $0xab8] sm:$0xff]
        %v5589 = vld [vmem:[#allocation19 + $0xac0] sm:$0xff]
        %v5590 = vld [vmem:[#allocation19 + $0xac8] sm:$0xff]
        %v5591 = vld [vmem:[#allocation19 + $0xad0] sm:$0xff]
        %v5592 = vld [vmem:[#allocation19 + $0xad8] sm:$0xff]
        %v5593 = vld [vmem:[#allocation19 + $0xae0] sm:$0xff]
        %v5594 = vld [vmem:[#allocation19 + $0xae8] sm:$0xff]
        %v5595 = vld [vmem:[#allocation19 + $0xaf0] sm:$0xff]
        %v5596 = vld [vmem:[#allocation19 + $0xaf8] sm:$0xff]
        %v5597 = vld [vmem:[#allocation19 + $0xb00] sm:$0xff]
        %v5598 = vld [vmem:[#allocation19 + $0xb08] sm:$0xff]
        %v5599 = vld [vmem:[#allocation19 + $0xb10] sm:$0xff]
        %v5600 = vld [vmem:[#allocation19 + $0xb18] sm:$0xff]
        %v5601 = vld [vmem:[#allocation19 + $0xb20] sm:$0xff]
        %v5602 = vld [vmem:[#allocation19 + $0xb28] sm:$0xff]
        %v5603 = vld [vmem:[#allocation19 + $0xb30] sm:$0xff]
        %v5604 = vld [vmem:[#allocation19 + $0xb38] sm:$0xff]
        %v5605 = vld [vmem:[#allocation19 + $0xb40] sm:$0xff]
        %v5606 = vld [vmem:[#allocation19 + $0xb48] sm:$0xff]
        %v5607 = vld [vmem:[#allocation19 + $0xb50] sm:$0xff]
        %v5608 = vld [vmem:[#allocation19 + $0xb58] sm:$0xff]
        %v5609 = vld [vmem:[#allocation19 + $0xb60] sm:$0xff]
        %v5610 = vld [vmem:[#allocation19 + $0xb68] sm:$0xff]
        %v5611 = vld [vmem:[#allocation19 + $0xb70] sm:$0xff]
        %v5612 = vld [vmem:[#allocation19 + $0xb78] sm:$0xff]
        %v5613 = vld [vmem:[#allocation19 + $0xb80] sm:$0xff]
        %v5614 = vld [vmem:[#allocation19 + $0xb88] sm:$0xff]
        %v5615 = vld [vmem:[#allocation19 + $0xb90] sm:$0xff]
        %v5616 = vld [vmem:[#allocation19 + $0xb98] sm:$0xff]
        %v5617 = vld [vmem:[#allocation19 + $0xba0] sm:$0xff]
        %v5618 = vld [vmem:[#allocation19 + $0xba8] sm:$0xff]
        %v5619 = vld [vmem:[#allocation19 + $0xbb0] sm:$0xff]
        %v5620 = vld [vmem:[#allocation19 + $0xbb8] sm:$0xff]
        %v5621 = vld [vmem:[#allocation19 + $0xbc0] sm:$0xff]
        %v5622 = vld [vmem:[#allocation19 + $0xbc8] sm:$0xff]
        %v5623 = vld [vmem:[#allocation19 + $0xbd0] sm:$0xff]
        %v5624 = vld [vmem:[#allocation19 + $0xbd8] sm:$0xff]
        %v5625 = vld [vmem:[#allocation19 + $0xbe0] sm:$0xff]
        %v5626 = vld [vmem:[#allocation19 + $0xbe8] sm:$0xff]
        %v5627 = vld [vmem:[#allocation19 + $0xbf0] sm:$0xff]
        %v5628 = vld [vmem:[#allocation19 + $0xbf8] sm:$0xff]
        %v5629 = vld [vmem:[#allocation19 + $0xc00] sm:$0xff]
        %v5630 = vld [vmem:[#allocation19 + $0xc08] sm:$0xff]
        %v5631 = vld [vmem:[#allocation19 + $0xc10] sm:$0xff]
        %v5632 = vld [vmem:[#allocation19 + $0xc18] sm:$0xff]
        %v5633 = vld [vmem:[#allocation19 + $0xc20] sm:$0xff]
        %v5634 = vld [vmem:[#allocation19 + $0xc28] sm:$0xff]
        %v5635 = vld [vmem:[#allocation19 + $0xc30] sm:$0xff]
        %v5636 = vld [vmem:[#allocation19 + $0xc38] sm:$0xff]
        %v5637 = vld [vmem:[#allocation19 + $0xc40] sm:$0xff]
        %v5638 = vld [vmem:[#allocation19 + $0xc48] sm:$0xff]
        %v5639 = vld [vmem:[#allocation19 + $0xc50] sm:$0xff]
        %v5640 = vld [vmem:[#allocation19 + $0xc58] sm:$0xff]
        %v5641 = vld [vmem:[#allocation19 + $0xc60] sm:$0xff]
        %v5642 = vld [vmem:[#allocation19 + $0xc68] sm:$0xff]
        %v5643 = vld [vmem:[#allocation19 + $0xc70] sm:$0xff]
        %v5644 = vld [vmem:[#allocation19 + $0xc78] sm:$0xff]
        %v5645 = vld [vmem:[#allocation19 + $0xc80] sm:$0xff]
        %v5646 = vld [vmem:[#allocation19 + $0xc88] sm:$0xff]
        %v5647 = vld [vmem:[#allocation19 + $0xc90] sm:$0xff]
        %v5648 = vld [vmem:[#allocation19 + $0xc98] sm:$0xff]
        %v5649 = vld [vmem:[#allocation19 + $0xca0] sm:$0xff]
        %v5650 = vld [vmem:[#allocation19 + $0xca8] sm:$0xff]
        %v5651 = vld [vmem:[#allocation19 + $0xcb0] sm:$0xff]
        %v5652 = vld [vmem:[#allocation19 + $0xcb8] sm:$0xff]
        %v5653 = vld [vmem:[#allocation19 + $0xcc0] sm:$0xff]
        %v5654 = vld [vmem:[#allocation19 + $0xcc8] sm:$0xff]
        %v5655 = vld [vmem:[#allocation19 + $0xcd0] sm:$0xff]
        %v5656 = vld [vmem:[#allocation19 + $0xcd8] sm:$0xff]
        %v5657 = vld [vmem:[#allocation19 + $0xce0] sm:$0xff]
        %v5658 = vld [vmem:[#allocation19 + $0xce8] sm:$0xff]
        %v5659 = vld [vmem:[#allocation19 + $0xcf0] sm:$0xff]
        %v5660 = vld [vmem:[#allocation19 + $0xcf8] sm:$0xff]
        %v5661 = vld [vmem:[#allocation19 + $0xd00] sm:$0xff]
        %v5662 = vld [vmem:[#allocation19 + $0xd08] sm:$0xff]
        %v5663 = vld [vmem:[#allocation19 + $0xd10] sm:$0xff]
        %v5664 = vld [vmem:[#allocation19 + $0xd18] sm:$0xff]
        %v5665 = vld [vmem:[#allocation19 + $0xd20] sm:$0xff]
        %v5666 = vld [vmem:[#allocation19 + $0xd28] sm:$0xff]
        %v5667 = vld [vmem:[#allocation19 + $0xd30] sm:$0xff]
        %v5668 = vld [vmem:[#allocation19 + $0xd38] sm:$0xff]
        %v5669 = vld [vmem:[#allocation19 + $0xd40] sm:$0xff]
        %v5670 = vld [vmem:[#allocation19 + $0xd48] sm:$0xff]
        %v5671 = vld [vmem:[#allocation19 + $0xd50] sm:$0xff]
        %v5672 = vld [vmem:[#allocation19 + $0xd58] sm:$0xff]
        %v5673 = vld [vmem:[#allocation19 + $0xd60] sm:$0xff]
        %v5674 = vld [vmem:[#allocation19 + $0xd68] sm:$0xff]
        %v5675 = vld [vmem:[#allocation19 + $0xd70] sm:$0xff]
        %v5676 = vld [vmem:[#allocation19 + $0xd78] sm:$0xff]
        %v5677 = vld [vmem:[#allocation19 + $0xd80] sm:$0xff]
        %v5678 = vld [vmem:[#allocation19 + $0xd88] sm:$0xff]
        %v5679 = vld [vmem:[#allocation19 + $0xd90] sm:$0xff]
        %v5680 = vld [vmem:[#allocation19 + $0xd98] sm:$0xff]
        %v5681 = vld [vmem:[#allocation19 + $0xda0] sm:$0xff]
        %v5682 = vld [vmem:[#allocation19 + $0xda8] sm:$0xff]
        %v5683 = vld [vmem:[#allocation19 + $0xdb0] sm:$0xff]
        %v5684 = vld [vmem:[#allocation19 + $0xdb8] sm:$0xff]
        %v5685 = vld [vmem:[#allocation19 + $0xdc0] sm:$0xff]
        %v5686 = vld [vmem:[#allocation19 + $0xdc8] sm:$0xff]
        %v5687 = vld [vmem:[#allocation19 + $0xdd0] sm:$0xff]
        %v5688 = vld [vmem:[#allocation19 + $0xdd8] sm:$0xff]
        %v5689 = vld [vmem:[#allocation19 + $0xde0] sm:$0xff]
        %v5690 = vld [vmem:[#allocation19 + $0xde8] sm:$0xff]
        %v5691 = vld [vmem:[#allocation19 + $0xdf0] sm:$0xff]
        %v5692 = vld [vmem:[#allocation19 + $0xdf8] sm:$0xff]
        %v5693 = vld [vmem:[#allocation19 + $0xe00] sm:$0xff]
        %v5694 = vld [vmem:[#allocation19 + $0xe08] sm:$0xff]
        %v5695 = vld [vmem:[#allocation19 + $0xe10] sm:$0xff]
        %v5696 = vld [vmem:[#allocation19 + $0xe18] sm:$0xff]
        %v5697 = vld [vmem:[#allocation19 + $0xe20] sm:$0xff]
        %v5698 = vld [vmem:[#allocation19 + $0xe28] sm:$0xff]
        %v5699 = vld [vmem:[#allocation19 + $0xe30] sm:$0xff]
        %v5700 = vld [vmem:[#allocation19 + $0xe38] sm:$0xff]
        %v5701 = vld [vmem:[#allocation19 + $0xe40] sm:$0xff]
        %v5702 = vld [vmem:[#allocation19 + $0xe48] sm:$0xff]
        %v5703 = vld [vmem:[#allocation19 + $0xe50] sm:$0xff]
        %v5704 = vld [vmem:[#allocation19 + $0xe58] sm:$0xff]
        %v5705 = vld [vmem:[#allocation19 + $0xe60] sm:$0xff]
        %v5706 = vld [vmem:[#allocation19 + $0xe68] sm:$0xff]
        %v5707 = vld [vmem:[#allocation19 + $0xe70] sm:$0xff]
        %v5708 = vld [vmem:[#allocation19 + $0xe78] sm:$0xff]
        %v5709 = vld [vmem:[#allocation19 + $0xe80] sm:$0xff]
        %v5710 = vld [vmem:[#allocation19 + $0xe88] sm:$0xff]
        %v5711 = vld [vmem:[#allocation19 + $0xe90] sm:$0xff]
        %v5712 = vld [vmem:[#allocation19 + $0xe98] sm:$0xff]
        %v5713 = vld [vmem:[#allocation19 + $0xea0] sm:$0xff]
        %v5714 = vld [vmem:[#allocation19 + $0xea8] sm:$0xff]
        %v5715 = vld [vmem:[#allocation19 + $0xeb0] sm:$0xff]
        %v5716 = vld [vmem:[#allocation19 + $0xeb8] sm:$0xff]
        %v5717 = vld [vmem:[#allocation19 + $0xec0] sm:$0xff]
        %v5718 = vld [vmem:[#allocation19 + $0xec8] sm:$0xff]
        %v5719 = vld [vmem:[#allocation19 + $0xed0] sm:$0xff]
        %v5720 = vld [vmem:[#allocation19 + $0xed8] sm:$0xff]
        %v5721 = vld [vmem:[#allocation19 + $0xee0] sm:$0xff]
        %v5722 = vld [vmem:[#allocation19 + $0xee8] sm:$0xff]
        %v5723 = vld [vmem:[#allocation19 + $0xef0] sm:$0xff]
        %v5724 = vld [vmem:[#allocation19 + $0xef8] sm:$0xff]
        %v5725 = vld [vmem:[#allocation19 + $0xf00] sm:$0xff]
        %v5726 = vld [vmem:[#allocation19 + $0xf08] sm:$0xff]
        %v5727 = vld [vmem:[#allocation19 + $0xf10] sm:$0xff]
        %v5728 = vld [vmem:[#allocation19 + $0xf18] sm:$0xff]
        %v5729 = vld [vmem:[#allocation19 + $0xf20] sm:$0xff]
        %v5730 = vld [vmem:[#allocation19 + $0xf28] sm:$0xff]
        %v5731 = vld [vmem:[#allocation19 + $0xf30] sm:$0xff]
        %v5732 = vld [vmem:[#allocation19 + $0xf38] sm:$0xff]
        %v5733 = vld [vmem:[#allocation19 + $0xf40] sm:$0xff]
        %v5734 = vld [vmem:[#allocation19 + $0xf48] sm:$0xff]
        %v5735 = vld [vmem:[#allocation19 + $0xf50] sm:$0xff]
        %v5736 = vld [vmem:[#allocation19 + $0xf58] sm:$0xff]
        %v5737 = vld [vmem:[#allocation19 + $0xf60] sm:$0xff]
        %v5738 = vld [vmem:[#allocation19 + $0xf68] sm:$0xff]
        %v5739 = vld [vmem:[#allocation19 + $0xf70] sm:$0xff]
        %v5740 = vld [vmem:[#allocation19 + $0xf78] sm:$0xff]
        %v5741 = vld [vmem:[#allocation19 + $0xf80] sm:$0xff]
        %v5742 = vld [vmem:[#allocation19 + $0xf88] sm:$0xff]
        %v5743 = vld [vmem:[#allocation19 + $0xf90] sm:$0xff]
        %v5744 = vld [vmem:[#allocation19 + $0xf98] sm:$0xff]
        %v5745 = vld [vmem:[#allocation19 + $0xfa0] sm:$0xff]
        %v5746 = vld [vmem:[#allocation19 + $0xfa8] sm:$0xff]
        %v5747 = vld [vmem:[#allocation19 + $0xfb0] sm:$0xff]
        %v5748 = vld [vmem:[#allocation19 + $0xfb8] sm:$0xff]
        %v5749 = vld [vmem:[#allocation19 + $0xfc0] sm:$0xff]
        %v5750 = vld [vmem:[#allocation19 + $0xfc8] sm:$0xff]
        %v5751 = vld [vmem:[#allocation19 + $0xfd0] sm:$0xff]
        %v5752 = vld [vmem:[#allocation19 + $0xfd8] sm:$0xff]
        %v5753 = vld [vmem:[#allocation19 + $0xfe0] sm:$0xff]
        %v5754 = vld [vmem:[#allocation19 + $0xfe8] sm:$0xff]
        %v5755 = vld [vmem:[#allocation19 + $0xff0] sm:$0xff]
        %v5756 = vld [vmem:[#allocation19 + $0xff8] sm:$0xff]
        %v5757 = vld [vmem:[#allocation19 + $0x1000] sm:$0xff]
        %v5758 = vld [vmem:[#allocation19 + $0x1008] sm:$0xff]
        %v5759 = vld [vmem:[#allocation19 + $0x1010] sm:$0xff]
        %v5760 = vld [vmem:[#allocation19 + $0x1018] sm:$0xff]
        %v5761 = vld [vmem:[#allocation19 + $0x1020] sm:$0xff]
        %v5762 = vld [vmem:[#allocation19 + $0x1028] sm:$0xff]
        %v5763 = vld [vmem:[#allocation19 + $0x1030] sm:$0xff]
        %v5764 = vld [vmem:[#allocation19 + $0x1038] sm:$0xff]
        %v5765 = vld [vmem:[#allocation19 + $0x1040] sm:$0xff]
        %v5766 = vld [vmem:[#allocation19 + $0x1048] sm:$0xff]
        %v5767 = vld [vmem:[#allocation19 + $0x1050] sm:$0xff]
        %v5768 = vld [vmem:[#allocation19 + $0x1058] sm:$0xff]
        %v5769 = vld [vmem:[#allocation19 + $0x1060] sm:$0xff]
        %v5770 = vld [vmem:[#allocation19 + $0x1068] sm:$0xff]
        %v5771 = vld [vmem:[#allocation19 + $0x1070] sm:$0xff]
        %v5772 = vld [vmem:[#allocation19 + $0x1078] sm:$0xff]
        %v5773 = vld [vmem:[#allocation19 + $0x1080] sm:$0xff]
        %v5774 = vld [vmem:[#allocation19 + $0x1088] sm:$0xff]
        %v5775 = vld [vmem:[#allocation19 + $0x1090] sm:$0xff]
        %v5776 = vld [vmem:[#allocation19 + $0x1098] sm:$0xff]
        %v5777 = vld [vmem:[#allocation19 + $0x10a0] sm:$0xff]
        %v5778 = vld [vmem:[#allocation19 + $0x10a8] sm:$0xff]
        %v5779 = vld [vmem:[#allocation19 + $0x10b0] sm:$0xff]
        %v5780 = vld [vmem:[#allocation19 + $0x10b8] sm:$0xff]
        %v5781 = vld [vmem:[#allocation19 + $0x10c0] sm:$0xff]
        %v5782 = vld [vmem:[#allocation19 + $0x10c8] sm:$0xff]
        %v5783 = vld [vmem:[#allocation19 + $0x10d0] sm:$0xff]
        %v5784 = vld [vmem:[#allocation19 + $0x10d8] sm:$0xff]
        %v5785 = vld [vmem:[#allocation19 + $0x10e0] sm:$0xff]
        %v5786 = vld [vmem:[#allocation19 + $0x10e8] sm:$0xff]
        %v5787 = vld [vmem:[#allocation19 + $0x10f0] sm:$0xff]
        %v5788 = vld [vmem:[#allocation19 + $0x10f8] sm:$0xff]
        %v5789 = vld [vmem:[#allocation19 + $0x1100] sm:$0xff]
        %v5790 = vld [vmem:[#allocation19 + $0x1108] sm:$0xff]
        %v5791 = vld [vmem:[#allocation19 + $0x1110] sm:$0xff]
        %v5792 = vld [vmem:[#allocation19 + $0x1118] sm:$0xff]
        %v5793 = vld [vmem:[#allocation19 + $0x1120] sm:$0xff]
        %v5794 = vld [vmem:[#allocation19 + $0x1128] sm:$0xff]
        %v5795 = vld [vmem:[#allocation19 + $0x1130] sm:$0xff]
        %v5796 = vld [vmem:[#allocation19 + $0x1138] sm:$0xff]
        %v5797 = vld [vmem:[#allocation19 + $0x1140] sm:$0xff]
        %v5798 = vld [vmem:[#allocation19 + $0x1148] sm:$0xff]
        %v5799 = vld [vmem:[#allocation19 + $0x1150] sm:$0xff]
        %v5800 = vld [vmem:[#allocation19 + $0x1158] sm:$0xff]
        %v5801 = vld [vmem:[#allocation19 + $0x1160] sm:$0xff]
        %v5802 = vld [vmem:[#allocation19 + $0x1168] sm:$0xff]
        %v5803 = vld [vmem:[#allocation19 + $0x1170] sm:$0xff]
        %v5804 = vld [vmem:[#allocation19 + $0x1178] sm:$0xff]
        %v5805 = vld [vmem:[#allocation19 + $0x1180] sm:$0xff]
        %v5806 = vld [vmem:[#allocation19 + $0x1188] sm:$0xff]
        %v5807 = vld [vmem:[#allocation19 + $0x1190] sm:$0xff]
        %v5808 = vld [vmem:[#allocation19 + $0x1198] sm:$0xff]
        %v5809 = vld [vmem:[#allocation19 + $0x11a0] sm:$0xff]
        %v5810 = vld [vmem:[#allocation19 + $0x11a8] sm:$0xff]
        %v5811 = vld [vmem:[#allocation19 + $0x11b0] sm:$0xff]
        %v5812 = vld [vmem:[#allocation19 + $0x11b8] sm:$0xff]
        %v5813 = vld [vmem:[#allocation19 + $0x11c0] sm:$0xff]
        %v5814 = vld [vmem:[#allocation19 + $0x11c8] sm:$0xff]
        %v5815 = vld [vmem:[#allocation19 + $0x11d0] sm:$0xff]
        %v5816 = vld [vmem:[#allocation19 + $0x11d8] sm:$0xff]
        %v5817 = vld [vmem:[#allocation19 + $0x11e0] sm:$0xff]
        %v5818 = vld [vmem:[#allocation19 + $0x11e8] sm:$0xff]
        %v5819 = vld [vmem:[#allocation19 + $0x11f0] sm:$0xff]
        %v5820 = vld [vmem:[#allocation19 + $0x11f8] sm:$0xff]
        %v5821 = vld [vmem:[#allocation20] sm:$0x7]
        %v5823 = vlaneseq
        %v5824 = vshrl.u32 %v5823, 7
        %v5825 = vsub.s32 0, %v5824
        %v5826 = vrot.slane %v5821, %v5825
        %v5827 = vlaneseq
        %v5828 = vshrl.u32 %v5827, 7
        %v5829 = vsub.s32 1, %v5828
        %v5830 = vrot.slane %v5821, %v5829
        %v5831 = vlaneseq
        %v5832 = vshrl.u32 %v5831, 7
        %v5833 = vsub.s32 2, %v5832
        %v5834 = vrot.slane %v5821, %v5833
        %5838 = vmatprep.subr.mxu0 %v5246
        %5839 = vmatpush1.msra.mxu0 %v5245
        %5840 = vmatprep.subr.mxu0 %v5249
        %5841 = vmatpush1.msra.mxu0 %v5248
        %5842 = vmatprep.subr.mxu0 %v5252
        %5843 = vmatpush1.msra.mxu0 %v5251
        %5844 = vmatprep.subr.mxu0 %v5255
        %5845 = vmatpush1.msra.mxu0 %v5254
        %5846 = vmatprep.subr.mxu0 %v5258
        %5847 = vmatpush1.msra.mxu0 %v5257
        %5848 = vmatprep.subr.mxu0 %v5261
        %5849 = vmatpush1.msra.mxu0 %v5260
        %5850 = vmatprep.subr.mxu0 %v5264
        %5851 = vmatpush1.msra.mxu0 %v5263
        %5852 = vmatprep.subr.mxu0 %v5267
        %5853 = vmatpush1.msra.mxu0 %v5266
        %5854 = vmatprep.subr.mxu0 %v5270
        %5855 = vmatpush1.msra.mxu0 %v5269
        %5856 = vmatprep.subr.mxu0 %v5273
        %5857 = vmatpush1.msra.mxu0 %v5272
        %5858 = vmatprep.subr.mxu0 %v5276
        %5859 = vmatpush1.msra.mxu0 %v5275
        %5860 = vmatprep.subr.mxu0 %v5279
        %5861 = vmatpush1.msra.mxu0 %v5278
        %5862 = vmatprep.subr.mxu0 %v5282
        %5863 = vmatpush1.msra.mxu0 %v5281
        %5864 = vmatprep.subr.mxu0 %v5285
        %5865 = vmatpush1.msra.mxu0 %v5284
        %5866 = vmatprep.subr.mxu0 %v5288
        %5867 = vmatpush1.msra.mxu0 %v5287
        %5868 = vmatprep.subr.mxu0 %v5291
        %5869 = vmatpush1.msra.mxu0 %v5290
        %5870 = vmatprep.subr.mxu0 %v5294
        %5871 = vmatpush1.msra.mxu0 %v5293
        %5872 = vmatprep.subr.mxu0 %v5297
        %5873 = vmatpush1.msra.mxu0 %v5296
        %5874 = vmatprep.subr.mxu0 %v5300
        %5875 = vmatpush1.msra.mxu0 %v5299
        %5876 = vmatprep.subr.mxu0 %v5303
        %5877 = vmatpush1.msra.mxu0 %v5302
        %5878 = vmatprep.subr.mxu0 %v5306
        %5879 = vmatpush1.msra.mxu0 %v5305
        %5880 = vmatprep.subr.mxu0 %v5309
        %5881 = vmatpush1.msra.mxu0 %v5308
        %5882 = vmatprep.subr.mxu0 %v5312
        %5883 = vmatpush1.msra.mxu0 %v5311
        %5884 = vmatprep.subr.mxu0 %v5315
        %5885 = vmatpush1.msra.mxu0 %v5314
        %5886 = vmatprep.subr.mxu0 %v5318
        %5887 = vmatpush1.msra.mxu0 %v5317
        %5888 = vmatprep.subr.mxu0 %v5321
        %5889 = vmatpush1.msra.mxu0 %v5320
        %5890 = vmatprep.subr.mxu0 %v5324
        %5891 = vmatpush1.msra.mxu0 %v5323
        %5892 = vmatprep.subr.mxu0 %v5327
        %5893 = vmatpush1.msra.mxu0 %v5326
        %5894 = vmatprep.subr.mxu0 %v5330
        %5895 = vmatpush1.msra.mxu0 %v5329
        %5896 = vmatprep.subr.mxu0 %v5333
        %5897 = vmatpush1.msra.mxu0 %v5332
        %5898 = vmatprep.subr.mxu0 %v5336
        %5899 = vmatpush1.msra.mxu0 %v5335
        %5900 = vmatprep.subr.mxu0 %v5339
        %5901 = vmatpush1.msra.mxu0 %v5338
        %5902 = vmatprep.mubr.f32.mxu0 %v5222
        %5903 = vmatmul.mubr.f32.gmra.mrb[0].mxu0 %v5221
        %v5904 = vpop.f32.mrb[0].mxu0
        %v5905 = vadd.f32 %v5826, %v5904
        %v5906 = vpop.f32.mrb[0].mxu0
        %v5907 = vadd.f32 %v5830, %v5906
        %5908 = vmatprep.mubr.f32.mxu0 %v5234
        %5909 = vmatmul.mubr.f32.gmra.mrb[0].mxu0 %v5233
        %v5910 = vpop.f32.mrb[0].mxu0
        %v5911 = vadd.f32 %v5826, %v5910
        %v5912 = vpop.f32.mrb[0].mxu0
        %v5913 = vadd.f32 %v5830, %v5912
        %5914 = vdwg.mxu0
        %5915 = vmatprep.subr.mxu0 %v5342
        %5916 = vmatpush1.msra.mxu0 %v5341
        %5917 = vmatprep.subr.mxu0 %v5345
        %5918 = vmatpush1.msra.mxu0 %v5344
        %5919 = vmatprep.subr.mxu0 %v5348
        %5920 = vmatpush1.msra.mxu0 %v5347
        %5921 = vmatprep.subr.mxu0 %v5351
        %5922 = vmatpush1.msra.mxu0 %v5350
        %5923 = vmatprep.subr.mxu0 %v5354
        %5924 = vmatpush1.msra.mxu0 %v5353
        %5925 = vmatprep.subr.mxu0 %v5357
        %5926 = vmatpush1.msra.mxu0 %v5356
        %5927 = vmatprep.subr.mxu0 %v5360
        %5928 = vmatpush1.msra.mxu0 %v5359
        %5929 = vmatprep.subr.mxu0 %v5363
        %5930 = vmatpush1.msra.mxu0 %v5362
        %5931 = vmatprep.subr.mxu0 %v5366
        %5932 = vmatpush1.msra.mxu0 %v5365
        %5933 = vmatprep.subr.mxu0 %v5369
        %5934 = vmatpush1.msra.mxu0 %v5368
        %5935 = vmatprep.subr.mxu0 %v5372
        %5936 = vmatpush1.msra.mxu0 %v5371
        %5937 = vmatprep.subr.mxu0 %v5375
        %5938 = vmatpush1.msra.mxu0 %v5374
        %5939 = vmatprep.subr.mxu0 %v5378
        %5940 = vmatpush1.msra.mxu0 %v5377
        %5941 = vmatprep.subr.mxu0 %v5381
        %5942 = vmatpush1.msra.mxu0 %v5380
        %5943 = vmatprep.subr.mxu0 %v5384
        %5944 = vmatpush1.msra.mxu0 %v5383
        %5945 = vmatprep.subr.mxu0 %v5387
        %5946 = vmatpush1.msra.mxu0 %v5386
        %5947 = vmatprep.subr.mxu0 %v5390
        %5948 = vmatpush1.msra.mxu0 %v5389
        %5949 = vmatprep.subr.mxu0 %v5393
        %5950 = vmatpush1.msra.mxu0 %v5392
        %5951 = vmatprep.subr.mxu0 %v5396
        %5952 = vmatpush1.msra.mxu0 %v5395
        %5953 = vmatprep.subr.mxu0 %v5399
        %5954 = vmatpush1.msra.mxu0 %v5398
        %5955 = vmatprep.subr.mxu0 %v5402
        %5956 = vmatpush1.msra.mxu0 %v5401
        %5957 = vmatprep.subr.mxu0 %v5405
        %5958 = vmatpush1.msra.mxu0 %v5404
        %5959 = vmatprep.subr.mxu0 %v5408
        %5960 = vmatpush1.msra.mxu0 %v5407
        %5961 = vmatprep.subr.mxu0 %v5411
        %5962 = vmatpush1.msra.mxu0 %v5410
        %5963 = vmatprep.subr.mxu0 %v5414
        %5964 = vmatpush1.msra.mxu0 %v5413
        %5965 = vmatprep.subr.mxu0 %v5417
        %5966 = vmatpush1.msra.mxu0 %v5416
        %5967 = vmatprep.subr.mxu0 %v5420
        %5968 = vmatpush1.msra.mxu0 %v5419
        %5969 = vmatprep.subr.mxu0 %v5423
        %5970 = vmatpush1.msra.mxu0 %v5422
        %5971 = vmatprep.subr.mxu0 %v5426
        %5972 = vmatpush1.msra.mxu0 %v5425
        %5973 = vmatprep.subr.mxu0 %v5429
        %5974 = vmatpush1.msra.mxu0 %v5428
        %5975 = vmatprep.subr.mxu0 %v5432
        %5976 = vmatpush1.msra.mxu0 %v5431
        %5977 = vmatprep.subr.mxu0 %v5435
        %5978 = vmatpush1.msra.mxu0 %v5434
        %5979 = vmatprep.mubr.f32.mxu0 %v5224
        %5980 = vmatmul.mubr.f32.gmra.mrb[0].mxu0 %v5223
        %v5981 = vpop.f32.mrb[0].mxu0
        %v5982 = vadd.f32 %v5905, %v5981
        %v5983 = vpop.f32.mrb[0].mxu0
        %v5984 = vadd.f32 %v5907, %v5983
        %5985 = vmatprep.mubr.f32.mxu0 %v5236
        %5986 = vmatmul.mubr.f32.gmra.mrb[0].mxu0 %v5235
        %v5987 = vpop.f32.mrb[0].mxu0
        %v5988 = vadd.f32 %v5911, %v5987
        %v5989 = vpop.f32.mrb[0].mxu0
        %v5990 = vadd.f32 %v5913, %v5989
        %5991 = vdwg.mxu0
        %5992 = vmatprep.subr.mxu0 %v5438
        %5993 = vmatpush1.msra.mxu0 %v5437
        %5994 = vmatprep.subr.mxu0 %v5441
        %5995 = vmatpush1.msra.mxu0 %v5440
        %5996 = vmatprep.subr.mxu0 %v5444
        %5997 = vmatpush1.msra.mxu0 %v5443
        %5998 = vmatprep.subr.mxu0 %v5447
        %5999 = vmatpush1.msra.mxu0 %v5446
        %6000 = vmatprep.subr.mxu0 %v5450
        %6001 = vmatpush1.msra.mxu0 %v5449
        %6002 = vmatprep.subr.mxu0 %v5453
        %6003 = vmatpush1.msra.mxu0 %v5452
        %6004 = vmatprep.subr.mxu0 %v5456
        %6005 = vmatpush1.msra.mxu0 %v5455
        %6006 = vmatprep.subr.mxu0 %v5459
        %6007 = vmatpush1.msra.mxu0 %v5458
        %6008 = vmatprep.subr.mxu0 %v5462
        %6009 = vmatpush1.msra.mxu0 %v5461
        %6010 = vmatprep.subr.mxu0 %v5465
        %6011 = vmatpush1.msra.mxu0 %v5464
        %6012 = vmatprep.subr.mxu0 %v5468
        %6013 = vmatpush1.msra.mxu0 %v5467
        %6014 = vmatprep.subr.mxu0 %v5471
        %6015 = vmatpush1.msra.mxu0 %v5470
        %6016 = vmatprep.subr.mxu0 %v5474
        %6017 = vmatpush1.msra.mxu0 %v5473
        %6018 = vmatprep.subr.mxu0 %v5477
        %6019 = vmatpush1.msra.mxu0 %v5476
        %6020 = vmatprep.subr.mxu0 %v5480
        %6021 = vmatpush1.msra.mxu0 %v5479
        %6022 = vmatprep.subr.mxu0 %v5483
        %6023 = vmatpush1.msra.mxu0 %v5482
        %6024 = vmatprep.subr.mxu0 %v5486
        %6025 = vmatpush1.msra.mxu0 %v5485
        %6026 = vmatprep.subr.mxu0 %v5489
        %6027 = vmatpush1.msra.mxu0 %v5488
        %6028 = vmatprep.subr.mxu0 %v5492
        %6029 = vmatpush1.msra.mxu0 %v5491
        %6030 = vmatprep.subr.mxu0 %v5495
        %6031 = vmatpush1.msra.mxu0 %v5494
        %6032 = vmatprep.subr.mxu0 %v5498
        %6033 = vmatpush1.msra.mxu0 %v5497
        %6034 = vmatprep.subr.mxu0 %v5501
        %6035 = vmatpush1.msra.mxu0 %v5500
        %6036 = vmatprep.subr.mxu0 %v5504
        %6037 = vmatpush1.msra.mxu0 %v5503
        %6038 = vmatprep.subr.mxu0 %v5507
        %6039 = vmatpush1.msra.mxu0 %v5506
        %6040 = vmatprep.subr.mxu0 %v5510
        %6041 = vmatpush1.msra.mxu0 %v5509
        %6042 = vmatprep.subr.mxu0 %v5513
        %6043 = vmatpush1.msra.mxu0 %v5512
        %6044 = vmatprep.subr.mxu0 %v5516
        %6045 = vmatpush1.msra.mxu0 %v5515
        %6046 = vmatprep.subr.mxu0 %v5519
        %6047 = vmatpush1.msra.mxu0 %v5518
        %6048 = vmatprep.subr.mxu0 %v5522
        %6049 = vmatpush1.msra.mxu0 %v5521
        %6050 = vmatprep.subr.mxu0 %v5525
        %6051 = vmatpush1.msra.mxu0 %v5524
        %6052 = vmatprep.subr.mxu0 %v5528
        %6053 = vmatpush1.msra.mxu0 %v5527
        %6054 = vmatprep.subr.mxu0 %v5531
        %6055 = vmatpush1.msra.mxu0 %v5530
        %6056 = vmatprep.mubr.f32.mxu0 %v5226
        %6057 = vmatmul.mubr.f32.gmra.mrb[0].mxu0 %v5225
        %v6058 = vpop.f32.mrb[0].mxu0
        %v6059 = vadd.f32 %v5982, %v6058
        %v6060 = vpop.f32.mrb[0].mxu0
        %v6061 = vadd.f32 %v5984, %v6060
        %6062 = vmatprep.mubr.f32.mxu0 %v5238
        %6063 = vmatmul.mubr.f32.gmra.mrb[0].mxu0 %v5237
        %v6064 = vpop.f32.mrb[0].mxu0
        %v6065 = vadd.f32 %v5988, %v6064
        %v6066 = vpop.f32.mrb[0].mxu0
        %v6067 = vadd.f32 %v5990, %v6066
        %6068 = vdwg.mxu0
        %6069 = vmatprep.subr.mxu0 %v5534
        %6070 = vmatpush1.msra.mxu0 %v5533
        %6071 = vmatprep.subr.mxu0 %v5537
        %6072 = vmatpush1.msra.mxu0 %v5536
        %6073 = vmatprep.subr.mxu0 %v5540
        %6074 = vmatpush1.msra.mxu0 %v5539
        %6075 = vmatprep.subr.mxu0 %v5543
        %6076 = vmatpush1.msra.mxu0 %v5542
        %6077 = vmatprep.subr.mxu0 %v5546
        %6078 = vmatpush1.msra.mxu0 %v5545
        %6079 = vmatprep.subr.mxu0 %v5549
        %6080 = vmatpush1.msra.mxu0 %v5548
        %6081 = vmatprep.subr.mxu0 %v5552
        %6082 = vmatpush1.msra.mxu0 %v5551
        %6083 = vmatprep.subr.mxu0 %v5555
        %6084 = vmatpush1.msra.mxu0 %v5554
        %6085 = vmatprep.subr.mxu0 %v5558
        %6086 = vmatpush1.msra.mxu0 %v5557
        %6087 = vmatprep.subr.mxu0 %v5561
        %6088 = vmatpush1.msra.mxu0 %v5560
        %6089 = vmatprep.subr.mxu0 %v5564
        %6090 = vmatpush1.msra.mxu0 %v5563
        %6091 = vmatprep.subr.mxu0 %v5567
        %6092 = vmatpush1.msra.mxu0 %v5566
        %6093 = vmatprep.subr.mxu0 %v5570
        %6094 = vmatpush1.msra.mxu0 %v5569
        %6095 = vmatprep.subr.mxu0 %v5573
        %6096 = vmatpush1.msra.mxu0 %v5572
        %6097 = vmatprep.subr.mxu0 %v5576
        %6098 = vmatpush1.msra.mxu0 %v5575
        %6099 = vmatprep.subr.mxu0 %v5579
        %6100 = vmatpush1.msra.mxu0 %v5578
        %6101 = vmatprep.subr.mxu0 %v5582
        %6102 = vmatpush1.msra.mxu0 %v5581
        %6103 = vmatprep.subr.mxu0 %v5585
        %6104 = vmatpush1.msra.mxu0 %v5584
        %6105 = vmatprep.subr.mxu0 %v5588
        %6106 = vmatpush1.msra.mxu0 %v5587
        %6107 = vmatprep.subr.mxu0 %v5591
        %6108 = vmatpush1.msra.mxu0 %v5590
        %6109 = vmatprep.subr.mxu0 %v5594
        %6110 = vmatpush1.msra.mxu0 %v5593
        %6111 = vmatprep.subr.mxu0 %v5597
        %6112 = vmatpush1.msra.mxu0 %v5596
        %6113 = vmatprep.subr.mxu0 %v5600
        %6114 = vmatpush1.msra.mxu0 %v5599
        %6115 = vmatprep.subr.mxu0 %v5603
        %6116 = vmatpush1.msra.mxu0 %v5602
        %6117 = vmatprep.subr.mxu0 %v5606
        %6118 = vmatpush1.msra.mxu0 %v5605
        %6119 = vmatprep.subr.mxu0 %v5609
        %6120 = vmatpush1.msra.mxu0 %v5608
        %6121 = vmatprep.subr.mxu0 %v5612
        %6122 = vmatpush1.msra.mxu0 %v5611
        %6123 = vmatprep.subr.mxu0 %v5615
        %6124 = vmatpush1.msra.mxu0 %v5614
        %6125 = vmatprep.subr.mxu0 %v5618
        %6126 = vmatpush1.msra.mxu0 %v5617
        %6127 = vmatprep.subr.mxu0 %v5621
        %6128 = vmatpush1.msra.mxu0 %v5620
        %6129 = vmatprep.subr.mxu0 %v5624
        %6130 = vmatpush1.msra.mxu0 %v5623
        %6131 = vmatprep.subr.mxu0 %v5627
        %6132 = vmatpush1.msra.mxu0 %v5626
        %6133 = vmatprep.mubr.f32.mxu0 %v5228
        %6134 = vmatmul.mubr.f32.gmra.mrb[0].mxu0 %v5227
        %v6135 = vpop.f32.mrb[0].mxu0
        %v6136 = vadd.f32 %v6059, %v6135
        %v6137 = vpop.f32.mrb[0].mxu0
        %v6138 = vadd.f32 %v6061, %v6137
        %6139 = vmatprep.mubr.f32.mxu0 %v5240
        %6140 = vmatmul.mubr.f32.gmra.mrb[0].mxu0 %v5239
        %v6141 = vpop.f32.mrb[0].mxu0
        %v6142 = vadd.f32 %v6065, %v6141
        %v6143 = vpop.f32.mrb[0].mxu0
        %v6144 = vadd.f32 %v6067, %v6143
        %6145 = vdwg.mxu0
        %6146 = vmatprep.subr.mxu0 %v5630
        %6147 = vmatpush1.msra.mxu0 %v5629
        %6148 = vmatprep.subr.mxu0 %v5633
        %6149 = vmatpush1.msra.mxu0 %v5632
        %6150 = vmatprep.subr.mxu0 %v5636
        %6151 = vmatpush1.msra.mxu0 %v5635
        %6152 = vmatprep.subr.mxu0 %v5639
        %6153 = vmatpush1.msra.mxu0 %v5638
        %6154 = vmatprep.subr.mxu0 %v5642
        %6155 = vmatpush1.msra.mxu0 %v5641
        %6156 = vmatprep.subr.mxu0 %v5645
        %6157 = vmatpush1.msra.mxu0 %v5644
        %6158 = vmatprep.subr.mxu0 %v5648
        %6159 = vmatpush1.msra.mxu0 %v5647
        %6160 = vmatprep.subr.mxu0 %v5651
        %6161 = vmatpush1.msra.mxu0 %v5650
        %6162 = vmatprep.subr.mxu0 %v5654
        %6163 = vmatpush1.msra.mxu0 %v5653
        %6164 = vmatprep.subr.mxu0 %v5657
        %6165 = vmatpush1.msra.mxu0 %v5656
        %6166 = vmatprep.subr.mxu0 %v5660
        %6167 = vmatpush1.msra.mxu0 %v5659
        %6168 = vmatprep.subr.mxu0 %v5663
        %6169 = vmatpush1.msra.mxu0 %v5662
        %6170 = vmatprep.subr.mxu0 %v5666
        %6171 = vmatpush1.msra.mxu0 %v5665
        %6172 = vmatprep.subr.mxu0 %v5669
        %6173 = vmatpush1.msra.mxu0 %v5668
        %6174 = vmatprep.subr.mxu0 %v5672
        %6175 = vmatpush1.msra.mxu0 %v5671
        %6176 = vmatprep.subr.mxu0 %v5675
        %6177 = vmatpush1.msra.mxu0 %v5674
        %6178 = vmatprep.subr.mxu0 %v5678
        %6179 = vmatpush1.msra.mxu0 %v5677
        %6180 = vmatprep.subr.mxu0 %v5681
        %6181 = vmatpush1.msra.mxu0 %v5680
        %6182 = vmatprep.subr.mxu0 %v5684
        %6183 = vmatpush1.msra.mxu0 %v5683
        %6184 = vmatprep.subr.mxu0 %v5687
        %6185 = vmatpush1.msra.mxu0 %v5686
        %6186 = vmatprep.subr.mxu0 %v5690
        %6187 = vmatpush1.msra.mxu0 %v5689
        %6188 = vmatprep.subr.mxu0 %v5693
        %6189 = vmatpush1.msra.mxu0 %v5692
        %6190 = vmatprep.subr.mxu0 %v5696
        %6191 = vmatpush1.msra.mxu0 %v5695
        %6192 = vmatprep.subr.mxu0 %v5699
        %6193 = vmatpush1.msra.mxu0 %v5698
        %6194 = vmatprep.subr.mxu0 %v5702
        %6195 = vmatpush1.msra.mxu0 %v5701
        %6196 = vmatprep.subr.mxu0 %v5705
        %6197 = vmatpush1.msra.mxu0 %v5704
        %6198 = vmatprep.subr.mxu0 %v5708
        %6199 = vmatpush1.msra.mxu0 %v5707
        %6200 = vmatprep.subr.mxu0 %v5711
        %6201 = vmatpush1.msra.mxu0 %v5710
        %6202 = vmatprep.subr.mxu0 %v5714
        %6203 = vmatpush1.msra.mxu0 %v5713
        %6204 = vmatprep.subr.mxu0 %v5717
        %6205 = vmatpush1.msra.mxu0 %v5716
        %6206 = vmatprep.subr.mxu0 %v5720
        %6207 = vmatpush1.msra.mxu0 %v5719
        %6208 = vmatprep.subr.mxu0 %v5723
        %6209 = vmatpush1.msra.mxu0 %v5722
        %6210 = vmatprep.mubr.f32.mxu0 %v5230
        %6211 = vmatmul.mubr.f32.gmra.mrb[0].mxu0 %v5229
        %v6212 = vpop.f32.mrb[0].mxu0
        %v6213 = vadd.f32 %v6136, %v6212
        %v6214 = vpop.f32.mrb[0].mxu0
        %v6215 = vadd.f32 %v6138, %v6214
        %6216 = vmatprep.mubr.f32.mxu0 %v5242
        %6217 = vmatmul.mubr.f32.gmra.mrb[0].mxu0 %v5241
        %v6218 = vpop.f32.mrb[0].mxu0
        %v6219 = vadd.f32 %v6142, %v6218
        %v6220 = vpop.f32.mrb[0].mxu0
        %v6221 = vadd.f32 %v6144, %v6220
        %6222 = vdwg.mxu0
        %6223 = vmatprep.subr.mxu0 %v5726
        %6224 = vmatpush1.msra.mxu0 %v5725
        %6225 = vmatprep.subr.mxu0 %v5729
        %6226 = vmatpush1.msra.mxu0 %v5728
        %6227 = vmatprep.subr.mxu0 %v5732
        %6228 = vmatpush1.msra.mxu0 %v5731
        %6229 = vmatprep.subr.mxu0 %v5735
        %6230 = vmatpush1.msra.mxu0 %v5734
        %6231 = vmatprep.subr.mxu0 %v5738
        %6232 = vmatpush1.msra.mxu0 %v5737
        %6233 = vmatprep.subr.mxu0 %v5741
        %6234 = vmatpush1.msra.mxu0 %v5740
        %6235 = vmatprep.subr.mxu0 %v5744
        %6236 = vmatpush1.msra.mxu0 %v5743
        %6237 = vmatprep.subr.mxu0 %v5747
        %6238 = vmatpush1.msra.mxu0 %v5746
        %6239 = vmatprep.subr.mxu0 %v5750
        %6240 = vmatpush1.msra.mxu0 %v5749
        %6241 = vmatprep.subr.mxu0 %v5753
        %6242 = vmatpush1.msra.mxu0 %v5752
        %6243 = vmatprep.subr.mxu0 %v5756
        %6244 = vmatpush1.msra.mxu0 %v5755
        %6245 = vmatprep.subr.mxu0 %v5759
        %6246 = vmatpush1.msra.mxu0 %v5758
        %6247 = vmatprep.subr.mxu0 %v5762
        %6248 = vmatpush1.msra.mxu0 %v5761
        %6249 = vmatprep.subr.mxu0 %v5765
        %6250 = vmatpush1.msra.mxu0 %v5764
        %6251 = vmatprep.subr.mxu0 %v5768
        %6252 = vmatpush1.msra.mxu0 %v5767
        %6253 = vmatprep.subr.mxu0 %v5771
        %6254 = vmatpush1.msra.mxu0 %v5770
        %6255 = vmatprep.subr.mxu0 %v5774
        %6256 = vmatpush1.msra.mxu0 %v5773
        %6257 = vmatprep.subr.mxu0 %v5777
        %6258 = vmatpush1.msra.mxu0 %v5776
        %6259 = vmatprep.subr.mxu0 %v5780
        %6260 = vmatpush1.msra.mxu0 %v5779
        %6261 = vmatprep.subr.mxu0 %v5783
        %6262 = vmatpush1.msra.mxu0 %v5782
        %6263 = vmatprep.subr.mxu0 %v5786
        %6264 = vmatpush1.msra.mxu0 %v5785
        %6265 = vmatprep.subr.mxu0 %v5789
        %6266 = vmatpush1.msra.mxu0 %v5788
        %6267 = vmatprep.subr.mxu0 %v5792
        %6268 = vmatpush1.msra.mxu0 %v5791
        %6269 = vmatprep.subr.mxu0 %v5795
        %6270 = vmatpush1.msra.mxu0 %v5794
        %6271 = vmatprep.subr.mxu0 %v5798
        %6272 = vmatpush1.msra.mxu0 %v5797
        %6273 = vmatprep.subr.mxu0 %v5801
        %6274 = vmatpush1.msra.mxu0 %v5800
        %6275 = vmatprep.subr.mxu0 %v5804
        %6276 = vmatpush1.msra.mxu0 %v5803
        %6277 = vmatprep.subr.mxu0 %v5807
        %6278 = vmatpush1.msra.mxu0 %v5806
        %6279 = vmatprep.subr.mxu0 %v5810
        %6280 = vmatpush1.msra.mxu0 %v5809
        %6281 = vmatprep.subr.mxu0 %v5813
        %6282 = vmatpush1.msra.mxu0 %v5812
        %6283 = vmatprep.subr.mxu0 %v5816
        %6284 = vmatpush1.msra.mxu0 %v5815
        %6285 = vmatprep.subr.mxu0 %v5819
        %6286 = vmatpush1.msra.mxu0 %v5818
        %6287 = vmatprep.mubr.f32.mxu0 %v5232
        %6288 = vmatmul.mubr.f32.gmra.mrb[0].mxu0 %v5231
        %v6289 = vpop.f32.mrb[0].mxu0
        %v6290 = vadd.f32 %v6213, %v6289
        %v6291 = vpop.f32.mrb[0].mxu0
        %v6292 = vadd.f32 %v6215, %v6291
        %6293 = vmatprep.mubr.f32.mxu0 %v5244
        %6294 = vmatmul.mubr.f32.gmra.mrb[0].mxu0 %v5243
        %v6295 = vpop.f32.mrb[0].mxu0
        %v6296 = vadd.f32 %v6219, %v6295
        %v6297 = vpop.f32.mrb[0].mxu0
        %v6298 = vadd.f32 %v6221, %v6297
        %6299 = vdwg.mxu0
        %6300 = vmatprep.subr.mxu0 0.0
        %6301 = vmatpush1.msra.mxu0 %v5247
        %6302 = vmatprep.subr.mxu0 0.0
        %6303 = vmatpush1.msra.mxu0 %v5250
        %6304 = vmatprep.subr.mxu0 0.0
        %6305 = vmatpush1.msra.mxu0 %v5253
        %6306 = vmatprep.subr.mxu0 0.0
        %6307 = vmatpush1.msra.mxu0 %v5256
        %6308 = vmatprep.subr.mxu0 0.0
        %6309 = vmatpush1.msra.mxu0 %v5259
        %6310 = vmatprep.subr.mxu0 0.0
        %6311 = vmatpush1.msra.mxu0 %v5262
        %6312 = vmatprep.subr.mxu0 0.0
        %6313 = vmatpush1.msra.mxu0 %v5265
        %6314 = vmatprep.subr.mxu0 0.0
        %6315 = vmatpush1.msra.mxu0 %v5268
        %6316 = vmatprep.subr.mxu0 0.0
        %6317 = vmatpush1.msra.mxu0 %v5271
        %6318 = vmatprep.subr.mxu0 0.0
        %6319 = vmatpush1.msra.mxu0 %v5274
        %6320 = vmatprep.subr.mxu0 0.0
        %6321 = vmatpush1.msra.mxu0 %v5277
        %6322 = vmatprep.subr.mxu0 0.0
        %6323 = vmatpush1.msra.mxu0 %v5280
        %6324 = vmatprep.subr.mxu0 0.0
        %6325 = vmatpush1.msra.mxu0 %v5283
        %6326 = vmatprep.subr.mxu0 0.0
        %6327 = vmatpush1.msra.mxu0 %v5286
        %6328 = vmatprep.subr.mxu0 0.0
        %6329 = vmatpush1.msra.mxu0 %v5289
        %6330 = vmatprep.subr.mxu0 0.0
        %6331 = vmatpush1.msra.mxu0 %v5292
        %6332 = vmatprep.subr.mxu0 0.0
        %6333 = vmatpush1.msra.mxu0 %v5295
        %6334 = vmatprep.subr.mxu0 0.0
        %6335 = vmatpush1.msra.mxu0 %v5298
        %6336 = vmatprep.subr.mxu0 0.0
        %6337 = vmatpush1.msra.mxu0 %v5301
        %6338 = vmatprep.subr.mxu0 0.0
        %6339 = vmatpush1.msra.mxu0 %v5304
        %6340 = vmatprep.subr.mxu0 0.0
        %6341 = vmatpush1.msra.mxu0 %v5307
        %6342 = vmatprep.subr.mxu0 0.0
        %6343 = vmatpush1.msra.mxu0 %v5310
        %6344 = vmatprep.subr.mxu0 0.0
        %6345 = vmatpush1.msra.mxu0 %v5313
        %6346 = vmatprep.subr.mxu0 0.0
        %6347 = vmatpush1.msra.mxu0 %v5316
        %6348 = vmatprep.subr.mxu0 0.0
        %6349 = vmatpush1.msra.mxu0 %v5319
        %6350 = vmatprep.subr.mxu0 0.0
        %6351 = vmatpush1.msra.mxu0 %v5322
        %6352 = vmatprep.subr.mxu0 0.0
        %6353 = vmatpush1.msra.mxu0 %v5325
        %6354 = vmatprep.subr.mxu0 0.0
        %6355 = vmatpush1.msra.mxu0 %v5328
        %6356 = vmatprep.subr.mxu0 0.0
        %6357 = vmatpush1.msra.mxu0 %v5331
        %6358 = vmatprep.subr.mxu0 0.0
        %6359 = vmatpush1.msra.mxu0 %v5334
        %6360 = vmatprep.subr.mxu0 0.0
        %6361 = vmatpush1.msra.mxu0 %v5337
        %6362 = vmatprep.subr.mxu0 0.0
        %6363 = vmatpush1.msra.mxu0 %v5340
        %6364 = vmatprep.mubr.f32.mxu0 %v5222
        %6365 = vmatmul.mubr.f32.gmra.mrb[0].mxu0 %v5221
        %v6366 = vpop.f32.mrb[0].mxu0
        %v6367 = vadd.f32 %v5834, %v6366
        %v6368 = vpop.f32.mrb[0].mxu0
        %6369 = vmatprep.mubr.f32.mxu0 %v5234
        %6370 = vmatmul.mubr.f32.gmra.mrb[0].mxu0 %v5233
        %v6371 = vpop.f32.mrb[0].mxu0
        %v6372 = vadd.f32 %v5834, %v6371
        %v6373 = vpop.f32.mrb[0].mxu0
        %6374 = vdwg.mxu0
        %6375 = vmatprep.subr.mxu0 0.0
        %6376 = vmatpush1.msra.mxu0 %v5343
        %6377 = vmatprep.subr.mxu0 0.0
        %6378 = vmatpush1.msra.mxu0 %v5346
        %6379 = vmatprep.subr.mxu0 0.0
        %6380 = vmatpush1.msra.mxu0 %v5349
        %6381 = vmatprep.subr.mxu0 0.0
        %6382 = vmatpush1.msra.mxu0 %v5352
        %6383 = vmatprep.subr.mxu0 0.0
        %6384 = vmatpush1.msra.mxu0 %v5355
        %6385 = vmatprep.subr.mxu0 0.0
        %6386 = vmatpush1.msra.mxu0 %v5358
        %6387 = vmatprep.subr.mxu0 0.0
        %6388 = vmatpush1.msra.mxu0 %v5361
        %6389 = vmatprep.subr.mxu0 0.0
        %6390 = vmatpush1.msra.mxu0 %v5364
        %6391 = vmatprep.subr.mxu0 0.0
        %6392 = vmatpush1.msra.mxu0 %v5367
        %6393 = vmatprep.subr.mxu0 0.0
        %6394 = vmatpush1.msra.mxu0 %v5370
        %6395 = vmatprep.subr.mxu0 0.0
        %6396 = vmatpush1.msra.mxu0 %v5373
        %6397 = vmatprep.subr.mxu0 0.0
        %6398 = vmatpush1.msra.mxu0 %v5376
        %6399 = vmatprep.subr.mxu0 0.0
        %6400 = vmatpush1.msra.mxu0 %v5379
        %6401 = vmatprep.subr.mxu0 0.0
        %6402 = vmatpush1.msra.mxu0 %v5382
        %6403 = vmatprep.subr.mxu0 0.0
        %6404 = vmatpush1.msra.mxu0 %v5385
        %6405 = vmatprep.subr.mxu0 0.0
        %6406 = vmatpush1.msra.mxu0 %v5388
        %6407 = vmatprep.subr.mxu0 0.0
        %6408 = vmatpush1.msra.mxu0 %v5391
        %6409 = vmatprep.subr.mxu0 0.0
        %6410 = vmatpush1.msra.mxu0 %v5394
        %6411 = vmatprep.subr.mxu0 0.0
        %6412 = vmatpush1.msra.mxu0 %v5397
        %6413 = vmatprep.subr.mxu0 0.0
        %6414 = vmatpush1.msra.mxu0 %v5400
        %6415 = vmatprep.subr.mxu0 0.0
        %6416 = vmatpush1.msra.mxu0 %v5403
        %6417 = vmatprep.subr.mxu0 0.0
        %6418 = vmatpush1.msra.mxu0 %v5406
        %6419 = vmatprep.subr.mxu0 0.0
        %6420 = vmatpush1.msra.mxu0 %v5409
        %6421 = vmatprep.subr.mxu0 0.0
        %6422 = vmatpush1.msra.mxu0 %v5412
        %6423 = vmatprep.subr.mxu0 0.0
        %6424 = vmatpush1.msra.mxu0 %v5415
        %6425 = vmatprep.subr.mxu0 0.0
        %6426 = vmatpush1.msra.mxu0 %v5418
        %6427 = vmatprep.subr.mxu0 0.0
        %6428 = vmatpush1.msra.mxu0 %v5421
        %6429 = vmatprep.subr.mxu0 0.0
        %6430 = vmatpush1.msra.mxu0 %v5424
        %6431 = vmatprep.subr.mxu0 0.0
        %6432 = vmatpush1.msra.mxu0 %v5427
        %6433 = vmatprep.subr.mxu0 0.0
        %6434 = vmatpush1.msra.mxu0 %v5430
        %6435 = vmatprep.subr.mxu0 0.0
        %6436 = vmatpush1.msra.mxu0 %v5433
        %6437 = vmatprep.subr.mxu0 0.0
        %6438 = vmatpush1.msra.mxu0 %v5436
        %6439 = vmatprep.mubr.f32.mxu0 %v5224
        %6440 = vmatmul.mubr.f32.gmra.mrb[0].mxu0 %v5223
        %v6441 = vpop.f32.mrb[0].mxu0
        %v6442 = vadd.f32 %v6367, %v6441
        %v6443 = vpop.f32.mrb[0].mxu0
        %6444 = vmatprep.mubr.f32.mxu0 %v5236
        %6445 = vmatmul.mubr.f32.gmra.mrb[0].mxu0 %v5235
        %v6446 = vpop.f32.mrb[0].mxu0
        %v6447 = vadd.f32 %v6372, %v6446
        %v6448 = vpop.f32.mrb[0].mxu0
        %6449 = vdwg.mxu0
        %6450 = vmatprep.subr.mxu0 0.0
        %6451 = vmatpush1.msra.mxu0 %v5439
        %6452 = vmatprep.subr.mxu0 0.0
        %6453 = vmatpush1.msra.mxu0 %v5442
        %6454 = vmatprep.subr.mxu0 0.0
        %6455 = vmatpush1.msra.mxu0 %v5445
        %6456 = vmatprep.subr.mxu0 0.0
        %6457 = vmatpush1.msra.mxu0 %v5448
        %6458 = vmatprep.subr.mxu0 0.0
        %6459 = vmatpush1.msra.mxu0 %v5451
        %6460 = vmatprep.subr.mxu0 0.0
        %6461 = vmatpush1.msra.mxu0 %v5454
        %6462 = vmatprep.subr.mxu0 0.0
        %6463 = vmatpush1.msra.mxu0 %v5457
        %6464 = vmatprep.subr.mxu0 0.0
        %6465 = vmatpush1.msra.mxu0 %v5460
        %6466 = vmatprep.subr.mxu0 0.0
        %6467 = vmatpush1.msra.mxu0 %v5463
        %6468 = vmatprep.subr.mxu0 0.0
        %6469 = vmatpush1.msra.mxu0 %v5466
        %6470 = vmatprep.subr.mxu0 0.0
        %6471 = vmatpush1.msra.mxu0 %v5469
        %6472 = vmatprep.subr.mxu0 0.0
        %6473 = vmatpush1.msra.mxu0 %v5472
        %6474 = vmatprep.subr.mxu0 0.0
        %6475 = vmatpush1.msra.mxu0 %v5475
        %6476 = vmatprep.subr.mxu0 0.0
        %6477 = vmatpush1.msra.mxu0 %v5478
        %6478 = vmatprep.subr.mxu0 0.0
        %6479 = vmatpush1.msra.mxu0 %v5481
        %6480 = vmatprep.subr.mxu0 0.0
        %6481 = vmatpush1.msra.mxu0 %v5484
        %6482 = vmatprep.subr.mxu0 0.0
        %6483 = vmatpush1.msra.mxu0 %v5487
        %6484 = vmatprep.subr.mxu0 0.0
        %6485 = vmatpush1.msra.mxu0 %v5490
        %6486 = vmatprep.subr.mxu0 0.0
        %6487 = vmatpush1.msra.mxu0 %v5493
        %6488 = vmatprep.subr.mxu0 0.0
        %6489 = vmatpush1.msra.mxu0 %v5496
        %6490 = vmatprep.subr.mxu0 0.0
        %6491 = vmatpush1.msra.mxu0 %v5499
        %6492 = vmatprep.subr.mxu0 0.0
        %6493 = vmatpush1.msra.mxu0 %v5502
        %6494 = vmatprep.subr.mxu0 0.0
        %6495 = vmatpush1.msra.mxu0 %v5505
        %6496 = vmatprep.subr.mxu0 0.0
        %6497 = vmatpush1.msra.mxu0 %v5508
        %6498 = vmatprep.subr.mxu0 0.0
        %6499 = vmatpush1.msra.mxu0 %v5511
        %6500 = vmatprep.subr.mxu0 0.0
        %6501 = vmatpush1.msra.mxu0 %v5514
        %6502 = vmatprep.subr.mxu0 0.0
        %6503 = vmatpush1.msra.mxu0 %v5517
        %6504 = vmatprep.subr.mxu0 0.0
        %6505 = vmatpush1.msra.mxu0 %v5520
        %6506 = vmatprep.subr.mxu0 0.0
        %6507 = vmatpush1.msra.mxu0 %v5523
        %6508 = vmatprep.subr.mxu0 0.0
        %6509 = vmatpush1.msra.mxu0 %v5526
        %6510 = vmatprep.subr.mxu0 0.0
        %6511 = vmatpush1.msra.mxu0 %v5529
        %6512 = vmatprep.subr.mxu0 0.0
        %6513 = vmatpush1.msra.mxu0 %v5532
        %6514 = vmatprep.mubr.f32.mxu0 %v5226
        %6515 = vmatmul.mubr.f32.gmra.mrb[0].mxu0 %v5225
        %v6516 = vpop.f32.mrb[0].mxu0
        %v6517 = vadd.f32 %v6442, %v6516
        %v6518 = vpop.f32.mrb[0].mxu0
        %6519 = vmatprep.mubr.f32.mxu0 %v5238
        %6520 = vmatmul.mubr.f32.gmra.mrb[0].mxu0 %v5237
        %v6521 = vpop.f32.mrb[0].mxu0
        %v6522 = vadd.f32 %v6447, %v6521
        %v6523 = vpop.f32.mrb[0].mxu0
        %6524 = vdwg.mxu0
        %6525 = vmatprep.subr.mxu0 0.0
        %6526 = vmatpush1.msra.mxu0 %v5535
        %6527 = vmatprep.subr.mxu0 0.0
        %6528 = vmatpush1.msra.mxu0 %v5538
        %6529 = vmatprep.subr.mxu0 0.0
        %6530 = vmatpush1.msra.mxu0 %v5541
        %6531 = vmatprep.subr.mxu0 0.0
        %6532 = vmatpush1.msra.mxu0 %v5544
        %6533 = vmatprep.subr.mxu0 0.0
        %6534 = vmatpush1.msra.mxu0 %v5547
        %6535 = vmatprep.subr.mxu0 0.0
        %6536 = vmatpush1.msra.mxu0 %v5550
        %6537 = vmatprep.subr.mxu0 0.0
        %6538 = vmatpush1.msra.mxu0 %v5553
        %6539 = vmatprep.subr.mxu0 0.0
        %6540 = vmatpush1.msra.mxu0 %v5556
        %6541 = vmatprep.subr.mxu0 0.0
        %6542 = vmatpush1.msra.mxu0 %v5559
        %6543 = vmatprep.subr.mxu0 0.0
        %6544 = vmatpush1.msra.mxu0 %v5562
        %6545 = vmatprep.subr.mxu0 0.0
        %6546 = vmatpush1.msra.mxu0 %v5565
        %6547 = vmatprep.subr.mxu0 0.0
        %6548 = vmatpush1.msra.mxu0 %v5568
        %6549 = vmatprep.subr.mxu0 0.0
        %6550 = vmatpush1.msra.mxu0 %v5571
        %6551 = vmatprep.subr.mxu0 0.0
        %6552 = vmatpush1.msra.mxu0 %v5574
        %6553 = vmatprep.subr.mxu0 0.0
        %6554 = vmatpush1.msra.mxu0 %v5577
        %6555 = vmatprep.subr.mxu0 0.0
        %6556 = vmatpush1.msra.mxu0 %v5580
        %6557 = vmatprep.subr.mxu0 0.0
        %6558 = vmatpush1.msra.mxu0 %v5583
        %6559 = vmatprep.subr.mxu0 0.0
        %6560 = vmatpush1.msra.mxu0 %v5586
        %6561 = vmatprep.subr.mxu0 0.0
        %6562 = vmatpush1.msra.mxu0 %v5589
        %6563 = vmatprep.subr.mxu0 0.0
        %6564 = vmatpush1.msra.mxu0 %v5592
        %6565 = vmatprep.subr.mxu0 0.0
        %6566 = vmatpush1.msra.mxu0 %v5595
        %6567 = vmatprep.subr.mxu0 0.0
        %6568 = vmatpush1.msra.mxu0 %v5598
        %6569 = vmatprep.subr.mxu0 0.0
        %6570 = vmatpush1.msra.mxu0 %v5601
        %6571 = vmatprep.subr.mxu0 0.0
        %6572 = vmatpush1.msra.mxu0 %v5604
        %6573 = vmatprep.subr.mxu0 0.0
        %6574 = vmatpush1.msra.mxu0 %v5607
        %6575 = vmatprep.subr.mxu0 0.0
        %6576 = vmatpush1.msra.mxu0 %v5610
        %6577 = vmatprep.subr.mxu0 0.0
        %6578 = vmatpush1.msra.mxu0 %v5613
        %6579 = vmatprep.subr.mxu0 0.0
        %6580 = vmatpush1.msra.mxu0 %v5616
        %6581 = vmatprep.subr.mxu0 0.0
        %6582 = vmatpush1.msra.mxu0 %v5619
        %6583 = vmatprep.subr.mxu0 0.0
        %6584 = vmatpush1.msra.mxu0 %v5622
        %6585 = vmatprep.subr.mxu0 0.0
        %6586 = vmatpush1.msra.mxu0 %v5625
        %6587 = vmatprep.subr.mxu0 0.0
        %6588 = vmatpush1.msra.mxu0 %v5628
        %6589 = vmatprep.mubr.f32.mxu0 %v5228
        %6590 = vmatmul.mubr.f32.gmra.mrb[0].mxu0 %v5227
        %v6591 = vpop.f32.mrb[0].mxu0
        %v6592 = vadd.f32 %v6517, %v6591
        %v6593 = vpop.f32.mrb[0].mxu0
        %6594 = vmatprep.mubr.f32.mxu0 %v5240
        %6595 = vmatmul.mubr.f32.gmra.mrb[0].mxu0 %v5239
        %v6596 = vpop.f32.mrb[0].mxu0
        %v6597 = vadd.f32 %v6522, %v6596
        %v6598 = vpop.f32.mrb[0].mxu0
        %6599 = vdwg.mxu0
        %6600 = vmatprep.subr.mxu0 0.0
        %6601 = vmatpush1.msra.mxu0 %v5631
        %6602 = vmatprep.subr.mxu0 0.0
        %6603 = vmatpush1.msra.mxu0 %v5634
        %6604 = vmatprep.subr.mxu0 0.0
        %6605 = vmatpush1.msra.mxu0 %v5637
        %6606 = vmatprep.subr.mxu0 0.0
        %6607 = vmatpush1.msra.mxu0 %v5640
        %6608 = vmatprep.subr.mxu0 0.0
        %6609 = vmatpush1.msra.mxu0 %v5643
        %6610 = vmatprep.subr.mxu0 0.0
        %6611 = vmatpush1.msra.mxu0 %v5646
        %6612 = vmatprep.subr.mxu0 0.0
        %6613 = vmatpush1.msra.mxu0 %v5649
        %6614 = vmatprep.subr.mxu0 0.0
        %6615 = vmatpush1.msra.mxu0 %v5652
        %6616 = vmatprep.subr.mxu0 0.0
        %6617 = vmatpush1.msra.mxu0 %v5655
        %6618 = vmatprep.subr.mxu0 0.0
        %6619 = vmatpush1.msra.mxu0 %v5658
        %6620 = vmatprep.subr.mxu0 0.0
        %6621 = vmatpush1.msra.mxu0 %v5661
        %6622 = vmatprep.subr.mxu0 0.0
        %6623 = vmatpush1.msra.mxu0 %v5664
        %6624 = vmatprep.subr.mxu0 0.0
        %6625 = vmatpush1.msra.mxu0 %v5667
        %6626 = vmatprep.subr.mxu0 0.0
        %6627 = vmatpush1.msra.mxu0 %v5670
        %6628 = vmatprep.subr.mxu0 0.0
        %6629 = vmatpush1.msra.mxu0 %v5673
        %6630 = vmatprep.subr.mxu0 0.0
        %6631 = vmatpush1.msra.mxu0 %v5676
        %6632 = vmatprep.subr.mxu0 0.0
        %6633 = vmatpush1.msra.mxu0 %v5679
        %6634 = vmatprep.subr.mxu0 0.0
        %6635 = vmatpush1.msra.mxu0 %v5682
        %6636 = vmatprep.subr.mxu0 0.0
        %6637 = vmatpush1.msra.mxu0 %v5685
        %6638 = vmatprep.subr.mxu0 0.0
        %6639 = vmatpush1.msra.mxu0 %v5688
        %6640 = vmatprep.subr.mxu0 0.0
        %6641 = vmatpush1.msra.mxu0 %v5691
        %6642 = vmatprep.subr.mxu0 0.0
        %6643 = vmatpush1.msra.mxu0 %v5694
        %6644 = vmatprep.subr.mxu0 0.0
        %6645 = vmatpush1.msra.mxu0 %v5697
        %6646 = vmatprep.subr.mxu0 0.0
        %6647 = vmatpush1.msra.mxu0 %v5700
        %6648 = vmatprep.subr.mxu0 0.0
        %6649 = vmatpush1.msra.mxu0 %v5703
        %6650 = vmatprep.subr.mxu0 0.0
        %6651 = vmatpush1.msra.mxu0 %v5706
        %6652 = vmatprep.subr.mxu0 0.0
        %6653 = vmatpush1.msra.mxu0 %v5709
        %6654 = vmatprep.subr.mxu0 0.0
        %6655 = vmatpush1.msra.mxu0 %v5712
        %6656 = vmatprep.subr.mxu0 0.0
        %6657 = vmatpush1.msra.mxu0 %v5715
        %6658 = vmatprep.subr.mxu0 0.0
        %6659 = vmatpush1.msra.mxu0 %v5718
        %6660 = vmatprep.subr.mxu0 0.0
        %6661 = vmatpush1.msra.mxu0 %v5721
        %6662 = vmatprep.subr.mxu0 0.0
        %6663 = vmatpush1.msra.mxu0 %v5724
        %6664 = vmatprep.mubr.f32.mxu0 %v5230
        %6665 = vmatmul.mubr.f32.gmra.mrb[0].mxu0 %v5229
        %v6666 = vpop.f32.mrb[0].mxu0
        %v6667 = vadd.f32 %v6592, %v6666
        %v6668 = vpop.f32.mrb[0].mxu0
        %6669 = vmatprep.mubr.f32.mxu0 %v5242
        %6670 = vmatmul.mubr.f32.gmra.mrb[0].mxu0 %v5241
        %v6671 = vpop.f32.mrb[0].mxu0
        %v6672 = vadd.f32 %v6597, %v6671
        %v6673 = vpop.f32.mrb[0].mxu0
        %6674 = vdwg.mxu0
        %6675 = vmatprep.subr.mxu0 0.0
        %6676 = vmatpush1.msra.mxu0 %v5727
        %6677 = vmatprep.subr.mxu0 0.0
        %6678 = vmatpush1.msra.mxu0 %v5730
        %6679 = vmatprep.subr.mxu0 0.0
        %6680 = vmatpush1.msra.mxu0 %v5733
        %6681 = vmatprep.subr.mxu0 0.0
        %6682 = vmatpush1.msra.mxu0 %v5736
        %6683 = vmatprep.subr.mxu0 0.0
        %6684 = vmatpush1.msra.mxu0 %v5739
        %6685 = vmatprep.subr.mxu0 0.0
        %6686 = vmatpush1.msra.mxu0 %v5742
        %6687 = vmatprep.subr.mxu0 0.0
        %6688 = vmatpush1.msra.mxu0 %v5745
        %6689 = vmatprep.subr.mxu0 0.0
        %6690 = vmatpush1.msra.mxu0 %v5748
        %6691 = vmatprep.subr.mxu0 0.0
        %6692 = vmatpush1.msra.mxu0 %v5751
        %6693 = vmatprep.subr.mxu0 0.0
        %6694 = vmatpush1.msra.mxu0 %v5754
        %6695 = vmatprep.subr.mxu0 0.0
        %6696 = vmatpush1.msra.mxu0 %v5757
        %6697 = vmatprep.subr.mxu0 0.0
        %6698 = vmatpush1.msra.mxu0 %v5760
        %6699 = vmatprep.subr.mxu0 0.0
        %6700 = vmatpush1.msra.mxu0 %v5763
        %6701 = vmatprep.subr.mxu0 0.0
        %6702 = vmatpush1.msra.mxu0 %v5766
        %6703 = vmatprep.subr.mxu0 0.0
        %6704 = vmatpush1.msra.mxu0 %v5769
        %6705 = vmatprep.subr.mxu0 0.0
        %6706 = vmatpush1.msra.mxu0 %v5772
        %6707 = vmatprep.subr.mxu0 0.0
        %6708 = vmatpush1.msra.mxu0 %v5775
        %6709 = vmatprep.subr.mxu0 0.0
        %6710 = vmatpush1.msra.mxu0 %v5778
        %6711 = vmatprep.subr.mxu0 0.0
        %6712 = vmatpush1.msra.mxu0 %v5781
        %6713 = vmatprep.subr.mxu0 0.0
        %6714 = vmatpush1.msra.mxu0 %v5784
        %6715 = vmatprep.subr.mxu0 0.0
        %6716 = vmatpush1.msra.mxu0 %v5787
        %6717 = vmatprep.subr.mxu0 0.0
        %6718 = vmatpush1.msra.mxu0 %v5790
        %6719 = vmatprep.subr.mxu0 0.0
        %6720 = vmatpush1.msra.mxu0 %v5793
        %6721 = vmatprep.subr.mxu0 0.0
        %6722 = vmatpush1.msra.mxu0 %v5796
        %6723 = vmatprep.subr.mxu0 0.0
        %6724 = vmatpush1.msra.mxu0 %v5799
        %6725 = vmatprep.subr.mxu0 0.0
        %6726 = vmatpush1.msra.mxu0 %v5802
        %6727 = vmatprep.subr.mxu0 0.0
        %6728 = vmatpush1.msra.mxu0 %v5805
        %6729 = vmatprep.subr.mxu0 0.0
        %6730 = vmatpush1.msra.mxu0 %v5808
        %6731 = vmatprep.subr.mxu0 0.0
        %6732 = vmatpush1.msra.mxu0 %v5811
        %6733 = vmatprep.subr.mxu0 0.0
        %6734 = vmatpush1.msra.mxu0 %v5814
        %6735 = vmatprep.subr.mxu0 0.0
        %6736 = vmatpush1.msra.mxu0 %v5817
        %6737 = vmatprep.subr.mxu0 0.0
        %6738 = vmatpush1.msra.mxu0 %v5820
        %6739 = vmatprep.mubr.f32.mxu0 %v5232
        %6740 = vmatmul.mubr.f32.gmra.mrb[0].mxu0 %v5231
        %v6741 = vpop.f32.mrb[0].mxu0
        %v6742 = vadd.f32 %v6667, %v6741
        %v6743 = vpop.f32.mrb[0].mxu0
        %6744 = vmatprep.mubr.f32.mxu0 %v5244
        %6745 = vmatmul.mubr.f32.gmra.mrb[0].mxu0 %v5243
        %v6746 = vpop.f32.mrb[0].mxu0
        %v6747 = vadd.f32 %v6672, %v6746
        %v6748 = vpop.f32.mrb[0].mxu0
        %6749 = vdwg.mxu0
        %v6750 = vadd.f32 %v3563, %v6290
        %v6751 = vadd.f32 %v3564, %v6292
        %v6752 = vadd.f32 %v3565, %v6742
        %v6753 = vadd.f32 %v3566, %v6296
        %v6754 = vadd.f32 %v3567, %v6298
        %v6755 = vadd.f32 %v3568, %v6747
        %6756 = vst [vmem:[%s577] sm:$0xff] %v6750
        %6757 = vst [vmem:[%s577 + $0x8] sm:$0xff] %v6751
        %6758 = vst [vmem:[%s577 + $0x10] sm:$0xff] %v6752
        %6759 = vst [vmem:[%s577 + $0x18] sm:$0xff] %v6753
        %6760 = vst [vmem:[%s577 + $0x20] sm:$0xff] %v6754
        %6761 = vst [vmem:[%s577 + $0x28] sm:$0xff] %v6755
        %s6762 = sand.u32 %s300, 1
        %s6763 = scalar_lea.sflag [#allocation4], %s6762
        %s6764 = sand.u32 %s300, 1
        %s6765 = smul.addr %s6764, 48
        %s6766 = scalar_lea.vmem [#allocation22], %s6765
        // Predicated region
        $region117: #{tpu_custom_call.1} parent=67 // pred_check
          %p6767 = pneg %p310
        $region118: #{tpu_custom_call.1} parent=67 // pred_check_branch
          %6769 = sbr.rel (%p6767) target = $region120
        $region119: #{tpu_custom_call.1} parent=67 // pred_region
          %s6771 = ssub.s32 768, 768
          %6772 = vsyncadd %s6763, %s6771
          %s6773 = smul.addr %s35, 6
          %s6774 = smul.addr %s6773, 128
          %s6775 = scalar_lea.hbm %s12, %s6774
          %s6776 = sshll.u32 %s6766, 4
          %s6777 = int_to_ptr.vmem [resolvable:$true] %s6776
          %6782 = dma.vmem_to_hbm [thread:$0]  %s6777, 768, %s6775, %s6763, 384, 384, 24
        $region120: #{tpu_custom_call.1} parent=67 // pred_fallthru
          _
      $region68: #{tpu_custom_call.1} parent=5 // pred_fallthru
        _
      %p6783 = scmp.le.s32.totalorder 2, %s30
      // Predicated region
      $region121: #{tpu_custom_call.1} parent=5 // pred_check
        %p6784 = pneg %p6783
      $region122: #{tpu_custom_call.1} parent=5 // pred_check_branch
        %6786 = sbr.rel (%p6784) target = $region124
      $region123: #{tpu_custom_call.1} parent=5 // pred_region
        %s6787 = ssub.s32 %s30, 2
        // Predicated region
        $region125: #{tpu_custom_call.1} parent=123 // pred_check
          %p6788 = pneg %p316
        $region126: #{tpu_custom_call.1} parent=123 // pred_check_branch
          %6790 = sbr.rel (%p6788) target = $region128
        $region127: #{tpu_custom_call.1} parent=123 // pred_region
          %s6791 = sand.u32 %s301, 1
          %s6792 = scalar_lea.sflag [#allocation4], %s6791
          %s6793 = sand.u32 %s301, 1
          %s6794 = smul.addr %s6793, 48
          %s6795 = scalar_lea.vmem [#allocation22], %s6794
          %6796 = dma.done %s6792, 768
        $region128: #{tpu_custom_call.1} parent=123 // pred_fallthru
          _
      $region124: #{tpu_custom_call.1} parent=5 // pred_fallthru
        _
    $region6: #{tpu_custom_call.1} parent=1 // loop_footer
      %s34 = sadd.s32 1, %s30
    $region7: #{tpu_custom_call.1} parent=1 // loop_footer_branch
      %29 = sbr.rel target = $region3
    $region8: #{tpu_custom_call.1} parent=1 // loop_exit
      _
    %6797 = vsyncpa [#allocation3], 1
    %s6798 = scalar_lea.sflag [#allocation3], 1
    %6799 = vsyncpa %s6798, 1
    %6800 = vsyncpa [#allocation6], 1
    %6801 = vsyncpa [#allocation9], 1
    %6802 = vsyncpa [#allocation12], 1
    %6803 = vsyncpa [#allocation15], 1
    %6804 = vsyncpa [#allocation18], 1
    %6805 = vsyncpa [#allocation21], 1
    %6806 = vsyncpa [#allocation4], 1
    %s6807 = scalar_lea.sflag [#allocation4], 1
    %6808 = vsyncpa %s6807, 1

</llo_original>
